<compile_context>
chip_gen: v6e
topology: v6e:2x2x1
jax: 0.10.0
libtpu: 0.0.40
codegen_flags: <defaults>
</compile_context>

<pallas_src>
import functools

import jax
import jax.numpy as jnp
from jax import lax
from jax.experimental import pallas as pl
from jax.experimental.pallas import tpu as pltpu


def _relu6(v):
    return jnp.clip(v, 0.0, 6.0)


# ----------------------------------------------------------------------------
# Pallas kernel: whole ASFF level-2 forward for one batch element.
# ----------------------------------------------------------------------------
def asff_kernel(
    x1_ref,               # (1, Hh*W2, C1)          bf16  level1, W pre-repeated 2x
    x2_ref,               # (1, H2*W2, C2)          bf16  level2
    x3p_ref,              # (1, 4*(H2+1), W2+1, C3) bf16  padded parity planes of level3
    w12_ref, b12_ref,     # (C1, C2) bf16, (1, C2) f32    level1_2 conv (BN folded)
    w32_ref, b32_ref,     # (9*C3, C2) bf16, (1, C2) f32  level3_2 conv taps (BN folded)
    ww1_ref, bw1_ref,     # (C2, 8) f32, (1, 8) f32
    ww2_ref, bw2_ref,     # (C2, 8) f32, (1, 8) f32
    ww3_ref, bw3_ref,     # (C2, 8) f32, (1, 8) f32
    wl1_ref, wl2_ref, wl3_ref, bwl_ref,   # (8, 3) f32 x3, (1, 3) f32
    wexp_ref, bexp_ref,   # (C2, Cout) bf16, (1, Cout) f32
    out_ref,              # (1, H2*W2, Cout)        f32
    *, H2, W2,
):
    f32 = jnp.float32
    bf16 = jnp.bfloat16
    Hh = H2 // 2
    C2 = w12_ref.shape[-1]
    C3 = x3p_ref.shape[-1]
    P2 = H2 * W2

    # --- level1_2: 1x1 conv + BN + ReLU6 at (Hh, W2) rows, then repeat 2x in H.
    #     (nearest upsample commutes with per-pixel conv/BN/ReLU6.)
    l1h = _relu6(jnp.dot(x1_ref[0], w12_ref[...], preferred_element_type=f32)
                 + b12_ref[...])                                  # (Hh*W2, C2)
    l1h3 = l1h.reshape(Hh, W2, C2)
    l1 = jnp.broadcast_to(l1h3[:, None, :, :], (Hh, 2, W2, C2)).reshape(P2, C2)

    # --- level2 passthrough -------------------------------------------------
    l2 = x2_ref[0].astype(f32)                                    # (P2, C2)

    # --- level3_2: 3x3 stride-2 pad-1 conv as 9 shifted matmuls over the
    #     zero-padded parity planes (in-kernel im2col, no HBM blow-up).
    acc3 = jnp.zeros((P2, C2), f32)
    for kh in range(3):
        for kw in range(3):
            rp = 0 if kh == 1 else 1          # input-row parity of this tap
            cp = 0 if kw == 1 else 1          # input-col parity of this tap
            plane = 2 * rp + cp
            rs = 0 if kh == 0 else 1          # row start inside padded plane
            cs = 0 if kw == 0 else 1          # col start inside padded plane
            t = 3 * kh + kw
            r0 = plane * (H2 + 1) + rs
            patch = x3p_ref[0, r0:r0 + H2, cs:cs + W2, :].reshape(P2, C3)
            acc3 = acc3 + jnp.dot(patch, w32_ref[t * C3:(t + 1) * C3, :],
                                  preferred_element_type=f32)
    l3 = _relu6(acc3 + b32_ref[...])

    # --- per-level weight embeddings (C2 -> 8) ------------------------------
    w1 = _relu6(jnp.dot(l1, ww1_ref[...], preferred_element_type=f32) + bw1_ref[...])
    w2 = _relu6(jnp.dot(l2, ww2_ref[...], preferred_element_type=f32) + bw2_ref[...])
    w3 = _relu6(jnp.dot(l3, ww3_ref[...], preferred_element_type=f32) + bw3_ref[...])

    # --- weight_level 1x1 conv (24 -> 3) without a lane-axis concat ---------
    logits = (jnp.dot(w1, wl1_ref[...], preferred_element_type=f32)
              + jnp.dot(w2, wl2_ref[...], preferred_element_type=f32)
              + jnp.dot(w3, wl3_ref[...], preferred_element_type=f32)
              + bwl_ref[...])
    m = jnp.max(logits, axis=-1, keepdims=True)
    e = jnp.exp(logits - m)
    a = e * pl.reciprocal(jnp.sum(e, axis=-1, keepdims=True), approx=True)

    # --- adaptive fusion + expand conv --------------------------------------
    fused = l1 * a[:, 0:1] + l2 * a[:, 1:2] + l3 * a[:, 2:3]
    out = _relu6(jnp.dot(fused.astype(bf16), wexp_ref[...],
                         preferred_element_type=f32) + bexp_ref[...])
    out_ref[0] = out.astype(out_ref.dtype)


# ----------------------------------------------------------------------------
# Parameter folding helpers (BatchNorm eval mode folded into conv weights).
# ----------------------------------------------------------------------------
def fold_bn(w_oihw, gamma, beta, mean, var, eps=1e-5):
    scale = gamma / jnp.sqrt(var + eps)          # (Cout,)
    shift = beta - mean * scale                  # (Cout,)
    return w_oihw * scale[:, None, None, None], shift


# ----------------------------------------------------------------------------
# Wrapper: layout plumbing + pallas_call.
# ----------------------------------------------------------------------------
def asff_level2_pallas(level1, level2, level3, p):
    B, C1, H1, W1 = level1.shape
    _, C2, H2, W2 = level2.shape
    _, C3, H3, W3 = level3.shape
    Cout = p["w_exp"].shape[0]
    assert H2 == 2 * H1 and W2 == 2 * W1 and H3 == 2 * H2 and W3 == 2 * W2
    Hh, Wh = H1, W1
    P2 = H2 * W2
    bf16 = jnp.bfloat16

    # ---- NCHW -> NHWC -------------------------------------------------------
    x1 = jnp.transpose(level1, (0, 2, 3, 1)).astype(jnp.float32)
    x2 = jnp.transpose(level2, (0, 2, 3, 1)).astype(jnp.float32)
    x3 = jnp.transpose(level3, (0, 2, 3, 1)).astype(jnp.float32)

    # level1: repeat 2x along W only (the H repeat is a cheap in-kernel reshape)
    x1w = jnp.repeat(x1, 2, axis=2).reshape(B, Hh * W2, C1).astype(bf16)

    x2_rows = x2.reshape(B, P2, C2).astype(bf16)

    # level3: 4 parity (pixel-unshuffle by 2) planes, each zero-padded by one
    # row on top and one column on the left so every 3x3-stride-2 tap becomes
    # a static (H2, W2) window of a plane.
    planes = []
    for rp in range(2):
        for cp in range(2):
            par = x3[:, rp::2, cp::2, :]                          # (B, H2, W2, C3)
            planes.append(jnp.pad(par, ((0, 0), (1, 0), (1, 0), (0, 0))))
    x3p = jnp.concatenate(planes, axis=1).astype(bf16)            # (B, 4*(H2+1), W2+1, C3)

    # ---- fold BN into convs, build matmul weights ---------------------------
    w12, b12 = fold_bn(p["w_l12"], *p["bn_l12"])
    w32, b32 = fold_bn(p["w_l32"], *p["bn_l32"])
    ww1, bw1 = fold_bn(p["w_w1"], *p["bn_w1"])
    ww2, bw2 = fold_bn(p["w_w2"], *p["bn_w2"])
    ww3, bw3 = fold_bn(p["w_w3"], *p["bn_w3"])
    wexp, bexp = fold_bn(p["w_exp"], *p["bn_exp"])

    w12_m = w12[:, :, 0, 0].T.astype(bf16)                            # (C1, C2)
    w32_m = jnp.transpose(w32, (2, 3, 1, 0)).reshape(9 * C3, C2).astype(bf16)
    ww1_m = ww1[:, :, 0, 0].T.astype(jnp.float32)                     # (C2, 8)
    ww2_m = ww2[:, :, 0, 0].T.astype(jnp.float32)
    ww3_m = ww3[:, :, 0, 0].T.astype(jnp.float32)
    wwl_m = p["w_wl"][:, :, 0, 0].T.astype(jnp.float32)               # (24, 3)
    fc = wwl_m.shape[0] // 3
    wl1_m, wl2_m, wl3_m = wwl_m[0:fc], wwl_m[fc:2 * fc], wwl_m[2 * fc:3 * fc]
    wexp_m = wexp[:, :, 0, 0].T.astype(bf16)                          # (C2, Cout)

    row = lambda v: v.reshape(1, -1).astype(jnp.float32)
    params = [
        w12_m, row(b12), w32_m, row(b32),
        ww1_m, row(bw1), ww2_m, row(bw2), ww3_m, row(bw3),
        wl1_m, wl2_m, wl3_m, row(p["b_wl"]),
        wexp_m, row(bexp),
    ]

    def const_spec(a):
        n = a.ndim
        return pl.BlockSpec(a.shape, lambda b: (0,) * n)

    in_specs = [
        pl.BlockSpec((1, Hh * W2, C1), lambda b: (b, 0, 0)),
        pl.BlockSpec((1, P2, C2), lambda b: (b, 0, 0)),
        pl.BlockSpec((1, 4 * (H2 + 1), W2 + 1, C3), lambda b: (b, 0, 0, 0)),
    ] + [const_spec(a) for a in params]

    out_rows = pl.pallas_call(
        functools.partial(asff_kernel, H2=H2, W2=W2),
        out_shape=jax.ShapeDtypeStruct((B, P2, Cout), jnp.float32),
        grid_spec=pltpu.PrefetchScalarGridSpec(
            num_scalar_prefetch=0,
            grid=(B,),
            in_specs=in_specs,
            out_specs=pl.BlockSpec((1, P2, Cout), lambda b: (b, 0, 0)),
        ),
        compiler_params=pltpu.CompilerParams(
            dimension_semantics=("parallel",)),
    )(x1w, x2_rows, x3p, *params)

    out = out_rows.reshape(B, H2, W2, Cout)
    return jnp.transpose(out, (0, 3, 1, 2))      # back to NCHW


# ----------------------------------------------------------------------------
# Pure-JAX reference (independent path via lax.conv) for correctness check.
# ----------------------------------------------------------------------------
def _conv2d(x, w, stride=1, padding=0):
    return lax.conv_general_dilated(
        x, w, (stride, stride), ((padding, padding), (padding, padding)),
        dimension_numbers=("NCHW", "OIHW", "NCHW"))


def _bn_relu6(x, bn, eps=1e-5):
    gamma, beta, mean, var = bn
    scale = gamma / jnp.sqrt(var + eps)
    shift = beta - mean * scale
    y = x * scale[None, :, None, None] + shift[None, :, None, None]
    return jnp.clip(y, 0.0, 6.0)


def asff_level2_ref(level1, level2, level3, p):
    l1 = _bn_relu6(_conv2d(level1, p["w_l12"]), p["bn_l12"])
    l1 = jnp.repeat(jnp.repeat(l1, 2, axis=2), 2, axis=3)
    l2 = level2
    l3 = _bn_relu6(_conv2d(level3, p["w_l32"], stride=2, padding=1), p["bn_l32"])
    w1 = _bn_relu6(_conv2d(l1, p["w_w1"]), p["bn_w1"])
    w2 = _bn_relu6(_conv2d(l2, p["w_w2"]), p["bn_w2"])
    w3 = _bn_relu6(_conv2d(l3, p["w_w3"]), p["bn_w3"])
    cat = jnp.concatenate([w1, w2, w3], axis=1)
    logits = _conv2d(cat, p["w_wl"]) + p["b_wl"][None, :, None, None]
    a = jax.nn.softmax(logits, axis=1)
    fused = l1 * a[:, 0:1] + l2 * a[:, 1:2] + l3 * a[:, 2:3]
    return _bn_relu6(_conv2d(fused, p["w_exp"]), p["bn_exp"])


# ----------------------------------------------------------------------------
# Deterministic parameter construction (shapes match ASFF.__init__, level=2).
# ----------------------------------------------------------------------------
def make_params(key, c1, c2, c3, cout):
    ks = iter(jax.random.split(key, 32))

    def conv_w(cout_, cin_, k):
        return 0.1 * jax.random.normal(next(ks), (cout_, cin_, k, k), jnp.float32)

    def bn(c):
        return (
            jax.random.uniform(next(ks), (c,), jnp.float32, 0.5, 1.5),   # gamma
            0.1 * jax.random.normal(next(ks), (c,), jnp.float32),        # beta
            0.1 * jax.random.normal(next(ks), (c,), jnp.float32),        # running_mean
            jax.random.uniform(next(ks), (c,), jnp.float32, 0.5, 1.5),   # running_var
        )

    fused_c = 8
    return {
        "w_l12": conv_w(c2, c1, 1), "bn_l12": bn(c2),        # upSampling_2x
        "w_l32": conv_w(c2, c3, 3), "bn_l32": bn(c2),        # downSampling_2x
        "w_w1": conv_w(fused_c, c2, 1), "bn_w1": bn(fused_c),
        "w_w2": conv_w(fused_c, c2, 1), "bn_w2": bn(fused_c),
        "w_w3": conv_w(fused_c, c2, 1), "bn_w3": bn(fused_c),
        "w_wl": conv_w(3, 3 * fused_c, 1),
        "b_wl": 0.1 * jax.random.normal(next(ks), (3,), jnp.float32),
        "w_exp": conv_w(cout, c2, 1), "bn_exp": bn(cout),
    }


if __name__ == "__main__":
    key = jax.random.PRNGKey(0)
    k1, k2, k3, kp = jax.random.split(key, 4)

    B = 2
    C1, C2, C3, COUT = 16, 8, 4, 8
    H2 = W2 = 16                                     # level-2 resolution
    level1 = jax.random.normal(k1, (B, C1, H2 // 2, W2 // 2), jnp.float32)
    level2 = jax.random.normal(k2, (B, C2, H2, W2), jnp.float32)
    level3 = jax.random.normal(k3, (B, C3, 2 * H2, 2 * W2), jnp.float32)

    params = make_params(kp, C1, C2, C3, COUT)

    asff_jit = jax.jit(asff_level2_pallas)
    out = asff_jit(level1, level2, level3, params)
    out = jax.block_until_ready(out)

    ref = asff_level2_ref(level1, level2, level3, params)
    assert out.shape == (B, COUT, H2, W2)
    max_err = float(jnp.max(jnp.abs(out - ref)))
    # bf16 matmul operands + approx reciprocal -> loosened tolerance.
    assert jnp.allclose(out, ref, rtol=5e-2, atol=5e-2), max_err

    print("KERNEL_OK")
</pallas_src>

<mosaic_0001>
module attributes {stable_mosaic.version = 11 : i64} {
  func.func @asff_kernel(%arg0: i32, %arg1: memref<1x128x16xbf16, #tpu.memory_space<vmem>>, %arg2: memref<1x256x8xbf16, #tpu.memory_space<vmem>>, %arg3: memref<1x68x17x4xbf16, #tpu.memory_space<vmem>>, %arg4: memref<16x8xbf16, #tpu.memory_space<vmem>>, %arg5: memref<1x8xf32, #tpu.memory_space<vmem>>, %arg6: memref<36x8xbf16, #tpu.memory_space<vmem>>, %arg7: memref<1x8xf32, #tpu.memory_space<vmem>>, %arg8: memref<8x8xf32, #tpu.memory_space<vmem>>, %arg9: memref<1x8xf32, #tpu.memory_space<vmem>>, %arg10: memref<8x8xf32, #tpu.memory_space<vmem>>, %arg11: memref<1x8xf32, #tpu.memory_space<vmem>>, %arg12: memref<8x8xf32, #tpu.memory_space<vmem>>, %arg13: memref<1x8xf32, #tpu.memory_space<vmem>>, %arg14: memref<8x3xf32, #tpu.memory_space<vmem>>, %arg15: memref<8x3xf32, #tpu.memory_space<vmem>>, %arg16: memref<8x3xf32, #tpu.memory_space<vmem>>, %arg17: memref<1x3xf32, #tpu.memory_space<vmem>>, %arg18: memref<8x8xbf16, #tpu.memory_space<vmem>>, %arg19: memref<1x8xf32, #tpu.memory_space<vmem>>, %arg20: memref<1x256x8xf32, #tpu.memory_space<vmem>>) attributes {dimension_semantics = [#tpu.dimension_semantics<parallel>], iteration_bounds = array<i64: 2>, scalar_prefetch = 0 : i64, scratch_operands = 0 : i64, tpu.core_type = #tpu.core_type<tc>, window_params = [{transform_indices = @transform_0, window_bounds = array<i64: 1, 128, 16>}, {transform_indices = @transform_1, window_bounds = array<i64: 1, 256, 8>}, {transform_indices = @transform_2, window_bounds = array<i64: 1, 68, 17, 4>}, {pipeline_mode = #tpu.pipeline_mode<synchronous>, transform_indices = @transform_3, window_bounds = array<i64: 16, 8>}, {pipeline_mode = #tpu.pipeline_mode<synchronous>, transform_indices = @transform_4, window_bounds = array<i64: 1, 8>}, {pipeline_mode = #tpu.pipeline_mode<synchronous>, transform_indices = @transform_5, window_bounds = array<i64: 36, 8>}, {pipeline_mode = #tpu.pipeline_mode<synchronous>, transform_indices = @transform_6, window_bounds = array<i64: 1, 8>}, {pipeline_mode = #tpu.pipeline_mode<synchronous>, transform_indices = @transform_7, window_bounds = array<i64: 8, 8>}, {pipeline_mode = #tpu.pipeline_mode<synchronous>, transform_indices = @transform_8, window_bounds = array<i64: 1, 8>}, {pipeline_mode = #tpu.pipeline_mode<synchronous>, transform_indices = @transform_9, window_bounds = array<i64: 8, 8>}, {pipeline_mode = #tpu.pipeline_mode<synchronous>, transform_indices = @transform_10, window_bounds = array<i64: 1, 8>}, {pipeline_mode = #tpu.pipeline_mode<synchronous>, transform_indices = @transform_11, window_bounds = array<i64: 8, 8>}, {pipeline_mode = #tpu.pipeline_mode<synchronous>, transform_indices = @transform_12, window_bounds = array<i64: 1, 8>}, {pipeline_mode = #tpu.pipeline_mode<synchronous>, transform_indices = @transform_13, window_bounds = array<i64: 8, 3>}, {pipeline_mode = #tpu.pipeline_mode<synchronous>, transform_indices = @transform_14, window_bounds = array<i64: 8, 3>}, {pipeline_mode = #tpu.pipeline_mode<synchronous>, transform_indices = @transform_15, window_bounds = array<i64: 8, 3>}, {pipeline_mode = #tpu.pipeline_mode<synchronous>, transform_indices = @transform_16, window_bounds = array<i64: 1, 3>}, {pipeline_mode = #tpu.pipeline_mode<synchronous>, transform_indices = @transform_17, window_bounds = array<i64: 8, 8>}, {pipeline_mode = #tpu.pipeline_mode<synchronous>, transform_indices = @transform_18, window_bounds = array<i64: 1, 8>}, {transform_indices = @transform_19, window_bounds = array<i64: 1, 256, 8>}]} {
    %c0 = arith.constant 0 : index
    %c0_0 = arith.constant 0 : index
    %c0_1 = arith.constant 0 : index
    %0 = vector.load %arg1[%c0, %c0_0, %c0_1] : memref<1x128x16xbf16, #tpu.memory_space<vmem>>, vector<1x128x16xbf16>
    %1 = vector.shape_cast %0 : vector<1x128x16xbf16> to vector<128x16xbf16>
    %c0_2 = arith.constant 0 : index
    %c0_3 = arith.constant 0 : index
    %2 = vector.load %arg4[%c0_2, %c0_3] : memref<16x8xbf16, #tpu.memory_space<vmem>>, vector<16x8xbf16>
    %cst = arith.constant dense<0.000000e+00> : vector<128x8xf32>
    %3 = tpu.matmul %1, %2, %cst {dimension_numbers = #tpu.dot_dimension_numbers<[1], [0], [0], [1], [0, 0, 1, 1], [], []>} : vector<128x16xbf16>, vector<16x8xbf16>, vector<128x8xf32> -> vector<128x8xf32>
    %c0_4 = arith.constant 0 : index
    %c0_5 = arith.constant 0 : index
    %4 = vector.load %arg5[%c0_4, %c0_5] : memref<1x8xf32, #tpu.memory_space<vmem>>, vector<1x8xf32>
    %5 = vector.broadcast %4 : vector<1x8xf32> to vector<128x8xf32>
    %6 = arith.addf %3, %5 : vector<128x8xf32>
    %cst_6 = arith.constant 0.000000e+00 : f32
    %cst_7 = arith.constant 6.000000e+00 : f32
    %7 = vector.broadcast %cst_6 : f32 to vector<128x8xf32>
    %8 = arith.maximumf %7, %6 : vector<128x8xf32>
    %9 = vector.broadcast %cst_7 : f32 to vector<128x8xf32>
    %10 = arith.minimumf %9, %8 : vector<128x8xf32>
    %11 = vector.shape_cast %10 : vector<128x8xf32> to vector<8x16x8xf32>
    %12 = vector.shape_cast %11 : vector<8x16x8xf32> to vector<8x1x16x8xf32>
    %13 = vector.shape_cast %12 : vector<8x1x16x8xf32> to vector<8x1x16x8xf32>
    %14 = vector.broadcast %13 : vector<8x1x16x8xf32> to vector<8x2x16x8xf32>
    %15 = vector.shape_cast %14 : vector<8x2x16x8xf32> to vector<256x8xf32>
    %c0_8 = arith.constant 0 : index
    %c0_9 = arith.constant 0 : index
    %c0_10 = arith.constant 0 : index
    %16 = vector.load %arg2[%c0_8, %c0_9, %c0_10] : memref<1x256x8xbf16, #tpu.memory_space<vmem>>, vector<1x256x8xbf16>
    %17 = vector.shape_cast %16 : vector<1x256x8xbf16> to vector<256x8xbf16>
    %18 = arith.extf %17 : vector<256x8xbf16> to vector<256x8xf32>
    %cst_11 = arith.constant 0.000000e+00 : f32
    %19 = vector.broadcast %cst_11 : f32 to vector<256x8xf32>
    %c0_12 = arith.constant 0 : index
    %c51 = arith.constant 51 : index
    %c0_13 = arith.constant 0 : index
    %c0_14 = arith.constant 0 : index
    %20 = vector.load %arg3[%c0_12, %c51, %c0_13, %c0_14] : memref<1x68x17x4xbf16, #tpu.memory_space<vmem>>, vector<1x16x16x4xbf16>
    %21 = vector.shape_cast %20 : vector<1x16x16x4xbf16> to vector<16x16x4xbf16>
    %22 = vector.shape_cast %21 : vector<16x16x4xbf16> to vector<256x4xbf16>
    %c0_15 = arith.constant 0 : index
    %c0_16 = arith.constant 0 : index
    %23 = vector.load %arg6[%c0_15, %c0_16] : memref<36x8xbf16, #tpu.memory_space<vmem>>, vector<4x8xbf16>
    %cst_17 = arith.constant dense<0.000000e+00> : vector<256x8xf32>
    %24 = tpu.matmul %22, %23, %cst_17 {dimension_numbers = #tpu.dot_dimension_numbers<[1], [0], [0], [1], [0, 0, 1, 1], [], []>} : vector<256x4xbf16>, vector<4x8xbf16>, vector<256x8xf32> -> vector<256x8xf32>
    %25 = arith.addf %19, %24 : vector<256x8xf32>
    %c0_18 = arith.constant 0 : index
    %c34 = arith.constant 34 : index
    %c1 = arith.constant 1 : index
    %c0_19 = arith.constant 0 : index
    %26 = vector.load %arg3[%c0_18, %c34, %c1, %c0_19] : memref<1x68x17x4xbf16, #tpu.memory_space<vmem>>, vector<1x16x16x4xbf16>
    %27 = vector.shape_cast %26 : vector<1x16x16x4xbf16> to vector<16x16x4xbf16>
    %28 = vector.shape_cast %27 : vector<16x16x4xbf16> to vector<256x4xbf16>
    %c4 = arith.constant 4 : index
    %c0_20 = arith.constant 0 : index
    %29 = vector.load %arg6[%c4, %c0_20] : memref<36x8xbf16, #tpu.memory_space<vmem>>, vector<4x8xbf16>
    %cst_21 = arith.constant dense<0.000000e+00> : vector<256x8xf32>
    %30 = tpu.matmul %28, %29, %cst_21 {dimension_numbers = #tpu.dot_dimension_numbers<[1], [0], [0], [1], [0, 0, 1, 1], [], []>} : vector<256x4xbf16>, vector<4x8xbf16>, vector<256x8xf32> -> vector<256x8xf32>
    %31 = arith.addf %25, %30 : vector<256x8xf32>
    %c0_22 = arith.constant 0 : index
    %c51_23 = arith.constant 51 : index
    %c1_24 = arith.constant 1 : index
    %c0_25 = arith.constant 0 : index
    %32 = vector.load %arg3[%c0_22, %c51_23, %c1_24, %c0_25] : memref<1x68x17x4xbf16, #tpu.memory_space<vmem>>, vector<1x16x16x4xbf16>
    %33 = vector.shape_cast %32 : vector<1x16x16x4xbf16> to vector<16x16x4xbf16>
    %34 = vector.shape_cast %33 : vector<16x16x4xbf16> to vector<256x4xbf16>
    %c8 = arith.constant 8 : index
    %c0_26 = arith.constant 0 : index
    %35 = vector.load %arg6[%c8, %c0_26] : memref<36x8xbf16, #tpu.memory_space<vmem>>, vector<4x8xbf16>
    %cst_27 = arith.constant dense<0.000000e+00> : vector<256x8xf32>
    %36 = tpu.matmul %34, %35, %cst_27 {dimension_numbers = #tpu.dot_dimension_numbers<[1], [0], [0], [1], [0, 0, 1, 1], [], []>} : vector<256x4xbf16>, vector<4x8xbf16>, vector<256x8xf32> -> vector<256x8xf32>
    %37 = arith.addf %31, %36 : vector<256x8xf32>
    %c0_28 = arith.constant 0 : index
    %c18 = arith.constant 18 : index
    %c0_29 = arith.constant 0 : index
    %c0_30 = arith.constant 0 : index
    %38 = vector.load %arg3[%c0_28, %c18, %c0_29, %c0_30] : memref<1x68x17x4xbf16, #tpu.memory_space<vmem>>, vector<1x16x16x4xbf16>
    %39 = vector.shape_cast %38 : vector<1x16x16x4xbf16> to vector<16x16x4xbf16>
    %40 = vector.shape_cast %39 : vector<16x16x4xbf16> to vector<256x4xbf16>
    %c12 = arith.constant 12 : index
    %c0_31 = arith.constant 0 : index
    %41 = vector.load %arg6[%c12, %c0_31] : memref<36x8xbf16, #tpu.memory_space<vmem>>, vector<4x8xbf16>
    %cst_32 = arith.constant dense<0.000000e+00> : vector<256x8xf32>
    %42 = tpu.matmul %40, %41, %cst_32 {dimension_numbers = #tpu.dot_dimension_numbers<[1], [0], [0], [1], [0, 0, 1, 1], [], []>} : vector<256x4xbf16>, vector<4x8xbf16>, vector<256x8xf32> -> vector<256x8xf32>
    %43 = arith.addf %37, %42 : vector<256x8xf32>
    %c0_33 = arith.constant 0 : index
    %c1_34 = arith.constant 1 : index
    %c1_35 = arith.constant 1 : index
    %c0_36 = arith.constant 0 : index
    %44 = vector.load %arg3[%c0_33, %c1_34, %c1_35, %c0_36] : memref<1x68x17x4xbf16, #tpu.memory_space<vmem>>, vector<1x16x16x4xbf16>
    %45 = vector.shape_cast %44 : vector<1x16x16x4xbf16> to vector<16x16x4xbf16>
    %46 = vector.shape_cast %45 : vector<16x16x4xbf16> to vector<256x4xbf16>
    %c16 = arith.constant 16 : index
    %c0_37 = arith.constant 0 : index
    %47 = vector.load %arg6[%c16, %c0_37] : memref<36x8xbf16, #tpu.memory_space<vmem>>, vector<4x8xbf16>
    %cst_38 = arith.constant dense<0.000000e+00> : vector<256x8xf32>
    %48 = tpu.matmul %46, %47, %cst_38 {dimension_numbers = #tpu.dot_dimension_numbers<[1], [0], [0], [1], [0, 0, 1, 1], [], []>} : vector<256x4xbf16>, vector<4x8xbf16>, vector<256x8xf32> -> vector<256x8xf32>
    %49 = arith.addf %43, %48 : vector<256x8xf32>
    %c0_39 = arith.constant 0 : index
    %c18_40 = arith.constant 18 : index
    %c1_41 = arith.constant 1 : index
    %c0_42 = arith.constant 0 : index
    %50 = vector.load %arg3[%c0_39, %c18_40, %c1_41, %c0_42] : memref<1x68x17x4xbf16, #tpu.memory_space<vmem>>, vector<1x16x16x4xbf16>
    %51 = vector.shape_cast %50 : vector<1x16x16x4xbf16> to vector<16x16x4xbf16>
    %52 = vector.shape_cast %51 : vector<16x16x4xbf16> to vector<256x4xbf16>
    %c20 = arith.constant 20 : index
    %c0_43 = arith.constant 0 : index
    %53 = vector.load %arg6[%c20, %c0_43] : memref<36x8xbf16, #tpu.memory_space<vmem>>, vector<4x8xbf16>
    %cst_44 = arith.constant dense<0.000000e+00> : vector<256x8xf32>
    %54 = tpu.matmul %52, %53, %cst_44 {dimension_numbers = #tpu.dot_dimension_numbers<[1], [0], [0], [1], [0, 0, 1, 1], [], []>} : vector<256x4xbf16>, vector<4x8xbf16>, vector<256x8xf32> -> vector<256x8xf32>
    %55 = arith.addf %49, %54 : vector<256x8xf32>
    %c0_45 = arith.constant 0 : index
    %c52 = arith.constant 52 : index
    %c0_46 = arith.constant 0 : index
    %c0_47 = arith.constant 0 : index
    %56 = vector.load %arg3[%c0_45, %c52, %c0_46, %c0_47] : memref<1x68x17x4xbf16, #tpu.memory_space<vmem>>, vector<1x16x16x4xbf16>
    %57 = vector.shape_cast %56 : vector<1x16x16x4xbf16> to vector<16x16x4xbf16>
    %58 = vector.shape_cast %57 : vector<16x16x4xbf16> to vector<256x4xbf16>
    %c24 = arith.constant 24 : index
    %c0_48 = arith.constant 0 : index
    %59 = vector.load %arg6[%c24, %c0_48] : memref<36x8xbf16, #tpu.memory_space<vmem>>, vector<4x8xbf16>
    %cst_49 = arith.constant dense<0.000000e+00> : vector<256x8xf32>
    %60 = tpu.matmul %58, %59, %cst_49 {dimension_numbers = #tpu.dot_dimension_numbers<[1], [0], [0], [1], [0, 0, 1, 1], [], []>} : vector<256x4xbf16>, vector<4x8xbf16>, vector<256x8xf32> -> vector<256x8xf32>
    %61 = arith.addf %55, %60 : vector<256x8xf32>
    %c0_50 = arith.constant 0 : index
    %c35 = arith.constant 35 : index
    %c1_51 = arith.constant 1 : index
    %c0_52 = arith.constant 0 : index
    %62 = vector.load %arg3[%c0_50, %c35, %c1_51, %c0_52] : memref<1x68x17x4xbf16, #tpu.memory_space<vmem>>, vector<1x16x16x4xbf16>
    %63 = vector.shape_cast %62 : vector<1x16x16x4xbf16> to vector<16x16x4xbf16>
    %64 = vector.shape_cast %63 : vector<16x16x4xbf16> to vector<256x4xbf16>
    %c28 = arith.constant 28 : index
    %c0_53 = arith.constant 0 : index
    %65 = vector.load %arg6[%c28, %c0_53] : memref<36x8xbf16, #tpu.memory_space<vmem>>, vector<4x8xbf16>
    %cst_54 = arith.constant dense<0.000000e+00> : vector<256x8xf32>
    %66 = tpu.matmul %64, %65, %cst_54 {dimension_numbers = #tpu.dot_dimension_numbers<[1], [0], [0], [1], [0, 0, 1, 1], [], []>} : vector<256x4xbf16>, vector<4x8xbf16>, vector<256x8xf32> -> vector<256x8xf32>
    %67 = arith.addf %61, %66 : vector<256x8xf32>
    %c0_55 = arith.constant 0 : index
    %c52_56 = arith.constant 52 : index
    %c1_57 = arith.constant 1 : index
    %c0_58 = arith.constant 0 : index
    %68 = vector.load %arg3[%c0_55, %c52_56, %c1_57, %c0_58] : memref<1x68x17x4xbf16, #tpu.memory_space<vmem>>, vector<1x16x16x4xbf16>
    %69 = vector.shape_cast %68 : vector<1x16x16x4xbf16> to vector<16x16x4xbf16>
    %70 = vector.shape_cast %69 : vector<16x16x4xbf16> to vector<256x4xbf16>
    %c32 = arith.constant 32 : index
    %c0_59 = arith.constant 0 : index
    %71 = vector.load %arg6[%c32, %c0_59] : memref<36x8xbf16, #tpu.memory_space<vmem>>, vector<4x8xbf16>
    %cst_60 = arith.constant dense<0.000000e+00> : vector<256x8xf32>
    %72 = tpu.matmul %70, %71, %cst_60 {dimension_numbers = #tpu.dot_dimension_numbers<[1], [0], [0], [1], [0, 0, 1, 1], [], []>} : vector<256x4xbf16>, vector<4x8xbf16>, vector<256x8xf32> -> vector<256x8xf32>
    %73 = arith.addf %67, %72 : vector<256x8xf32>
    %c0_61 = arith.constant 0 : index
    %c0_62 = arith.constant 0 : index
    %74 = vector.load %arg7[%c0_61, %c0_62] : memref<1x8xf32, #tpu.memory_space<vmem>>, vector<1x8xf32>
    %75 = vector.broadcast %74 : vector<1x8xf32> to vector<256x8xf32>
    %76 = arith.addf %73, %75 : vector<256x8xf32>
    %cst_63 = arith.constant 0.000000e+00 : f32
    %cst_64 = arith.constant 6.000000e+00 : f32
    %77 = vector.broadcast %cst_63 : f32 to vector<256x8xf32>
    %78 = arith.maximumf %77, %76 : vector<256x8xf32>
    %79 = vector.broadcast %cst_64 : f32 to vector<256x8xf32>
    %80 = arith.minimumf %79, %78 : vector<256x8xf32>
    %c0_65 = arith.constant 0 : index
    %c0_66 = arith.constant 0 : index
    %81 = vector.load %arg8[%c0_65, %c0_66] : memref<8x8xf32, #tpu.memory_space<vmem>>, vector<8x8xf32>
    %cst_67 = arith.constant dense<0.000000e+00> : vector<256x8xf32>
    %82 = tpu.matmul %15, %81, %cst_67 {dimension_numbers = #tpu.dot_dimension_numbers<[1], [0], [0], [1], [0, 0, 1, 1], [], []>} : vector<256x8xf32>, vector<8x8xf32>, vector<256x8xf32> -> vector<256x8xf32>
    %c0_68 = arith.constant 0 : index
    %c0_69 = arith.constant 0 : index
    %83 = vector.load %arg9[%c0_68, %c0_69] : memref<1x8xf32, #tpu.memory_space<vmem>>, vector<1x8xf32>
    %84 = vector.broadcast %83 : vector<1x8xf32> to vector<256x8xf32>
    %85 = arith.addf %82, %84 : vector<256x8xf32>
    %cst_70 = arith.constant 0.000000e+00 : f32
    %cst_71 = arith.constant 6.000000e+00 : f32
    %86 = vector.broadcast %cst_70 : f32 to vector<256x8xf32>
    %87 = arith.maximumf %86, %85 : vector<256x8xf32>
    %88 = vector.broadcast %cst_71 : f32 to vector<256x8xf32>
    %89 = arith.minimumf %88, %87 : vector<256x8xf32>
    %c0_72 = arith.constant 0 : index
    %c0_73 = arith.constant 0 : index
    %90 = vector.load %arg10[%c0_72, %c0_73] : memref<8x8xf32, #tpu.memory_space<vmem>>, vector<8x8xf32>
    %cst_74 = arith.constant dense<0.000000e+00> : vector<256x8xf32>
    %91 = tpu.matmul %18, %90, %cst_74 {dimension_numbers = #tpu.dot_dimension_numbers<[1], [0], [0], [1], [0, 0, 1, 1], [], []>} : vector<256x8xf32>, vector<8x8xf32>, vector<256x8xf32> -> vector<256x8xf32>
    %c0_75 = arith.constant 0 : index
    %c0_76 = arith.constant 0 : index
    %92 = vector.load %arg11[%c0_75, %c0_76] : memref<1x8xf32, #tpu.memory_space<vmem>>, vector<1x8xf32>
    %93 = vector.broadcast %92 : vector<1x8xf32> to vector<256x8xf32>
    %94 = arith.addf %91, %93 : vector<256x8xf32>
    %cst_77 = arith.constant 0.000000e+00 : f32
    %cst_78 = arith.constant 6.000000e+00 : f32
    %95 = vector.broadcast %cst_77 : f32 to vector<256x8xf32>
    %96 = arith.maximumf %95, %94 : vector<256x8xf32>
    %97 = vector.broadcast %cst_78 : f32 to vector<256x8xf32>
    %98 = arith.minimumf %97, %96 : vector<256x8xf32>
    %c0_79 = arith.constant 0 : index
    %c0_80 = arith.constant 0 : index
    %99 = vector.load %arg12[%c0_79, %c0_80] : memref<8x8xf32, #tpu.memory_space<vmem>>, vector<8x8xf32>
    %cst_81 = arith.constant dense<0.000000e+00> : vector<256x8xf32>
    %100 = tpu.matmul %80, %99, %cst_81 {dimension_numbers = #tpu.dot_dimension_numbers<[1], [0], [0], [1], [0, 0, 1, 1], [], []>} : vector<256x8xf32>, vector<8x8xf32>, vector<256x8xf32> -> vector<256x8xf32>
    %c0_82 = arith.constant 0 : index
    %c0_83 = arith.constant 0 : index
    %101 = vector.load %arg13[%c0_82, %c0_83] : memref<1x8xf32, #tpu.memory_space<vmem>>, vector<1x8xf32>
    %102 = vector.broadcast %101 : vector<1x8xf32> to vector<256x8xf32>
    %103 = arith.addf %100, %102 : vector<256x8xf32>
    %cst_84 = arith.constant 0.000000e+00 : f32
    %cst_85 = arith.constant 6.000000e+00 : f32
    %104 = vector.broadcast %cst_84 : f32 to vector<256x8xf32>
    %105 = arith.maximumf %104, %103 : vector<256x8xf32>
    %106 = vector.broadcast %cst_85 : f32 to vector<256x8xf32>
    %107 = arith.minimumf %106, %105 : vector<256x8xf32>
    %c0_86 = arith.constant 0 : index
    %c0_87 = arith.constant 0 : index
    %108 = vector.load %arg14[%c0_86, %c0_87] : memref<8x3xf32, #tpu.memory_space<vmem>>, vector<8x3xf32>
    %cst_88 = arith.constant dense<0.000000e+00> : vector<256x3xf32>
    %109 = tpu.matmul %89, %108, %cst_88 {dimension_numbers = #tpu.dot_dimension_numbers<[1], [0], [0], [1], [0, 0, 1, 1], [], []>} : vector<256x8xf32>, vector<8x3xf32>, vector<256x3xf32> -> vector<256x3xf32>
    %c0_89 = arith.constant 0 : index
    %c0_90 = arith.constant 0 : index
    %110 = vector.load %arg15[%c0_89, %c0_90] : memref<8x3xf32, #tpu.memory_space<vmem>>, vector<8x3xf32>
    %cst_91 = arith.constant dense<0.000000e+00> : vector<256x3xf32>
    %111 = tpu.matmul %98, %110, %cst_91 {dimension_numbers = #tpu.dot_dimension_numbers<[1], [0], [0], [1], [0, 0, 1, 1], [], []>} : vector<256x8xf32>, vector<8x3xf32>, vector<256x3xf32> -> vector<256x3xf32>
    %112 = arith.addf %109, %111 : vector<256x3xf32>
    %c0_92 = arith.constant 0 : index
    %c0_93 = arith.constant 0 : index
    %113 = vector.load %arg16[%c0_92, %c0_93] : memref<8x3xf32, #tpu.memory_space<vmem>>, vector<8x3xf32>
    %cst_94 = arith.constant dense<0.000000e+00> : vector<256x3xf32>
    %114 = tpu.matmul %107, %113, %cst_94 {dimension_numbers = #tpu.dot_dimension_numbers<[1], [0], [0], [1], [0, 0, 1, 1], [], []>} : vector<256x8xf32>, vector<8x3xf32>, vector<256x3xf32> -> vector<256x3xf32>
    %115 = arith.addf %112, %114 : vector<256x3xf32>
    %c0_95 = arith.constant 0 : index
    %c0_96 = arith.constant 0 : index
    %116 = vector.load %arg17[%c0_95, %c0_96] : memref<1x3xf32, #tpu.memory_space<vmem>>, vector<1x3xf32>
    %117 = vector.broadcast %116 : vector<1x3xf32> to vector<256x3xf32>
    %118 = arith.addf %115, %117 : vector<256x3xf32>
    %cst_97 = arith.constant dense<0xFF800000> : vector<256xf32>
    %119 = vector.multi_reduction <maximumf>, %118, %cst_97 [1] : vector<256x3xf32> to vector<256xf32>
    %120 = vector.shape_cast %119 : vector<256xf32> to vector<256x1xf32>
    %121 = vector.broadcast %120 : vector<256x1xf32> to vector<256x3xf32>
    %122 = arith.subf %118, %121 : vector<256x3xf32>
    %123 = math.exp %122 : vector<256x3xf32>
    %cst_98 = arith.constant dense<0.000000e+00> : vector<256xf32>
    %124 = vector.multi_reduction <add>, %123, %cst_98 [1] : vector<256x3xf32> to vector<256xf32>
    %125 = vector.shape_cast %124 : vector<256xf32> to vector<256x1xf32>
    %126 = tpu.reciprocal %125 {approx = true} : vector<256x1xf32> -> vector<256x1xf32>
    %127 = vector.broadcast %126 : vector<256x1xf32> to vector<256x3xf32>
    %128 = arith.mulf %123, %127 : vector<256x3xf32>
    %129 = vector.extract_strided_slice %128 {offsets = [0, 0], sizes = [256, 1], strides = [1, 1]} : vector<256x3xf32> to vector<256x1xf32>
    %130 = vector.broadcast %129 : vector<256x1xf32> to vector<256x8xf32>
    %131 = arith.mulf %15, %130 : vector<256x8xf32>
    %132 = vector.extract_strided_slice %128 {offsets = [0, 1], sizes = [256, 1], strides = [1, 1]} : vector<256x3xf32> to vector<256x1xf32>
    %133 = vector.broadcast %132 : vector<256x1xf32> to vector<256x8xf32>
    %134 = arith.mulf %18, %133 : vector<256x8xf32>
    %135 = arith.addf %131, %134 : vector<256x8xf32>
    %136 = vector.extract_strided_slice %128 {offsets = [0, 2], sizes = [256, 1], strides = [1, 1]} : vector<256x3xf32> to vector<256x1xf32>
    %137 = vector.broadcast %136 : vector<256x1xf32> to vector<256x8xf32>
    %138 = arith.mulf %80, %137 : vector<256x8xf32>
    %139 = arith.addf %135, %138 : vector<256x8xf32>
    %140 = arith.truncf %139 : vector<256x8xf32> to vector<256x8xbf16>
    %c0_99 = arith.constant 0 : index
    %c0_100 = arith.constant 0 : index
    %141 = vector.load %arg18[%c0_99, %c0_100] : memref<8x8xbf16, #tpu.memory_space<vmem>>, vector<8x8xbf16>
    %cst_101 = arith.constant dense<0.000000e+00> : vector<256x8xf32>
    %142 = tpu.matmul %140, %141, %cst_101 {dimension_numbers = #tpu.dot_dimension_numbers<[1], [0], [0], [1], [0, 0, 1, 1], [], []>} : vector<256x8xbf16>, vector<8x8xbf16>, vector<256x8xf32> -> vector<256x8xf32>
    %c0_102 = arith.constant 0 : index
    %c0_103 = arith.constant 0 : index
    %143 = vector.load %arg19[%c0_102, %c0_103] : memref<1x8xf32, #tpu.memory_space<vmem>>, vector<1x8xf32>
    %144 = vector.broadcast %143 : vector<1x8xf32> to vector<256x8xf32>
    %145 = arith.addf %142, %144 : vector<256x8xf32>
    %cst_104 = arith.constant 0.000000e+00 : f32
    %cst_105 = arith.constant 6.000000e+00 : f32
    %146 = vector.broadcast %cst_104 : f32 to vector<256x8xf32>
    %147 = arith.maximumf %146, %145 : vector<256x8xf32>
    %148 = vector.broadcast %cst_105 : f32 to vector<256x8xf32>
    %149 = arith.minimumf %148, %147 : vector<256x8xf32>
    %c0_106 = arith.constant 0 : index
    %c0_107 = arith.constant 0 : index
    %c0_108 = arith.constant 0 : index
    %150 = vector.load %arg20[%c0_106, %c0_107, %c0_108] : memref<1x256x8xf32, #tpu.memory_space<vmem>>, vector<1x256x8xf32>
    %151 = vector.shape_cast %150 : vector<1x256x8xf32> to vector<256x8xf32>
    %152 = vector.shape_cast %149 : vector<256x8xf32> to vector<1x256x8xf32>
    tpu.vector_store %arg20[%c0_106, %c0_107, %c0_108], %152 {strides = array<i32>} : memref<1x256x8xf32, #tpu.memory_space<vmem>>, vector<1x256x8xf32>,
    return
  }
  func.func @transform_0(%arg0: i32) -> (i32, i32, i32) {
    %c0_i32 = arith.constant 0 : i32
    %c0_i32_0 = arith.constant 0 : i32
    %c0_i32_1 = arith.constant 0 : i32
    return %arg0, %c0_i32, %c0_i32_0 : i32, i32, i32
  }
  func.func @transform_1(%arg0: i32) -> (i32, i32, i32) {
    %c0_i32 = arith.constant 0 : i32
    %c0_i32_0 = arith.constant 0 : i32
    %c0_i32_1 = arith.constant 0 : i32
    return %arg0, %c0_i32, %c0_i32_0 : i32, i32, i32
  }
  func.func @transform_2(%arg0: i32) -> (i32, i32, i32, i32) {
    %c0_i32 = arith.constant 0 : i32
    %c0_i32_0 = arith.constant 0 : i32
    %c0_i32_1 = arith.constant 0 : i32
    %c0_i32_2 = arith.constant 0 : i32
    return %arg0, %c0_i32, %c0_i32_0, %c0_i32_1 : i32, i32, i32, i32
  }
  func.func @transform_3(%arg0: i32) -> (i32, i32) {
    %c0_i32 = arith.constant 0 : i32
    %c0_i32_0 = arith.constant 0 : i32
    %c0_i32_1 = arith.constant 0 : i32
    return %c0_i32, %c0_i32_0 : i32, i32
  }
  func.func @transform_4(%arg0: i32) -> (i32, i32) {
    %c0_i32 = arith.constant 0 : i32
    %c0_i32_0 = arith.constant 0 : i32
    %c0_i32_1 = arith.constant 0 : i32
    return %c0_i32, %c0_i32_0 : i32, i32
  }
  func.func @transform_5(%arg0: i32) -> (i32, i32) {
    %c0_i32 = arith.constant 0 : i32
    %c0_i32_0 = arith.constant 0 : i32
    %c0_i32_1 = arith.constant 0 : i32
    return %c0_i32, %c0_i32_0 : i32, i32
  }
  func.func @transform_6(%arg0: i32) -> (i32, i32) {
    %c0_i32 = arith.constant 0 : i32
    %c0_i32_0 = arith.constant 0 : i32
    %c0_i32_1 = arith.constant 0 : i32
    return %c0_i32, %c0_i32_0 : i32, i32
  }
  func.func @transform_7(%arg0: i32) -> (i32, i32) {
    %c0_i32 = arith.constant 0 : i32
    %c0_i32_0 = arith.constant 0 : i32
    %c0_i32_1 = arith.constant 0 : i32
    return %c0_i32, %c0_i32_0 : i32, i32
  }
  func.func @transform_8(%arg0: i32) -> (i32, i32) {
    %c0_i32 = arith.constant 0 : i32
    %c0_i32_0 = arith.constant 0 : i32
    %c0_i32_1 = arith.constant 0 : i32
    return %c0_i32, %c0_i32_0 : i32, i32
  }
  func.func @transform_9(%arg0: i32) -> (i32, i32) {
    %c0_i32 = arith.constant 0 : i32
    %c0_i32_0 = arith.constant 0 : i32
    %c0_i32_1 = arith.constant 0 : i32
    return %c0_i32, %c0_i32_0 : i32, i32
  }
  func.func @transform_10(%arg0: i32) -> (i32, i32) {
    %c0_i32 = arith.constant 0 : i32
    %c0_i32_0 = arith.constant 0 : i32
    %c0_i32_1 = arith.constant 0 : i32
    return %c0_i32, %c0_i32_0 : i32, i32
  }
  func.func @transform_11(%arg0: i32) -> (i32, i32) {
    %c0_i32 = arith.constant 0 : i32
    %c0_i32_0 = arith.constant 0 : i32
    %c0_i32_1 = arith.constant 0 : i32
    return %c0_i32, %c0_i32_0 : i32, i32
  }
  func.func @transform_12(%arg0: i32) -> (i32, i32) {
    %c0_i32 = arith.constant 0 : i32
    %c0_i32_0 = arith.constant 0 : i32
    %c0_i32_1 = arith.constant 0 : i32
    return %c0_i32, %c0_i32_0 : i32, i32
  }
  func.func @transform_13(%arg0: i32) -> (i32, i32) {
    %c0_i32 = arith.constant 0 : i32
    %c0_i32_0 = arith.constant 0 : i32
    %c0_i32_1 = arith.constant 0 : i32
    return %c0_i32, %c0_i32_0 : i32, i32
  }
  func.func @transform_14(%arg0: i32) -> (i32, i32) {
    %c0_i32 = arith.constant 0 : i32
    %c0_i32_0 = arith.constant 0 : i32
    %c0_i32_1 = arith.constant 0 : i32
    return %c0_i32, %c0_i32_0 : i32, i32
  }
  func.func @transform_15(%arg0: i32) -> (i32, i32) {
    %c0_i32 = arith.constant 0 : i32
    %c0_i32_0 = arith.constant 0 : i32
    %c0_i32_1 = arith.constant 0 : i32
    return %c0_i32, %c0_i32_0 : i32, i32
  }
  func.func @transform_16(%arg0: i32) -> (i32, i32) {
    %c0_i32 = arith.constant 0 : i32
    %c0_i32_0 = arith.constant 0 : i32
    %c0_i32_1 = arith.constant 0 : i32
    return %c0_i32, %c0_i32_0 : i32, i32
  }
  func.func @transform_17(%arg0: i32) -> (i32, i32) {
    %c0_i32 = arith.constant 0 : i32
    %c0_i32_0 = arith.constant 0 : i32
    %c0_i32_1 = arith.constant 0 : i32
    return %c0_i32, %c0_i32_0 : i32, i32
  }
  func.func @transform_18(%arg0: i32) -> (i32, i32) {
    %c0_i32 = arith.constant 0 : i32
    %c0_i32_0 = arith.constant 0 : i32
    %c0_i32_1 = arith.constant 0 : i32
    return %c0_i32, %c0_i32_0 : i32, i32
  }
  func.func @transform_19(%arg0: i32) -> (i32, i32, i32) {
    %c0_i32 = arith.constant 0 : i32
    %c0_i32_0 = arith.constant 0 : i32
    %c0_i32_1 = arith.constant 0 : i32
    return %arg0, %c0_i32, %c0_i32_0 : i32, i32, i32
  }
}

</mosaic_0001>

<llo_original>
// kernel: asff_level2_pallas.1
$region0: #{asff_level2_pallas.1}
  #allocation0 [shape = 'u32[]', space=smem, size = 0x4, offset = 0x4, fixed_abs, tag = 'smem constant byte address 0x4 - core index']
  #allocation1 [shape = 'u32[144,128]{1,0:T(1,128)}', space=vmem, size = 0x12000, scoped, tag = 'internal scratch']
  %s0 = inlined_call_operand.vmem [shape: bf16[2,128,16], index: 0, kind: input, shape index: {}]
  %s1 = inlined_call_operand.vmem [shape: bf16[2,256,8], index: 1, kind: input, shape index: {}]
  %s2 = inlined_call_operand.vmem [shape: bf16[2,68,17,4], index: 2, kind: input, shape index: {}]
  %s3 = inlined_call_operand.vmem [shape: bf16[16,8], index: 3, kind: input, shape index: {}]
  %s4 = inlined_call_operand.vmem [shape: f32[1,8], index: 4, kind: input, shape index: {}]
  %s5 = inlined_call_operand.vmem [shape: bf16[36,8], index: 5, kind: input, shape index: {}]
  %s6 = inlined_call_operand.vmem [shape: f32[1,8], index: 6, kind: input, shape index: {}]
  %s7 = inlined_call_operand.vmem [shape: f32[8,8], index: 7, kind: input, shape index: {}]
  %s8 = inlined_call_operand.vmem [shape: f32[1,8], index: 8, kind: input, shape index: {}]
  %s9 = inlined_call_operand.vmem [shape: f32[8,8], index: 9, kind: input, shape index: {}]
  %s10 = inlined_call_operand.vmem [shape: f32[1,8], index: 10, kind: input, shape index: {}]
  %s11 = inlined_call_operand.vmem [shape: f32[8,8], index: 11, kind: input, shape index: {}]
  %s12 = inlined_call_operand.vmem [shape: f32[1,8], index: 12, kind: input, shape index: {}]
  %s13 = inlined_call_operand.vmem [shape: f32[8,3], index: 13, kind: input, shape index: {}]
  %s14 = inlined_call_operand.vmem [shape: f32[8,3], index: 14, kind: input, shape index: {}]
  %s15 = inlined_call_operand.vmem [shape: f32[8,3], index: 15, kind: input, shape index: {}]
  %s16 = inlined_call_operand.vmem [shape: f32[1,3], index: 16, kind: input, shape index: {}]
  %s17 = inlined_call_operand.vmem [shape: bf16[8,8], index: 17, kind: input, shape index: {}]
  %s18 = inlined_call_operand.vmem [shape: f32[1,8], index: 18, kind: input, shape index: {}]
  %s19 = inlined_call_operand.vmem [shape: f32[2,256,8], index: 19, kind: output, shape index: {}]
  %s20 = sld [smem:[#allocation0]]
  $region109: #{asff_level2_pallas.1} parent=0
    _
  %s22 = ssub.s32 1, %s20
  %s23 = scalar_select 0, %s22, %s20
  loop: start=0, step=1, limit=4
  $region2: #{asff_level2_pallas.1} parent=0 // loop_pre_header
    _
  $region3: #{asff_level2_pallas.1} parent=0 // loop_header
    %s25 = sphi 0, %s29
    %p26 = scmp.ge.s32.totalorder %s25, 4
    %s35 = sphi 0, %s37
    %s38 = sphi 0, %s35
    %s39 = sphi 0, %s38
    %s55 = sphi 0, %s39
    %s61 = sphi 0, %s63
    %s64 = sphi 0, %s61
    %s65 = sphi 0, %s64
    %s81 = sphi 0, %s65
    %s87 = sphi 0, %s89
    %s90 = sphi 0, %s87
    %s91 = sphi 0, %s90
    %s107 = sphi 0, %s91
    %s111 = sphi 0, %s111
    %s113 = sphi 0, %s111
    %s114 = sphi 0, %s113
    %s128 = sphi 0, %s114
    %s132 = sphi 0, %s132
    %s134 = sphi 0, %s132
    %s135 = sphi 0, %s134
    %s149 = sphi 0, %s135
    %s153 = sphi 0, %s153
    %s155 = sphi 0, %s153
    %s156 = sphi 0, %s155
    %s170 = sphi 0, %s156
    %s174 = sphi 0, %s174
    %s176 = sphi 0, %s174
    %s177 = sphi 0, %s176
    %s191 = sphi 0, %s177
    %s195 = sphi 0, %s195
    %s197 = sphi 0, %s195
    %s198 = sphi 0, %s197
    %s212 = sphi 0, %s198
    %s216 = sphi 0, %s216
    %s218 = sphi 0, %s216
    %s219 = sphi 0, %s218
    %s233 = sphi 0, %s219
    %s237 = sphi 0, %s237
    %s239 = sphi 0, %s237
    %s240 = sphi 0, %s239
    %s254 = sphi 0, %s240
    %s258 = sphi 0, %s258
    %s260 = sphi 0, %s258
    %s261 = sphi 0, %s260
    %s275 = sphi 0, %s261
    %s279 = sphi 0, %s279
    %s281 = sphi 0, %s279
    %s282 = sphi 0, %s281
    %s296 = sphi 0, %s282
    %s300 = sphi 0, %s300
    %s302 = sphi 0, %s300
    %s303 = sphi 0, %s302
    %s317 = sphi 0, %s303
    %s321 = sphi 0, %s321
    %s323 = sphi 0, %s321
    %s324 = sphi 0, %s323
    %s338 = sphi 0, %s324
    %s342 = sphi 0, %s342
    %s344 = sphi 0, %s342
    %s345 = sphi 0, %s344
    %s359 = sphi 0, %s345
    %s363 = sphi 0, %s363
    %s365 = sphi 0, %s363
    %s366 = sphi 0, %s365
    %s380 = sphi 0, %s366
    %s384 = sphi 0, %s384
    %s386 = sphi 0, %s384
    %s387 = sphi 0, %s386
    %s401 = sphi 0, %s387
    %s405 = sphi 0, %s405
    %s407 = sphi 0, %s405
    %s408 = sphi 0, %s407
    %s422 = sphi 0, %s408
    %s426 = sphi 0, %s426
    %s428 = sphi 0, %s426
    %s429 = sphi 0, %s428
    %s443 = sphi 0, %s429
    %s449 = sphi 0, %s451
    %s452 = sphi 0, %s449
    %s453 = sphi 0, %s452
    %s469 = sphi 0, %s453
  $region4: #{asff_level2_pallas.1} parent=0 // loop_header_branch
    %28 = sbr.rel (%p26) target = $region8
  $region5: #{asff_level2_pallas.1} parent=0 // loop_body
    %s30 = ssub.s32 %s25, 1
    %s31 = ssub.s32 %s25, 2
    %s32 = sadd.s32 %s25, 1
    %s33 = ssub.s32 %s25, %s32
    %p34 = scmp.eq.s32.totalorder %s33, 0
    %s36 = sadd.s32 %s35, 1
    %s37 = scalar_select %p34, %s35, %s36
    %p40 = pneg %p34
    %p41 = scmp.eq.s32.totalorder %s25, 1
    %p42 = por %p40, %p41
    %p43 = scmp.ne.s32.totalorder %s35, %s38
    %p44 = scmp.eq.s32.totalorder %s25, 0
    %p45 = por %p43, %p44
    %p46 = scmp.ne.s32.totalorder %s35, %s38
    %p47 = scmp.eq.s32.totalorder %s30, 1
    %p48 = por %p46, %p47
    %p49 = scmp.ne.s32.totalorder %s38, %s39
    %p50 = scmp.eq.s32.totalorder %s30, 0
    %p51 = por %p49, %p50
    %p52 = scmp.ne.s32.totalorder %s38, %s39
    %p53 = scmp.eq.s32.totalorder %s31, 1
    %p54 = por %p52, %p53
    %p56 = scmp.ne.s32.totalorder %s39, %s55
    %p57 = scmp.eq.s32.totalorder %s31, 0
    %p58 = por %p56, %p57
    %s59 = ssub.s32 %s25, %s32
    %p60 = scmp.eq.s32.totalorder %s59, 0
    %s62 = sadd.s32 %s61, 1
    %s63 = scalar_select %p60, %s61, %s62
    %p66 = pneg %p60
    %p67 = scmp.eq.s32.totalorder %s25, 1
    %p68 = por %p66, %p67
    %p69 = scmp.ne.s32.totalorder %s61, %s64
    %p70 = scmp.eq.s32.totalorder %s25, 0
    %p71 = por %p69, %p70
    %p72 = scmp.ne.s32.totalorder %s61, %s64
    %p73 = scmp.eq.s32.totalorder %s30, 1
    %p74 = por %p72, %p73
    %p75 = scmp.ne.s32.totalorder %s64, %s65
    %p76 = scmp.eq.s32.totalorder %s30, 0
    %p77 = por %p75, %p76
    %p78 = scmp.ne.s32.totalorder %s64, %s65
    %p79 = scmp.eq.s32.totalorder %s31, 1
    %p80 = por %p78, %p79
    %p82 = scmp.ne.s32.totalorder %s65, %s81
    %p83 = scmp.eq.s32.totalorder %s31, 0
    %p84 = por %p82, %p83
    %s85 = ssub.s32 %s25, %s32
    %p86 = scmp.eq.s32.totalorder %s85, 0
    %s88 = sadd.s32 %s87, 1
    %s89 = scalar_select %p86, %s87, %s88
    %p92 = pneg %p86
    %p93 = scmp.eq.s32.totalorder %s25, 1
    %p94 = por %p92, %p93
    %p95 = scmp.ne.s32.totalorder %s87, %s90
    %p96 = scmp.eq.s32.totalorder %s25, 0
    %p97 = por %p95, %p96
    %p98 = scmp.ne.s32.totalorder %s87, %s90
    %p99 = scmp.eq.s32.totalorder %s30, 1
    %p100 = por %p98, %p99
    %p101 = scmp.ne.s32.totalorder %s90, %s91
    %p102 = scmp.eq.s32.totalorder %s30, 0
    %p103 = por %p101, %p102
    %p104 = scmp.ne.s32.totalorder %s90, %s91
    %p105 = scmp.eq.s32.totalorder %s31, 1
    %p106 = por %p104, %p105
    %p108 = scmp.ne.s32.totalorder %s91, %s107
    %p109 = scmp.eq.s32.totalorder %s31, 0
    %p110 = por %p108, %p109
    %s112 = sadd.s32 %s111, 1
    %p115 = scmp.eq.s32.totalorder %s25, 1
    %p116 = scmp.ne.s32.totalorder %s111, %s113
    %p117 = scmp.eq.s32.totalorder %s25, 0
    %p118 = por %p116, %p117
    %p119 = scmp.ne.s32.totalorder %s111, %s113
    %p120 = scmp.eq.s32.totalorder %s30, 1
    %p121 = por %p119, %p120
    %p122 = scmp.ne.s32.totalorder %s113, %s114
    %p123 = scmp.eq.s32.totalorder %s30, 0
    %p124 = por %p122, %p123
    %p125 = scmp.ne.s32.totalorder %s113, %s114
    %p126 = scmp.eq.s32.totalorder %s31, 1
    %p127 = por %p125, %p126
    %p129 = scmp.ne.s32.totalorder %s114, %s128
    %p130 = scmp.eq.s32.totalorder %s31, 0
    %p131 = por %p129, %p130
    %s133 = sadd.s32 %s132, 1
    %p136 = scmp.eq.s32.totalorder %s25, 1
    %p137 = scmp.ne.s32.totalorder %s132, %s134
    %p138 = scmp.eq.s32.totalorder %s25, 0
    %p139 = por %p137, %p138
    %p140 = scmp.ne.s32.totalorder %s132, %s134
    %p141 = scmp.eq.s32.totalorder %s30, 1
    %p142 = por %p140, %p141
    %p143 = scmp.ne.s32.totalorder %s134, %s135
    %p144 = scmp.eq.s32.totalorder %s30, 0
    %p145 = por %p143, %p144
    %p146 = scmp.ne.s32.totalorder %s134, %s135
    %p147 = scmp.eq.s32.totalorder %s31, 1
    %p148 = por %p146, %p147
    %p150 = scmp.ne.s32.totalorder %s135, %s149
    %p151 = scmp.eq.s32.totalorder %s31, 0
    %p152 = por %p150, %p151
    %s154 = sadd.s32 %s153, 1
    %p157 = scmp.eq.s32.totalorder %s25, 1
    %p158 = scmp.ne.s32.totalorder %s153, %s155
    %p159 = scmp.eq.s32.totalorder %s25, 0
    %p160 = por %p158, %p159
    %p161 = scmp.ne.s32.totalorder %s153, %s155
    %p162 = scmp.eq.s32.totalorder %s30, 1
    %p163 = por %p161, %p162
    %p164 = scmp.ne.s32.totalorder %s155, %s156
    %p165 = scmp.eq.s32.totalorder %s30, 0
    %p166 = por %p164, %p165
    %p167 = scmp.ne.s32.totalorder %s155, %s156
    %p168 = scmp.eq.s32.totalorder %s31, 1
    %p169 = por %p167, %p168
    %p171 = scmp.ne.s32.totalorder %s156, %s170
    %p172 = scmp.eq.s32.totalorder %s31, 0
    %p173 = por %p171, %p172
    %s175 = sadd.s32 %s174, 1
    %p178 = scmp.eq.s32.totalorder %s25, 1
    %p179 = scmp.ne.s32.totalorder %s174, %s176
    %p180 = scmp.eq.s32.totalorder %s25, 0
    %p181 = por %p179, %p180
    %p182 = scmp.ne.s32.totalorder %s174, %s176
    %p183 = scmp.eq.s32.totalorder %s30, 1
    %p184 = por %p182, %p183
    %p185 = scmp.ne.s32.totalorder %s176, %s177
    %p186 = scmp.eq.s32.totalorder %s30, 0
    %p187 = por %p185, %p186
    %p188 = scmp.ne.s32.totalorder %s176, %s177
    %p189 = scmp.eq.s32.totalorder %s31, 1
    %p190 = por %p188, %p189
    %p192 = scmp.ne.s32.totalorder %s177, %s191
    %p193 = scmp.eq.s32.totalorder %s31, 0
    %p194 = por %p192, %p193
    %s196 = sadd.s32 %s195, 1
    %p199 = scmp.eq.s32.totalorder %s25, 1
    %p200 = scmp.ne.s32.totalorder %s195, %s197
    %p201 = scmp.eq.s32.totalorder %s25, 0
    %p202 = por %p200, %p201
    %p203 = scmp.ne.s32.totalorder %s195, %s197
    %p204 = scmp.eq.s32.totalorder %s30, 1
    %p205 = por %p203, %p204
    %p206 = scmp.ne.s32.totalorder %s197, %s198
    %p207 = scmp.eq.s32.totalorder %s30, 0
    %p208 = por %p206, %p207
    %p209 = scmp.ne.s32.totalorder %s197, %s198
    %p210 = scmp.eq.s32.totalorder %s31, 1
    %p211 = por %p209, %p210
    %p213 = scmp.ne.s32.totalorder %s198, %s212
    %p214 = scmp.eq.s32.totalorder %s31, 0
    %p215 = por %p213, %p214
    %s217 = sadd.s32 %s216, 1
    %p220 = scmp.eq.s32.totalorder %s25, 1
    %p221 = scmp.ne.s32.totalorder %s216, %s218
    %p222 = scmp.eq.s32.totalorder %s25, 0
    %p223 = por %p221, %p222
    %p224 = scmp.ne.s32.totalorder %s216, %s218
    %p225 = scmp.eq.s32.totalorder %s30, 1
    %p226 = por %p224, %p225
    %p227 = scmp.ne.s32.totalorder %s218, %s219
    %p228 = scmp.eq.s32.totalorder %s30, 0
    %p229 = por %p227, %p228
    %p230 = scmp.ne.s32.totalorder %s218, %s219
    %p231 = scmp.eq.s32.totalorder %s31, 1
    %p232 = por %p230, %p231
    %p234 = scmp.ne.s32.totalorder %s219, %s233
    %p235 = scmp.eq.s32.totalorder %s31, 0
    %p236 = por %p234, %p235
    %s238 = sadd.s32 %s237, 1
    %p241 = scmp.eq.s32.totalorder %s25, 1
    %p242 = scmp.ne.s32.totalorder %s237, %s239
    %p243 = scmp.eq.s32.totalorder %s25, 0
    %p244 = por %p242, %p243
    %p245 = scmp.ne.s32.totalorder %s237, %s239
    %p246 = scmp.eq.s32.totalorder %s30, 1
    %p247 = por %p245, %p246
    %p248 = scmp.ne.s32.totalorder %s239, %s240
    %p249 = scmp.eq.s32.totalorder %s30, 0
    %p250 = por %p248, %p249
    %p251 = scmp.ne.s32.totalorder %s239, %s240
    %p252 = scmp.eq.s32.totalorder %s31, 1
    %p253 = por %p251, %p252
    %p255 = scmp.ne.s32.totalorder %s240, %s254
    %p256 = scmp.eq.s32.totalorder %s31, 0
    %p257 = por %p255, %p256
    %s259 = sadd.s32 %s258, 1
    %p262 = scmp.eq.s32.totalorder %s25, 1
    %p263 = scmp.ne.s32.totalorder %s258, %s260
    %p264 = scmp.eq.s32.totalorder %s25, 0
    %p265 = por %p263, %p264
    %p266 = scmp.ne.s32.totalorder %s258, %s260
    %p267 = scmp.eq.s32.totalorder %s30, 1
    %p268 = por %p266, %p267
    %p269 = scmp.ne.s32.totalorder %s260, %s261
    %p270 = scmp.eq.s32.totalorder %s30, 0
    %p271 = por %p269, %p270
    %p272 = scmp.ne.s32.totalorder %s260, %s261
    %p273 = scmp.eq.s32.totalorder %s31, 1
    %p274 = por %p272, %p273
    %p276 = scmp.ne.s32.totalorder %s261, %s275
    %p277 = scmp.eq.s32.totalorder %s31, 0
    %p278 = por %p276, %p277
    %s280 = sadd.s32 %s279, 1
    %p283 = scmp.eq.s32.totalorder %s25, 1
    %p284 = scmp.ne.s32.totalorder %s279, %s281
    %p285 = scmp.eq.s32.totalorder %s25, 0
    %p286 = por %p284, %p285
    %p287 = scmp.ne.s32.totalorder %s279, %s281
    %p288 = scmp.eq.s32.totalorder %s30, 1
    %p289 = por %p287, %p288
    %p290 = scmp.ne.s32.totalorder %s281, %s282
    %p291 = scmp.eq.s32.totalorder %s30, 0
    %p292 = por %p290, %p291
    %p293 = scmp.ne.s32.totalorder %s281, %s282
    %p294 = scmp.eq.s32.totalorder %s31, 1
    %p295 = por %p293, %p294
    %p297 = scmp.ne.s32.totalorder %s282, %s296
    %p298 = scmp.eq.s32.totalorder %s31, 0
    %p299 = por %p297, %p298
    %s301 = sadd.s32 %s300, 1
    %p304 = scmp.eq.s32.totalorder %s25, 1
    %p305 = scmp.ne.s32.totalorder %s300, %s302
    %p306 = scmp.eq.s32.totalorder %s25, 0
    %p307 = por %p305, %p306
    %p308 = scmp.ne.s32.totalorder %s300, %s302
    %p309 = scmp.eq.s32.totalorder %s30, 1
    %p310 = por %p308, %p309
    %p311 = scmp.ne.s32.totalorder %s302, %s303
    %p312 = scmp.eq.s32.totalorder %s30, 0
    %p313 = por %p311, %p312
    %p314 = scmp.ne.s32.totalorder %s302, %s303
    %p315 = scmp.eq.s32.totalorder %s31, 1
    %p316 = por %p314, %p315
    %p318 = scmp.ne.s32.totalorder %s303, %s317
    %p319 = scmp.eq.s32.totalorder %s31, 0
    %p320 = por %p318, %p319
    %s322 = sadd.s32 %s321, 1
    %p325 = scmp.eq.s32.totalorder %s25, 1
    %p326 = scmp.ne.s32.totalorder %s321, %s323
    %p327 = scmp.eq.s32.totalorder %s25, 0
    %p328 = por %p326, %p327
    %p329 = scmp.ne.s32.totalorder %s321, %s323
    %p330 = scmp.eq.s32.totalorder %s30, 1
    %p331 = por %p329, %p330
    %p332 = scmp.ne.s32.totalorder %s323, %s324
    %p333 = scmp.eq.s32.totalorder %s30, 0
    %p334 = por %p332, %p333
    %p335 = scmp.ne.s32.totalorder %s323, %s324
    %p336 = scmp.eq.s32.totalorder %s31, 1
    %p337 = por %p335, %p336
    %p339 = scmp.ne.s32.totalorder %s324, %s338
    %p340 = scmp.eq.s32.totalorder %s31, 0
    %p341 = por %p339, %p340
    %s343 = sadd.s32 %s342, 1
    %p346 = scmp.eq.s32.totalorder %s25, 1
    %p347 = scmp.ne.s32.totalorder %s342, %s344
    %p348 = scmp.eq.s32.totalorder %s25, 0
    %p349 = por %p347, %p348
    %p350 = scmp.ne.s32.totalorder %s342, %s344
    %p351 = scmp.eq.s32.totalorder %s30, 1
    %p352 = por %p350, %p351
    %p353 = scmp.ne.s32.totalorder %s344, %s345
    %p354 = scmp.eq.s32.totalorder %s30, 0
    %p355 = por %p353, %p354
    %p356 = scmp.ne.s32.totalorder %s344, %s345
    %p357 = scmp.eq.s32.totalorder %s31, 1
    %p358 = por %p356, %p357
    %p360 = scmp.ne.s32.totalorder %s345, %s359
    %p361 = scmp.eq.s32.totalorder %s31, 0
    %p362 = por %p360, %p361
    %s364 = sadd.s32 %s363, 1
    %p367 = scmp.eq.s32.totalorder %s25, 1
    %p368 = scmp.ne.s32.totalorder %s363, %s365
    %p369 = scmp.eq.s32.totalorder %s25, 0
    %p370 = por %p368, %p369
    %p371 = scmp.ne.s32.totalorder %s363, %s365
    %p372 = scmp.eq.s32.totalorder %s30, 1
    %p373 = por %p371, %p372
    %p374 = scmp.ne.s32.totalorder %s365, %s366
    %p375 = scmp.eq.s32.totalorder %s30, 0
    %p376 = por %p374, %p375
    %p377 = scmp.ne.s32.totalorder %s365, %s366
    %p378 = scmp.eq.s32.totalorder %s31, 1
    %p379 = por %p377, %p378
    %p381 = scmp.ne.s32.totalorder %s366, %s380
    %p382 = scmp.eq.s32.totalorder %s31, 0
    %p383 = por %p381, %p382
    %s385 = sadd.s32 %s384, 1
    %p388 = scmp.eq.s32.totalorder %s25, 1
    %p389 = scmp.ne.s32.totalorder %s384, %s386
    %p390 = scmp.eq.s32.totalorder %s25, 0
    %p391 = por %p389, %p390
    %p392 = scmp.ne.s32.totalorder %s384, %s386
    %p393 = scmp.eq.s32.totalorder %s30, 1
    %p394 = por %p392, %p393
    %p395 = scmp.ne.s32.totalorder %s386, %s387
    %p396 = scmp.eq.s32.totalorder %s30, 0
    %p397 = por %p395, %p396
    %p398 = scmp.ne.s32.totalorder %s386, %s387
    %p399 = scmp.eq.s32.totalorder %s31, 1
    %p400 = por %p398, %p399
    %p402 = scmp.ne.s32.totalorder %s387, %s401
    %p403 = scmp.eq.s32.totalorder %s31, 0
    %p404 = por %p402, %p403
    %s406 = sadd.s32 %s405, 1
    %p409 = scmp.eq.s32.totalorder %s25, 1
    %p410 = scmp.ne.s32.totalorder %s405, %s407
    %p411 = scmp.eq.s32.totalorder %s25, 0
    %p412 = por %p410, %p411
    %p413 = scmp.ne.s32.totalorder %s405, %s407
    %p414 = scmp.eq.s32.totalorder %s30, 1
    %p415 = por %p413, %p414
    %p416 = scmp.ne.s32.totalorder %s407, %s408
    %p417 = scmp.eq.s32.totalorder %s30, 0
    %p418 = por %p416, %p417
    %p419 = scmp.ne.s32.totalorder %s407, %s408
    %p420 = scmp.eq.s32.totalorder %s31, 1
    %p421 = por %p419, %p420
    %p423 = scmp.ne.s32.totalorder %s408, %s422
    %p424 = scmp.eq.s32.totalorder %s31, 0
    %p425 = por %p423, %p424
    %s427 = sadd.s32 %s426, 1
    %p430 = scmp.eq.s32.totalorder %s25, 1
    %p431 = scmp.ne.s32.totalorder %s426, %s428
    %p432 = scmp.eq.s32.totalorder %s25, 0
    %p433 = por %p431, %p432
    %p434 = scmp.ne.s32.totalorder %s426, %s428
    %p435 = scmp.eq.s32.totalorder %s30, 1
    %p436 = por %p434, %p435
    %p437 = scmp.ne.s32.totalorder %s428, %s429
    %p438 = scmp.eq.s32.totalorder %s30, 0
    %p439 = por %p437, %p438
    %p440 = scmp.ne.s32.totalorder %s428, %s429
    %p441 = scmp.eq.s32.totalorder %s31, 1
    %p442 = por %p440, %p441
    %p444 = scmp.ne.s32.totalorder %s429, %s443
    %p445 = scmp.eq.s32.totalorder %s31, 0
    %p446 = por %p444, %p445
    %s447 = ssub.s32 %s25, %s32
    %p448 = scmp.eq.s32.totalorder %s447, 0
    %s450 = sadd.s32 %s449, 1
    %s451 = scalar_select %p448, %s449, %s450
    %p454 = pneg %p448
    %p455 = scmp.eq.s32.totalorder %s25, 1
    %p456 = por %p454, %p455
    %p457 = scmp.ne.s32.totalorder %s449, %s452
    %p458 = scmp.eq.s32.totalorder %s25, 0
    %p459 = por %p457, %p458
    %p460 = scmp.ne.s32.totalorder %s449, %s452
    %p461 = scmp.eq.s32.totalorder %s30, 1
    %p462 = por %p460, %p461
    %p463 = scmp.ne.s32.totalorder %s452, %s453
    %p464 = scmp.eq.s32.totalorder %s30, 0
    %p465 = por %p463, %p464
    %p466 = scmp.ne.s32.totalorder %s452, %s453
    %p467 = scmp.eq.s32.totalorder %s31, 1
    %p468 = por %p466, %p467
    %p470 = scmp.ne.s32.totalorder %s453, %s469
    %p471 = scmp.eq.s32.totalorder %s31, 0
    %p472 = por %p470, %p471
    %p473 = scmp.le.s32.totalorder 1, %s25
    %p474 = scmp.lt.s32.totalorder %s25, 3
    %p475 = pnand %p473, %p474
    %p476 = pneg %p475
    // Predicated region
    $region9: #{asff_level2_pallas.1} parent=5 // pred_check
      _
    $region10: #{asff_level2_pallas.1} parent=5 // pred_check_branch
      %478 = sbr.rel (%p475) target = $region12
    $region11: #{asff_level2_pallas.1} parent=5 // pred_region
      %s479 = ssub.s32 %s25, 1
      // Predicated region
      $region13: #{asff_level2_pallas.1} parent=11 // pred_check
        %p480 = pneg %p124
      $region14: #{asff_level2_pallas.1} parent=11 // pred_check_branch
        %482 = sbr.rel (%p480) target = $region16
      $region15: #{asff_level2_pallas.1} parent=11 // pred_region
        _
      $region16: #{asff_level2_pallas.1} parent=11 // pred_fallthru
        _
      // Predicated region
      $region17: #{asff_level2_pallas.1} parent=11 // pred_check
        %p483 = pneg %p145
      $region18: #{asff_level2_pallas.1} parent=11 // pred_check_branch
        %485 = sbr.rel (%p483) target = $region20
      $region19: #{asff_level2_pallas.1} parent=11 // pred_region
        _
      $region20: #{asff_level2_pallas.1} parent=11 // pred_fallthru
        _
      // Predicated region
      $region21: #{asff_level2_pallas.1} parent=11 // pred_check
        %p486 = pneg %p166
      $region22: #{asff_level2_pallas.1} parent=11 // pred_check_branch
        %488 = sbr.rel (%p486) target = $region24
      $region23: #{asff_level2_pallas.1} parent=11 // pred_region
        _
      $region24: #{asff_level2_pallas.1} parent=11 // pred_fallthru
        _
      // Predicated region
      $region25: #{asff_level2_pallas.1} parent=11 // pred_check
        %p489 = pneg %p187
      $region26: #{asff_level2_pallas.1} parent=11 // pred_check_branch
        %491 = sbr.rel (%p489) target = $region28
      $region27: #{asff_level2_pallas.1} parent=11 // pred_region
        _
      $region28: #{asff_level2_pallas.1} parent=11 // pred_fallthru
        _
      // Predicated region
      $region29: #{asff_level2_pallas.1} parent=11 // pred_check
        %p492 = pneg %p208
      $region30: #{asff_level2_pallas.1} parent=11 // pred_check_branch
        %494 = sbr.rel (%p492) target = $region32
      $region31: #{asff_level2_pallas.1} parent=11 // pred_region
        _
      $region32: #{asff_level2_pallas.1} parent=11 // pred_fallthru
        _
      // Predicated region
      $region33: #{asff_level2_pallas.1} parent=11 // pred_check
        %p495 = pneg %p229
      $region34: #{asff_level2_pallas.1} parent=11 // pred_check_branch
        %497 = sbr.rel (%p495) target = $region36
      $region35: #{asff_level2_pallas.1} parent=11 // pred_region
        _
      $region36: #{asff_level2_pallas.1} parent=11 // pred_fallthru
        _
      // Predicated region
      $region37: #{asff_level2_pallas.1} parent=11 // pred_check
        %p498 = pneg %p250
      $region38: #{asff_level2_pallas.1} parent=11 // pred_check_branch
        %500 = sbr.rel (%p498) target = $region40
      $region39: #{asff_level2_pallas.1} parent=11 // pred_region
        _
      $region40: #{asff_level2_pallas.1} parent=11 // pred_fallthru
        _
      // Predicated region
      $region41: #{asff_level2_pallas.1} parent=11 // pred_check
        %p501 = pneg %p271
      $region42: #{asff_level2_pallas.1} parent=11 // pred_check_branch
        %503 = sbr.rel (%p501) target = $region44
      $region43: #{asff_level2_pallas.1} parent=11 // pred_region
        _
      $region44: #{asff_level2_pallas.1} parent=11 // pred_fallthru
        _
      // Predicated region
      $region45: #{asff_level2_pallas.1} parent=11 // pred_check
        %p504 = pneg %p292
      $region46: #{asff_level2_pallas.1} parent=11 // pred_check_branch
        %506 = sbr.rel (%p504) target = $region48
      $region47: #{asff_level2_pallas.1} parent=11 // pred_region
        _
      $region48: #{asff_level2_pallas.1} parent=11 // pred_fallthru
        _
      // Predicated region
      $region49: #{asff_level2_pallas.1} parent=11 // pred_check
        %p507 = pneg %p313
      $region50: #{asff_level2_pallas.1} parent=11 // pred_check_branch
        %509 = sbr.rel (%p507) target = $region52
      $region51: #{asff_level2_pallas.1} parent=11 // pred_region
        _
      $region52: #{asff_level2_pallas.1} parent=11 // pred_fallthru
        _
      // Predicated region
      $region53: #{asff_level2_pallas.1} parent=11 // pred_check
        %p510 = pneg %p334
      $region54: #{asff_level2_pallas.1} parent=11 // pred_check_branch
        %512 = sbr.rel (%p510) target = $region56
      $region55: #{asff_level2_pallas.1} parent=11 // pred_region
        _
      $region56: #{asff_level2_pallas.1} parent=11 // pred_fallthru
        _
      // Predicated region
      $region57: #{asff_level2_pallas.1} parent=11 // pred_check
        %p513 = pneg %p355
      $region58: #{asff_level2_pallas.1} parent=11 // pred_check_branch
        %515 = sbr.rel (%p513) target = $region60
      $region59: #{asff_level2_pallas.1} parent=11 // pred_region
        _
      $region60: #{asff_level2_pallas.1} parent=11 // pred_fallthru
        _
      // Predicated region
      $region61: #{asff_level2_pallas.1} parent=11 // pred_check
        %p516 = pneg %p376
      $region62: #{asff_level2_pallas.1} parent=11 // pred_check_branch
        %518 = sbr.rel (%p516) target = $region64
      $region63: #{asff_level2_pallas.1} parent=11 // pred_region
        _
      $region64: #{asff_level2_pallas.1} parent=11 // pred_fallthru
        _
      // Predicated region
      $region65: #{asff_level2_pallas.1} parent=11 // pred_check
        %p519 = pneg %p397
      $region66: #{asff_level2_pallas.1} parent=11 // pred_check_branch
        %521 = sbr.rel (%p519) target = $region68
      $region67: #{asff_level2_pallas.1} parent=11 // pred_region
        _
      $region68: #{asff_level2_pallas.1} parent=11 // pred_fallthru
        _
      // Predicated region
      $region69: #{asff_level2_pallas.1} parent=11 // pred_check
        %p522 = pneg %p418
      $region70: #{asff_level2_pallas.1} parent=11 // pred_check_branch
        %524 = sbr.rel (%p522) target = $region72
      $region71: #{asff_level2_pallas.1} parent=11 // pred_region
        _
      $region72: #{asff_level2_pallas.1} parent=11 // pred_fallthru
        _
      // Predicated region
      $region73: #{asff_level2_pallas.1} parent=11 // pred_check
        %p525 = pneg %p439
      $region74: #{asff_level2_pallas.1} parent=11 // pred_check_branch
        %527 = sbr.rel (%p525) target = $region76
      $region75: #{asff_level2_pallas.1} parent=11 // pred_region
        _
      $region76: #{asff_level2_pallas.1} parent=11 // pred_fallthru
        _
    $region12: #{asff_level2_pallas.1} parent=5 // pred_fallthru
      _
    %p528 = scmp.lt.s32.totalorder %s25, 2
    // Predicated region
    $region77: #{asff_level2_pallas.1} parent=5 // pred_check
      %p529 = pneg %p528
    $region78: #{asff_level2_pallas.1} parent=5 // pred_check_branch
      %531 = sbr.rel (%p529) target = $region80
    $region79: #{asff_level2_pallas.1} parent=5 // pred_region
      // Predicated region
      $region81: #{asff_level2_pallas.1} parent=79 // pred_check
        %p532 = pneg %p45
      $region82: #{asff_level2_pallas.1} parent=79 // pred_check_branch
        %534 = sbr.rel (%p532) target = $region84
      $region83: #{asff_level2_pallas.1} parent=79 // pred_region
        %p535 = scmp.lt.s32.totalorder %s25, 1
        %s536 = scalar_select %p535, %s25, 1
        %s537 = smul.addr %s536, 16
        %s538 = smul.addr %s537, 4
        %s539 = scalar_lea.vmem %s0, %s538
      $region84: #{asff_level2_pallas.1} parent=79 // pred_fallthru
        _
      // Predicated region
      $region85: #{asff_level2_pallas.1} parent=79 // pred_check
        %p540 = pneg %p71
      $region86: #{asff_level2_pallas.1} parent=79 // pred_check_branch
        %542 = sbr.rel (%p540) target = $region88
      $region87: #{asff_level2_pallas.1} parent=79 // pred_region
        %p543 = scmp.lt.s32.totalorder %s25, 1
        %s544 = scalar_select %p543, %s25, 1
        %s545 = smul.addr %s544, 32
        %s546 = smul.addr %s545, 4
        %s547 = scalar_lea.vmem %s1, %s546
      $region88: #{asff_level2_pallas.1} parent=79 // pred_fallthru
        _
      // Predicated region
      $region89: #{asff_level2_pallas.1} parent=79 // pred_check
        %p548 = pneg %p97
      $region90: #{asff_level2_pallas.1} parent=79 // pred_check_branch
        %550 = sbr.rel (%p548) target = $region92
      $region91: #{asff_level2_pallas.1} parent=79 // pred_region
        %p551 = scmp.lt.s32.totalorder %s25, 1
        %s552 = scalar_select %p551, %s25, 1
        %s553 = smul.addr %s552, 204
        %s554 = smul.addr %s553, 4
        %s555 = scalar_lea.vmem %s2, %s554
      $region92: #{asff_level2_pallas.1} parent=79 // pred_fallthru
        _
    $region80: #{asff_level2_pallas.1} parent=5 // pred_fallthru
      _
    %p556 = scmp.le.s32.totalorder 1, %s25
    %p557 = scmp.lt.s32.totalorder %s25, 3
    %p558 = pnand %p556, %p557
    %p559 = pneg %p558
    // Predicated region
    $region93: #{asff_level2_pallas.1} parent=5 // pred_check
      _
    $region94: #{asff_level2_pallas.1} parent=5 // pred_check_branch
      %561 = sbr.rel (%p558) target = $region96
    $region95: #{asff_level2_pallas.1} parent=5 // pred_region
      %s562 = ssub.s32 %s25, 1
      %p563 = scmp.lt.s32.totalorder %s30, 1
      %s564 = scalar_select %p563, %s30, 1
      %s565 = smul.addr %s564, 16
      %s566 = smul.addr %s565, 4
      %s567 = scalar_lea.vmem %s0, %s566
      %p568 = pneg %p51
      %p569 = pneg %p48
      %p570 = scmp.lt.s32.totalorder %s30, 1
      %s571 = scalar_select %p570, %s30, 1
      %s572 = smul.addr %s571, 32
      %s573 = smul.addr %s572, 4
      %s574 = scalar_lea.vmem %s1, %s573
      %p575 = pneg %p77
      %p576 = pneg %p74
      %p577 = scmp.lt.s32.totalorder %s30, 1
      %s578 = scalar_select %p577, %s30, 1
      %s579 = smul.addr %s578, 204
      %s580 = smul.addr %s579, 4
      %s581 = scalar_lea.vmem %s2, %s580
      %p582 = pneg %p103
      %p583 = pneg %p100
      %p584 = pneg %p124
      %p585 = pneg %p121
      %p586 = pneg %p145
      %p587 = pneg %p142
      %p588 = pneg %p166
      %p589 = pneg %p163
      %p590 = pneg %p187
      %p591 = pneg %p184
      %p592 = pneg %p208
      %p593 = pneg %p205
      %p594 = pneg %p229
      %p595 = pneg %p226
      %p596 = pneg %p250
      %p597 = pneg %p247
      %p598 = pneg %p271
      %p599 = pneg %p268
      %p600 = pneg %p292
      %p601 = pneg %p289
      %p602 = pneg %p313
      %p603 = pneg %p310
      %p604 = pneg %p334
      %p605 = pneg %p331
      %p606 = pneg %p355
      %p607 = pneg %p352
      %p608 = pneg %p376
      %p609 = pneg %p373
      %p610 = pneg %p397
      %p611 = pneg %p394
      %p612 = pneg %p418
      %p613 = pneg %p415
      %p614 = pneg %p439
      %p615 = pneg %p436
      %p616 = pneg %p465
      %p617 = pneg %p462
      %p618 = scmp.lt.s32.totalorder %s30, 1
      %s619 = scalar_select %p618, %s30, 1
      %s620 = smul.addr %s619, 32
      %s621 = smul.addr %s620, 8
      %s622 = scalar_lea.vmem %s19, %s621
      %p623 = scmp.lt.s32.totalorder %s30, 1
      %s624 = scalar_select %p623, %s30, 1
      %s625 = smul.addr %s624, 16
      %s626 = smul.addr %s625, 4
      %s627 = scalar_lea.vmem %s0, %s626
      %p628 = scmp.lt.s32.totalorder %s30, 1
      %s629 = scalar_select %p628, %s30, 1
      %s630 = smul.addr %s629, 32
      %s631 = smul.addr %s630, 4
      %s632 = scalar_lea.vmem %s1, %s631
      %p633 = scmp.lt.s32.totalorder %s30, 1
      %s634 = scalar_select %p633, %s30, 1
      %s635 = smul.addr %s634, 204
      %s636 = smul.addr %s635, 4
      %s637 = scalar_lea.vmem %s2, %s636
      %p638 = scmp.lt.s32.totalorder %s30, 1
      %s639 = scalar_select %p638, %s30, 1
      %s640 = smul.addr %s639, 32
      %s641 = smul.addr %s640, 8
      %s642 = scalar_lea.vmem %s19, %s641
      %v644 = vld [vmem:[%s627] sm:$0xf]
      %v645 = vld [vmem:[%s627 + $0x4] sm:$0xf]
      %v646 = vld [vmem:[%s627 + $0x8] sm:$0xf]
      %v647 = vld [vmem:[%s627 + $0xc] sm:$0xf]
      %v648 = vld [vmem:[%s627 + $0x10] sm:$0xf]
      %v649 = vld [vmem:[%s627 + $0x14] sm:$0xf]
      %v650 = vld [vmem:[%s627 + $0x18] sm:$0xf]
      %v651 = vld [vmem:[%s627 + $0x1c] sm:$0xf]
      %v652 = vld [vmem:[%s627 + $0x20] sm:$0xf]
      %v653 = vld [vmem:[%s627 + $0x24] sm:$0xf]
      %v654 = vld [vmem:[%s627 + $0x28] sm:$0xf]
      %v655 = vld [vmem:[%s627 + $0x2c] sm:$0xf]
      %v656 = vld [vmem:[%s627 + $0x30] sm:$0xf]
      %v657 = vld [vmem:[%s627 + $0x34] sm:$0xf]
      %v658 = vld [vmem:[%s627 + $0x38] sm:$0xf]
      %v659 = vld [vmem:[%s627 + $0x3c] sm:$0xf]
      %v660 = vld [vmem:[%s3] sm:$0xf]
      %v661 = vld [vmem:[%s3 + $0x4] sm:$0xf]
      %v662 = vld [vmem:[%s4] sm:$0x1]
      %v664 = vlaneseq
      %v665 = vshrl.u32 %v664, 7
      %v666 = vsub.s32 0, %v665
      %v667 = vrot.slane %v662, %v666
      %v685 = vunpack.c.l.b16 %v644
      %v686 = vunpack.c.l.b16 %v645
      %v687 = vunpack.c.l.b16 %v646
      %v688 = vunpack.c.l.b16 %v647
      %v689 = vunpack.c.l.b16 %v648
      %v690 = vunpack.c.l.b16 %v649
      %v691 = vunpack.c.l.b16 %v650
      %v692 = vunpack.c.l.b16 %v651
      %v693 = vunpack.c.l.b16 %v652
      %v694 = vunpack.c.l.b16 %v653
      %v695 = vunpack.c.l.b16 %v654
      %v696 = vunpack.c.l.b16 %v655
      %v697 = vunpack.c.l.b16 %v656
      %v698 = vunpack.c.l.b16 %v657
      %v699 = vunpack.c.l.b16 %v658
      %v700 = vunpack.c.l.b16 %v659
      %v701 = vpack.c.b16 %v686, %v685
      %v702 = vpack.c.b16 %v688, %v687
      %v703 = vpack.c.b16 %v690, %v689
      %v704 = vpack.c.b16 %v692, %v691
      %v705 = vpack.c.b16 %v694, %v693
      %v706 = vpack.c.b16 %v696, %v695
      %v707 = vpack.c.b16 %v698, %v697
      %v708 = vpack.c.b16 %v700, %v699
      %v711 = vunpack.c.l.b16 %v660
      %v712 = vunpack.c.l.b16 %v661
      %v713 = vpack.c.b16 %v712, %v711
      %vm715 = vcmask 130048
      %v717 = vsel %vm715, %v701, 0
      %v720 = vsel %vm715, %v702, 0
      %v723 = vsel %vm715, %v703, 0
      %v726 = vsel %vm715, %v704, 0
      %v729 = vsel %vm715, %v705, 0
      %v732 = vsel %vm715, %v706, 0
      %v735 = vsel %vm715, %v707, 0
      %v738 = vsel %vm715, %v708, 0
      %740 = vmatprep.subr.bf16.mxu0 0
      %741 = vmatpush1.bf16.msra.mxu0 0
      %742 = vmatprep.subr.bf16.mxu0 0
      %743 = vmatpush1.bf16.msra.mxu0 0
      %744 = vmatprep.subr.bf16.mxu0 0
      %745 = vmatpush1.bf16.msra.mxu0 0
      %746 = vmatprep.subr.bf16.mxu0 0
      %747 = vmatpush1.bf16.msra.mxu0 0
      %748 = vmatprep.subr.bf16.mxu0 0
      %749 = vmatpush1.bf16.msra.mxu0 0
      %750 = vmatprep.subr.bf16.mxu0 0
      %751 = vmatpush1.bf16.msra.mxu0 0
      %752 = vmatprep.subr.bf16.mxu0 0
      %753 = vmatpush1.bf16.msra.mxu0 0
      %754 = vmatprep.subr.bf16.mxu0 0
      %755 = vmatpush1.bf16.msra.mxu0 %v713
      %756 = vmatprep.subr.bf16.mxu0 0
      %757 = vmatpush2.bf16.msra.mxu0 0
      %758 = vmatprep.subr.bf16.mxu0 0
      %759 = vmatpush2.bf16.msra.mxu0 0
      %760 = vmatprep.subr.bf16.mxu0 0
      %761 = vmatpush2.bf16.msra.mxu0 0
      %762 = vmatprep.subr.bf16.mxu0 0
      %763 = vmatpush2.bf16.msra.mxu0 0
      %764 = vmatprep.subr.bf16.mxu0 0
      %765 = vmatpush2.bf16.msra.mxu0 0
      %766 = vmatprep.subr.bf16.mxu0 0
      %767 = vmatpush2.bf16.msra.mxu0 0
      %768 = vmatprep.subr.bf16.mxu0 0
      %769 = vmatpush2.bf16.msra.mxu0 0
      %770 = vmatprep.subr.bf16.mxu0 0
      %771 = vmatpush2.bf16.msra.mxu0 0
      %772 = vmatprep.mubr.bf16.mxu0 0
      %773 = vmatmul.mubr.bf16.gmra.mxu0 %v717
      %v774 = vpop.f32.mrf.mxu0
      %v775 = vadd.f32 %v667, %v774
      %v776 = vpop.f32.mrf.mxu0
      %v777 = vpop.f32.mrf.mxu0
      %v778 = vadd.f32 %v667, %v777
      %v779 = vpop.f32.mrf.mxu0
      %780 = vmatprep.mubr.bf16.mxu0 0
      %781 = vmatmul.mubr.bf16.gmra.mxu0 %v720
      %v782 = vpop.f32.mrf.mxu0
      %v783 = vadd.f32 %v667, %v782
      %v784 = vpop.f32.mrf.mxu0
      %v785 = vpop.f32.mrf.mxu0
      %v786 = vadd.f32 %v667, %v785
      %v787 = vpop.f32.mrf.mxu0
      %788 = vmatprep.mubr.bf16.mxu0 0
      %789 = vmatmul.mubr.bf16.gmra.mxu0 %v723
      %v790 = vpop.f32.mrf.mxu0
      %v791 = vadd.f32 %v667, %v790
      %v792 = vpop.f32.mrf.mxu0
      %v793 = vpop.f32.mrf.mxu0
      %v794 = vadd.f32 %v667, %v793
      %v795 = vpop.f32.mrf.mxu0
      %796 = vmatprep.mubr.bf16.mxu0 0
      %797 = vmatmul.mubr.bf16.gmra.mxu0 %v726
      %v798 = vpop.f32.mrf.mxu0
      %v799 = vadd.f32 %v667, %v798
      %v800 = vpop.f32.mrf.mxu0
      %v801 = vpop.f32.mrf.mxu0
      %v802 = vadd.f32 %v667, %v801
      %v803 = vpop.f32.mrf.mxu0
      %804 = vmatprep.mubr.bf16.mxu0 0
      %805 = vmatmul.mubr.bf16.gmra.mxu0 %v729
      %v806 = vpop.f32.mrf.mxu0
      %v807 = vadd.f32 %v667, %v806
      %v808 = vpop.f32.mrf.mxu0
      %v809 = vpop.f32.mrf.mxu0
      %v810 = vadd.f32 %v667, %v809
      %v811 = vpop.f32.mrf.mxu0
      %812 = vmatprep.mubr.bf16.mxu0 0
      %813 = vmatmul.mubr.bf16.gmra.mxu0 %v732
      %v814 = vpop.f32.mrf.mxu0
      %v815 = vadd.f32 %v667, %v814
      %v816 = vpop.f32.mrf.mxu0
      %v817 = vpop.f32.mrf.mxu0
      %v818 = vadd.f32 %v667, %v817
      %v819 = vpop.f32.mrf.mxu0
      %820 = vmatprep.mubr.bf16.mxu0 0
      %821 = vmatmul.mubr.bf16.gmra.mxu0 %v735
      %v822 = vpop.f32.mrf.mxu0
      %v823 = vadd.f32 %v667, %v822
      %v824 = vpop.f32.mrf.mxu0
      %v825 = vpop.f32.mrf.mxu0
      %v826 = vadd.f32 %v667, %v825
      %v827 = vpop.f32.mrf.mxu0
      %828 = vmatprep.mubr.bf16.mxu0 0
      %829 = vmatmul.mubr.bf16.gmra.mxu0 %v738
      %v830 = vpop.f32.mrf.mxu0
      %v831 = vadd.f32 %v667, %v830
      %v832 = vpop.f32.mrf.mxu0
      %v833 = vpop.f32.mrf.mxu0
      %v834 = vadd.f32 %v667, %v833
      %v835 = vpop.f32.mrf.mxu0
      %836 = vdwg.mxu0
      %v837 = vmax.f32 %v775, 0.0
      %v838 = vmax.f32 %v778, 0.0
      %v839 = vmax.f32 %v783, 0.0
      %v840 = vmax.f32 %v786, 0.0
      %v841 = vmax.f32 %v791, 0.0
      %v842 = vmax.f32 %v794, 0.0
      %v843 = vmax.f32 %v799, 0.0
      %v844 = vmax.f32 %v802, 0.0
      %v845 = vmax.f32 %v807, 0.0
      %v846 = vmax.f32 %v810, 0.0
      %v847 = vmax.f32 %v815, 0.0
      %v848 = vmax.f32 %v818, 0.0
      %v849 = vmax.f32 %v823, 0.0
      %v850 = vmax.f32 %v826, 0.0
      %v851 = vmax.f32 %v831, 0.0
      %v852 = vmax.f32 %v834, 0.0
      %v853 = vmin.f32 %v837, 6.0
      %v854 = vmin.f32 %v838, 6.0
      %v855 = vmin.f32 %v839, 6.0
      %v856 = vmin.f32 %v840, 6.0
      %v857 = vmin.f32 %v841, 6.0
      %v858 = vmin.f32 %v842, 6.0
      %v859 = vmin.f32 %v843, 6.0
      %v860 = vmin.f32 %v844, 6.0
      %v861 = vmin.f32 %v845, 6.0
      %v862 = vmin.f32 %v846, 6.0
      %v863 = vmin.f32 %v847, 6.0
      %v864 = vmin.f32 %v848, 6.0
      %v865 = vmin.f32 %v849, 6.0
      %v866 = vmin.f32 %v850, 6.0
      %v867 = vmin.f32 %v851, 6.0
      %v868 = vmin.f32 %v852, 6.0
      %v869 = vld [vmem:[%s632] sm:$0xf]
      %v870 = vld [vmem:[%s632 + $0x4] sm:$0xf]
      %v871 = vld [vmem:[%s632 + $0x8] sm:$0xf]
      %v872 = vld [vmem:[%s632 + $0xc] sm:$0xf]
      %v873 = vld [vmem:[%s632 + $0x10] sm:$0xf]
      %v874 = vld [vmem:[%s632 + $0x14] sm:$0xf]
      %v875 = vld [vmem:[%s632 + $0x18] sm:$0xf]
      %v876 = vld [vmem:[%s632 + $0x1c] sm:$0xf]
      %v877 = vld [vmem:[%s632 + $0x20] sm:$0xf]
      %v878 = vld [vmem:[%s632 + $0x24] sm:$0xf]
      %v879 = vld [vmem:[%s632 + $0x28] sm:$0xf]
      %v880 = vld [vmem:[%s632 + $0x2c] sm:$0xf]
      %v881 = vld [vmem:[%s632 + $0x30] sm:$0xf]
      %v882 = vld [vmem:[%s632 + $0x34] sm:$0xf]
      %v883 = vld [vmem:[%s632 + $0x38] sm:$0xf]
      %v884 = vld [vmem:[%s632 + $0x3c] sm:$0xf]
      %v885 = vld [vmem:[%s632 + $0x40] sm:$0xf]
      %v886 = vld [vmem:[%s632 + $0x44] sm:$0xf]
      %v887 = vld [vmem:[%s632 + $0x48] sm:$0xf]
      %v888 = vld [vmem:[%s632 + $0x4c] sm:$0xf]
      %v889 = vld [vmem:[%s632 + $0x50] sm:$0xf]
      %v890 = vld [vmem:[%s632 + $0x54] sm:$0xf]
      %v891 = vld [vmem:[%s632 + $0x58] sm:$0xf]
      %v892 = vld [vmem:[%s632 + $0x5c] sm:$0xf]
      %v893 = vld [vmem:[%s632 + $0x60] sm:$0xf]
      %v894 = vld [vmem:[%s632 + $0x64] sm:$0xf]
      %v895 = vld [vmem:[%s632 + $0x68] sm:$0xf]
      %v896 = vld [vmem:[%s632 + $0x6c] sm:$0xf]
      %v897 = vld [vmem:[%s632 + $0x70] sm:$0xf]
      %v898 = vld [vmem:[%s632 + $0x74] sm:$0xf]
      %v899 = vld [vmem:[%s632 + $0x78] sm:$0xf]
      %v900 = vld [vmem:[%s632 + $0x7c] sm:$0xf]
      %v901 = vunpack.c.l.bf16 %v869
      %v902 = vunpack.c.l.bf16 %v870
      %v903 = vunpack.c.l.bf16 %v871
      %v904 = vunpack.c.l.bf16 %v872
      %v905 = vunpack.c.l.bf16 %v873
      %v906 = vunpack.c.l.bf16 %v874
      %v907 = vunpack.c.l.bf16 %v875
      %v908 = vunpack.c.l.bf16 %v876
      %v909 = vunpack.c.l.bf16 %v877
      %v910 = vunpack.c.l.bf16 %v878
      %v911 = vunpack.c.l.bf16 %v879
      %v912 = vunpack.c.l.bf16 %v880
      %v913 = vunpack.c.l.bf16 %v881
      %v914 = vunpack.c.l.bf16 %v882
      %v915 = vunpack.c.l.bf16 %v883
      %v916 = vunpack.c.l.bf16 %v884
      %v917 = vunpack.c.l.bf16 %v885
      %v918 = vunpack.c.l.bf16 %v886
      %v919 = vunpack.c.l.bf16 %v887
      %v920 = vunpack.c.l.bf16 %v888
      %v921 = vunpack.c.l.bf16 %v889
      %v922 = vunpack.c.l.bf16 %v890
      %v923 = vunpack.c.l.bf16 %v891
      %v924 = vunpack.c.l.bf16 %v892
      %v925 = vunpack.c.l.bf16 %v893
      %v926 = vunpack.c.l.bf16 %v894
      %v927 = vunpack.c.l.bf16 %v895
      %v928 = vunpack.c.l.bf16 %v896
      %v929 = vunpack.c.l.bf16 %v897
      %v930 = vunpack.c.l.bf16 %v898
      %v931 = vunpack.c.l.bf16 %v899
      %v932 = vunpack.c.l.bf16 %v900
      %s933 = scalar_lea.vmem %s637, 612
      %v934 = vld [vmem:[%s933] sm:$0xf]
      %v935 = vld [vmem:[%s933 + $0x4] sm:$0xf]
      %v936 = vld [vmem:[%s933 + $0xc] sm:$0xf]
      %v937 = vld [vmem:[%s933 + $0x10] sm:$0xf]
      %v938 = vld [vmem:[%s933 + $0x18] sm:$0xf]
      %v939 = vld [vmem:[%s933 + $0x1c] sm:$0xf]
      %v940 = vld [vmem:[%s933 + $0x24] sm:$0xf]
      %v941 = vld [vmem:[%s933 + $0x28] sm:$0xf]
      %v942 = vld [vmem:[%s933 + $0x30] sm:$0xf]
      %v943 = vld [vmem:[%s933 + $0x34] sm:$0xf]
      %v944 = vld [vmem:[%s933 + $0x3c] sm:$0xf]
      %v945 = vld [vmem:[%s933 + $0x40] sm:$0xf]
      %v946 = vld [vmem:[%s933 + $0x48] sm:$0xf]
      %v947 = vld [vmem:[%s933 + $0x4c] sm:$0xf]
      %v948 = vld [vmem:[%s933 + $0x54] sm:$0xf]
      %v949 = vld [vmem:[%s933 + $0x58] sm:$0xf]
      %v950 = vld [vmem:[%s933 + $0x60] sm:$0xf]
      %v951 = vld [vmem:[%s933 + $0x64] sm:$0xf]
      %v952 = vld [vmem:[%s933 + $0x6c] sm:$0xf]
      %v953 = vld [vmem:[%s933 + $0x70] sm:$0xf]
      %v954 = vld [vmem:[%s933 + $0x78] sm:$0xf]
      %v955 = vld [vmem:[%s933 + $0x7c] sm:$0xf]
      %v956 = vld [vmem:[%s933 + $0x84] sm:$0xf]
      %v957 = vld [vmem:[%s933 + $0x88] sm:$0xf]
      %v958 = vld [vmem:[%s933 + $0x90] sm:$0xf]
      %v959 = vld [vmem:[%s933 + $0x94] sm:$0xf]
      %v960 = vld [vmem:[%s933 + $0x9c] sm:$0xf]
      %v961 = vld [vmem:[%s933 + $0xa0] sm:$0xf]
      %v962 = vld [vmem:[%s933 + $0xa8] sm:$0xf]
      %v963 = vld [vmem:[%s933 + $0xac] sm:$0xf]
      %v964 = vld [vmem:[%s933 + $0xb4] sm:$0xf]
      %v965 = vld [vmem:[%s933 + $0xb8] sm:$0xf]
      %v966 = vld [vmem:[%s5] sm:$0x3]
      %s967 = scalar_lea.vmem %s637, 408
      %v968 = vld [vmem:[%s967] sm:$0xf]
      %v969 = vld [vmem:[%s967 + $0x4] sm:$0xf]
      %v970 = vld [vmem:[%s967 + $0x8] sm:$0x1]
      %v971 = vld [vmem:[%s967 + $0xc] sm:$0xf]
      %v972 = vld [vmem:[%s967 + $0x10] sm:$0xf]
      %v973 = vld [vmem:[%s967 + $0x14] sm:$0x1]
      %v974 = vld [vmem:[%s967 + $0x18] sm:$0xf]
      %v975 = vld [vmem:[%s967 + $0x1c] sm:$0xf]
      %v976 = vld [vmem:[%s967 + $0x20] sm:$0x1]
      %v977 = vld [vmem:[%s967 + $0x24] sm:$0xf]
      %v978 = vld [vmem:[%s967 + $0x28] sm:$0xf]
      %v979 = vld [vmem:[%s967 + $0x2c] sm:$0x1]
      %v980 = vld [vmem:[%s967 + $0x30] sm:$0xf]
      %v981 = vld [vmem:[%s967 + $0x34] sm:$0xf]
      %v982 = vld [vmem:[%s967 + $0x38] sm:$0x1]
      %v983 = vld [vmem:[%s967 + $0x3c] sm:$0xf]
      %v984 = vld [vmem:[%s967 + $0x40] sm:$0xf]
      %v985 = vld [vmem:[%s967 + $0x44] sm:$0x1]
      %v986 = vld [vmem:[%s967 + $0x48] sm:$0xf]
      %v987 = vld [vmem:[%s967 + $0x4c] sm:$0xf]
      %v988 = vld [vmem:[%s967 + $0x50] sm:$0x1]
      %v989 = vld [vmem:[%s967 + $0x54] sm:$0xf]
      %v990 = vld [vmem:[%s967 + $0x58] sm:$0xf]
      %v991 = vld [vmem:[%s967 + $0x5c] sm:$0x1]
      %v992 = vld [vmem:[%s967 + $0x60] sm:$0xf]
      %v993 = vld [vmem:[%s967 + $0x64] sm:$0xf]
      %v994 = vld [vmem:[%s967 + $0x68] sm:$0x1]
      %v995 = vld [vmem:[%s967 + $0x6c] sm:$0xf]
      %v996 = vld [vmem:[%s967 + $0x70] sm:$0xf]
      %v997 = vld [vmem:[%s967 + $0x74] sm:$0x1]
      %v998 = vld [vmem:[%s967 + $0x78] sm:$0xf]
      %v999 = vld [vmem:[%s967 + $0x7c] sm:$0xf]
      %v1000 = vld [vmem:[%s967 + $0x80] sm:$0x1]
      %v1001 = vld [vmem:[%s967 + $0x84] sm:$0xf]
      %v1002 = vld [vmem:[%s967 + $0x88] sm:$0xf]
      %v1003 = vld [vmem:[%s967 + $0x8c] sm:$0x1]
      %v1004 = vld [vmem:[%s967 + $0x90] sm:$0xf]
      %v1005 = vld [vmem:[%s967 + $0x94] sm:$0xf]
      %v1006 = vld [vmem:[%s967 + $0x98] sm:$0x1]
      %v1007 = vld [vmem:[%s967 + $0x9c] sm:$0xf]
      %v1008 = vld [vmem:[%s967 + $0xa0] sm:$0xf]
      %v1009 = vld [vmem:[%s967 + $0xa4] sm:$0x1]
      %v1010 = vld [vmem:[%s967 + $0xa8] sm:$0xf]
      %v1011 = vld [vmem:[%s967 + $0xac] sm:$0xf]
      %v1012 = vld [vmem:[%s967 + $0xb0] sm:$0x1]
      %v1013 = vld [vmem:[%s967 + $0xb4] sm:$0xf]
      %v1014 = vld [vmem:[%s967 + $0xb8] sm:$0xf]
      %v1015 = vld [vmem:[%s967 + $0xbc] sm:$0x1]
      %vm1016 = vsmask.f32 3328
      %vm1017 = vsmask.f32 7440
      %vm1018 = vmor %vm1016, %vm1017
      %v1020 = vshrl.u32 %v968, 16
      %v1022 = vrot.slane %v1020, 4
      %v1023 = vshll.u32 %v968, 16
      %v1025 = vrot.slane %v1023, 5
      %v1026 = vor.u32 %v1022, %v1025
      %v1027 = vrot.slane %v1026, 4
      %v1029 = vshll.u32 %v969, 16
      %v1031 = vrot.slane %v1029, 5
      %v1032 = vsel %vm1018, %v1027, %v1031
      %v1033 = vshrl.u32 %v969, 16
      %v1035 = vrot.slane %v1033, 4
      %v1036 = vor.u32 %v1035, %v1031
      %v1037 = vrot.slane %v1036, 4
      %v1039 = vshll.u32 %v970, 16
      %v1041 = vrot.slane %v1039, 5
      %v1042 = vsel %vm1018, %v1037, %v1041
      %v1044 = vshrl.u32 %v971, 16
      %v1046 = vrot.slane %v1044, 4
      %v1047 = vshll.u32 %v971, 16
      %v1049 = vrot.slane %v1047, 5
      %v1050 = vor.u32 %v1046, %v1049
      %v1051 = vrot.slane %v1050, 4
      %v1053 = vshll.u32 %v972, 16
      %v1055 = vrot.slane %v1053, 5
      %v1056 = vsel %vm1018, %v1051, %v1055
      %v1057 = vshrl.u32 %v972, 16
      %v1059 = vrot.slane %v1057, 4
      %v1060 = vor.u32 %v1059, %v1055
      %v1061 = vrot.slane %v1060, 4
      %v1063 = vshll.u32 %v973, 16
      %v1065 = vrot.slane %v1063, 5
      %v1066 = vsel %vm1018, %v1061, %v1065
      %v1068 = vshrl.u32 %v974, 16
      %v1070 = vrot.slane %v1068, 4
      %v1071 = vshll.u32 %v974, 16
      %v1073 = vrot.slane %v1071, 5
      %v1074 = vor.u32 %v1070, %v1073
      %v1075 = vrot.slane %v1074, 4
      %v1077 = vshll.u32 %v975, 16
      %v1079 = vrot.slane %v1077, 5
      %v1080 = vsel %vm1018, %v1075, %v1079
      %v1081 = vshrl.u32 %v975, 16
      %v1083 = vrot.slane %v1081, 4
      %v1084 = vor.u32 %v1083, %v1079
      %v1085 = vrot.slane %v1084, 4
      %v1087 = vshll.u32 %v976, 16
      %v1089 = vrot.slane %v1087, 5
      %v1090 = vsel %vm1018, %v1085, %v1089
      %v1092 = vshrl.u32 %v977, 16
      %v1094 = vrot.slane %v1092, 4
      %v1095 = vshll.u32 %v977, 16
      %v1097 = vrot.slane %v1095, 5
      %v1098 = vor.u32 %v1094, %v1097
      %v1099 = vrot.slane %v1098, 4
      %v1101 = vshll.u32 %v978, 16
      %v1103 = vrot.slane %v1101, 5
      %v1104 = vsel %vm1018, %v1099, %v1103
      %v1105 = vshrl.u32 %v978, 16
      %v1107 = vrot.slane %v1105, 4
      %v1108 = vor.u32 %v1107, %v1103
      %v1109 = vrot.slane %v1108, 4
      %v1111 = vshll.u32 %v979, 16
      %v1113 = vrot.slane %v1111, 5
      %v1114 = vsel %vm1018, %v1109, %v1113
      %v1116 = vshrl.u32 %v980, 16
      %v1118 = vrot.slane %v1116, 4
      %v1119 = vshll.u32 %v980, 16
      %v1121 = vrot.slane %v1119, 5
      %v1122 = vor.u32 %v1118, %v1121
      %v1123 = vrot.slane %v1122, 4
      %v1125 = vshll.u32 %v981, 16
      %v1127 = vrot.slane %v1125, 5
      %v1128 = vsel %vm1018, %v1123, %v1127
      %v1129 = vshrl.u32 %v981, 16
      %v1131 = vrot.slane %v1129, 4
      %v1132 = vor.u32 %v1131, %v1127
      %v1133 = vrot.slane %v1132, 4
      %v1135 = vshll.u32 %v982, 16
      %v1137 = vrot.slane %v1135, 5
      %v1138 = vsel %vm1018, %v1133, %v1137
      %v1140 = vshrl.u32 %v983, 16
      %v1142 = vrot.slane %v1140, 4
      %v1143 = vshll.u32 %v983, 16
      %v1145 = vrot.slane %v1143, 5
      %v1146 = vor.u32 %v1142, %v1145
      %v1147 = vrot.slane %v1146, 4
      %v1149 = vshll.u32 %v984, 16
      %v1151 = vrot.slane %v1149, 5
      %v1152 = vsel %vm1018, %v1147, %v1151
      %v1153 = vshrl.u32 %v984, 16
      %v1155 = vrot.slane %v1153, 4
      %v1156 = vor.u32 %v1155, %v1151
      %v1157 = vrot.slane %v1156, 4
      %v1159 = vshll.u32 %v985, 16
      %v1161 = vrot.slane %v1159, 5
      %v1162 = vsel %vm1018, %v1157, %v1161
      %v1164 = vshrl.u32 %v986, 16
      %v1166 = vrot.slane %v1164, 4
      %v1167 = vshll.u32 %v986, 16
      %v1169 = vrot.slane %v1167, 5
      %v1170 = vor.u32 %v1166, %v1169
      %v1171 = vrot.slane %v1170, 4
      %v1173 = vshll.u32 %v987, 16
      %v1175 = vrot.slane %v1173, 5
      %v1176 = vsel %vm1018, %v1171, %v1175
      %v1177 = vshrl.u32 %v987, 16
      %v1179 = vrot.slane %v1177, 4
      %v1180 = vor.u32 %v1179, %v1175
      %v1181 = vrot.slane %v1180, 4
      %v1183 = vshll.u32 %v988, 16
      %v1185 = vrot.slane %v1183, 5
      %v1186 = vsel %vm1018, %v1181, %v1185
      %v1188 = vshrl.u32 %v989, 16
      %v1190 = vrot.slane %v1188, 4
      %v1191 = vshll.u32 %v989, 16
      %v1193 = vrot.slane %v1191, 5
      %v1194 = vor.u32 %v1190, %v1193
      %v1195 = vrot.slane %v1194, 4
      %v1197 = vshll.u32 %v990, 16
      %v1199 = vrot.slane %v1197, 5
      %v1200 = vsel %vm1018, %v1195, %v1199
      %v1201 = vshrl.u32 %v990, 16
      %v1203 = vrot.slane %v1201, 4
      %v1204 = vor.u32 %v1203, %v1199
      %v1205 = vrot.slane %v1204, 4
      %v1207 = vshll.u32 %v991, 16
      %v1209 = vrot.slane %v1207, 5
      %v1210 = vsel %vm1018, %v1205, %v1209
      %v1212 = vshrl.u32 %v992, 16
      %v1214 = vrot.slane %v1212, 4
      %v1215 = vshll.u32 %v992, 16
      %v1217 = vrot.slane %v1215, 5
      %v1218 = vor.u32 %v1214, %v1217
      %v1219 = vrot.slane %v1218, 4
      %v1221 = vshll.u32 %v993, 16
      %v1223 = vrot.slane %v1221, 5
      %v1224 = vsel %vm1018, %v1219, %v1223
      %v1225 = vshrl.u32 %v993, 16
      %v1227 = vrot.slane %v1225, 4
      %v1228 = vor.u32 %v1227, %v1223
      %v1229 = vrot.slane %v1228, 4
      %v1231 = vshll.u32 %v994, 16
      %v1233 = vrot.slane %v1231, 5
      %v1234 = vsel %vm1018, %v1229, %v1233
      %v1236 = vshrl.u32 %v995, 16
      %v1238 = vrot.slane %v1236, 4
      %v1239 = vshll.u32 %v995, 16
      %v1241 = vrot.slane %v1239, 5
      %v1242 = vor.u32 %v1238, %v1241
      %v1243 = vrot.slane %v1242, 4
      %v1245 = vshll.u32 %v996, 16
      %v1247 = vrot.slane %v1245, 5
      %v1248 = vsel %vm1018, %v1243, %v1247
      %v1249 = vshrl.u32 %v996, 16
      %v1251 = vrot.slane %v1249, 4
      %v1252 = vor.u32 %v1251, %v1247
      %v1253 = vrot.slane %v1252, 4
      %v1255 = vshll.u32 %v997, 16
      %v1257 = vrot.slane %v1255, 5
      %v1258 = vsel %vm1018, %v1253, %v1257
      %v1260 = vshrl.u32 %v998, 16
      %v1262 = vrot.slane %v1260, 4
      %v1263 = vshll.u32 %v998, 16
      %v1265 = vrot.slane %v1263, 5
      %v1266 = vor.u32 %v1262, %v1265
      %v1267 = vrot.slane %v1266, 4
      %v1269 = vshll.u32 %v999, 16
      %v1271 = vrot.slane %v1269, 5
      %v1272 = vsel %vm1018, %v1267, %v1271
      %v1273 = vshrl.u32 %v999, 16
      %v1275 = vrot.slane %v1273, 4
      %v1276 = vor.u32 %v1275, %v1271
      %v1277 = vrot.slane %v1276, 4
      %v1279 = vshll.u32 %v1000, 16
      %v1281 = vrot.slane %v1279, 5
      %v1282 = vsel %vm1018, %v1277, %v1281
      %v1284 = vshrl.u32 %v1001, 16
      %v1286 = vrot.slane %v1284, 4
      %v1287 = vshll.u32 %v1001, 16
      %v1289 = vrot.slane %v1287, 5
      %v1290 = vor.u32 %v1286, %v1289
      %v1291 = vrot.slane %v1290, 4
      %v1293 = vshll.u32 %v1002, 16
      %v1295 = vrot.slane %v1293, 5
      %v1296 = vsel %vm1018, %v1291, %v1295
      %v1297 = vshrl.u32 %v1002, 16
      %v1299 = vrot.slane %v1297, 4
      %v1300 = vor.u32 %v1299, %v1295
      %v1301 = vrot.slane %v1300, 4
      %v1303 = vshll.u32 %v1003, 16
      %v1305 = vrot.slane %v1303, 5
      %v1306 = vsel %vm1018, %v1301, %v1305
      %v1308 = vshrl.u32 %v1004, 16
      %v1310 = vrot.slane %v1308, 4
      %v1311 = vshll.u32 %v1004, 16
      %v1313 = vrot.slane %v1311, 5
      %v1314 = vor.u32 %v1310, %v1313
      %v1315 = vrot.slane %v1314, 4
      %v1317 = vshll.u32 %v1005, 16
      %v1319 = vrot.slane %v1317, 5
      %v1320 = vsel %vm1018, %v1315, %v1319
      %v1321 = vshrl.u32 %v1005, 16
      %v1323 = vrot.slane %v1321, 4
      %v1324 = vor.u32 %v1323, %v1319
      %v1325 = vrot.slane %v1324, 4
      %v1327 = vshll.u32 %v1006, 16
      %v1329 = vrot.slane %v1327, 5
      %v1330 = vsel %vm1018, %v1325, %v1329
      %v1332 = vshrl.u32 %v1007, 16
      %v1334 = vrot.slane %v1332, 4
      %v1335 = vshll.u32 %v1007, 16
      %v1337 = vrot.slane %v1335, 5
      %v1338 = vor.u32 %v1334, %v1337
      %v1339 = vrot.slane %v1338, 4
      %v1341 = vshll.u32 %v1008, 16
      %v1343 = vrot.slane %v1341, 5
      %v1344 = vsel %vm1018, %v1339, %v1343
      %v1345 = vshrl.u32 %v1008, 16
      %v1347 = vrot.slane %v1345, 4
      %v1348 = vor.u32 %v1347, %v1343
      %v1349 = vrot.slane %v1348, 4
      %v1351 = vshll.u32 %v1009, 16
      %v1353 = vrot.slane %v1351, 5
      %v1354 = vsel %vm1018, %v1349, %v1353
      %v1356 = vshrl.u32 %v1010, 16
      %v1358 = vrot.slane %v1356, 4
      %v1359 = vshll.u32 %v1010, 16
      %v1361 = vrot.slane %v1359, 5
      %v1362 = vor.u32 %v1358, %v1361
      %v1363 = vrot.slane %v1362, 4
      %v1365 = vshll.u32 %v1011, 16
      %v1367 = vrot.slane %v1365, 5
      %v1368 = vsel %vm1018, %v1363, %v1367
      %v1369 = vshrl.u32 %v1011, 16
      %v1371 = vrot.slane %v1369, 4
      %v1372 = vor.u32 %v1371, %v1367
      %v1373 = vrot.slane %v1372, 4
      %v1375 = vshll.u32 %v1012, 16
      %v1377 = vrot.slane %v1375, 5
      %v1378 = vsel %vm1018, %v1373, %v1377
      %v1380 = vshrl.u32 %v1013, 16
      %v1382 = vrot.slane %v1380, 4
      %v1383 = vshll.u32 %v1013, 16
      %v1385 = vrot.slane %v1383, 5
      %v1386 = vor.u32 %v1382, %v1385
      %v1387 = vrot.slane %v1386, 4
      %v1389 = vshll.u32 %v1014, 16
      %v1391 = vrot.slane %v1389, 5
      %v1392 = vsel %vm1018, %v1387, %v1391
      %v1393 = vshrl.u32 %v1014, 16
      %v1395 = vrot.slane %v1393, 4
      %v1396 = vor.u32 %v1395, %v1391
      %v1397 = vrot.slane %v1396, 4
      %v1399 = vshll.u32 %v1015, 16
      %v1401 = vrot.slane %v1399, 5
      %v1402 = vsel %vm1018, %v1397, %v1401
      %v1403 = vld [vmem:[%s5] sm:$0xc]
      %v1404 = vunpack.c.l.b16 %v1032
      %v1405 = vunpack.c.l.b16 %v1042
      %v1406 = vunpack.c.l.b16 %v1056
      %v1407 = vunpack.c.l.b16 %v1066
      %v1408 = vunpack.c.l.b16 %v1080
      %v1409 = vunpack.c.l.b16 %v1090
      %v1410 = vunpack.c.l.b16 %v1104
      %v1411 = vunpack.c.l.b16 %v1114
      %v1412 = vunpack.c.l.b16 %v1128
      %v1413 = vunpack.c.l.b16 %v1138
      %v1414 = vunpack.c.l.b16 %v1152
      %v1415 = vunpack.c.l.b16 %v1162
      %v1416 = vunpack.c.l.b16 %v1176
      %v1417 = vunpack.c.l.b16 %v1186
      %v1418 = vunpack.c.l.b16 %v1200
      %v1419 = vunpack.c.l.b16 %v1210
      %v1420 = vunpack.c.l.b16 %v1224
      %v1421 = vunpack.c.l.b16 %v1234
      %v1422 = vunpack.c.l.b16 %v1248
      %v1423 = vunpack.c.l.b16 %v1258
      %v1424 = vunpack.c.l.b16 %v1272
      %v1425 = vunpack.c.l.b16 %v1282
      %v1426 = vunpack.c.l.b16 %v1296
      %v1427 = vunpack.c.l.b16 %v1306
      %v1428 = vunpack.c.l.b16 %v1320
      %v1429 = vunpack.c.l.b16 %v1330
      %v1430 = vunpack.c.l.b16 %v1344
      %v1431 = vunpack.c.l.b16 %v1354
      %v1432 = vunpack.c.l.b16 %v1368
      %v1433 = vunpack.c.l.b16 %v1378
      %v1434 = vunpack.c.l.b16 %v1392
      %v1435 = vunpack.c.l.b16 %v1402
      %v1436 = vpack.c.b16 %v1405, %v1404
      %v1437 = vpack.c.b16 %v1407, %v1406
      %v1438 = vpack.c.b16 %v1409, %v1408
      %v1439 = vpack.c.b16 %v1411, %v1410
      %v1440 = vpack.c.b16 %v1413, %v1412
      %v1441 = vpack.c.b16 %v1415, %v1414
      %v1442 = vpack.c.b16 %v1417, %v1416
      %v1443 = vpack.c.b16 %v1419, %v1418
      %v1444 = vpack.c.b16 %v1421, %v1420
      %v1445 = vpack.c.b16 %v1423, %v1422
      %v1446 = vpack.c.b16 %v1425, %v1424
      %v1447 = vpack.c.b16 %v1427, %v1426
      %v1448 = vpack.c.b16 %v1429, %v1428
      %v1449 = vpack.c.b16 %v1431, %v1430
      %v1450 = vpack.c.b16 %v1433, %v1432
      %v1451 = vpack.c.b16 %v1435, %v1434
      %v1453 = vunpack.c.l.b16 %v1403
      %v1454 = vpack.c.b16 %v1453, %v1453
      %v1455 = vrot.slane %v1454, 2
      %vm1456 = vcmask 31744
      %v1458 = vsel %vm1456, %v1436, 0
      %v1461 = vsel %vm1456, %v1437, 0
      %v1464 = vsel %vm1456, %v1438, 0
      %v1467 = vsel %vm1456, %v1439, 0
      %v1470 = vsel %vm1456, %v1440, 0
      %v1473 = vsel %vm1456, %v1441, 0
      %v1476 = vsel %vm1456, %v1442, 0
      %v1479 = vsel %vm1456, %v1443, 0
      %v1482 = vsel %vm1456, %v1444, 0
      %v1485 = vsel %vm1456, %v1445, 0
      %v1488 = vsel %vm1456, %v1446, 0
      %v1491 = vsel %vm1456, %v1447, 0
      %v1494 = vsel %vm1456, %v1448, 0
      %v1497 = vsel %vm1456, %v1449, 0
      %v1500 = vsel %vm1456, %v1450, 0
      %v1503 = vsel %vm1456, %v1451, 0
      %vm1505 = vcmask 1041408
      %v1507 = vsel %vm1505, %v1455, 0
      %1509 = vmatprep.subr.bf16.mxu0 0
      %1510 = vmatpush1.bf16.msra.mxu0 0
      %1511 = vmatprep.subr.bf16.mxu0 0
      %1512 = vmatpush1.bf16.msra.mxu0 0
      %1513 = vmatprep.subr.bf16.mxu0 0
      %1514 = vmatpush1.bf16.msra.mxu0 0
      %1515 = vmatprep.subr.bf16.mxu0 0
      %1516 = vmatpush1.bf16.msra.mxu0 0
      %1517 = vmatprep.subr.bf16.mxu0 0
      %1518 = vmatpush1.bf16.msra.mxu0 0
      %1519 = vmatprep.subr.bf16.mxu0 0
      %1520 = vmatpush1.bf16.msra.mxu0 0
      %1521 = vmatprep.subr.bf16.mxu0 0
      %1522 = vmatpush1.bf16.msra.mxu0 0
      %1523 = vmatprep.subr.bf16.mxu0 0
      %1524 = vmatpush1.bf16.msra.mxu0 %v1507
      %1525 = vmatprep.subr.bf16.mxu0 0
      %1526 = vmatpush2.bf16.msra.mxu0 0
      %1527 = vmatprep.subr.bf16.mxu0 0
      %1528 = vmatpush2.bf16.msra.mxu0 0
      %1529 = vmatprep.subr.bf16.mxu0 0
      %1530 = vmatpush2.bf16.msra.mxu0 0
      %1531 = vmatprep.subr.bf16.mxu0 0
      %1532 = vmatpush2.bf16.msra.mxu0 0
      %1533 = vmatprep.subr.bf16.mxu0 0
      %1534 = vmatpush2.bf16.msra.mxu0 0
      %1535 = vmatprep.subr.bf16.mxu0 0
      %1536 = vmatpush2.bf16.msra.mxu0 0
      %1537 = vmatprep.subr.bf16.mxu0 0
      %1538 = vmatpush2.bf16.msra.mxu0 0
      %1539 = vmatprep.subr.bf16.mxu0 0
      %1540 = vmatpush2.bf16.msra.mxu0 0
      %1541 = vmatprep.mubr.bf16.mxu0 0
      %1542 = vmatmul.mubr.bf16.gmra.mxu0 %v1458
      %v1543 = vpop.f32.mrf.mxu0
      %v1544 = vadd.f32 0.0, %v1543
      %v1545 = vpop.f32.mrf.mxu0
      %v1546 = vpop.f32.mrf.mxu0
      %v1547 = vadd.f32 0.0, %v1546
      %v1548 = vpop.f32.mrf.mxu0
      %1549 = vmatprep.mubr.bf16.mxu0 0
      %1550 = vmatmul.mubr.bf16.gmra.mxu0 %v1461
      %v1551 = vpop.f32.mrf.mxu0
      %v1552 = vadd.f32 0.0, %v1551
      %v1553 = vpop.f32.mrf.mxu0
      %v1554 = vpop.f32.mrf.mxu0
      %v1555 = vadd.f32 0.0, %v1554
      %v1556 = vpop.f32.mrf.mxu0
      %1557 = vmatprep.mubr.bf16.mxu0 0
      %1558 = vmatmul.mubr.bf16.gmra.mxu0 %v1464
      %v1559 = vpop.f32.mrf.mxu0
      %v1560 = vadd.f32 0.0, %v1559
      %v1561 = vpop.f32.mrf.mxu0
      %v1562 = vpop.f32.mrf.mxu0
      %v1563 = vadd.f32 0.0, %v1562
      %v1564 = vpop.f32.mrf.mxu0
      %1565 = vmatprep.mubr.bf16.mxu0 0
      %1566 = vmatmul.mubr.bf16.gmra.mxu0 %v1467
      %v1567 = vpop.f32.mrf.mxu0
      %v1568 = vadd.f32 0.0, %v1567
      %v1569 = vpop.f32.mrf.mxu0
      %v1570 = vpop.f32.mrf.mxu0
      %v1571 = vadd.f32 0.0, %v1570
      %v1572 = vpop.f32.mrf.mxu0
      %1573 = vmatprep.mubr.bf16.mxu0 0
      %1574 = vmatmul.mubr.bf16.gmra.mxu0 %v1470
      %v1575 = vpop.f32.mrf.mxu0
      %v1576 = vadd.f32 0.0, %v1575
      %v1577 = vpop.f32.mrf.mxu0
      %v1578 = vpop.f32.mrf.mxu0
      %v1579 = vadd.f32 0.0, %v1578
      %v1580 = vpop.f32.mrf.mxu0
      %1581 = vmatprep.mubr.bf16.mxu0 0
      %1582 = vmatmul.mubr.bf16.gmra.mxu0 %v1473
      %v1583 = vpop.f32.mrf.mxu0
      %v1584 = vadd.f32 0.0, %v1583
      %v1585 = vpop.f32.mrf.mxu0
      %v1586 = vpop.f32.mrf.mxu0
      %v1587 = vadd.f32 0.0, %v1586
      %v1588 = vpop.f32.mrf.mxu0
      %1589 = vmatprep.mubr.bf16.mxu0 0
      %1590 = vmatmul.mubr.bf16.gmra.mxu0 %v1476
      %v1591 = vpop.f32.mrf.mxu0
      %v1592 = vadd.f32 0.0, %v1591
      %v1593 = vpop.f32.mrf.mxu0
      %v1594 = vpop.f32.mrf.mxu0
      %v1595 = vadd.f32 0.0, %v1594
      %v1596 = vpop.f32.mrf.mxu0
      %1597 = vmatprep.mubr.bf16.mxu0 0
      %1598 = vmatmul.mubr.bf16.gmra.mxu0 %v1479
      %v1599 = vpop.f32.mrf.mxu0
      %v1600 = vadd.f32 0.0, %v1599
      %v1601 = vpop.f32.mrf.mxu0
      %v1602 = vpop.f32.mrf.mxu0
      %v1603 = vadd.f32 0.0, %v1602
      %v1604 = vpop.f32.mrf.mxu0
      %1605 = vmatprep.mubr.bf16.mxu0 0
      %1606 = vmatmul.mubr.bf16.gmra.mxu0 %v1482
      %v1607 = vpop.f32.mrf.mxu0
      %v1608 = vadd.f32 0.0, %v1607
      %v1609 = vpop.f32.mrf.mxu0
      %v1610 = vpop.f32.mrf.mxu0
      %v1611 = vadd.f32 0.0, %v1610
      %v1612 = vpop.f32.mrf.mxu0
      %1613 = vmatprep.mubr.bf16.mxu0 0
      %1614 = vmatmul.mubr.bf16.gmra.mxu0 %v1485
      %v1615 = vpop.f32.mrf.mxu0
      %v1616 = vadd.f32 0.0, %v1615
      %v1617 = vpop.f32.mrf.mxu0
      %v1618 = vpop.f32.mrf.mxu0
      %v1619 = vadd.f32 0.0, %v1618
      %v1620 = vpop.f32.mrf.mxu0
      %1621 = vmatprep.mubr.bf16.mxu0 0
      %1622 = vmatmul.mubr.bf16.gmra.mxu0 %v1488
      %v1623 = vpop.f32.mrf.mxu0
      %v1624 = vadd.f32 0.0, %v1623
      %v1625 = vpop.f32.mrf.mxu0
      %v1626 = vpop.f32.mrf.mxu0
      %v1627 = vadd.f32 0.0, %v1626
      %v1628 = vpop.f32.mrf.mxu0
      %1629 = vmatprep.mubr.bf16.mxu0 0
      %1630 = vmatmul.mubr.bf16.gmra.mxu0 %v1491
      %v1631 = vpop.f32.mrf.mxu0
      %v1632 = vadd.f32 0.0, %v1631
      %v1633 = vpop.f32.mrf.mxu0
      %v1634 = vpop.f32.mrf.mxu0
      %v1635 = vadd.f32 0.0, %v1634
      %v1636 = vpop.f32.mrf.mxu0
      %1637 = vmatprep.mubr.bf16.mxu0 0
      %1638 = vmatmul.mubr.bf16.gmra.mxu0 %v1494
      %v1639 = vpop.f32.mrf.mxu0
      %v1640 = vadd.f32 0.0, %v1639
      %v1641 = vpop.f32.mrf.mxu0
      %v1642 = vpop.f32.mrf.mxu0
      %v1643 = vadd.f32 0.0, %v1642
      %v1644 = vpop.f32.mrf.mxu0
      %1645 = vmatprep.mubr.bf16.mxu0 0
      %1646 = vmatmul.mubr.bf16.gmra.mxu0 %v1497
      %v1647 = vpop.f32.mrf.mxu0
      %v1648 = vadd.f32 0.0, %v1647
      %v1649 = vpop.f32.mrf.mxu0
      %v1650 = vpop.f32.mrf.mxu0
      %v1651 = vadd.f32 0.0, %v1650
      %v1652 = vpop.f32.mrf.mxu0
      %1653 = vmatprep.mubr.bf16.mxu0 0
      %1654 = vmatmul.mubr.bf16.gmra.mxu0 %v1500
      %v1655 = vpop.f32.mrf.mxu0
      %v1656 = vadd.f32 0.0, %v1655
      %v1657 = vpop.f32.mrf.mxu0
      %v1658 = vpop.f32.mrf.mxu0
      %v1659 = vadd.f32 0.0, %v1658
      %v1660 = vpop.f32.mrf.mxu0
      %1661 = vmatprep.mubr.bf16.mxu0 0
      %1662 = vmatmul.mubr.bf16.gmra.mxu0 %v1503
      %v1663 = vpop.f32.mrf.mxu0
      %v1664 = vadd.f32 0.0, %v1663
      %v1665 = vpop.f32.mrf.mxu0
      %v1666 = vpop.f32.mrf.mxu0
      %v1667 = vadd.f32 0.0, %v1666
      %v1668 = vpop.f32.mrf.mxu0
      %1669 = vdwg.mxu0
      %v1702 = vunpack.c.l.b16 %v934
      %v1703 = vunpack.c.l.b16 %v935
      %v1704 = vunpack.c.l.b16 %v936
      %v1705 = vunpack.c.l.b16 %v937
      %v1706 = vunpack.c.l.b16 %v938
      %v1707 = vunpack.c.l.b16 %v939
      %v1708 = vunpack.c.l.b16 %v940
      %v1709 = vunpack.c.l.b16 %v941
      %v1710 = vunpack.c.l.b16 %v942
      %v1711 = vunpack.c.l.b16 %v943
      %v1712 = vunpack.c.l.b16 %v944
      %v1713 = vunpack.c.l.b16 %v945
      %v1714 = vunpack.c.l.b16 %v946
      %v1715 = vunpack.c.l.b16 %v947
      %v1716 = vunpack.c.l.b16 %v948
      %v1717 = vunpack.c.l.b16 %v949
      %v1718 = vunpack.c.l.b16 %v950
      %v1719 = vunpack.c.l.b16 %v951
      %v1720 = vunpack.c.l.b16 %v952
      %v1721 = vunpack.c.l.b16 %v953
      %v1722 = vunpack.c.l.b16 %v954
      %v1723 = vunpack.c.l.b16 %v955
      %v1724 = vunpack.c.l.b16 %v956
      %v1725 = vunpack.c.l.b16 %v957
      %v1726 = vunpack.c.l.b16 %v958
      %v1727 = vunpack.c.l.b16 %v959
      %v1728 = vunpack.c.l.b16 %v960
      %v1729 = vunpack.c.l.b16 %v961
      %v1730 = vunpack.c.l.b16 %v962
      %v1731 = vunpack.c.l.b16 %v963
      %v1732 = vunpack.c.l.b16 %v964
      %v1733 = vunpack.c.l.b16 %v965
      %v1734 = vpack.c.b16 %v1703, %v1702
      %v1735 = vpack.c.b16 %v1705, %v1704
      %v1736 = vpack.c.b16 %v1707, %v1706
      %v1737 = vpack.c.b16 %v1709, %v1708
      %v1738 = vpack.c.b16 %v1711, %v1710
      %v1739 = vpack.c.b16 %v1713, %v1712
      %v1740 = vpack.c.b16 %v1715, %v1714
      %v1741 = vpack.c.b16 %v1717, %v1716
      %v1742 = vpack.c.b16 %v1719, %v1718
      %v1743 = vpack.c.b16 %v1721, %v1720
      %v1744 = vpack.c.b16 %v1723, %v1722
      %v1745 = vpack.c.b16 %v1725, %v1724
      %v1746 = vpack.c.b16 %v1727, %v1726
      %v1747 = vpack.c.b16 %v1729, %v1728
      %v1748 = vpack.c.b16 %v1731, %v1730
      %v1749 = vpack.c.b16 %v1733, %v1732
      %v1751 = vsel %vm1456, %v1734, 0
      %v1754 = vsel %vm1456, %v1735, 0
      %v1757 = vsel %vm1456, %v1736, 0
      %v1760 = vsel %vm1456, %v1737, 0
      %v1763 = vsel %vm1456, %v1738, 0
      %v1766 = vsel %vm1456, %v1739, 0
      %v1769 = vsel %vm1456, %v1740, 0
      %v1772 = vsel %vm1456, %v1741, 0
      %v1775 = vsel %vm1456, %v1742, 0
      %v1778 = vsel %vm1456, %v1743, 0
      %v1781 = vsel %vm1456, %v1744, 0
      %v1784 = vsel %vm1456, %v1745, 0
      %v1787 = vsel %vm1456, %v1746, 0
      %v1790 = vsel %vm1456, %v1747, 0
      %v1793 = vsel %vm1456, %v1748, 0
      %v1796 = vsel %vm1456, %v1749, 0
      %v1799 = vsel %vm1505, %v966, 0
      %1801 = vmatprep.subr.bf16.mxu0 0
      %1802 = vmatpush1.bf16.msra.mxu0 0
      %1803 = vmatprep.subr.bf16.mxu0 0
      %1804 = vmatpush1.bf16.msra.mxu0 0
      %1805 = vmatprep.subr.bf16.mxu0 0
      %1806 = vmatpush1.bf16.msra.mxu0 0
      %1807 = vmatprep.subr.bf16.mxu0 0
      %1808 = vmatpush1.bf16.msra.mxu0 0
      %1809 = vmatprep.subr.bf16.mxu0 0
      %1810 = vmatpush1.bf16.msra.mxu0 0
      %1811 = vmatprep.subr.bf16.mxu0 0
      %1812 = vmatpush1.bf16.msra.mxu0 0
      %1813 = vmatprep.subr.bf16.mxu0 0
      %1814 = vmatpush1.bf16.msra.mxu0 0
      %1815 = vmatprep.subr.bf16.mxu0 0
      %1816 = vmatpush1.bf16.msra.mxu0 %v1799
      %1817 = vmatprep.subr.bf16.mxu0 0
      %1818 = vmatpush2.bf16.msra.mxu0 0
      %1819 = vmatprep.subr.bf16.mxu0 0
      %1820 = vmatpush2.bf16.msra.mxu0 0
      %1821 = vmatprep.subr.bf16.mxu0 0
      %1822 = vmatpush2.bf16.msra.mxu0 0
      %1823 = vmatprep.subr.bf16.mxu0 0
      %1824 = vmatpush2.bf16.msra.mxu0 0
      %1825 = vmatprep.subr.bf16.mxu0 0
      %1826 = vmatpush2.bf16.msra.mxu0 0
      %1827 = vmatprep.subr.bf16.mxu0 0
      %1828 = vmatpush2.bf16.msra.mxu0 0
      %1829 = vmatprep.subr.bf16.mxu0 0
      %1830 = vmatpush2.bf16.msra.mxu0 0
      %1831 = vmatprep.subr.bf16.mxu0 0
      %1832 = vmatpush2.bf16.msra.mxu0 0
      %1833 = vmatprep.mubr.bf16.mxu0 0
      %1834 = vmatmul.mubr.bf16.gmra.mxu0 %v1751
      %v1835 = vpop.f32.mrf.mxu0
      %v1836 = vadd.f32 %v1544, %v1835
      %v1837 = vpop.f32.mrf.mxu0
      %v1838 = vpop.f32.mrf.mxu0
      %v1839 = vadd.f32 %v1547, %v1838
      %v1840 = vpop.f32.mrf.mxu0
      %1841 = vmatprep.mubr.bf16.mxu0 0
      %1842 = vmatmul.mubr.bf16.gmra.mxu0 %v1754
      %v1843 = vpop.f32.mrf.mxu0
      %v1844 = vadd.f32 %v1552, %v1843
      %v1845 = vpop.f32.mrf.mxu0
      %v1846 = vpop.f32.mrf.mxu0
      %v1847 = vadd.f32 %v1555, %v1846
      %v1848 = vpop.f32.mrf.mxu0
      %1849 = vmatprep.mubr.bf16.mxu0 0
      %1850 = vmatmul.mubr.bf16.gmra.mxu0 %v1757
      %v1851 = vpop.f32.mrf.mxu0
      %v1852 = vadd.f32 %v1560, %v1851
      %v1853 = vpop.f32.mrf.mxu0
      %v1854 = vpop.f32.mrf.mxu0
      %v1855 = vadd.f32 %v1563, %v1854
      %v1856 = vpop.f32.mrf.mxu0
      %1857 = vmatprep.mubr.bf16.mxu0 0
      %1858 = vmatmul.mubr.bf16.gmra.mxu0 %v1760
      %v1859 = vpop.f32.mrf.mxu0
      %v1860 = vadd.f32 %v1568, %v1859
      %v1861 = vpop.f32.mrf.mxu0
      %v1862 = vpop.f32.mrf.mxu0
      %v1863 = vadd.f32 %v1571, %v1862
      %v1864 = vpop.f32.mrf.mxu0
      %1865 = vmatprep.mubr.bf16.mxu0 0
      %1866 = vmatmul.mubr.bf16.gmra.mxu0 %v1763
      %v1867 = vpop.f32.mrf.mxu0
      %v1868 = vadd.f32 %v1576, %v1867
      %v1869 = vpop.f32.mrf.mxu0
      %v1870 = vpop.f32.mrf.mxu0
      %v1871 = vadd.f32 %v1579, %v1870
      %v1872 = vpop.f32.mrf.mxu0
      %1873 = vmatprep.mubr.bf16.mxu0 0
      %1874 = vmatmul.mubr.bf16.gmra.mxu0 %v1766
      %v1875 = vpop.f32.mrf.mxu0
      %v1876 = vadd.f32 %v1584, %v1875
      %v1877 = vpop.f32.mrf.mxu0
      %v1878 = vpop.f32.mrf.mxu0
      %v1879 = vadd.f32 %v1587, %v1878
      %v1880 = vpop.f32.mrf.mxu0
      %1881 = vmatprep.mubr.bf16.mxu0 0
      %1882 = vmatmul.mubr.bf16.gmra.mxu0 %v1769
      %v1883 = vpop.f32.mrf.mxu0
      %v1884 = vadd.f32 %v1592, %v1883
      %v1885 = vpop.f32.mrf.mxu0
      %v1886 = vpop.f32.mrf.mxu0
      %v1887 = vadd.f32 %v1595, %v1886
      %v1888 = vpop.f32.mrf.mxu0
      %1889 = vmatprep.mubr.bf16.mxu0 0
      %1890 = vmatmul.mubr.bf16.gmra.mxu0 %v1772
      %v1891 = vpop.f32.mrf.mxu0
      %v1892 = vadd.f32 %v1600, %v1891
      %v1893 = vpop.f32.mrf.mxu0
      %v1894 = vpop.f32.mrf.mxu0
      %v1895 = vadd.f32 %v1603, %v1894
      %v1896 = vpop.f32.mrf.mxu0
      %1897 = vmatprep.mubr.bf16.mxu0 0
      %1898 = vmatmul.mubr.bf16.gmra.mxu0 %v1775
      %v1899 = vpop.f32.mrf.mxu0
      %v1900 = vadd.f32 %v1608, %v1899
      %v1901 = vpop.f32.mrf.mxu0
      %v1902 = vpop.f32.mrf.mxu0
      %v1903 = vadd.f32 %v1611, %v1902
      %v1904 = vpop.f32.mrf.mxu0
      %1905 = vmatprep.mubr.bf16.mxu0 0
      %1906 = vmatmul.mubr.bf16.gmra.mxu0 %v1778
      %v1907 = vpop.f32.mrf.mxu0
      %v1908 = vadd.f32 %v1616, %v1907
      %v1909 = vpop.f32.mrf.mxu0
      %v1910 = vpop.f32.mrf.mxu0
      %v1911 = vadd.f32 %v1619, %v1910
      %v1912 = vpop.f32.mrf.mxu0
      %1913 = vmatprep.mubr.bf16.mxu0 0
      %1914 = vmatmul.mubr.bf16.gmra.mxu0 %v1781
      %v1915 = vpop.f32.mrf.mxu0
      %v1916 = vadd.f32 %v1624, %v1915
      %v1917 = vpop.f32.mrf.mxu0
      %v1918 = vpop.f32.mrf.mxu0
      %v1919 = vadd.f32 %v1627, %v1918
      %v1920 = vpop.f32.mrf.mxu0
      %1921 = vmatprep.mubr.bf16.mxu0 0
      %1922 = vmatmul.mubr.bf16.gmra.mxu0 %v1784
      %v1923 = vpop.f32.mrf.mxu0
      %v1924 = vadd.f32 %v1632, %v1923
      %v1925 = vpop.f32.mrf.mxu0
      %v1926 = vpop.f32.mrf.mxu0
      %v1927 = vadd.f32 %v1635, %v1926
      %v1928 = vpop.f32.mrf.mxu0
      %1929 = vmatprep.mubr.bf16.mxu0 0
      %1930 = vmatmul.mubr.bf16.gmra.mxu0 %v1787
      %v1931 = vpop.f32.mrf.mxu0
      %v1932 = vadd.f32 %v1640, %v1931
      %v1933 = vpop.f32.mrf.mxu0
      %v1934 = vpop.f32.mrf.mxu0
      %v1935 = vadd.f32 %v1643, %v1934
      %v1936 = vpop.f32.mrf.mxu0
      %1937 = vmatprep.mubr.bf16.mxu0 0
      %1938 = vmatmul.mubr.bf16.gmra.mxu0 %v1790
      %v1939 = vpop.f32.mrf.mxu0
      %v1940 = vadd.f32 %v1648, %v1939
      %v1941 = vpop.f32.mrf.mxu0
      %v1942 = vpop.f32.mrf.mxu0
      %v1943 = vadd.f32 %v1651, %v1942
      %v1944 = vpop.f32.mrf.mxu0
      %1945 = vmatprep.mubr.bf16.mxu0 0
      %1946 = vmatmul.mubr.bf16.gmra.mxu0 %v1793
      %v1947 = vpop.f32.mrf.mxu0
      %v1948 = vadd.f32 %v1656, %v1947
      %v1949 = vpop.f32.mrf.mxu0
      %v1950 = vpop.f32.mrf.mxu0
      %v1951 = vadd.f32 %v1659, %v1950
      %v1952 = vpop.f32.mrf.mxu0
      %1953 = vmatprep.mubr.bf16.mxu0 0
      %1954 = vmatmul.mubr.bf16.gmra.mxu0 %v1796
      %v1955 = vpop.f32.mrf.mxu0
      %v1956 = vadd.f32 %v1664, %v1955
      %v1957 = vpop.f32.mrf.mxu0
      %v1958 = vpop.f32.mrf.mxu0
      %v1959 = vadd.f32 %v1667, %v1958
      %v1960 = vpop.f32.mrf.mxu0
      %1961 = vdwg.mxu0
      %v1962 = vld [vmem:[%s933] sm:$0xf]
      %v1963 = vld [vmem:[%s933 + $0x4] sm:$0xf]
      %v1964 = vld [vmem:[%s933 + $0x8] sm:$0x1]
      %v1965 = vld [vmem:[%s933 + $0xc] sm:$0xf]
      %v1966 = vld [vmem:[%s933 + $0x10] sm:$0xf]
      %v1967 = vld [vmem:[%s933 + $0x14] sm:$0x1]
      %v1968 = vld [vmem:[%s933 + $0x18] sm:$0xf]
      %v1969 = vld [vmem:[%s933 + $0x1c] sm:$0xf]
      %v1970 = vld [vmem:[%s933 + $0x20] sm:$0x1]
      %v1971 = vld [vmem:[%s933 + $0x24] sm:$0xf]
      %v1972 = vld [vmem:[%s933 + $0x28] sm:$0xf]
      %v1973 = vld [vmem:[%s933 + $0x2c] sm:$0x1]
      %v1974 = vld [vmem:[%s933 + $0x30] sm:$0xf]
      %v1975 = vld [vmem:[%s933 + $0x34] sm:$0xf]
      %v1976 = vld [vmem:[%s933 + $0x38] sm:$0x1]
      %v1977 = vld [vmem:[%s933 + $0x3c] sm:$0xf]
      %v1978 = vld [vmem:[%s933 + $0x40] sm:$0xf]
      %v1979 = vld [vmem:[%s933 + $0x44] sm:$0x1]
      %v1980 = vld [vmem:[%s933 + $0x48] sm:$0xf]
      %v1981 = vld [vmem:[%s933 + $0x4c] sm:$0xf]
      %v1982 = vld [vmem:[%s933 + $0x50] sm:$0x1]
      %v1983 = vld [vmem:[%s933 + $0x54] sm:$0xf]
      %v1984 = vld [vmem:[%s933 + $0x58] sm:$0xf]
      %v1985 = vld [vmem:[%s933 + $0x5c] sm:$0x1]
      %v1986 = vld [vmem:[%s933 + $0x60] sm:$0xf]
      %v1987 = vld [vmem:[%s933 + $0x64] sm:$0xf]
      %v1988 = vld [vmem:[%s933 + $0x68] sm:$0x1]
      %v1989 = vld [vmem:[%s933 + $0x6c] sm:$0xf]
      %v1990 = vld [vmem:[%s933 + $0x70] sm:$0xf]
      %v1991 = vld [vmem:[%s933 + $0x74] sm:$0x1]
      %v1992 = vld [vmem:[%s933 + $0x78] sm:$0xf]
      %v1993 = vld [vmem:[%s933 + $0x7c] sm:$0xf]
      %v1994 = vld [vmem:[%s933 + $0x80] sm:$0x1]
      %v1995 = vld [vmem:[%s933 + $0x84] sm:$0xf]
      %v1996 = vld [vmem:[%s933 + $0x88] sm:$0xf]
      %v1997 = vld [vmem:[%s933 + $0x8c] sm:$0x1]
      %v1998 = vld [vmem:[%s933 + $0x90] sm:$0xf]
      %v1999 = vld [vmem:[%s933 + $0x94] sm:$0xf]
      %v2000 = vld [vmem:[%s933 + $0x98] sm:$0x1]
      %v2001 = vld [vmem:[%s933 + $0x9c] sm:$0xf]
      %v2002 = vld [vmem:[%s933 + $0xa0] sm:$0xf]
      %v2003 = vld [vmem:[%s933 + $0xa4] sm:$0x1]
      %v2004 = vld [vmem:[%s933 + $0xa8] sm:$0xf]
      %v2005 = vld [vmem:[%s933 + $0xac] sm:$0xf]
      %v2006 = vld [vmem:[%s933 + $0xb0] sm:$0x1]
      %v2007 = vld [vmem:[%s933 + $0xb4] sm:$0xf]
      %v2008 = vld [vmem:[%s933 + $0xb8] sm:$0xf]
      %v2009 = vld [vmem:[%s933 + $0xbc] sm:$0x1]
      %v2011 = vshrl.u32 %v1962, 16
      %v2013 = vrot.slane %v2011, 4
      %v2014 = vshll.u32 %v1962, 16
      %v2016 = vrot.slane %v2014, 5
      %v2017 = vor.u32 %v2013, %v2016
      %v2018 = vrot.slane %v2017, 4
      %v2020 = vshll.u32 %v1963, 16
      %v2022 = vrot.slane %v2020, 5
      %v2023 = vsel %vm1018, %v2018, %v2022
      %v2024 = vshrl.u32 %v1963, 16
      %v2026 = vrot.slane %v2024, 4
      %v2027 = vor.u32 %v2026, %v2022
      %v2028 = vrot.slane %v2027, 4
      %v2030 = vshll.u32 %v1964, 16
      %v2032 = vrot.slane %v2030, 5
      %v2033 = vsel %vm1018, %v2028, %v2032
      %v2035 = vshrl.u32 %v1965, 16
      %v2037 = vrot.slane %v2035, 4
      %v2038 = vshll.u32 %v1965, 16
      %v2040 = vrot.slane %v2038, 5
      %v2041 = vor.u32 %v2037, %v2040
      %v2042 = vrot.slane %v2041, 4
      %v2044 = vshll.u32 %v1966, 16
      %v2046 = vrot.slane %v2044, 5
      %v2047 = vsel %vm1018, %v2042, %v2046
      %v2048 = vshrl.u32 %v1966, 16
      %v2050 = vrot.slane %v2048, 4
      %v2051 = vor.u32 %v2050, %v2046
      %v2052 = vrot.slane %v2051, 4
      %v2054 = vshll.u32 %v1967, 16
      %v2056 = vrot.slane %v2054, 5
      %v2057 = vsel %vm1018, %v2052, %v2056
      %v2059 = vshrl.u32 %v1968, 16
      %v2061 = vrot.slane %v2059, 4
      %v2062 = vshll.u32 %v1968, 16
      %v2064 = vrot.slane %v2062, 5
      %v2065 = vor.u32 %v2061, %v2064
      %v2066 = vrot.slane %v2065, 4
      %v2068 = vshll.u32 %v1969, 16
      %v2070 = vrot.slane %v2068, 5
      %v2071 = vsel %vm1018, %v2066, %v2070
      %v2072 = vshrl.u32 %v1969, 16
      %v2074 = vrot.slane %v2072, 4
      %v2075 = vor.u32 %v2074, %v2070
      %v2076 = vrot.slane %v2075, 4
      %v2078 = vshll.u32 %v1970, 16
      %v2080 = vrot.slane %v2078, 5
      %v2081 = vsel %vm1018, %v2076, %v2080
      %v2083 = vshrl.u32 %v1971, 16
      %v2085 = vrot.slane %v2083, 4
      %v2086 = vshll.u32 %v1971, 16
      %v2088 = vrot.slane %v2086, 5
      %v2089 = vor.u32 %v2085, %v2088
      %v2090 = vrot.slane %v2089, 4
      %v2092 = vshll.u32 %v1972, 16
      %v2094 = vrot.slane %v2092, 5
      %v2095 = vsel %vm1018, %v2090, %v2094
      %v2096 = vshrl.u32 %v1972, 16
      %v2098 = vrot.slane %v2096, 4
      %v2099 = vor.u32 %v2098, %v2094
      %v2100 = vrot.slane %v2099, 4
      %v2102 = vshll.u32 %v1973, 16
      %v2104 = vrot.slane %v2102, 5
      %v2105 = vsel %vm1018, %v2100, %v2104
      %v2107 = vshrl.u32 %v1974, 16
      %v2109 = vrot.slane %v2107, 4
      %v2110 = vshll.u32 %v1974, 16
      %v2112 = vrot.slane %v2110, 5
      %v2113 = vor.u32 %v2109, %v2112
      %v2114 = vrot.slane %v2113, 4
      %v2116 = vshll.u32 %v1975, 16
      %v2118 = vrot.slane %v2116, 5
      %v2119 = vsel %vm1018, %v2114, %v2118
      %v2120 = vshrl.u32 %v1975, 16
      %v2122 = vrot.slane %v2120, 4
      %v2123 = vor.u32 %v2122, %v2118
      %v2124 = vrot.slane %v2123, 4
      %v2126 = vshll.u32 %v1976, 16
      %v2128 = vrot.slane %v2126, 5
      %v2129 = vsel %vm1018, %v2124, %v2128
      %v2131 = vshrl.u32 %v1977, 16
      %v2133 = vrot.slane %v2131, 4
      %v2134 = vshll.u32 %v1977, 16
      %v2136 = vrot.slane %v2134, 5
      %v2137 = vor.u32 %v2133, %v2136
      %v2138 = vrot.slane %v2137, 4
      %v2140 = vshll.u32 %v1978, 16
      %v2142 = vrot.slane %v2140, 5
      %v2143 = vsel %vm1018, %v2138, %v2142
      %v2144 = vshrl.u32 %v1978, 16
      %v2146 = vrot.slane %v2144, 4
      %v2147 = vor.u32 %v2146, %v2142
      %v2148 = vrot.slane %v2147, 4
      %v2150 = vshll.u32 %v1979, 16
      %v2152 = vrot.slane %v2150, 5
      %v2153 = vsel %vm1018, %v2148, %v2152
      %v2155 = vshrl.u32 %v1980, 16
      %v2157 = vrot.slane %v2155, 4
      %v2158 = vshll.u32 %v1980, 16
      %v2160 = vrot.slane %v2158, 5
      %v2161 = vor.u32 %v2157, %v2160
      %v2162 = vrot.slane %v2161, 4
      %v2164 = vshll.u32 %v1981, 16
      %v2166 = vrot.slane %v2164, 5
      %v2167 = vsel %vm1018, %v2162, %v2166
      %v2168 = vshrl.u32 %v1981, 16
      %v2170 = vrot.slane %v2168, 4
      %v2171 = vor.u32 %v2170, %v2166
      %v2172 = vrot.slane %v2171, 4
      %v2174 = vshll.u32 %v1982, 16
      %v2176 = vrot.slane %v2174, 5
      %v2177 = vsel %vm1018, %v2172, %v2176
      %v2179 = vshrl.u32 %v1983, 16
      %v2181 = vrot.slane %v2179, 4
      %v2182 = vshll.u32 %v1983, 16
      %v2184 = vrot.slane %v2182, 5
      %v2185 = vor.u32 %v2181, %v2184
      %v2186 = vrot.slane %v2185, 4
      %v2188 = vshll.u32 %v1984, 16
      %v2190 = vrot.slane %v2188, 5
      %v2191 = vsel %vm1018, %v2186, %v2190
      %v2192 = vshrl.u32 %v1984, 16
      %v2194 = vrot.slane %v2192, 4
      %v2195 = vor.u32 %v2194, %v2190
      %v2196 = vrot.slane %v2195, 4
      %v2198 = vshll.u32 %v1985, 16
      %v2200 = vrot.slane %v2198, 5
      %v2201 = vsel %vm1018, %v2196, %v2200
      %v2203 = vshrl.u32 %v1986, 16
      %v2205 = vrot.slane %v2203, 4
      %v2206 = vshll.u32 %v1986, 16
      %v2208 = vrot.slane %v2206, 5
      %v2209 = vor.u32 %v2205, %v2208
      %v2210 = vrot.slane %v2209, 4
      %v2212 = vshll.u32 %v1987, 16
      %v2214 = vrot.slane %v2212, 5
      %v2215 = vsel %vm1018, %v2210, %v2214
      %v2216 = vshrl.u32 %v1987, 16
      %v2218 = vrot.slane %v2216, 4
      %v2219 = vor.u32 %v2218, %v2214
      %v2220 = vrot.slane %v2219, 4
      %v2222 = vshll.u32 %v1988, 16
      %v2224 = vrot.slane %v2222, 5
      %v2225 = vsel %vm1018, %v2220, %v2224
      %v2227 = vshrl.u32 %v1989, 16
      %v2229 = vrot.slane %v2227, 4
      %v2230 = vshll.u32 %v1989, 16
      %v2232 = vrot.slane %v2230, 5
      %v2233 = vor.u32 %v2229, %v2232
      %v2234 = vrot.slane %v2233, 4
      %v2236 = vshll.u32 %v1990, 16
      %v2238 = vrot.slane %v2236, 5
      %v2239 = vsel %vm1018, %v2234, %v2238
      %v2240 = vshrl.u32 %v1990, 16
      %v2242 = vrot.slane %v2240, 4
      %v2243 = vor.u32 %v2242, %v2238
      %v2244 = vrot.slane %v2243, 4
      %v2246 = vshll.u32 %v1991, 16
      %v2248 = vrot.slane %v2246, 5
      %v2249 = vsel %vm1018, %v2244, %v2248
      %v2251 = vshrl.u32 %v1992, 16
      %v2253 = vrot.slane %v2251, 4
      %v2254 = vshll.u32 %v1992, 16
      %v2256 = vrot.slane %v2254, 5
      %v2257 = vor.u32 %v2253, %v2256
      %v2258 = vrot.slane %v2257, 4
      %v2260 = vshll.u32 %v1993, 16
      %v2262 = vrot.slane %v2260, 5
      %v2263 = vsel %vm1018, %v2258, %v2262
      %v2264 = vshrl.u32 %v1993, 16
      %v2266 = vrot.slane %v2264, 4
      %v2267 = vor.u32 %v2266, %v2262
      %v2268 = vrot.slane %v2267, 4
      %v2270 = vshll.u32 %v1994, 16
      %v2272 = vrot.slane %v2270, 5
      %v2273 = vsel %vm1018, %v2268, %v2272
      %v2275 = vshrl.u32 %v1995, 16
      %v2277 = vrot.slane %v2275, 4
      %v2278 = vshll.u32 %v1995, 16
      %v2280 = vrot.slane %v2278, 5
      %v2281 = vor.u32 %v2277, %v2280
      %v2282 = vrot.slane %v2281, 4
      %v2284 = vshll.u32 %v1996, 16
      %v2286 = vrot.slane %v2284, 5
      %v2287 = vsel %vm1018, %v2282, %v2286
      %v2288 = vshrl.u32 %v1996, 16
      %v2290 = vrot.slane %v2288, 4
      %v2291 = vor.u32 %v2290, %v2286
      %v2292 = vrot.slane %v2291, 4
      %v2294 = vshll.u32 %v1997, 16
      %v2296 = vrot.slane %v2294, 5
      %v2297 = vsel %vm1018, %v2292, %v2296
      %v2299 = vshrl.u32 %v1998, 16
      %v2301 = vrot.slane %v2299, 4
      %v2302 = vshll.u32 %v1998, 16
      %v2304 = vrot.slane %v2302, 5
      %v2305 = vor.u32 %v2301, %v2304
      %v2306 = vrot.slane %v2305, 4
      %v2308 = vshll.u32 %v1999, 16
      %v2310 = vrot.slane %v2308, 5
      %v2311 = vsel %vm1018, %v2306, %v2310
      %v2312 = vshrl.u32 %v1999, 16
      %v2314 = vrot.slane %v2312, 4
      %v2315 = vor.u32 %v2314, %v2310
      %v2316 = vrot.slane %v2315, 4
      %v2318 = vshll.u32 %v2000, 16
      %v2320 = vrot.slane %v2318, 5
      %v2321 = vsel %vm1018, %v2316, %v2320
      %v2323 = vshrl.u32 %v2001, 16
      %v2325 = vrot.slane %v2323, 4
      %v2326 = vshll.u32 %v2001, 16
      %v2328 = vrot.slane %v2326, 5
      %v2329 = vor.u32 %v2325, %v2328
      %v2330 = vrot.slane %v2329, 4
      %v2332 = vshll.u32 %v2002, 16
      %v2334 = vrot.slane %v2332, 5
      %v2335 = vsel %vm1018, %v2330, %v2334
      %v2336 = vshrl.u32 %v2002, 16
      %v2338 = vrot.slane %v2336, 4
      %v2339 = vor.u32 %v2338, %v2334
      %v2340 = vrot.slane %v2339, 4
      %v2342 = vshll.u32 %v2003, 16
      %v2344 = vrot.slane %v2342, 5
      %v2345 = vsel %vm1018, %v2340, %v2344
      %v2347 = vshrl.u32 %v2004, 16
      %v2349 = vrot.slane %v2347, 4
      %v2350 = vshll.u32 %v2004, 16
      %v2352 = vrot.slane %v2350, 5
      %v2353 = vor.u32 %v2349, %v2352
      %v2354 = vrot.slane %v2353, 4
      %v2356 = vshll.u32 %v2005, 16
      %v2358 = vrot.slane %v2356, 5
      %v2359 = vsel %vm1018, %v2354, %v2358
      %v2360 = vshrl.u32 %v2005, 16
      %v2362 = vrot.slane %v2360, 4
      %v2363 = vor.u32 %v2362, %v2358
      %v2364 = vrot.slane %v2363, 4
      %v2366 = vshll.u32 %v2006, 16
      %v2368 = vrot.slane %v2366, 5
      %v2369 = vsel %vm1018, %v2364, %v2368
      %v2371 = vshrl.u32 %v2007, 16
      %v2373 = vrot.slane %v2371, 4
      %v2374 = vshll.u32 %v2007, 16
      %v2376 = vrot.slane %v2374, 5
      %v2377 = vor.u32 %v2373, %v2376
      %v2378 = vrot.slane %v2377, 4
      %v2380 = vshll.u32 %v2008, 16
      %v2382 = vrot.slane %v2380, 5
      %v2383 = vsel %vm1018, %v2378, %v2382
      %v2384 = vshrl.u32 %v2008, 16
      %v2386 = vrot.slane %v2384, 4
      %v2387 = vor.u32 %v2386, %v2382
      %v2388 = vrot.slane %v2387, 4
      %v2390 = vshll.u32 %v2009, 16
      %v2392 = vrot.slane %v2390, 5
      %v2393 = vsel %vm1018, %v2388, %v2392
      %v2394 = vld [vmem:[%s5 + $0x4] sm:$0x3]
      %v2395 = vunpack.c.l.b16 %v2023
      %v2396 = vunpack.c.l.b16 %v2033
      %v2397 = vunpack.c.l.b16 %v2047
      %v2398 = vunpack.c.l.b16 %v2057
      %v2399 = vunpack.c.l.b16 %v2071
      %v2400 = vunpack.c.l.b16 %v2081
      %v2401 = vunpack.c.l.b16 %v2095
      %v2402 = vunpack.c.l.b16 %v2105
      %v2403 = vunpack.c.l.b16 %v2119
      %v2404 = vunpack.c.l.b16 %v2129
      %v2405 = vunpack.c.l.b16 %v2143
      %v2406 = vunpack.c.l.b16 %v2153
      %v2407 = vunpack.c.l.b16 %v2167
      %v2408 = vunpack.c.l.b16 %v2177
      %v2409 = vunpack.c.l.b16 %v2191
      %v2410 = vunpack.c.l.b16 %v2201
      %v2411 = vunpack.c.l.b16 %v2215
      %v2412 = vunpack.c.l.b16 %v2225
      %v2413 = vunpack.c.l.b16 %v2239
      %v2414 = vunpack.c.l.b16 %v2249
      %v2415 = vunpack.c.l.b16 %v2263
      %v2416 = vunpack.c.l.b16 %v2273
      %v2417 = vunpack.c.l.b16 %v2287
      %v2418 = vunpack.c.l.b16 %v2297
      %v2419 = vunpack.c.l.b16 %v2311
      %v2420 = vunpack.c.l.b16 %v2321
      %v2421 = vunpack.c.l.b16 %v2335
      %v2422 = vunpack.c.l.b16 %v2345
      %v2423 = vunpack.c.l.b16 %v2359
      %v2424 = vunpack.c.l.b16 %v2369
      %v2425 = vunpack.c.l.b16 %v2383
      %v2426 = vunpack.c.l.b16 %v2393
      %v2427 = vpack.c.b16 %v2396, %v2395
      %v2428 = vpack.c.b16 %v2398, %v2397
      %v2429 = vpack.c.b16 %v2400, %v2399
      %v2430 = vpack.c.b16 %v2402, %v2401
      %v2431 = vpack.c.b16 %v2404, %v2403
      %v2432 = vpack.c.b16 %v2406, %v2405
      %v2433 = vpack.c.b16 %v2408, %v2407
      %v2434 = vpack.c.b16 %v2410, %v2409
      %v2435 = vpack.c.b16 %v2412, %v2411
      %v2436 = vpack.c.b16 %v2414, %v2413
      %v2437 = vpack.c.b16 %v2416, %v2415
      %v2438 = vpack.c.b16 %v2418, %v2417
      %v2439 = vpack.c.b16 %v2420, %v2419
      %v2440 = vpack.c.b16 %v2422, %v2421
      %v2441 = vpack.c.b16 %v2424, %v2423
      %v2442 = vpack.c.b16 %v2426, %v2425
      %v2444 = vsel %vm1456, %v2427, 0
      %v2447 = vsel %vm1456, %v2428, 0
      %v2450 = vsel %vm1456, %v2429, 0
      %v2453 = vsel %vm1456, %v2430, 0
      %v2456 = vsel %vm1456, %v2431, 0
      %v2459 = vsel %vm1456, %v2432, 0
      %v2462 = vsel %vm1456, %v2433, 0
      %v2465 = vsel %vm1456, %v2434, 0
      %v2468 = vsel %vm1456, %v2435, 0
      %v2471 = vsel %vm1456, %v2436, 0
      %v2474 = vsel %vm1456, %v2437, 0
      %v2477 = vsel %vm1456, %v2438, 0
      %v2480 = vsel %vm1456, %v2439, 0
      %v2483 = vsel %vm1456, %v2440, 0
      %v2486 = vsel %vm1456, %v2441, 0
      %v2489 = vsel %vm1456, %v2442, 0
      %v2492 = vsel %vm1505, %v2394, 0
      %2494 = vmatprep.subr.bf16.mxu0 0
      %2495 = vmatpush1.bf16.msra.mxu0 0
      %2496 = vmatprep.subr.bf16.mxu0 0
      %2497 = vmatpush1.bf16.msra.mxu0 0
      %2498 = vmatprep.subr.bf16.mxu0 0
      %2499 = vmatpush1.bf16.msra.mxu0 0
      %2500 = vmatprep.subr.bf16.mxu0 0
      %2501 = vmatpush1.bf16.msra.mxu0 0
      %2502 = vmatprep.subr.bf16.mxu0 0
      %2503 = vmatpush1.bf16.msra.mxu0 0
      %2504 = vmatprep.subr.bf16.mxu0 0
      %2505 = vmatpush1.bf16.msra.mxu0 0
      %2506 = vmatprep.subr.bf16.mxu0 0
      %2507 = vmatpush1.bf16.msra.mxu0 0
      %2508 = vmatprep.subr.bf16.mxu0 0
      %2509 = vmatpush1.bf16.msra.mxu0 %v2492
      %2510 = vmatprep.subr.bf16.mxu0 0
      %2511 = vmatpush2.bf16.msra.mxu0 0
      %2512 = vmatprep.subr.bf16.mxu0 0
      %2513 = vmatpush2.bf16.msra.mxu0 0
      %2514 = vmatprep.subr.bf16.mxu0 0
      %2515 = vmatpush2.bf16.msra.mxu0 0
      %2516 = vmatprep.subr.bf16.mxu0 0
      %2517 = vmatpush2.bf16.msra.mxu0 0
      %2518 = vmatprep.subr.bf16.mxu0 0
      %2519 = vmatpush2.bf16.msra.mxu0 0
      %2520 = vmatprep.subr.bf16.mxu0 0
      %2521 = vmatpush2.bf16.msra.mxu0 0
      %2522 = vmatprep.subr.bf16.mxu0 0
      %2523 = vmatpush2.bf16.msra.mxu0 0
      %2524 = vmatprep.subr.bf16.mxu0 0
      %2525 = vmatpush2.bf16.msra.mxu0 0
      %2526 = vmatprep.mubr.bf16.mxu0 0
      %2527 = vmatmul.mubr.bf16.gmra.mxu0 %v2444
      %v2528 = vpop.f32.mrf.mxu0
      %v2529 = vadd.f32 0.0, %v2528
      %v2530 = vpop.f32.mrf.mxu0
      %v2531 = vpop.f32.mrf.mxu0
      %v2532 = vadd.f32 0.0, %v2531
      %v2533 = vpop.f32.mrf.mxu0
      %2534 = vmatprep.mubr.bf16.mxu0 0
      %2535 = vmatmul.mubr.bf16.gmra.mxu0 %v2447
      %v2536 = vpop.f32.mrf.mxu0
      %v2537 = vadd.f32 0.0, %v2536
      %v2538 = vpop.f32.mrf.mxu0
      %v2539 = vpop.f32.mrf.mxu0
      %v2540 = vadd.f32 0.0, %v2539
      %v2541 = vpop.f32.mrf.mxu0
      %2542 = vmatprep.mubr.bf16.mxu0 0
      %2543 = vmatmul.mubr.bf16.gmra.mxu0 %v2450
      %v2544 = vpop.f32.mrf.mxu0
      %v2545 = vadd.f32 0.0, %v2544
      %v2546 = vpop.f32.mrf.mxu0
      %v2547 = vpop.f32.mrf.mxu0
      %v2548 = vadd.f32 0.0, %v2547
      %v2549 = vpop.f32.mrf.mxu0
      %2550 = vmatprep.mubr.bf16.mxu0 0
      %2551 = vmatmul.mubr.bf16.gmra.mxu0 %v2453
      %v2552 = vpop.f32.mrf.mxu0
      %v2553 = vadd.f32 0.0, %v2552
      %v2554 = vpop.f32.mrf.mxu0
      %v2555 = vpop.f32.mrf.mxu0
      %v2556 = vadd.f32 0.0, %v2555
      %v2557 = vpop.f32.mrf.mxu0
      %2558 = vmatprep.mubr.bf16.mxu0 0
      %2559 = vmatmul.mubr.bf16.gmra.mxu0 %v2456
      %v2560 = vpop.f32.mrf.mxu0
      %v2561 = vadd.f32 0.0, %v2560
      %v2562 = vpop.f32.mrf.mxu0
      %v2563 = vpop.f32.mrf.mxu0
      %v2564 = vadd.f32 0.0, %v2563
      %v2565 = vpop.f32.mrf.mxu0
      %2566 = vmatprep.mubr.bf16.mxu0 0
      %2567 = vmatmul.mubr.bf16.gmra.mxu0 %v2459
      %v2568 = vpop.f32.mrf.mxu0
      %v2569 = vadd.f32 0.0, %v2568
      %v2570 = vpop.f32.mrf.mxu0
      %v2571 = vpop.f32.mrf.mxu0
      %v2572 = vadd.f32 0.0, %v2571
      %v2573 = vpop.f32.mrf.mxu0
      %2574 = vmatprep.mubr.bf16.mxu0 0
      %2575 = vmatmul.mubr.bf16.gmra.mxu0 %v2462
      %v2576 = vpop.f32.mrf.mxu0
      %v2577 = vadd.f32 0.0, %v2576
      %v2578 = vpop.f32.mrf.mxu0
      %v2579 = vpop.f32.mrf.mxu0
      %v2580 = vadd.f32 0.0, %v2579
      %v2581 = vpop.f32.mrf.mxu0
      %2582 = vmatprep.mubr.bf16.mxu0 0
      %2583 = vmatmul.mubr.bf16.gmra.mxu0 %v2465
      %v2584 = vpop.f32.mrf.mxu0
      %v2585 = vadd.f32 0.0, %v2584
      %v2586 = vpop.f32.mrf.mxu0
      %v2587 = vpop.f32.mrf.mxu0
      %v2588 = vadd.f32 0.0, %v2587
      %v2589 = vpop.f32.mrf.mxu0
      %2590 = vmatprep.mubr.bf16.mxu0 0
      %2591 = vmatmul.mubr.bf16.gmra.mxu0 %v2468
      %v2592 = vpop.f32.mrf.mxu0
      %v2593 = vadd.f32 0.0, %v2592
      %v2594 = vpop.f32.mrf.mxu0
      %v2595 = vpop.f32.mrf.mxu0
      %v2596 = vadd.f32 0.0, %v2595
      %v2597 = vpop.f32.mrf.mxu0
      %2598 = vmatprep.mubr.bf16.mxu0 0
      %2599 = vmatmul.mubr.bf16.gmra.mxu0 %v2471
      %v2600 = vpop.f32.mrf.mxu0
      %v2601 = vadd.f32 0.0, %v2600
      %v2602 = vpop.f32.mrf.mxu0
      %v2603 = vpop.f32.mrf.mxu0
      %v2604 = vadd.f32 0.0, %v2603
      %v2605 = vpop.f32.mrf.mxu0
      %2606 = vmatprep.mubr.bf16.mxu0 0
      %2607 = vmatmul.mubr.bf16.gmra.mxu0 %v2474
      %v2608 = vpop.f32.mrf.mxu0
      %v2609 = vadd.f32 0.0, %v2608
      %v2610 = vpop.f32.mrf.mxu0
      %v2611 = vpop.f32.mrf.mxu0
      %v2612 = vadd.f32 0.0, %v2611
      %v2613 = vpop.f32.mrf.mxu0
      %2614 = vmatprep.mubr.bf16.mxu0 0
      %2615 = vmatmul.mubr.bf16.gmra.mxu0 %v2477
      %v2616 = vpop.f32.mrf.mxu0
      %v2617 = vadd.f32 0.0, %v2616
      %v2618 = vpop.f32.mrf.mxu0
      %v2619 = vpop.f32.mrf.mxu0
      %v2620 = vadd.f32 0.0, %v2619
      %v2621 = vpop.f32.mrf.mxu0
      %2622 = vmatprep.mubr.bf16.mxu0 0
      %2623 = vmatmul.mubr.bf16.gmra.mxu0 %v2480
      %v2624 = vpop.f32.mrf.mxu0
      %v2625 = vadd.f32 0.0, %v2624
      %v2626 = vpop.f32.mrf.mxu0
      %v2627 = vpop.f32.mrf.mxu0
      %v2628 = vadd.f32 0.0, %v2627
      %v2629 = vpop.f32.mrf.mxu0
      %2630 = vmatprep.mubr.bf16.mxu0 0
      %2631 = vmatmul.mubr.bf16.gmra.mxu0 %v2483
      %v2632 = vpop.f32.mrf.mxu0
      %v2633 = vadd.f32 0.0, %v2632
      %v2634 = vpop.f32.mrf.mxu0
      %v2635 = vpop.f32.mrf.mxu0
      %v2636 = vadd.f32 0.0, %v2635
      %v2637 = vpop.f32.mrf.mxu0
      %2638 = vmatprep.mubr.bf16.mxu0 0
      %2639 = vmatmul.mubr.bf16.gmra.mxu0 %v2486
      %v2640 = vpop.f32.mrf.mxu0
      %v2641 = vadd.f32 0.0, %v2640
      %v2642 = vpop.f32.mrf.mxu0
      %v2643 = vpop.f32.mrf.mxu0
      %v2644 = vadd.f32 0.0, %v2643
      %v2645 = vpop.f32.mrf.mxu0
      %2646 = vmatprep.mubr.bf16.mxu0 0
      %2647 = vmatmul.mubr.bf16.gmra.mxu0 %v2489
      %v2648 = vpop.f32.mrf.mxu0
      %v2649 = vadd.f32 0.0, %v2648
      %v2650 = vpop.f32.mrf.mxu0
      %v2651 = vpop.f32.mrf.mxu0
      %v2652 = vadd.f32 0.0, %v2651
      %v2653 = vpop.f32.mrf.mxu0
      %2654 = vdwg.mxu0
      %v2655 = vadd.f32 %v1836, %v2529
      %v2656 = vadd.f32 %v1839, %v2532
      %v2657 = vadd.f32 %v1844, %v2537
      %v2658 = vadd.f32 %v1847, %v2540
      %v2659 = vadd.f32 %v1852, %v2545
      %v2660 = vadd.f32 %v1855, %v2548
      %v2661 = vadd.f32 %v1860, %v2553
      %v2662 = vadd.f32 %v1863, %v2556
      %v2663 = vadd.f32 %v1868, %v2561
      %v2664 = vadd.f32 %v1871, %v2564
      %v2665 = vadd.f32 %v1876, %v2569
      %v2666 = vadd.f32 %v1879, %v2572
      %v2667 = vadd.f32 %v1884, %v2577
      %v2668 = vadd.f32 %v1887, %v2580
      %v2669 = vadd.f32 %v1892, %v2585
      %v2670 = vadd.f32 %v1895, %v2588
      %v2671 = vadd.f32 %v1900, %v2593
      %v2672 = vadd.f32 %v1903, %v2596
      %v2673 = vadd.f32 %v1908, %v2601
      %v2674 = vadd.f32 %v1911, %v2604
      %v2675 = vadd.f32 %v1916, %v2609
      %v2676 = vadd.f32 %v1919, %v2612
      %v2677 = vadd.f32 %v1924, %v2617
      %v2678 = vadd.f32 %v1927, %v2620
      %v2679 = vadd.f32 %v1932, %v2625
      %v2680 = vadd.f32 %v1935, %v2628
      %v2681 = vadd.f32 %v1940, %v2633
      %v2682 = vadd.f32 %v1943, %v2636
      %v2683 = vadd.f32 %v1948, %v2641
      %v2684 = vadd.f32 %v1951, %v2644
      %v2685 = vadd.f32 %v1956, %v2649
      %v2686 = vadd.f32 %v1959, %v2652
      %s2687 = scalar_lea.vmem %s637, 216
      %v2688 = vld [vmem:[%s2687] sm:$0xf]
      %v2689 = vld [vmem:[%s2687 + $0x4] sm:$0xf]
      %v2690 = vld [vmem:[%s2687 + $0xc] sm:$0xf]
      %v2691 = vld [vmem:[%s2687 + $0x10] sm:$0xf]
      %v2692 = vld [vmem:[%s2687 + $0x18] sm:$0xf]
      %v2693 = vld [vmem:[%s2687 + $0x1c] sm:$0xf]
      %v2694 = vld [vmem:[%s2687 + $0x24] sm:$0xf]
      %v2695 = vld [vmem:[%s2687 + $0x28] sm:$0xf]
      %v2696 = vld [vmem:[%s2687 + $0x30] sm:$0xf]
      %v2697 = vld [vmem:[%s2687 + $0x34] sm:$0xf]
      %v2698 = vld [vmem:[%s2687 + $0x3c] sm:$0xf]
      %v2699 = vld [vmem:[%s2687 + $0x40] sm:$0xf]
      %v2700 = vld [vmem:[%s2687 + $0x48] sm:$0xf]
      %v2701 = vld [vmem:[%s2687 + $0x4c] sm:$0xf]
      %v2702 = vld [vmem:[%s2687 + $0x54] sm:$0xf]
      %v2703 = vld [vmem:[%s2687 + $0x58] sm:$0xf]
      %v2704 = vld [vmem:[%s2687 + $0x60] sm:$0xf]
      %v2705 = vld [vmem:[%s2687 + $0x64] sm:$0xf]
      %v2706 = vld [vmem:[%s2687 + $0x6c] sm:$0xf]
      %v2707 = vld [vmem:[%s2687 + $0x70] sm:$0xf]
      %v2708 = vld [vmem:[%s2687 + $0x78] sm:$0xf]
      %v2709 = vld [vmem:[%s2687 + $0x7c] sm:$0xf]
      %v2710 = vld [vmem:[%s2687 + $0x84] sm:$0xf]
      %v2711 = vld [vmem:[%s2687 + $0x88] sm:$0xf]
      %v2712 = vld [vmem:[%s2687 + $0x90] sm:$0xf]
      %v2713 = vld [vmem:[%s2687 + $0x94] sm:$0xf]
      %v2714 = vld [vmem:[%s2687 + $0x9c] sm:$0xf]
      %v2715 = vld [vmem:[%s2687 + $0xa0] sm:$0xf]
      %v2716 = vld [vmem:[%s2687 + $0xa8] sm:$0xf]
      %v2717 = vld [vmem:[%s2687 + $0xac] sm:$0xf]
      %v2718 = vld [vmem:[%s2687 + $0xb4] sm:$0xf]
      %v2719 = vld [vmem:[%s2687 + $0xb8] sm:$0xf]
      %v2720 = vld [vmem:[%s5 + $0x4] sm:$0xc]
      %v2753 = vunpack.c.l.b16 %v2688
      %v2754 = vunpack.c.l.b16 %v2689
      %v2755 = vunpack.c.l.b16 %v2690
      %v2756 = vunpack.c.l.b16 %v2691
      %v2757 = vunpack.c.l.b16 %v2692
      %v2758 = vunpack.c.l.b16 %v2693
      %v2759 = vunpack.c.l.b16 %v2694
      %v2760 = vunpack.c.l.b16 %v2695
      %v2761 = vunpack.c.l.b16 %v2696
      %v2762 = vunpack.c.l.b16 %v2697
      %v2763 = vunpack.c.l.b16 %v2698
      %v2764 = vunpack.c.l.b16 %v2699
      %v2765 = vunpack.c.l.b16 %v2700
      %v2766 = vunpack.c.l.b16 %v2701
      %v2767 = vunpack.c.l.b16 %v2702
      %v2768 = vunpack.c.l.b16 %v2703
      %v2769 = vunpack.c.l.b16 %v2704
      %v2770 = vunpack.c.l.b16 %v2705
      %v2771 = vunpack.c.l.b16 %v2706
      %v2772 = vunpack.c.l.b16 %v2707
      %v2773 = vunpack.c.l.b16 %v2708
      %v2774 = vunpack.c.l.b16 %v2709
      %v2775 = vunpack.c.l.b16 %v2710
      %v2776 = vunpack.c.l.b16 %v2711
      %v2777 = vunpack.c.l.b16 %v2712
      %v2778 = vunpack.c.l.b16 %v2713
      %v2779 = vunpack.c.l.b16 %v2714
      %v2780 = vunpack.c.l.b16 %v2715
      %v2781 = vunpack.c.l.b16 %v2716
      %v2782 = vunpack.c.l.b16 %v2717
      %v2783 = vunpack.c.l.b16 %v2718
      %v2784 = vunpack.c.l.b16 %v2719
      %v2785 = vpack.c.b16 %v2754, %v2753
      %v2786 = vpack.c.b16 %v2756, %v2755
      %v2787 = vpack.c.b16 %v2758, %v2757
      %v2788 = vpack.c.b16 %v2760, %v2759
      %v2789 = vpack.c.b16 %v2762, %v2761
      %v2790 = vpack.c.b16 %v2764, %v2763
      %v2791 = vpack.c.b16 %v2766, %v2765
      %v2792 = vpack.c.b16 %v2768, %v2767
      %v2793 = vpack.c.b16 %v2770, %v2769
      %v2794 = vpack.c.b16 %v2772, %v2771
      %v2795 = vpack.c.b16 %v2774, %v2773
      %v2796 = vpack.c.b16 %v2776, %v2775
      %v2797 = vpack.c.b16 %v2778, %v2777
      %v2798 = vpack.c.b16 %v2780, %v2779
      %v2799 = vpack.c.b16 %v2782, %v2781
      %v2800 = vpack.c.b16 %v2784, %v2783
      %v2802 = vunpack.c.l.b16 %v2720
      %v2803 = vpack.c.b16 %v2802, %v2802
      %v2804 = vrot.slane %v2803, 2
      %v2806 = vsel %vm1456, %v2785, 0
      %v2809 = vsel %vm1456, %v2786, 0
      %v2812 = vsel %vm1456, %v2787, 0
      %v2815 = vsel %vm1456, %v2788, 0
      %v2818 = vsel %vm1456, %v2789, 0
      %v2821 = vsel %vm1456, %v2790, 0
      %v2824 = vsel %vm1456, %v2791, 0
      %v2827 = vsel %vm1456, %v2792, 0
      %v2830 = vsel %vm1456, %v2793, 0
      %v2833 = vsel %vm1456, %v2794, 0
      %v2836 = vsel %vm1456, %v2795, 0
      %v2839 = vsel %vm1456, %v2796, 0
      %v2842 = vsel %vm1456, %v2797, 0
      %v2845 = vsel %vm1456, %v2798, 0
      %v2848 = vsel %vm1456, %v2799, 0
      %v2851 = vsel %vm1456, %v2800, 0
      %v2854 = vsel %vm1505, %v2804, 0
      %2856 = vmatprep.subr.bf16.mxu0 0
      %2857 = vmatpush1.bf16.msra.mxu0 0
      %2858 = vmatprep.subr.bf16.mxu0 0
      %2859 = vmatpush1.bf16.msra.mxu0 0
      %2860 = vmatprep.subr.bf16.mxu0 0
      %2861 = vmatpush1.bf16.msra.mxu0 0
      %2862 = vmatprep.subr.bf16.mxu0 0
      %2863 = vmatpush1.bf16.msra.mxu0 0
      %2864 = vmatprep.subr.bf16.mxu0 0
      %2865 = vmatpush1.bf16.msra.mxu0 0
      %2866 = vmatprep.subr.bf16.mxu0 0
      %2867 = vmatpush1.bf16.msra.mxu0 0
      %2868 = vmatprep.subr.bf16.mxu0 0
      %2869 = vmatpush1.bf16.msra.mxu0 0
      %2870 = vmatprep.subr.bf16.mxu0 0
      %2871 = vmatpush1.bf16.msra.mxu0 %v2854
      %2872 = vmatprep.subr.bf16.mxu0 0
      %2873 = vmatpush2.bf16.msra.mxu0 0
      %2874 = vmatprep.subr.bf16.mxu0 0
      %2875 = vmatpush2.bf16.msra.mxu0 0
      %2876 = vmatprep.subr.bf16.mxu0 0
      %2877 = vmatpush2.bf16.msra.mxu0 0
      %2878 = vmatprep.subr.bf16.mxu0 0
      %2879 = vmatpush2.bf16.msra.mxu0 0
      %2880 = vmatprep.subr.bf16.mxu0 0
      %2881 = vmatpush2.bf16.msra.mxu0 0
      %2882 = vmatprep.subr.bf16.mxu0 0
      %2883 = vmatpush2.bf16.msra.mxu0 0
      %2884 = vmatprep.subr.bf16.mxu0 0
      %2885 = vmatpush2.bf16.msra.mxu0 0
      %2886 = vmatprep.subr.bf16.mxu0 0
      %2887 = vmatpush2.bf16.msra.mxu0 0
      %2888 = vmatprep.mubr.bf16.mxu0 0
      %2889 = vmatmul.mubr.bf16.gmra.mxu0 %v2806
      %v2890 = vpop.f32.mrf.mxu0
      %v2891 = vadd.f32 0.0, %v2890
      %v2892 = vpop.f32.mrf.mxu0
      %v2893 = vpop.f32.mrf.mxu0
      %v2894 = vadd.f32 0.0, %v2893
      %v2895 = vpop.f32.mrf.mxu0
      %2896 = vmatprep.mubr.bf16.mxu0 0
      %2897 = vmatmul.mubr.bf16.gmra.mxu0 %v2809
      %v2898 = vpop.f32.mrf.mxu0
      %v2899 = vadd.f32 0.0, %v2898
      %v2900 = vpop.f32.mrf.mxu0
      %v2901 = vpop.f32.mrf.mxu0
      %v2902 = vadd.f32 0.0, %v2901
      %v2903 = vpop.f32.mrf.mxu0
      %2904 = vmatprep.mubr.bf16.mxu0 0
      %2905 = vmatmul.mubr.bf16.gmra.mxu0 %v2812
      %v2906 = vpop.f32.mrf.mxu0
      %v2907 = vadd.f32 0.0, %v2906
      %v2908 = vpop.f32.mrf.mxu0
      %v2909 = vpop.f32.mrf.mxu0
      %v2910 = vadd.f32 0.0, %v2909
      %v2911 = vpop.f32.mrf.mxu0
      %2912 = vmatprep.mubr.bf16.mxu0 0
      %2913 = vmatmul.mubr.bf16.gmra.mxu0 %v2815
      %v2914 = vpop.f32.mrf.mxu0
      %v2915 = vadd.f32 0.0, %v2914
      %v2916 = vpop.f32.mrf.mxu0
      %v2917 = vpop.f32.mrf.mxu0
      %v2918 = vadd.f32 0.0, %v2917
      %v2919 = vpop.f32.mrf.mxu0
      %2920 = vmatprep.mubr.bf16.mxu0 0
      %2921 = vmatmul.mubr.bf16.gmra.mxu0 %v2818
      %v2922 = vpop.f32.mrf.mxu0
      %v2923 = vadd.f32 0.0, %v2922
      %v2924 = vpop.f32.mrf.mxu0
      %v2925 = vpop.f32.mrf.mxu0
      %v2926 = vadd.f32 0.0, %v2925
      %v2927 = vpop.f32.mrf.mxu0
      %2928 = vmatprep.mubr.bf16.mxu0 0
      %2929 = vmatmul.mubr.bf16.gmra.mxu0 %v2821
      %v2930 = vpop.f32.mrf.mxu0
      %v2931 = vadd.f32 0.0, %v2930
      %v2932 = vpop.f32.mrf.mxu0
      %v2933 = vpop.f32.mrf.mxu0
      %v2934 = vadd.f32 0.0, %v2933
      %v2935 = vpop.f32.mrf.mxu0
      %2936 = vmatprep.mubr.bf16.mxu0 0
      %2937 = vmatmul.mubr.bf16.gmra.mxu0 %v2824
      %v2938 = vpop.f32.mrf.mxu0
      %v2939 = vadd.f32 0.0, %v2938
      %v2940 = vpop.f32.mrf.mxu0
      %v2941 = vpop.f32.mrf.mxu0
      %v2942 = vadd.f32 0.0, %v2941
      %v2943 = vpop.f32.mrf.mxu0
      %2944 = vmatprep.mubr.bf16.mxu0 0
      %2945 = vmatmul.mubr.bf16.gmra.mxu0 %v2827
      %v2946 = vpop.f32.mrf.mxu0
      %v2947 = vadd.f32 0.0, %v2946
      %v2948 = vpop.f32.mrf.mxu0
      %v2949 = vpop.f32.mrf.mxu0
      %v2950 = vadd.f32 0.0, %v2949
      %v2951 = vpop.f32.mrf.mxu0
      %2952 = vmatprep.mubr.bf16.mxu0 0
      %2953 = vmatmul.mubr.bf16.gmra.mxu0 %v2830
      %v2954 = vpop.f32.mrf.mxu0
      %v2955 = vadd.f32 0.0, %v2954
      %v2956 = vpop.f32.mrf.mxu0
      %v2957 = vpop.f32.mrf.mxu0
      %v2958 = vadd.f32 0.0, %v2957
      %v2959 = vpop.f32.mrf.mxu0
      %2960 = vmatprep.mubr.bf16.mxu0 0
      %2961 = vmatmul.mubr.bf16.gmra.mxu0 %v2833
      %v2962 = vpop.f32.mrf.mxu0
      %v2963 = vadd.f32 0.0, %v2962
      %v2964 = vpop.f32.mrf.mxu0
      %v2965 = vpop.f32.mrf.mxu0
      %v2966 = vadd.f32 0.0, %v2965
      %v2967 = vpop.f32.mrf.mxu0
      %2968 = vmatprep.mubr.bf16.mxu0 0
      %2969 = vmatmul.mubr.bf16.gmra.mxu0 %v2836
      %v2970 = vpop.f32.mrf.mxu0
      %v2971 = vadd.f32 0.0, %v2970
      %v2972 = vpop.f32.mrf.mxu0
      %v2973 = vpop.f32.mrf.mxu0
      %v2974 = vadd.f32 0.0, %v2973
      %v2975 = vpop.f32.mrf.mxu0
      %2976 = vmatprep.mubr.bf16.mxu0 0
      %2977 = vmatmul.mubr.bf16.gmra.mxu0 %v2839
      %v2978 = vpop.f32.mrf.mxu0
      %v2979 = vadd.f32 0.0, %v2978
      %v2980 = vpop.f32.mrf.mxu0
      %v2981 = vpop.f32.mrf.mxu0
      %v2982 = vadd.f32 0.0, %v2981
      %v2983 = vpop.f32.mrf.mxu0
      %2984 = vmatprep.mubr.bf16.mxu0 0
      %2985 = vmatmul.mubr.bf16.gmra.mxu0 %v2842
      %v2986 = vpop.f32.mrf.mxu0
      %v2987 = vadd.f32 0.0, %v2986
      %v2988 = vpop.f32.mrf.mxu0
      %v2989 = vpop.f32.mrf.mxu0
      %v2990 = vadd.f32 0.0, %v2989
      %v2991 = vpop.f32.mrf.mxu0
      %2992 = vmatprep.mubr.bf16.mxu0 0
      %2993 = vmatmul.mubr.bf16.gmra.mxu0 %v2845
      %v2994 = vpop.f32.mrf.mxu0
      %v2995 = vadd.f32 0.0, %v2994
      %v2996 = vpop.f32.mrf.mxu0
      %v2997 = vpop.f32.mrf.mxu0
      %v2998 = vadd.f32 0.0, %v2997
      %v2999 = vpop.f32.mrf.mxu0
      %3000 = vmatprep.mubr.bf16.mxu0 0
      %3001 = vmatmul.mubr.bf16.gmra.mxu0 %v2848
      %v3002 = vpop.f32.mrf.mxu0
      %v3003 = vadd.f32 0.0, %v3002
      %v3004 = vpop.f32.mrf.mxu0
      %v3005 = vpop.f32.mrf.mxu0
      %v3006 = vadd.f32 0.0, %v3005
      %v3007 = vpop.f32.mrf.mxu0
      %3008 = vmatprep.mubr.bf16.mxu0 0
      %3009 = vmatmul.mubr.bf16.gmra.mxu0 %v2851
      %v3010 = vpop.f32.mrf.mxu0
      %v3011 = vadd.f32 0.0, %v3010
      %v3012 = vpop.f32.mrf.mxu0
      %v3013 = vpop.f32.mrf.mxu0
      %v3014 = vadd.f32 0.0, %v3013
      %v3015 = vpop.f32.mrf.mxu0
      %3016 = vdwg.mxu0
      %v3017 = vadd.f32 %v2655, %v2891
      %v3018 = vadd.f32 %v2656, %v2894
      %v3019 = vadd.f32 %v2657, %v2899
      %v3020 = vadd.f32 %v2658, %v2902
      %v3021 = vadd.f32 %v2659, %v2907
      %v3022 = vadd.f32 %v2660, %v2910
      %v3023 = vadd.f32 %v2661, %v2915
      %v3024 = vadd.f32 %v2662, %v2918
      %v3025 = vadd.f32 %v2663, %v2923
      %v3026 = vadd.f32 %v2664, %v2926
      %v3027 = vadd.f32 %v2665, %v2931
      %v3028 = vadd.f32 %v2666, %v2934
      %v3029 = vadd.f32 %v2667, %v2939
      %v3030 = vadd.f32 %v2668, %v2942
      %v3031 = vadd.f32 %v2669, %v2947
      %v3032 = vadd.f32 %v2670, %v2950
      %v3033 = vadd.f32 %v2671, %v2955
      %v3034 = vadd.f32 %v2672, %v2958
      %v3035 = vadd.f32 %v2673, %v2963
      %v3036 = vadd.f32 %v2674, %v2966
      %v3037 = vadd.f32 %v2675, %v2971
      %v3038 = vadd.f32 %v2676, %v2974
      %v3039 = vadd.f32 %v2677, %v2979
      %v3040 = vadd.f32 %v2678, %v2982
      %v3041 = vadd.f32 %v2679, %v2987
      %v3042 = vadd.f32 %v2680, %v2990
      %v3043 = vadd.f32 %v2681, %v2995
      %v3044 = vadd.f32 %v2682, %v2998
      %v3045 = vadd.f32 %v2683, %v3003
      %v3046 = vadd.f32 %v2684, %v3006
      %v3047 = vadd.f32 %v2685, %v3011
      %v3048 = vadd.f32 %v2686, %v3014
      %s3049 = scalar_lea.vmem %s637, 12
      %v3050 = vld [vmem:[%s3049] sm:$0xf]
      %v3051 = vld [vmem:[%s3049 + $0x4] sm:$0xf]
      %v3052 = vld [vmem:[%s3049 + $0x8] sm:$0x1]
      %v3053 = vld [vmem:[%s3049 + $0xc] sm:$0xf]
      %v3054 = vld [vmem:[%s3049 + $0x10] sm:$0xf]
      %v3055 = vld [vmem:[%s3049 + $0x14] sm:$0x1]
      %v3056 = vld [vmem:[%s3049 + $0x18] sm:$0xf]
      %v3057 = vld [vmem:[%s3049 + $0x1c] sm:$0xf]
      %v3058 = vld [vmem:[%s3049 + $0x20] sm:$0x1]
      %v3059 = vld [vmem:[%s3049 + $0x24] sm:$0xf]
      %v3060 = vld [vmem:[%s3049 + $0x28] sm:$0xf]
      %v3061 = vld [vmem:[%s3049 + $0x2c] sm:$0x1]
      %v3062 = vld [vmem:[%s3049 + $0x30] sm:$0xf]
      %v3063 = vld [vmem:[%s3049 + $0x34] sm:$0xf]
      %v3064 = vld [vmem:[%s3049 + $0x38] sm:$0x1]
      %v3065 = vld [vmem:[%s3049 + $0x3c] sm:$0xf]
      %v3066 = vld [vmem:[%s3049 + $0x40] sm:$0xf]
      %v3067 = vld [vmem:[%s3049 + $0x44] sm:$0x1]
      %v3068 = vld [vmem:[%s3049 + $0x48] sm:$0xf]
      %v3069 = vld [vmem:[%s3049 + $0x4c] sm:$0xf]
      %v3070 = vld [vmem:[%s3049 + $0x50] sm:$0x1]
      %v3071 = vld [vmem:[%s3049 + $0x54] sm:$0xf]
      %v3072 = vld [vmem:[%s3049 + $0x58] sm:$0xf]
      %v3073 = vld [vmem:[%s3049 + $0x5c] sm:$0x1]
      %v3074 = vld [vmem:[%s3049 + $0x60] sm:$0xf]
      %v3075 = vld [vmem:[%s3049 + $0x64] sm:$0xf]
      %v3076 = vld [vmem:[%s3049 + $0x68] sm:$0x1]
      %v3077 = vld [vmem:[%s3049 + $0x6c] sm:$0xf]
      %v3078 = vld [vmem:[%s3049 + $0x70] sm:$0xf]
      %v3079 = vld [vmem:[%s3049 + $0x74] sm:$0x1]
      %v3080 = vld [vmem:[%s3049 + $0x78] sm:$0xf]
      %v3081 = vld [vmem:[%s3049 + $0x7c] sm:$0xf]
      %v3082 = vld [vmem:[%s3049 + $0x80] sm:$0x1]
      %v3083 = vld [vmem:[%s3049 + $0x84] sm:$0xf]
      %v3084 = vld [vmem:[%s3049 + $0x88] sm:$0xf]
      %v3085 = vld [vmem:[%s3049 + $0x8c] sm:$0x1]
      %v3086 = vld [vmem:[%s3049 + $0x90] sm:$0xf]
      %v3087 = vld [vmem:[%s3049 + $0x94] sm:$0xf]
      %v3088 = vld [vmem:[%s3049 + $0x98] sm:$0x1]
      %v3089 = vld [vmem:[%s3049 + $0x9c] sm:$0xf]
      %v3090 = vld [vmem:[%s3049 + $0xa0] sm:$0xf]
      %v3091 = vld [vmem:[%s3049 + $0xa4] sm:$0x1]
      %v3092 = vld [vmem:[%s3049 + $0xa8] sm:$0xf]
      %v3093 = vld [vmem:[%s3049 + $0xac] sm:$0xf]
      %v3094 = vld [vmem:[%s3049 + $0xb0] sm:$0x1]
      %v3095 = vld [vmem:[%s3049 + $0xb4] sm:$0xf]
      %v3096 = vld [vmem:[%s3049 + $0xb8] sm:$0xf]
      %v3097 = vld [vmem:[%s3049 + $0xbc] sm:$0x1]
      %v3099 = vshrl.u32 %v3050, 16
      %v3101 = vrot.slane %v3099, 4
      %v3102 = vshll.u32 %v3050, 16
      %v3104 = vrot.slane %v3102, 5
      %v3105 = vor.u32 %v3101, %v3104
      %v3106 = vrot.slane %v3105, 4
      %v3108 = vshll.u32 %v3051, 16
      %v3110 = vrot.slane %v3108, 5
      %v3111 = vsel %vm1018, %v3106, %v3110
      %v3112 = vshrl.u32 %v3051, 16
      %v3114 = vrot.slane %v3112, 4
      %v3115 = vor.u32 %v3114, %v3110
      %v3116 = vrot.slane %v3115, 4
      %v3118 = vshll.u32 %v3052, 16
      %v3120 = vrot.slane %v3118, 5
      %v3121 = vsel %vm1018, %v3116, %v3120
      %v3123 = vshrl.u32 %v3053, 16
      %v3125 = vrot.slane %v3123, 4
      %v3126 = vshll.u32 %v3053, 16
      %v3128 = vrot.slane %v3126, 5
      %v3129 = vor.u32 %v3125, %v3128
      %v3130 = vrot.slane %v3129, 4
      %v3132 = vshll.u32 %v3054, 16
      %v3134 = vrot.slane %v3132, 5
      %v3135 = vsel %vm1018, %v3130, %v3134
      %v3136 = vshrl.u32 %v3054, 16
      %v3138 = vrot.slane %v3136, 4
      %v3139 = vor.u32 %v3138, %v3134
      %v3140 = vrot.slane %v3139, 4
      %v3142 = vshll.u32 %v3055, 16
      %v3144 = vrot.slane %v3142, 5
      %v3145 = vsel %vm1018, %v3140, %v3144
      %v3147 = vshrl.u32 %v3056, 16
      %v3149 = vrot.slane %v3147, 4
      %v3150 = vshll.u32 %v3056, 16
      %v3152 = vrot.slane %v3150, 5
      %v3153 = vor.u32 %v3149, %v3152
      %v3154 = vrot.slane %v3153, 4
      %v3156 = vshll.u32 %v3057, 16
      %v3158 = vrot.slane %v3156, 5
      %v3159 = vsel %vm1018, %v3154, %v3158
      %v3160 = vshrl.u32 %v3057, 16
      %v3162 = vrot.slane %v3160, 4
      %v3163 = vor.u32 %v3162, %v3158
      %v3164 = vrot.slane %v3163, 4
      %v3166 = vshll.u32 %v3058, 16
      %v3168 = vrot.slane %v3166, 5
      %v3169 = vsel %vm1018, %v3164, %v3168
      %v3171 = vshrl.u32 %v3059, 16
      %v3173 = vrot.slane %v3171, 4
      %v3174 = vshll.u32 %v3059, 16
      %v3176 = vrot.slane %v3174, 5
      %v3177 = vor.u32 %v3173, %v3176
      %v3178 = vrot.slane %v3177, 4
      %v3180 = vshll.u32 %v3060, 16
      %v3182 = vrot.slane %v3180, 5
      %v3183 = vsel %vm1018, %v3178, %v3182
      %v3184 = vshrl.u32 %v3060, 16
      %v3186 = vrot.slane %v3184, 4
      %v3187 = vor.u32 %v3186, %v3182
      %v3188 = vrot.slane %v3187, 4
      %v3190 = vshll.u32 %v3061, 16
      %v3192 = vrot.slane %v3190, 5
      %v3193 = vsel %vm1018, %v3188, %v3192
      %v3195 = vshrl.u32 %v3062, 16
      %v3197 = vrot.slane %v3195, 4
      %v3198 = vshll.u32 %v3062, 16
      %v3200 = vrot.slane %v3198, 5
      %v3201 = vor.u32 %v3197, %v3200
      %v3202 = vrot.slane %v3201, 4
      %v3204 = vshll.u32 %v3063, 16
      %v3206 = vrot.slane %v3204, 5
      %v3207 = vsel %vm1018, %v3202, %v3206
      %v3208 = vshrl.u32 %v3063, 16
      %v3210 = vrot.slane %v3208, 4
      %v3211 = vor.u32 %v3210, %v3206
      %v3212 = vrot.slane %v3211, 4
      %v3214 = vshll.u32 %v3064, 16
      %v3216 = vrot.slane %v3214, 5
      %v3217 = vsel %vm1018, %v3212, %v3216
      %v3219 = vshrl.u32 %v3065, 16
      %v3221 = vrot.slane %v3219, 4
      %v3222 = vshll.u32 %v3065, 16
      %v3224 = vrot.slane %v3222, 5
      %v3225 = vor.u32 %v3221, %v3224
      %v3226 = vrot.slane %v3225, 4
      %v3228 = vshll.u32 %v3066, 16
      %v3230 = vrot.slane %v3228, 5
      %v3231 = vsel %vm1018, %v3226, %v3230
      %v3232 = vshrl.u32 %v3066, 16
      %v3234 = vrot.slane %v3232, 4
      %v3235 = vor.u32 %v3234, %v3230
      %v3236 = vrot.slane %v3235, 4
      %v3238 = vshll.u32 %v3067, 16
      %v3240 = vrot.slane %v3238, 5
      %v3241 = vsel %vm1018, %v3236, %v3240
      %v3243 = vshrl.u32 %v3068, 16
      %v3245 = vrot.slane %v3243, 4
      %v3246 = vshll.u32 %v3068, 16
      %v3248 = vrot.slane %v3246, 5
      %v3249 = vor.u32 %v3245, %v3248
      %v3250 = vrot.slane %v3249, 4
      %v3252 = vshll.u32 %v3069, 16
      %v3254 = vrot.slane %v3252, 5
      %v3255 = vsel %vm1018, %v3250, %v3254
      %v3256 = vshrl.u32 %v3069, 16
      %v3258 = vrot.slane %v3256, 4
      %v3259 = vor.u32 %v3258, %v3254
      %v3260 = vrot.slane %v3259, 4
      %v3262 = vshll.u32 %v3070, 16
      %v3264 = vrot.slane %v3262, 5
      %v3265 = vsel %vm1018, %v3260, %v3264
      %v3267 = vshrl.u32 %v3071, 16
      %v3269 = vrot.slane %v3267, 4
      %v3270 = vshll.u32 %v3071, 16
      %v3272 = vrot.slane %v3270, 5
      %v3273 = vor.u32 %v3269, %v3272
      %v3274 = vrot.slane %v3273, 4
      %v3276 = vshll.u32 %v3072, 16
      %v3278 = vrot.slane %v3276, 5
      %v3279 = vsel %vm1018, %v3274, %v3278
      %v3280 = vshrl.u32 %v3072, 16
      %v3282 = vrot.slane %v3280, 4
      %v3283 = vor.u32 %v3282, %v3278
      %v3284 = vrot.slane %v3283, 4
      %v3286 = vshll.u32 %v3073, 16
      %v3288 = vrot.slane %v3286, 5
      %v3289 = vsel %vm1018, %v3284, %v3288
      %v3291 = vshrl.u32 %v3074, 16
      %v3293 = vrot.slane %v3291, 4
      %v3294 = vshll.u32 %v3074, 16
      %v3296 = vrot.slane %v3294, 5
      %v3297 = vor.u32 %v3293, %v3296
      %v3298 = vrot.slane %v3297, 4
      %v3300 = vshll.u32 %v3075, 16
      %v3302 = vrot.slane %v3300, 5
      %v3303 = vsel %vm1018, %v3298, %v3302
      %v3304 = vshrl.u32 %v3075, 16
      %v3306 = vrot.slane %v3304, 4
      %v3307 = vor.u32 %v3306, %v3302
      %v3308 = vrot.slane %v3307, 4
      %v3310 = vshll.u32 %v3076, 16
      %v3312 = vrot.slane %v3310, 5
      %v3313 = vsel %vm1018, %v3308, %v3312
      %v3315 = vshrl.u32 %v3077, 16
      %v3317 = vrot.slane %v3315, 4
      %v3318 = vshll.u32 %v3077, 16
      %v3320 = vrot.slane %v3318, 5
      %v3321 = vor.u32 %v3317, %v3320
      %v3322 = vrot.slane %v3321, 4
      %v3324 = vshll.u32 %v3078, 16
      %v3326 = vrot.slane %v3324, 5
      %v3327 = vsel %vm1018, %v3322, %v3326
      %v3328 = vshrl.u32 %v3078, 16
      %v3330 = vrot.slane %v3328, 4
      %v3331 = vor.u32 %v3330, %v3326
      %v3332 = vrot.slane %v3331, 4
      %v3334 = vshll.u32 %v3079, 16
      %v3336 = vrot.slane %v3334, 5
      %v3337 = vsel %vm1018, %v3332, %v3336
      %v3339 = vshrl.u32 %v3080, 16
      %v3341 = vrot.slane %v3339, 4
      %v3342 = vshll.u32 %v3080, 16
      %v3344 = vrot.slane %v3342, 5
      %v3345 = vor.u32 %v3341, %v3344
      %v3346 = vrot.slane %v3345, 4
      %v3348 = vshll.u32 %v3081, 16
      %v3350 = vrot.slane %v3348, 5
      %v3351 = vsel %vm1018, %v3346, %v3350
      %v3352 = vshrl.u32 %v3081, 16
      %v3354 = vrot.slane %v3352, 4
      %v3355 = vor.u32 %v3354, %v3350
      %v3356 = vrot.slane %v3355, 4
      %v3358 = vshll.u32 %v3082, 16
      %v3360 = vrot.slane %v3358, 5
      %v3361 = vsel %vm1018, %v3356, %v3360
      %v3363 = vshrl.u32 %v3083, 16
      %v3365 = vrot.slane %v3363, 4
      %v3366 = vshll.u32 %v3083, 16
      %v3368 = vrot.slane %v3366, 5
      %v3369 = vor.u32 %v3365, %v3368
      %v3370 = vrot.slane %v3369, 4
      %v3372 = vshll.u32 %v3084, 16
      %v3374 = vrot.slane %v3372, 5
      %v3375 = vsel %vm1018, %v3370, %v3374
      %v3376 = vshrl.u32 %v3084, 16
      %v3378 = vrot.slane %v3376, 4
      %v3379 = vor.u32 %v3378, %v3374
      %v3380 = vrot.slane %v3379, 4
      %v3382 = vshll.u32 %v3085, 16
      %v3384 = vrot.slane %v3382, 5
      %v3385 = vsel %vm1018, %v3380, %v3384
      %v3387 = vshrl.u32 %v3086, 16
      %v3389 = vrot.slane %v3387, 4
      %v3390 = vshll.u32 %v3086, 16
      %v3392 = vrot.slane %v3390, 5
      %v3393 = vor.u32 %v3389, %v3392
      %v3394 = vrot.slane %v3393, 4
      %v3396 = vshll.u32 %v3087, 16
      %v3398 = vrot.slane %v3396, 5
      %v3399 = vsel %vm1018, %v3394, %v3398
      %v3400 = vshrl.u32 %v3087, 16
      %v3402 = vrot.slane %v3400, 4
      %v3403 = vor.u32 %v3402, %v3398
      %v3404 = vrot.slane %v3403, 4
      %v3406 = vshll.u32 %v3088, 16
      %v3408 = vrot.slane %v3406, 5
      %v3409 = vsel %vm1018, %v3404, %v3408
      %v3411 = vshrl.u32 %v3089, 16
      %v3413 = vrot.slane %v3411, 4
      %v3414 = vshll.u32 %v3089, 16
      %v3416 = vrot.slane %v3414, 5
      %v3417 = vor.u32 %v3413, %v3416
      %v3418 = vrot.slane %v3417, 4
      %v3420 = vshll.u32 %v3090, 16
      %v3422 = vrot.slane %v3420, 5
      %v3423 = vsel %vm1018, %v3418, %v3422
      %v3424 = vshrl.u32 %v3090, 16
      %v3426 = vrot.slane %v3424, 4
      %v3427 = vor.u32 %v3426, %v3422
      %v3428 = vrot.slane %v3427, 4
      %v3430 = vshll.u32 %v3091, 16
      %v3432 = vrot.slane %v3430, 5
      %v3433 = vsel %vm1018, %v3428, %v3432
      %v3435 = vshrl.u32 %v3092, 16
      %v3437 = vrot.slane %v3435, 4
      %v3438 = vshll.u32 %v3092, 16
      %v3440 = vrot.slane %v3438, 5
      %v3441 = vor.u32 %v3437, %v3440
      %v3442 = vrot.slane %v3441, 4
      %v3444 = vshll.u32 %v3093, 16
      %v3446 = vrot.slane %v3444, 5
      %v3447 = vsel %vm1018, %v3442, %v3446
      %v3448 = vshrl.u32 %v3093, 16
      %v3450 = vrot.slane %v3448, 4
      %v3451 = vor.u32 %v3450, %v3446
      %v3452 = vrot.slane %v3451, 4
      %v3454 = vshll.u32 %v3094, 16
      %v3456 = vrot.slane %v3454, 5
      %v3457 = vsel %vm1018, %v3452, %v3456
      %v3459 = vshrl.u32 %v3095, 16
      %v3461 = vrot.slane %v3459, 4
      %v3462 = vshll.u32 %v3095, 16
      %v3464 = vrot.slane %v3462, 5
      %v3465 = vor.u32 %v3461, %v3464
      %v3466 = vrot.slane %v3465, 4
      %v3468 = vshll.u32 %v3096, 16
      %v3470 = vrot.slane %v3468, 5
      %v3471 = vsel %vm1018, %v3466, %v3470
      %v3472 = vshrl.u32 %v3096, 16
      %v3474 = vrot.slane %v3472, 4
      %v3475 = vor.u32 %v3474, %v3470
      %v3476 = vrot.slane %v3475, 4
      %v3478 = vshll.u32 %v3097, 16
      %v3480 = vrot.slane %v3478, 5
      %v3481 = vsel %vm1018, %v3476, %v3480
      %v3482 = vld [vmem:[%s5 + $0x8] sm:$0x3]
      %v3483 = vunpack.c.l.b16 %v3111
      %v3484 = vunpack.c.l.b16 %v3121
      %v3485 = vunpack.c.l.b16 %v3135
      %v3486 = vunpack.c.l.b16 %v3145
      %v3487 = vunpack.c.l.b16 %v3159
      %v3488 = vunpack.c.l.b16 %v3169
      %v3489 = vunpack.c.l.b16 %v3183
      %v3490 = vunpack.c.l.b16 %v3193
      %v3491 = vunpack.c.l.b16 %v3207
      %v3492 = vunpack.c.l.b16 %v3217
      %v3493 = vunpack.c.l.b16 %v3231
      %v3494 = vunpack.c.l.b16 %v3241
      %v3495 = vunpack.c.l.b16 %v3255
      %v3496 = vunpack.c.l.b16 %v3265
      %v3497 = vunpack.c.l.b16 %v3279
      %v3498 = vunpack.c.l.b16 %v3289
      %v3499 = vunpack.c.l.b16 %v3303
      %v3500 = vunpack.c.l.b16 %v3313
      %v3501 = vunpack.c.l.b16 %v3327
      %v3502 = vunpack.c.l.b16 %v3337
      %v3503 = vunpack.c.l.b16 %v3351
      %v3504 = vunpack.c.l.b16 %v3361
      %v3505 = vunpack.c.l.b16 %v3375
      %v3506 = vunpack.c.l.b16 %v3385
      %v3507 = vunpack.c.l.b16 %v3399
      %v3508 = vunpack.c.l.b16 %v3409
      %v3509 = vunpack.c.l.b16 %v3423
      %v3510 = vunpack.c.l.b16 %v3433
      %v3511 = vunpack.c.l.b16 %v3447
      %v3512 = vunpack.c.l.b16 %v3457
      %v3513 = vunpack.c.l.b16 %v3471
      %v3514 = vunpack.c.l.b16 %v3481
      %v3515 = vpack.c.b16 %v3484, %v3483
      %v3516 = vpack.c.b16 %v3486, %v3485
      %v3517 = vpack.c.b16 %v3488, %v3487
      %v3518 = vpack.c.b16 %v3490, %v3489
      %v3519 = vpack.c.b16 %v3492, %v3491
      %v3520 = vpack.c.b16 %v3494, %v3493
      %v3521 = vpack.c.b16 %v3496, %v3495
      %v3522 = vpack.c.b16 %v3498, %v3497
      %v3523 = vpack.c.b16 %v3500, %v3499
      %v3524 = vpack.c.b16 %v3502, %v3501
      %v3525 = vpack.c.b16 %v3504, %v3503
      %v3526 = vpack.c.b16 %v3506, %v3505
      %v3527 = vpack.c.b16 %v3508, %v3507
      %v3528 = vpack.c.b16 %v3510, %v3509
      %v3529 = vpack.c.b16 %v3512, %v3511
      %v3530 = vpack.c.b16 %v3514, %v3513
      %v3532 = vsel %vm1456, %v3515, 0
      %v3535 = vsel %vm1456, %v3516, 0
      %v3538 = vsel %vm1456, %v3517, 0
      %v3541 = vsel %vm1456, %v3518, 0
      %v3544 = vsel %vm1456, %v3519, 0
      %v3547 = vsel %vm1456, %v3520, 0
      %v3550 = vsel %vm1456, %v3521, 0
      %v3553 = vsel %vm1456, %v3522, 0
      %v3556 = vsel %vm1456, %v3523, 0
      %v3559 = vsel %vm1456, %v3524, 0
      %v3562 = vsel %vm1456, %v3525, 0
      %v3565 = vsel %vm1456, %v3526, 0
      %v3568 = vsel %vm1456, %v3527, 0
      %v3571 = vsel %vm1456, %v3528, 0
      %v3574 = vsel %vm1456, %v3529, 0
      %v3577 = vsel %vm1456, %v3530, 0
      %v3580 = vsel %vm1505, %v3482, 0
      %3582 = vmatprep.subr.bf16.mxu0 0
      %3583 = vmatpush1.bf16.msra.mxu0 0
      %3584 = vmatprep.subr.bf16.mxu0 0
      %3585 = vmatpush1.bf16.msra.mxu0 0
      %3586 = vmatprep.subr.bf16.mxu0 0
      %3587 = vmatpush1.bf16.msra.mxu0 0
      %3588 = vmatprep.subr.bf16.mxu0 0
      %3589 = vmatpush1.bf16.msra.mxu0 0
      %3590 = vmatprep.subr.bf16.mxu0 0
      %3591 = vmatpush1.bf16.msra.mxu0 0
      %3592 = vmatprep.subr.bf16.mxu0 0
      %3593 = vmatpush1.bf16.msra.mxu0 0
      %3594 = vmatprep.subr.bf16.mxu0 0
      %3595 = vmatpush1.bf16.msra.mxu0 0
      %3596 = vmatprep.subr.bf16.mxu0 0
      %3597 = vmatpush1.bf16.msra.mxu0 %v3580
      %3598 = vmatprep.subr.bf16.mxu0 0
      %3599 = vmatpush2.bf16.msra.mxu0 0
      %3600 = vmatprep.subr.bf16.mxu0 0
      %3601 = vmatpush2.bf16.msra.mxu0 0
      %3602 = vmatprep.subr.bf16.mxu0 0
      %3603 = vmatpush2.bf16.msra.mxu0 0
      %3604 = vmatprep.subr.bf16.mxu0 0
      %3605 = vmatpush2.bf16.msra.mxu0 0
      %3606 = vmatprep.subr.bf16.mxu0 0
      %3607 = vmatpush2.bf16.msra.mxu0 0
      %3608 = vmatprep.subr.bf16.mxu0 0
      %3609 = vmatpush2.bf16.msra.mxu0 0
      %3610 = vmatprep.subr.bf16.mxu0 0
      %3611 = vmatpush2.bf16.msra.mxu0 0
      %3612 = vmatprep.subr.bf16.mxu0 0
      %3613 = vmatpush2.bf16.msra.mxu0 0
      %3614 = vmatprep.mubr.bf16.mxu0 0
      %3615 = vmatmul.mubr.bf16.gmra.mxu0 %v3532
      %v3616 = vpop.f32.mrf.mxu0
      %v3617 = vadd.f32 0.0, %v3616
      %v3618 = vpop.f32.mrf.mxu0
      %v3619 = vpop.f32.mrf.mxu0
      %v3620 = vadd.f32 0.0, %v3619
      %v3621 = vpop.f32.mrf.mxu0
      %3622 = vmatprep.mubr.bf16.mxu0 0
      %3623 = vmatmul.mubr.bf16.gmra.mxu0 %v3535
      %v3624 = vpop.f32.mrf.mxu0
      %v3625 = vadd.f32 0.0, %v3624
      %v3626 = vpop.f32.mrf.mxu0
      %v3627 = vpop.f32.mrf.mxu0
      %v3628 = vadd.f32 0.0, %v3627
      %v3629 = vpop.f32.mrf.mxu0
      %3630 = vmatprep.mubr.bf16.mxu0 0
      %3631 = vmatmul.mubr.bf16.gmra.mxu0 %v3538
      %v3632 = vpop.f32.mrf.mxu0
      %v3633 = vadd.f32 0.0, %v3632
      %v3634 = vpop.f32.mrf.mxu0
      %v3635 = vpop.f32.mrf.mxu0
      %v3636 = vadd.f32 0.0, %v3635
      %v3637 = vpop.f32.mrf.mxu0
      %3638 = vmatprep.mubr.bf16.mxu0 0
      %3639 = vmatmul.mubr.bf16.gmra.mxu0 %v3541
      %v3640 = vpop.f32.mrf.mxu0
      %v3641 = vadd.f32 0.0, %v3640
      %v3642 = vpop.f32.mrf.mxu0
      %v3643 = vpop.f32.mrf.mxu0
      %v3644 = vadd.f32 0.0, %v3643
      %v3645 = vpop.f32.mrf.mxu0
      %3646 = vmatprep.mubr.bf16.mxu0 0
      %3647 = vmatmul.mubr.bf16.gmra.mxu0 %v3544
      %v3648 = vpop.f32.mrf.mxu0
      %v3649 = vadd.f32 0.0, %v3648
      %v3650 = vpop.f32.mrf.mxu0
      %v3651 = vpop.f32.mrf.mxu0
      %v3652 = vadd.f32 0.0, %v3651
      %v3653 = vpop.f32.mrf.mxu0
      %3654 = vmatprep.mubr.bf16.mxu0 0
      %3655 = vmatmul.mubr.bf16.gmra.mxu0 %v3547
      %v3656 = vpop.f32.mrf.mxu0
      %v3657 = vadd.f32 0.0, %v3656
      %v3658 = vpop.f32.mrf.mxu0
      %v3659 = vpop.f32.mrf.mxu0
      %v3660 = vadd.f32 0.0, %v3659
      %v3661 = vpop.f32.mrf.mxu0
      %3662 = vmatprep.mubr.bf16.mxu0 0
      %3663 = vmatmul.mubr.bf16.gmra.mxu0 %v3550
      %v3664 = vpop.f32.mrf.mxu0
      %v3665 = vadd.f32 0.0, %v3664
      %v3666 = vpop.f32.mrf.mxu0
      %v3667 = vpop.f32.mrf.mxu0
      %v3668 = vadd.f32 0.0, %v3667
      %v3669 = vpop.f32.mrf.mxu0
      %3670 = vmatprep.mubr.bf16.mxu0 0
      %3671 = vmatmul.mubr.bf16.gmra.mxu0 %v3553
      %v3672 = vpop.f32.mrf.mxu0
      %v3673 = vadd.f32 0.0, %v3672
      %v3674 = vpop.f32.mrf.mxu0
      %v3675 = vpop.f32.mrf.mxu0
      %v3676 = vadd.f32 0.0, %v3675
      %v3677 = vpop.f32.mrf.mxu0
      %3678 = vmatprep.mubr.bf16.mxu0 0
      %3679 = vmatmul.mubr.bf16.gmra.mxu0 %v3556
      %v3680 = vpop.f32.mrf.mxu0
      %v3681 = vadd.f32 0.0, %v3680
      %v3682 = vpop.f32.mrf.mxu0
      %v3683 = vpop.f32.mrf.mxu0
      %v3684 = vadd.f32 0.0, %v3683
      %v3685 = vpop.f32.mrf.mxu0
      %3686 = vmatprep.mubr.bf16.mxu0 0
      %3687 = vmatmul.mubr.bf16.gmra.mxu0 %v3559
      %v3688 = vpop.f32.mrf.mxu0
      %v3689 = vadd.f32 0.0, %v3688
      %v3690 = vpop.f32.mrf.mxu0
      %v3691 = vpop.f32.mrf.mxu0
      %v3692 = vadd.f32 0.0, %v3691
      %v3693 = vpop.f32.mrf.mxu0
      %3694 = vmatprep.mubr.bf16.mxu0 0
      %3695 = vmatmul.mubr.bf16.gmra.mxu0 %v3562
      %v3696 = vpop.f32.mrf.mxu0
      %v3697 = vadd.f32 0.0, %v3696
      %v3698 = vpop.f32.mrf.mxu0
      %v3699 = vpop.f32.mrf.mxu0
      %v3700 = vadd.f32 0.0, %v3699
      %v3701 = vpop.f32.mrf.mxu0
      %3702 = vmatprep.mubr.bf16.mxu0 0
      %3703 = vmatmul.mubr.bf16.gmra.mxu0 %v3565
      %v3704 = vpop.f32.mrf.mxu0
      %v3705 = vadd.f32 0.0, %v3704
      %v3706 = vpop.f32.mrf.mxu0
      %v3707 = vpop.f32.mrf.mxu0
      %v3708 = vadd.f32 0.0, %v3707
      %v3709 = vpop.f32.mrf.mxu0
      %3710 = vmatprep.mubr.bf16.mxu0 0
      %3711 = vmatmul.mubr.bf16.gmra.mxu0 %v3568
      %v3712 = vpop.f32.mrf.mxu0
      %v3713 = vadd.f32 0.0, %v3712
      %v3714 = vpop.f32.mrf.mxu0
      %v3715 = vpop.f32.mrf.mxu0
      %v3716 = vadd.f32 0.0, %v3715
      %v3717 = vpop.f32.mrf.mxu0
      %3718 = vmatprep.mubr.bf16.mxu0 0
      %3719 = vmatmul.mubr.bf16.gmra.mxu0 %v3571
      %v3720 = vpop.f32.mrf.mxu0
      %v3721 = vadd.f32 0.0, %v3720
      %v3722 = vpop.f32.mrf.mxu0
      %v3723 = vpop.f32.mrf.mxu0
      %v3724 = vadd.f32 0.0, %v3723
      %v3725 = vpop.f32.mrf.mxu0
      %3726 = vmatprep.mubr.bf16.mxu0 0
      %3727 = vmatmul.mubr.bf16.gmra.mxu0 %v3574
      %v3728 = vpop.f32.mrf.mxu0
      %v3729 = vadd.f32 0.0, %v3728
      %v3730 = vpop.f32.mrf.mxu0
      %v3731 = vpop.f32.mrf.mxu0
      %v3732 = vadd.f32 0.0, %v3731
      %v3733 = vpop.f32.mrf.mxu0
      %3734 = vmatprep.mubr.bf16.mxu0 0
      %3735 = vmatmul.mubr.bf16.gmra.mxu0 %v3577
      %v3736 = vpop.f32.mrf.mxu0
      %v3737 = vadd.f32 0.0, %v3736
      %v3738 = vpop.f32.mrf.mxu0
      %v3739 = vpop.f32.mrf.mxu0
      %v3740 = vadd.f32 0.0, %v3739
      %v3741 = vpop.f32.mrf.mxu0
      %3742 = vdwg.mxu0
      %v3743 = vadd.f32 %v3017, %v3617
      %v3744 = vadd.f32 %v3018, %v3620
      %v3745 = vadd.f32 %v3019, %v3625
      %v3746 = vadd.f32 %v3020, %v3628
      %v3747 = vadd.f32 %v3021, %v3633
      %v3748 = vadd.f32 %v3022, %v3636
      %v3749 = vadd.f32 %v3023, %v3641
      %v3750 = vadd.f32 %v3024, %v3644
      %v3751 = vadd.f32 %v3025, %v3649
      %v3752 = vadd.f32 %v3026, %v3652
      %v3753 = vadd.f32 %v3027, %v3657
      %v3754 = vadd.f32 %v3028, %v3660
      %v3755 = vadd.f32 %v3029, %v3665
      %v3756 = vadd.f32 %v3030, %v3668
      %v3757 = vadd.f32 %v3031, %v3673
      %v3758 = vadd.f32 %v3032, %v3676
      %v3759 = vadd.f32 %v3033, %v3681
      %v3760 = vadd.f32 %v3034, %v3684
      %v3761 = vadd.f32 %v3035, %v3689
      %v3762 = vadd.f32 %v3036, %v3692
      %v3763 = vadd.f32 %v3037, %v3697
      %v3764 = vadd.f32 %v3038, %v3700
      %v3765 = vadd.f32 %v3039, %v3705
      %v3766 = vadd.f32 %v3040, %v3708
      %v3767 = vadd.f32 %v3041, %v3713
      %v3768 = vadd.f32 %v3042, %v3716
      %v3769 = vadd.f32 %v3043, %v3721
      %v3770 = vadd.f32 %v3044, %v3724
      %v3771 = vadd.f32 %v3045, %v3729
      %v3772 = vadd.f32 %v3046, %v3732
      %v3773 = vadd.f32 %v3047, %v3737
      %v3774 = vadd.f32 %v3048, %v3740
      %v3775 = vld [vmem:[%s2687] sm:$0xf]
      %v3776 = vld [vmem:[%s2687 + $0x4] sm:$0xf]
      %v3777 = vld [vmem:[%s2687 + $0x8] sm:$0x1]
      %v3778 = vld [vmem:[%s2687 + $0xc] sm:$0xf]
      %v3779 = vld [vmem:[%s2687 + $0x10] sm:$0xf]
      %v3780 = vld [vmem:[%s2687 + $0x14] sm:$0x1]
      %v3781 = vld [vmem:[%s2687 + $0x18] sm:$0xf]
      %v3782 = vld [vmem:[%s2687 + $0x1c] sm:$0xf]
      %v3783 = vld [vmem:[%s2687 + $0x20] sm:$0x1]
      %v3784 = vld [vmem:[%s2687 + $0x24] sm:$0xf]
      %v3785 = vld [vmem:[%s2687 + $0x28] sm:$0xf]
      %v3786 = vld [vmem:[%s2687 + $0x2c] sm:$0x1]
      %v3787 = vld [vmem:[%s2687 + $0x30] sm:$0xf]
      %v3788 = vld [vmem:[%s2687 + $0x34] sm:$0xf]
      %v3789 = vld [vmem:[%s2687 + $0x38] sm:$0x1]
      %v3790 = vld [vmem:[%s2687 + $0x3c] sm:$0xf]
      %v3791 = vld [vmem:[%s2687 + $0x40] sm:$0xf]
      %v3792 = vld [vmem:[%s2687 + $0x44] sm:$0x1]
      %v3793 = vld [vmem:[%s2687 + $0x48] sm:$0xf]
      %v3794 = vld [vmem:[%s2687 + $0x4c] sm:$0xf]
      %v3795 = vld [vmem:[%s2687 + $0x50] sm:$0x1]
      %v3796 = vld [vmem:[%s2687 + $0x54] sm:$0xf]
      %v3797 = vld [vmem:[%s2687 + $0x58] sm:$0xf]
      %v3798 = vld [vmem:[%s2687 + $0x5c] sm:$0x1]
      %v3799 = vld [vmem:[%s2687 + $0x60] sm:$0xf]
      %v3800 = vld [vmem:[%s2687 + $0x64] sm:$0xf]
      %v3801 = vld [vmem:[%s2687 + $0x68] sm:$0x1]
      %v3802 = vld [vmem:[%s2687 + $0x6c] sm:$0xf]
      %v3803 = vld [vmem:[%s2687 + $0x70] sm:$0xf]
      %v3804 = vld [vmem:[%s2687 + $0x74] sm:$0x1]
      %v3805 = vld [vmem:[%s2687 + $0x78] sm:$0xf]
      %v3806 = vld [vmem:[%s2687 + $0x7c] sm:$0xf]
      %v3807 = vld [vmem:[%s2687 + $0x80] sm:$0x1]
      %v3808 = vld [vmem:[%s2687 + $0x84] sm:$0xf]
      %v3809 = vld [vmem:[%s2687 + $0x88] sm:$0xf]
      %v3810 = vld [vmem:[%s2687 + $0x8c] sm:$0x1]
      %v3811 = vld [vmem:[%s2687 + $0x90] sm:$0xf]
      %v3812 = vld [vmem:[%s2687 + $0x94] sm:$0xf]
      %v3813 = vld [vmem:[%s2687 + $0x98] sm:$0x1]
      %v3814 = vld [vmem:[%s2687 + $0x9c] sm:$0xf]
      %v3815 = vld [vmem:[%s2687 + $0xa0] sm:$0xf]
      %v3816 = vld [vmem:[%s2687 + $0xa4] sm:$0x1]
      %v3817 = vld [vmem:[%s2687 + $0xa8] sm:$0xf]
      %v3818 = vld [vmem:[%s2687 + $0xac] sm:$0xf]
      %v3819 = vld [vmem:[%s2687 + $0xb0] sm:$0x1]
      %v3820 = vld [vmem:[%s2687 + $0xb4] sm:$0xf]
      %v3821 = vld [vmem:[%s2687 + $0xb8] sm:$0xf]
      %v3822 = vld [vmem:[%s2687 + $0xbc] sm:$0x1]
      %v3824 = vshrl.u32 %v3775, 16
      %v3826 = vrot.slane %v3824, 4
      %v3827 = vshll.u32 %v3775, 16
      %v3829 = vrot.slane %v3827, 5
      %v3830 = vor.u32 %v3826, %v3829
      %v3831 = vrot.slane %v3830, 4
      %v3833 = vshll.u32 %v3776, 16
      %v3835 = vrot.slane %v3833, 5
      %v3836 = vsel %vm1018, %v3831, %v3835
      %v3837 = vshrl.u32 %v3776, 16
      %v3839 = vrot.slane %v3837, 4
      %v3840 = vor.u32 %v3839, %v3835
      %v3841 = vrot.slane %v3840, 4
      %v3843 = vshll.u32 %v3777, 16
      %v3845 = vrot.slane %v3843, 5
      %v3846 = vsel %vm1018, %v3841, %v3845
      %v3848 = vshrl.u32 %v3778, 16
      %v3850 = vrot.slane %v3848, 4
      %v3851 = vshll.u32 %v3778, 16
      %v3853 = vrot.slane %v3851, 5
      %v3854 = vor.u32 %v3850, %v3853
      %v3855 = vrot.slane %v3854, 4
      %v3857 = vshll.u32 %v3779, 16
      %v3859 = vrot.slane %v3857, 5
      %v3860 = vsel %vm1018, %v3855, %v3859
      %v3861 = vshrl.u32 %v3779, 16
      %v3863 = vrot.slane %v3861, 4
      %v3864 = vor.u32 %v3863, %v3859
      %v3865 = vrot.slane %v3864, 4
      %v3867 = vshll.u32 %v3780, 16
      %v3869 = vrot.slane %v3867, 5
      %v3870 = vsel %vm1018, %v3865, %v3869
      %v3872 = vshrl.u32 %v3781, 16
      %v3874 = vrot.slane %v3872, 4
      %v3875 = vshll.u32 %v3781, 16
      %v3877 = vrot.slane %v3875, 5
      %v3878 = vor.u32 %v3874, %v3877
      %v3879 = vrot.slane %v3878, 4
      %v3881 = vshll.u32 %v3782, 16
      %v3883 = vrot.slane %v3881, 5
      %v3884 = vsel %vm1018, %v3879, %v3883
      %v3885 = vshrl.u32 %v3782, 16
      %v3887 = vrot.slane %v3885, 4
      %v3888 = vor.u32 %v3887, %v3883
      %v3889 = vrot.slane %v3888, 4
      %v3891 = vshll.u32 %v3783, 16
      %v3893 = vrot.slane %v3891, 5
      %v3894 = vsel %vm1018, %v3889, %v3893
      %v3896 = vshrl.u32 %v3784, 16
      %v3898 = vrot.slane %v3896, 4
      %v3899 = vshll.u32 %v3784, 16
      %v3901 = vrot.slane %v3899, 5
      %v3902 = vor.u32 %v3898, %v3901
      %v3903 = vrot.slane %v3902, 4
      %v3905 = vshll.u32 %v3785, 16
      %v3907 = vrot.slane %v3905, 5
      %v3908 = vsel %vm1018, %v3903, %v3907
      %v3909 = vshrl.u32 %v3785, 16
      %v3911 = vrot.slane %v3909, 4
      %v3912 = vor.u32 %v3911, %v3907
      %v3913 = vrot.slane %v3912, 4
      %v3915 = vshll.u32 %v3786, 16
      %v3917 = vrot.slane %v3915, 5
      %v3918 = vsel %vm1018, %v3913, %v3917
      %v3920 = vshrl.u32 %v3787, 16
      %v3922 = vrot.slane %v3920, 4
      %v3923 = vshll.u32 %v3787, 16
      %v3925 = vrot.slane %v3923, 5
      %v3926 = vor.u32 %v3922, %v3925
      %v3927 = vrot.slane %v3926, 4
      %v3929 = vshll.u32 %v3788, 16
      %v3931 = vrot.slane %v3929, 5
      %v3932 = vsel %vm1018, %v3927, %v3931
      %v3933 = vshrl.u32 %v3788, 16
      %v3935 = vrot.slane %v3933, 4
      %v3936 = vor.u32 %v3935, %v3931
      %v3937 = vrot.slane %v3936, 4
      %v3939 = vshll.u32 %v3789, 16
      %v3941 = vrot.slane %v3939, 5
      %v3942 = vsel %vm1018, %v3937, %v3941
      %v3944 = vshrl.u32 %v3790, 16
      %v3946 = vrot.slane %v3944, 4
      %v3947 = vshll.u32 %v3790, 16
      %v3949 = vrot.slane %v3947, 5
      %v3950 = vor.u32 %v3946, %v3949
      %v3951 = vrot.slane %v3950, 4
      %v3953 = vshll.u32 %v3791, 16
      %v3955 = vrot.slane %v3953, 5
      %v3956 = vsel %vm1018, %v3951, %v3955
      %v3957 = vshrl.u32 %v3791, 16
      %v3959 = vrot.slane %v3957, 4
      %v3960 = vor.u32 %v3959, %v3955
      %v3961 = vrot.slane %v3960, 4
      %v3963 = vshll.u32 %v3792, 16
      %v3965 = vrot.slane %v3963, 5
      %v3966 = vsel %vm1018, %v3961, %v3965
      %v3968 = vshrl.u32 %v3793, 16
      %v3970 = vrot.slane %v3968, 4
      %v3971 = vshll.u32 %v3793, 16
      %v3973 = vrot.slane %v3971, 5
      %v3974 = vor.u32 %v3970, %v3973
      %v3975 = vrot.slane %v3974, 4
      %v3977 = vshll.u32 %v3794, 16
      %v3979 = vrot.slane %v3977, 5
      %v3980 = vsel %vm1018, %v3975, %v3979
      %v3981 = vshrl.u32 %v3794, 16
      %v3983 = vrot.slane %v3981, 4
      %v3984 = vor.u32 %v3983, %v3979
      %v3985 = vrot.slane %v3984, 4
      %v3987 = vshll.u32 %v3795, 16
      %v3989 = vrot.slane %v3987, 5
      %v3990 = vsel %vm1018, %v3985, %v3989
      %v3992 = vshrl.u32 %v3796, 16
      %v3994 = vrot.slane %v3992, 4
      %v3995 = vshll.u32 %v3796, 16
      %v3997 = vrot.slane %v3995, 5
      %v3998 = vor.u32 %v3994, %v3997
      %v3999 = vrot.slane %v3998, 4
      %v4001 = vshll.u32 %v3797, 16
      %v4003 = vrot.slane %v4001, 5
      %v4004 = vsel %vm1018, %v3999, %v4003
      %v4005 = vshrl.u32 %v3797, 16
      %v4007 = vrot.slane %v4005, 4
      %v4008 = vor.u32 %v4007, %v4003
      %v4009 = vrot.slane %v4008, 4
      %v4011 = vshll.u32 %v3798, 16
      %v4013 = vrot.slane %v4011, 5
      %v4014 = vsel %vm1018, %v4009, %v4013
      %v4016 = vshrl.u32 %v3799, 16
      %v4018 = vrot.slane %v4016, 4
      %v4019 = vshll.u32 %v3799, 16
      %v4021 = vrot.slane %v4019, 5
      %v4022 = vor.u32 %v4018, %v4021
      %v4023 = vrot.slane %v4022, 4
      %v4025 = vshll.u32 %v3800, 16
      %v4027 = vrot.slane %v4025, 5
      %v4028 = vsel %vm1018, %v4023, %v4027
      %v4029 = vshrl.u32 %v3800, 16
      %v4031 = vrot.slane %v4029, 4
      %v4032 = vor.u32 %v4031, %v4027
      %v4033 = vrot.slane %v4032, 4
      %v4035 = vshll.u32 %v3801, 16
      %v4037 = vrot.slane %v4035, 5
      %v4038 = vsel %vm1018, %v4033, %v4037
      %v4040 = vshrl.u32 %v3802, 16
      %v4042 = vrot.slane %v4040, 4
      %v4043 = vshll.u32 %v3802, 16
      %v4045 = vrot.slane %v4043, 5
      %v4046 = vor.u32 %v4042, %v4045
      %v4047 = vrot.slane %v4046, 4
      %v4049 = vshll.u32 %v3803, 16
      %v4051 = vrot.slane %v4049, 5
      %v4052 = vsel %vm1018, %v4047, %v4051
      %v4053 = vshrl.u32 %v3803, 16
      %v4055 = vrot.slane %v4053, 4
      %v4056 = vor.u32 %v4055, %v4051
      %v4057 = vrot.slane %v4056, 4
      %v4059 = vshll.u32 %v3804, 16
      %v4061 = vrot.slane %v4059, 5
      %v4062 = vsel %vm1018, %v4057, %v4061
      %v4064 = vshrl.u32 %v3805, 16
      %v4066 = vrot.slane %v4064, 4
      %v4067 = vshll.u32 %v3805, 16
      %v4069 = vrot.slane %v4067, 5
      %v4070 = vor.u32 %v4066, %v4069
      %v4071 = vrot.slane %v4070, 4
      %v4073 = vshll.u32 %v3806, 16
      %v4075 = vrot.slane %v4073, 5
      %v4076 = vsel %vm1018, %v4071, %v4075
      %v4077 = vshrl.u32 %v3806, 16
      %v4079 = vrot.slane %v4077, 4
      %v4080 = vor.u32 %v4079, %v4075
      %v4081 = vrot.slane %v4080, 4
      %v4083 = vshll.u32 %v3807, 16
      %v4085 = vrot.slane %v4083, 5
      %v4086 = vsel %vm1018, %v4081, %v4085
      %v4088 = vshrl.u32 %v3808, 16
      %v4090 = vrot.slane %v4088, 4
      %v4091 = vshll.u32 %v3808, 16
      %v4093 = vrot.slane %v4091, 5
      %v4094 = vor.u32 %v4090, %v4093
      %v4095 = vrot.slane %v4094, 4
      %v4097 = vshll.u32 %v3809, 16
      %v4099 = vrot.slane %v4097, 5
      %v4100 = vsel %vm1018, %v4095, %v4099
      %v4101 = vshrl.u32 %v3809, 16
      %v4103 = vrot.slane %v4101, 4
      %v4104 = vor.u32 %v4103, %v4099
      %v4105 = vrot.slane %v4104, 4
      %v4107 = vshll.u32 %v3810, 16
      %v4109 = vrot.slane %v4107, 5
      %v4110 = vsel %vm1018, %v4105, %v4109
      %v4112 = vshrl.u32 %v3811, 16
      %v4114 = vrot.slane %v4112, 4
      %v4115 = vshll.u32 %v3811, 16
      %v4117 = vrot.slane %v4115, 5
      %v4118 = vor.u32 %v4114, %v4117
      %v4119 = vrot.slane %v4118, 4
      %v4121 = vshll.u32 %v3812, 16
      %v4123 = vrot.slane %v4121, 5
      %v4124 = vsel %vm1018, %v4119, %v4123
      %v4125 = vshrl.u32 %v3812, 16
      %v4127 = vrot.slane %v4125, 4
      %v4128 = vor.u32 %v4127, %v4123
      %v4129 = vrot.slane %v4128, 4
      %v4131 = vshll.u32 %v3813, 16
      %v4133 = vrot.slane %v4131, 5
      %v4134 = vsel %vm1018, %v4129, %v4133
      %v4136 = vshrl.u32 %v3814, 16
      %v4138 = vrot.slane %v4136, 4
      %v4139 = vshll.u32 %v3814, 16
      %v4141 = vrot.slane %v4139, 5
      %v4142 = vor.u32 %v4138, %v4141
      %v4143 = vrot.slane %v4142, 4
      %v4145 = vshll.u32 %v3815, 16
      %v4147 = vrot.slane %v4145, 5
      %v4148 = vsel %vm1018, %v4143, %v4147
      %v4149 = vshrl.u32 %v3815, 16
      %v4151 = vrot.slane %v4149, 4
      %v4152 = vor.u32 %v4151, %v4147
      %v4153 = vrot.slane %v4152, 4
      %v4155 = vshll.u32 %v3816, 16
      %v4157 = vrot.slane %v4155, 5
      %v4158 = vsel %vm1018, %v4153, %v4157
      %v4160 = vshrl.u32 %v3817, 16
      %v4162 = vrot.slane %v4160, 4
      %v4163 = vshll.u32 %v3817, 16
      %v4165 = vrot.slane %v4163, 5
      %v4166 = vor.u32 %v4162, %v4165
      %v4167 = vrot.slane %v4166, 4
      %v4169 = vshll.u32 %v3818, 16
      %v4171 = vrot.slane %v4169, 5
      %v4172 = vsel %vm1018, %v4167, %v4171
      %v4173 = vshrl.u32 %v3818, 16
      %v4175 = vrot.slane %v4173, 4
      %v4176 = vor.u32 %v4175, %v4171
      %v4177 = vrot.slane %v4176, 4
      %v4179 = vshll.u32 %v3819, 16
      %v4181 = vrot.slane %v4179, 5
      %v4182 = vsel %vm1018, %v4177, %v4181
      %v4184 = vshrl.u32 %v3820, 16
      %v4186 = vrot.slane %v4184, 4
      %v4187 = vshll.u32 %v3820, 16
      %v4189 = vrot.slane %v4187, 5
      %v4190 = vor.u32 %v4186, %v4189
      %v4191 = vrot.slane %v4190, 4
      %v4193 = vshll.u32 %v3821, 16
      %v4195 = vrot.slane %v4193, 5
      %v4196 = vsel %vm1018, %v4191, %v4195
      %v4197 = vshrl.u32 %v3821, 16
      %v4199 = vrot.slane %v4197, 4
      %v4200 = vor.u32 %v4199, %v4195
      %v4201 = vrot.slane %v4200, 4
      %v4203 = vshll.u32 %v3822, 16
      %v4205 = vrot.slane %v4203, 5
      %v4206 = vsel %vm1018, %v4201, %v4205
      %v4207 = vld [vmem:[%s5 + $0x8] sm:$0xc]
      %v4208 = vunpack.c.l.b16 %v3836
      %v4209 = vunpack.c.l.b16 %v3846
      %v4210 = vunpack.c.l.b16 %v3860
      %v4211 = vunpack.c.l.b16 %v3870
      %v4212 = vunpack.c.l.b16 %v3884
      %v4213 = vunpack.c.l.b16 %v3894
      %v4214 = vunpack.c.l.b16 %v3908
      %v4215 = vunpack.c.l.b16 %v3918
      %v4216 = vunpack.c.l.b16 %v3932
      %v4217 = vunpack.c.l.b16 %v3942
      %v4218 = vunpack.c.l.b16 %v3956
      %v4219 = vunpack.c.l.b16 %v3966
      %v4220 = vunpack.c.l.b16 %v3980
      %v4221 = vunpack.c.l.b16 %v3990
      %v4222 = vunpack.c.l.b16 %v4004
      %v4223 = vunpack.c.l.b16 %v4014
      %v4224 = vunpack.c.l.b16 %v4028
      %v4225 = vunpack.c.l.b16 %v4038
      %v4226 = vunpack.c.l.b16 %v4052
      %v4227 = vunpack.c.l.b16 %v4062
      %v4228 = vunpack.c.l.b16 %v4076
      %v4229 = vunpack.c.l.b16 %v4086
      %v4230 = vunpack.c.l.b16 %v4100
      %v4231 = vunpack.c.l.b16 %v4110
      %v4232 = vunpack.c.l.b16 %v4124
      %v4233 = vunpack.c.l.b16 %v4134
      %v4234 = vunpack.c.l.b16 %v4148
      %v4235 = vunpack.c.l.b16 %v4158
      %v4236 = vunpack.c.l.b16 %v4172
      %v4237 = vunpack.c.l.b16 %v4182
      %v4238 = vunpack.c.l.b16 %v4196
      %v4239 = vunpack.c.l.b16 %v4206
      %v4240 = vpack.c.b16 %v4209, %v4208
      %v4241 = vpack.c.b16 %v4211, %v4210
      %v4242 = vpack.c.b16 %v4213, %v4212
      %v4243 = vpack.c.b16 %v4215, %v4214
      %v4244 = vpack.c.b16 %v4217, %v4216
      %v4245 = vpack.c.b16 %v4219, %v4218
      %v4246 = vpack.c.b16 %v4221, %v4220
      %v4247 = vpack.c.b16 %v4223, %v4222
      %v4248 = vpack.c.b16 %v4225, %v4224
      %v4249 = vpack.c.b16 %v4227, %v4226
      %v4250 = vpack.c.b16 %v4229, %v4228
      %v4251 = vpack.c.b16 %v4231, %v4230
      %v4252 = vpack.c.b16 %v4233, %v4232
      %v4253 = vpack.c.b16 %v4235, %v4234
      %v4254 = vpack.c.b16 %v4237, %v4236
      %v4255 = vpack.c.b16 %v4239, %v4238
      %v4257 = vunpack.c.l.b16 %v4207
      %v4258 = vpack.c.b16 %v4257, %v4257
      %v4259 = vrot.slane %v4258, 2
      %v4261 = vsel %vm1456, %v4240, 0
      %v4264 = vsel %vm1456, %v4241, 0
      %v4267 = vsel %vm1456, %v4242, 0
      %v4270 = vsel %vm1456, %v4243, 0
      %v4273 = vsel %vm1456, %v4244, 0
      %v4276 = vsel %vm1456, %v4245, 0
      %v4279 = vsel %vm1456, %v4246, 0
      %v4282 = vsel %vm1456, %v4247, 0
      %v4285 = vsel %vm1456, %v4248, 0
      %v4288 = vsel %vm1456, %v4249, 0
      %v4291 = vsel %vm1456, %v4250, 0
      %v4294 = vsel %vm1456, %v4251, 0
      %v4297 = vsel %vm1456, %v4252, 0
      %v4300 = vsel %vm1456, %v4253, 0
      %v4303 = vsel %vm1456, %v4254, 0
      %v4306 = vsel %vm1456, %v4255, 0
      %v4309 = vsel %vm1505, %v4259, 0
      %4311 = vmatprep.subr.bf16.mxu0 0
      %4312 = vmatpush1.bf16.msra.mxu0 0
      %4313 = vmatprep.subr.bf16.mxu0 0
      %4314 = vmatpush1.bf16.msra.mxu0 0
      %4315 = vmatprep.subr.bf16.mxu0 0
      %4316 = vmatpush1.bf16.msra.mxu0 0
      %4317 = vmatprep.subr.bf16.mxu0 0
      %4318 = vmatpush1.bf16.msra.mxu0 0
      %4319 = vmatprep.subr.bf16.mxu0 0
      %4320 = vmatpush1.bf16.msra.mxu0 0
      %4321 = vmatprep.subr.bf16.mxu0 0
      %4322 = vmatpush1.bf16.msra.mxu0 0
      %4323 = vmatprep.subr.bf16.mxu0 0
      %4324 = vmatpush1.bf16.msra.mxu0 0
      %4325 = vmatprep.subr.bf16.mxu0 0
      %4326 = vmatpush1.bf16.msra.mxu0 %v4309
      %4327 = vmatprep.subr.bf16.mxu0 0
      %4328 = vmatpush2.bf16.msra.mxu0 0
      %4329 = vmatprep.subr.bf16.mxu0 0
      %4330 = vmatpush2.bf16.msra.mxu0 0
      %4331 = vmatprep.subr.bf16.mxu0 0
      %4332 = vmatpush2.bf16.msra.mxu0 0
      %4333 = vmatprep.subr.bf16.mxu0 0
      %4334 = vmatpush2.bf16.msra.mxu0 0
      %4335 = vmatprep.subr.bf16.mxu0 0
      %4336 = vmatpush2.bf16.msra.mxu0 0
      %4337 = vmatprep.subr.bf16.mxu0 0
      %4338 = vmatpush2.bf16.msra.mxu0 0
      %4339 = vmatprep.subr.bf16.mxu0 0
      %4340 = vmatpush2.bf16.msra.mxu0 0
      %4341 = vmatprep.subr.bf16.mxu0 0
      %4342 = vmatpush2.bf16.msra.mxu0 0
      %4343 = vmatprep.mubr.bf16.mxu0 0
      %4344 = vmatmul.mubr.bf16.gmra.mxu0 %v4261
      %v4345 = vpop.f32.mrf.mxu0
      %v4346 = vadd.f32 0.0, %v4345
      %v4347 = vpop.f32.mrf.mxu0
      %v4348 = vpop.f32.mrf.mxu0
      %v4349 = vadd.f32 0.0, %v4348
      %v4350 = vpop.f32.mrf.mxu0
      %4351 = vmatprep.mubr.bf16.mxu0 0
      %4352 = vmatmul.mubr.bf16.gmra.mxu0 %v4264
      %v4353 = vpop.f32.mrf.mxu0
      %v4354 = vadd.f32 0.0, %v4353
      %v4355 = vpop.f32.mrf.mxu0
      %v4356 = vpop.f32.mrf.mxu0
      %v4357 = vadd.f32 0.0, %v4356
      %v4358 = vpop.f32.mrf.mxu0
      %4359 = vmatprep.mubr.bf16.mxu0 0
      %4360 = vmatmul.mubr.bf16.gmra.mxu0 %v4267
      %v4361 = vpop.f32.mrf.mxu0
      %v4362 = vadd.f32 0.0, %v4361
      %v4363 = vpop.f32.mrf.mxu0
      %v4364 = vpop.f32.mrf.mxu0
      %v4365 = vadd.f32 0.0, %v4364
      %v4366 = vpop.f32.mrf.mxu0
      %4367 = vmatprep.mubr.bf16.mxu0 0
      %4368 = vmatmul.mubr.bf16.gmra.mxu0 %v4270
      %v4369 = vpop.f32.mrf.mxu0
      %v4370 = vadd.f32 0.0, %v4369
      %v4371 = vpop.f32.mrf.mxu0
      %v4372 = vpop.f32.mrf.mxu0
      %v4373 = vadd.f32 0.0, %v4372
      %v4374 = vpop.f32.mrf.mxu0
      %4375 = vmatprep.mubr.bf16.mxu0 0
      %4376 = vmatmul.mubr.bf16.gmra.mxu0 %v4273
      %v4377 = vpop.f32.mrf.mxu0
      %v4378 = vadd.f32 0.0, %v4377
      %v4379 = vpop.f32.mrf.mxu0
      %v4380 = vpop.f32.mrf.mxu0
      %v4381 = vadd.f32 0.0, %v4380
      %v4382 = vpop.f32.mrf.mxu0
      %4383 = vmatprep.mubr.bf16.mxu0 0
      %4384 = vmatmul.mubr.bf16.gmra.mxu0 %v4276
      %v4385 = vpop.f32.mrf.mxu0
      %v4386 = vadd.f32 0.0, %v4385
      %v4387 = vpop.f32.mrf.mxu0
      %v4388 = vpop.f32.mrf.mxu0
      %v4389 = vadd.f32 0.0, %v4388
      %v4390 = vpop.f32.mrf.mxu0
      %4391 = vmatprep.mubr.bf16.mxu0 0
      %4392 = vmatmul.mubr.bf16.gmra.mxu0 %v4279
      %v4393 = vpop.f32.mrf.mxu0
      %v4394 = vadd.f32 0.0, %v4393
      %v4395 = vpop.f32.mrf.mxu0
      %v4396 = vpop.f32.mrf.mxu0
      %v4397 = vadd.f32 0.0, %v4396
      %v4398 = vpop.f32.mrf.mxu0
      %4399 = vmatprep.mubr.bf16.mxu0 0
      %4400 = vmatmul.mubr.bf16.gmra.mxu0 %v4282
      %v4401 = vpop.f32.mrf.mxu0
      %v4402 = vadd.f32 0.0, %v4401
      %v4403 = vpop.f32.mrf.mxu0
      %v4404 = vpop.f32.mrf.mxu0
      %v4405 = vadd.f32 0.0, %v4404
      %v4406 = vpop.f32.mrf.mxu0
      %4407 = vmatprep.mubr.bf16.mxu0 0
      %4408 = vmatmul.mubr.bf16.gmra.mxu0 %v4285
      %v4409 = vpop.f32.mrf.mxu0
      %v4410 = vadd.f32 0.0, %v4409
      %v4411 = vpop.f32.mrf.mxu0
      %v4412 = vpop.f32.mrf.mxu0
      %v4413 = vadd.f32 0.0, %v4412
      %v4414 = vpop.f32.mrf.mxu0
      %4415 = vmatprep.mubr.bf16.mxu0 0
      %4416 = vmatmul.mubr.bf16.gmra.mxu0 %v4288
      %v4417 = vpop.f32.mrf.mxu0
      %v4418 = vadd.f32 0.0, %v4417
      %v4419 = vpop.f32.mrf.mxu0
      %v4420 = vpop.f32.mrf.mxu0
      %v4421 = vadd.f32 0.0, %v4420
      %v4422 = vpop.f32.mrf.mxu0
      %4423 = vmatprep.mubr.bf16.mxu0 0
      %4424 = vmatmul.mubr.bf16.gmra.mxu0 %v4291
      %v4425 = vpop.f32.mrf.mxu0
      %v4426 = vadd.f32 0.0, %v4425
      %v4427 = vpop.f32.mrf.mxu0
      %v4428 = vpop.f32.mrf.mxu0
      %v4429 = vadd.f32 0.0, %v4428
      %v4430 = vpop.f32.mrf.mxu0
      %4431 = vmatprep.mubr.bf16.mxu0 0
      %4432 = vmatmul.mubr.bf16.gmra.mxu0 %v4294
      %v4433 = vpop.f32.mrf.mxu0
      %v4434 = vadd.f32 0.0, %v4433
      %v4435 = vpop.f32.mrf.mxu0
      %v4436 = vpop.f32.mrf.mxu0
      %v4437 = vadd.f32 0.0, %v4436
      %v4438 = vpop.f32.mrf.mxu0
      %4439 = vmatprep.mubr.bf16.mxu0 0
      %4440 = vmatmul.mubr.bf16.gmra.mxu0 %v4297
      %v4441 = vpop.f32.mrf.mxu0
      %v4442 = vadd.f32 0.0, %v4441
      %v4443 = vpop.f32.mrf.mxu0
      %v4444 = vpop.f32.mrf.mxu0
      %v4445 = vadd.f32 0.0, %v4444
      %v4446 = vpop.f32.mrf.mxu0
      %4447 = vmatprep.mubr.bf16.mxu0 0
      %4448 = vmatmul.mubr.bf16.gmra.mxu0 %v4300
      %v4449 = vpop.f32.mrf.mxu0
      %v4450 = vadd.f32 0.0, %v4449
      %v4451 = vpop.f32.mrf.mxu0
      %v4452 = vpop.f32.mrf.mxu0
      %v4453 = vadd.f32 0.0, %v4452
      %v4454 = vpop.f32.mrf.mxu0
      %4455 = vmatprep.mubr.bf16.mxu0 0
      %4456 = vmatmul.mubr.bf16.gmra.mxu0 %v4303
      %v4457 = vpop.f32.mrf.mxu0
      %v4458 = vadd.f32 0.0, %v4457
      %v4459 = vpop.f32.mrf.mxu0
      %v4460 = vpop.f32.mrf.mxu0
      %v4461 = vadd.f32 0.0, %v4460
      %v4462 = vpop.f32.mrf.mxu0
      %4463 = vmatprep.mubr.bf16.mxu0 0
      %4464 = vmatmul.mubr.bf16.gmra.mxu0 %v4306
      %v4465 = vpop.f32.mrf.mxu0
      %v4466 = vadd.f32 0.0, %v4465
      %v4467 = vpop.f32.mrf.mxu0
      %v4468 = vpop.f32.mrf.mxu0
      %v4469 = vadd.f32 0.0, %v4468
      %v4470 = vpop.f32.mrf.mxu0
      %4471 = vdwg.mxu0
      %v4472 = vadd.f32 %v3743, %v4346
      %v4473 = vadd.f32 %v3744, %v4349
      %v4474 = vadd.f32 %v3745, %v4354
      %v4475 = vadd.f32 %v3746, %v4357
      %v4476 = vadd.f32 %v3747, %v4362
      %v4477 = vadd.f32 %v3748, %v4365
      %v4478 = vadd.f32 %v3749, %v4370
      %v4479 = vadd.f32 %v3750, %v4373
      %v4480 = vadd.f32 %v3751, %v4378
      %v4481 = vadd.f32 %v3752, %v4381
      %v4482 = vadd.f32 %v3753, %v4386
      %v4483 = vadd.f32 %v3754, %v4389
      %v4484 = vadd.f32 %v3755, %v4394
      %v4485 = vadd.f32 %v3756, %v4397
      %v4486 = vadd.f32 %v3757, %v4402
      %v4487 = vadd.f32 %v3758, %v4405
      %v4488 = vadd.f32 %v3759, %v4410
      %v4489 = vadd.f32 %v3760, %v4413
      %v4490 = vadd.f32 %v3761, %v4418
      %v4491 = vadd.f32 %v3762, %v4421
      %v4492 = vadd.f32 %v3763, %v4426
      %v4493 = vadd.f32 %v3764, %v4429
      %v4494 = vadd.f32 %v3765, %v4434
      %v4495 = vadd.f32 %v3766, %v4437
      %v4496 = vadd.f32 %v3767, %v4442
      %v4497 = vadd.f32 %v3768, %v4445
      %v4498 = vadd.f32 %v3769, %v4450
      %v4499 = vadd.f32 %v3770, %v4453
      %v4500 = vadd.f32 %v3771, %v4458
      %v4501 = vadd.f32 %v3772, %v4461
      %v4502 = vadd.f32 %v3773, %v4466
      %v4503 = vadd.f32 %v3774, %v4469
      %s4504 = scalar_lea.vmem %s637, 624
      %v4505 = vld [vmem:[%s4504] sm:$0xf]
      %v4506 = vld [vmem:[%s4504 + $0x4] sm:$0xf]
      %v4507 = vld [vmem:[%s4504 + $0xc] sm:$0xf]
      %v4508 = vld [vmem:[%s4504 + $0x10] sm:$0xf]
      %v4509 = vld [vmem:[%s4504 + $0x18] sm:$0xf]
      %v4510 = vld [vmem:[%s4504 + $0x1c] sm:$0xf]
      %v4511 = vld [vmem:[%s4504 + $0x24] sm:$0xf]
      %v4512 = vld [vmem:[%s4504 + $0x28] sm:$0xf]
      %v4513 = vld [vmem:[%s4504 + $0x30] sm:$0xf]
      %v4514 = vld [vmem:[%s4504 + $0x34] sm:$0xf]
      %v4515 = vld [vmem:[%s4504 + $0x3c] sm:$0xf]
      %v4516 = vld [vmem:[%s4504 + $0x40] sm:$0xf]
      %v4517 = vld [vmem:[%s4504 + $0x48] sm:$0xf]
      %v4518 = vld [vmem:[%s4504 + $0x4c] sm:$0xf]
      %v4519 = vld [vmem:[%s4504 + $0x54] sm:$0xf]
      %v4520 = vld [vmem:[%s4504 + $0x58] sm:$0xf]
      %v4521 = vld [vmem:[%s4504 + $0x60] sm:$0xf]
      %v4522 = vld [vmem:[%s4504 + $0x64] sm:$0xf]
      %v4523 = vld [vmem:[%s4504 + $0x6c] sm:$0xf]
      %v4524 = vld [vmem:[%s4504 + $0x70] sm:$0xf]
      %v4525 = vld [vmem:[%s4504 + $0x78] sm:$0xf]
      %v4526 = vld [vmem:[%s4504 + $0x7c] sm:$0xf]
      %v4527 = vld [vmem:[%s4504 + $0x84] sm:$0xf]
      %v4528 = vld [vmem:[%s4504 + $0x88] sm:$0xf]
      %v4529 = vld [vmem:[%s4504 + $0x90] sm:$0xf]
      %v4530 = vld [vmem:[%s4504 + $0x94] sm:$0xf]
      %v4531 = vld [vmem:[%s4504 + $0x9c] sm:$0xf]
      %v4532 = vld [vmem:[%s4504 + $0xa0] sm:$0xf]
      %v4533 = vld [vmem:[%s4504 + $0xa8] sm:$0xf]
      %v4534 = vld [vmem:[%s4504 + $0xac] sm:$0xf]
      %v4535 = vld [vmem:[%s4504 + $0xb4] sm:$0xf]
      %v4536 = vld [vmem:[%s4504 + $0xb8] sm:$0xf]
      %v4537 = vld [vmem:[%s5 + $0xc] sm:$0x3]
      %v4570 = vunpack.c.l.b16 %v4505
      %v4571 = vunpack.c.l.b16 %v4506
      %v4572 = vunpack.c.l.b16 %v4507
      %v4573 = vunpack.c.l.b16 %v4508
      %v4574 = vunpack.c.l.b16 %v4509
      %v4575 = vunpack.c.l.b16 %v4510
      %v4576 = vunpack.c.l.b16 %v4511
      %v4577 = vunpack.c.l.b16 %v4512
      %v4578 = vunpack.c.l.b16 %v4513
      %v4579 = vunpack.c.l.b16 %v4514
      %v4580 = vunpack.c.l.b16 %v4515
      %v4581 = vunpack.c.l.b16 %v4516
      %v4582 = vunpack.c.l.b16 %v4517
      %v4583 = vunpack.c.l.b16 %v4518
      %v4584 = vunpack.c.l.b16 %v4519
      %v4585 = vunpack.c.l.b16 %v4520
      %v4586 = vunpack.c.l.b16 %v4521
      %v4587 = vunpack.c.l.b16 %v4522
      %v4588 = vunpack.c.l.b16 %v4523
      %v4589 = vunpack.c.l.b16 %v4524
      %v4590 = vunpack.c.l.b16 %v4525
      %v4591 = vunpack.c.l.b16 %v4526
      %v4592 = vunpack.c.l.b16 %v4527
      %v4593 = vunpack.c.l.b16 %v4528
      %v4594 = vunpack.c.l.b16 %v4529
      %v4595 = vunpack.c.l.b16 %v4530
      %v4596 = vunpack.c.l.b16 %v4531
      %v4597 = vunpack.c.l.b16 %v4532
      %v4598 = vunpack.c.l.b16 %v4533
      %v4599 = vunpack.c.l.b16 %v4534
      %v4600 = vunpack.c.l.b16 %v4535
      %v4601 = vunpack.c.l.b16 %v4536
      %v4602 = vpack.c.b16 %v4571, %v4570
      %v4603 = vpack.c.b16 %v4573, %v4572
      %v4604 = vpack.c.b16 %v4575, %v4574
      %v4605 = vpack.c.b16 %v4577, %v4576
      %v4606 = vpack.c.b16 %v4579, %v4578
      %v4607 = vpack.c.b16 %v4581, %v4580
      %v4608 = vpack.c.b16 %v4583, %v4582
      %v4609 = vpack.c.b16 %v4585, %v4584
      %v4610 = vpack.c.b16 %v4587, %v4586
      %v4611 = vpack.c.b16 %v4589, %v4588
      %v4612 = vpack.c.b16 %v4591, %v4590
      %v4613 = vpack.c.b16 %v4593, %v4592
      %v4614 = vpack.c.b16 %v4595, %v4594
      %v4615 = vpack.c.b16 %v4597, %v4596
      %v4616 = vpack.c.b16 %v4599, %v4598
      %v4617 = vpack.c.b16 %v4601, %v4600
      %v4619 = vsel %vm1456, %v4602, 0
      %v4622 = vsel %vm1456, %v4603, 0
      %v4625 = vsel %vm1456, %v4604, 0
      %v4628 = vsel %vm1456, %v4605, 0
      %v4631 = vsel %vm1456, %v4606, 0
      %v4634 = vsel %vm1456, %v4607, 0
      %v4637 = vsel %vm1456, %v4608, 0
      %v4640 = vsel %vm1456, %v4609, 0
      %v4643 = vsel %vm1456, %v4610, 0
      %v4646 = vsel %vm1456, %v4611, 0
      %v4649 = vsel %vm1456, %v4612, 0
      %v4652 = vsel %vm1456, %v4613, 0
      %v4655 = vsel %vm1456, %v4614, 0
      %v4658 = vsel %vm1456, %v4615, 0
      %v4661 = vsel %vm1456, %v4616, 0
      %v4664 = vsel %vm1456, %v4617, 0
      %v4667 = vsel %vm1505, %v4537, 0
      %4669 = vmatprep.subr.bf16.mxu0 0
      %4670 = vmatpush1.bf16.msra.mxu0 0
      %4671 = vmatprep.subr.bf16.mxu0 0
      %4672 = vmatpush1.bf16.msra.mxu0 0
      %4673 = vmatprep.subr.bf16.mxu0 0
      %4674 = vmatpush1.bf16.msra.mxu0 0
      %4675 = vmatprep.subr.bf16.mxu0 0
      %4676 = vmatpush1.bf16.msra.mxu0 0
      %4677 = vmatprep.subr.bf16.mxu0 0
      %4678 = vmatpush1.bf16.msra.mxu0 0
      %4679 = vmatprep.subr.bf16.mxu0 0
      %4680 = vmatpush1.bf16.msra.mxu0 0
      %4681 = vmatprep.subr.bf16.mxu0 0
      %4682 = vmatpush1.bf16.msra.mxu0 0
      %4683 = vmatprep.subr.bf16.mxu0 0
      %4684 = vmatpush1.bf16.msra.mxu0 %v4667
      %4685 = vmatprep.subr.bf16.mxu0 0
      %4686 = vmatpush2.bf16.msra.mxu0 0
      %4687 = vmatprep.subr.bf16.mxu0 0
      %4688 = vmatpush2.bf16.msra.mxu0 0
      %4689 = vmatprep.subr.bf16.mxu0 0
      %4690 = vmatpush2.bf16.msra.mxu0 0
      %4691 = vmatprep.subr.bf16.mxu0 0
      %4692 = vmatpush2.bf16.msra.mxu0 0
      %4693 = vmatprep.subr.bf16.mxu0 0
      %4694 = vmatpush2.bf16.msra.mxu0 0
      %4695 = vmatprep.subr.bf16.mxu0 0
      %4696 = vmatpush2.bf16.msra.mxu0 0
      %4697 = vmatprep.subr.bf16.mxu0 0
      %4698 = vmatpush2.bf16.msra.mxu0 0
      %4699 = vmatprep.subr.bf16.mxu0 0
      %4700 = vmatpush2.bf16.msra.mxu0 0
      %4701 = vmatprep.mubr.bf16.mxu0 0
      %4702 = vmatmul.mubr.bf16.gmra.mxu0 %v4619
      %v4703 = vpop.f32.mrf.mxu0
      %v4704 = vadd.f32 0.0, %v4703
      %v4705 = vpop.f32.mrf.mxu0
      %v4706 = vpop.f32.mrf.mxu0
      %v4707 = vadd.f32 0.0, %v4706
      %v4708 = vpop.f32.mrf.mxu0
      %4709 = vmatprep.mubr.bf16.mxu0 0
      %4710 = vmatmul.mubr.bf16.gmra.mxu0 %v4622
      %v4711 = vpop.f32.mrf.mxu0
      %v4712 = vadd.f32 0.0, %v4711
      %v4713 = vpop.f32.mrf.mxu0
      %v4714 = vpop.f32.mrf.mxu0
      %v4715 = vadd.f32 0.0, %v4714
      %v4716 = vpop.f32.mrf.mxu0
      %4717 = vmatprep.mubr.bf16.mxu0 0
      %4718 = vmatmul.mubr.bf16.gmra.mxu0 %v4625
      %v4719 = vpop.f32.mrf.mxu0
      %v4720 = vadd.f32 0.0, %v4719
      %v4721 = vpop.f32.mrf.mxu0
      %v4722 = vpop.f32.mrf.mxu0
      %v4723 = vadd.f32 0.0, %v4722
      %v4724 = vpop.f32.mrf.mxu0
      %4725 = vmatprep.mubr.bf16.mxu0 0
      %4726 = vmatmul.mubr.bf16.gmra.mxu0 %v4628
      %v4727 = vpop.f32.mrf.mxu0
      %v4728 = vadd.f32 0.0, %v4727
      %v4729 = vpop.f32.mrf.mxu0
      %v4730 = vpop.f32.mrf.mxu0
      %v4731 = vadd.f32 0.0, %v4730
      %v4732 = vpop.f32.mrf.mxu0
      %4733 = vmatprep.mubr.bf16.mxu0 0
      %4734 = vmatmul.mubr.bf16.gmra.mxu0 %v4631
      %v4735 = vpop.f32.mrf.mxu0
      %v4736 = vadd.f32 0.0, %v4735
      %v4737 = vpop.f32.mrf.mxu0
      %v4738 = vpop.f32.mrf.mxu0
      %v4739 = vadd.f32 0.0, %v4738
      %v4740 = vpop.f32.mrf.mxu0
      %4741 = vmatprep.mubr.bf16.mxu0 0
      %4742 = vmatmul.mubr.bf16.gmra.mxu0 %v4634
      %v4743 = vpop.f32.mrf.mxu0
      %v4744 = vadd.f32 0.0, %v4743
      %v4745 = vpop.f32.mrf.mxu0
      %v4746 = vpop.f32.mrf.mxu0
      %v4747 = vadd.f32 0.0, %v4746
      %v4748 = vpop.f32.mrf.mxu0
      %4749 = vmatprep.mubr.bf16.mxu0 0
      %4750 = vmatmul.mubr.bf16.gmra.mxu0 %v4637
      %v4751 = vpop.f32.mrf.mxu0
      %v4752 = vadd.f32 0.0, %v4751
      %v4753 = vpop.f32.mrf.mxu0
      %v4754 = vpop.f32.mrf.mxu0
      %v4755 = vadd.f32 0.0, %v4754
      %v4756 = vpop.f32.mrf.mxu0
      %4757 = vmatprep.mubr.bf16.mxu0 0
      %4758 = vmatmul.mubr.bf16.gmra.mxu0 %v4640
      %v4759 = vpop.f32.mrf.mxu0
      %v4760 = vadd.f32 0.0, %v4759
      %v4761 = vpop.f32.mrf.mxu0
      %v4762 = vpop.f32.mrf.mxu0
      %v4763 = vadd.f32 0.0, %v4762
      %v4764 = vpop.f32.mrf.mxu0
      %4765 = vmatprep.mubr.bf16.mxu0 0
      %4766 = vmatmul.mubr.bf16.gmra.mxu0 %v4643
      %v4767 = vpop.f32.mrf.mxu0
      %v4768 = vadd.f32 0.0, %v4767
      %v4769 = vpop.f32.mrf.mxu0
      %v4770 = vpop.f32.mrf.mxu0
      %v4771 = vadd.f32 0.0, %v4770
      %v4772 = vpop.f32.mrf.mxu0
      %4773 = vmatprep.mubr.bf16.mxu0 0
      %4774 = vmatmul.mubr.bf16.gmra.mxu0 %v4646
      %v4775 = vpop.f32.mrf.mxu0
      %v4776 = vadd.f32 0.0, %v4775
      %v4777 = vpop.f32.mrf.mxu0
      %v4778 = vpop.f32.mrf.mxu0
      %v4779 = vadd.f32 0.0, %v4778
      %v4780 = vpop.f32.mrf.mxu0
      %4781 = vmatprep.mubr.bf16.mxu0 0
      %4782 = vmatmul.mubr.bf16.gmra.mxu0 %v4649
      %v4783 = vpop.f32.mrf.mxu0
      %v4784 = vadd.f32 0.0, %v4783
      %v4785 = vpop.f32.mrf.mxu0
      %v4786 = vpop.f32.mrf.mxu0
      %v4787 = vadd.f32 0.0, %v4786
      %v4788 = vpop.f32.mrf.mxu0
      %4789 = vmatprep.mubr.bf16.mxu0 0
      %4790 = vmatmul.mubr.bf16.gmra.mxu0 %v4652
      %v4791 = vpop.f32.mrf.mxu0
      %v4792 = vadd.f32 0.0, %v4791
      %v4793 = vpop.f32.mrf.mxu0
      %v4794 = vpop.f32.mrf.mxu0
      %v4795 = vadd.f32 0.0, %v4794
      %v4796 = vpop.f32.mrf.mxu0
      %4797 = vmatprep.mubr.bf16.mxu0 0
      %4798 = vmatmul.mubr.bf16.gmra.mxu0 %v4655
      %v4799 = vpop.f32.mrf.mxu0
      %v4800 = vadd.f32 0.0, %v4799
      %v4801 = vpop.f32.mrf.mxu0
      %v4802 = vpop.f32.mrf.mxu0
      %v4803 = vadd.f32 0.0, %v4802
      %v4804 = vpop.f32.mrf.mxu0
      %4805 = vmatprep.mubr.bf16.mxu0 0
      %4806 = vmatmul.mubr.bf16.gmra.mxu0 %v4658
      %v4807 = vpop.f32.mrf.mxu0
      %v4808 = vadd.f32 0.0, %v4807
      %v4809 = vpop.f32.mrf.mxu0
      %v4810 = vpop.f32.mrf.mxu0
      %v4811 = vadd.f32 0.0, %v4810
      %v4812 = vpop.f32.mrf.mxu0
      %4813 = vmatprep.mubr.bf16.mxu0 0
      %4814 = vmatmul.mubr.bf16.gmra.mxu0 %v4661
      %v4815 = vpop.f32.mrf.mxu0
      %v4816 = vadd.f32 0.0, %v4815
      %v4817 = vpop.f32.mrf.mxu0
      %v4818 = vpop.f32.mrf.mxu0
      %v4819 = vadd.f32 0.0, %v4818
      %v4820 = vpop.f32.mrf.mxu0
      %4821 = vmatprep.mubr.bf16.mxu0 0
      %4822 = vmatmul.mubr.bf16.gmra.mxu0 %v4664
      %v4823 = vpop.f32.mrf.mxu0
      %v4824 = vadd.f32 0.0, %v4823
      %v4825 = vpop.f32.mrf.mxu0
      %v4826 = vpop.f32.mrf.mxu0
      %v4827 = vadd.f32 0.0, %v4826
      %v4828 = vpop.f32.mrf.mxu0
      %4829 = vdwg.mxu0
      %v4830 = vadd.f32 %v4472, %v4704
      %v4831 = vadd.f32 %v4473, %v4707
      %v4832 = vadd.f32 %v4474, %v4712
      %v4833 = vadd.f32 %v4475, %v4715
      %v4834 = vadd.f32 %v4476, %v4720
      %v4835 = vadd.f32 %v4477, %v4723
      %v4836 = vadd.f32 %v4478, %v4728
      %v4837 = vadd.f32 %v4479, %v4731
      %v4838 = vadd.f32 %v4480, %v4736
      %v4839 = vadd.f32 %v4481, %v4739
      %v4840 = vadd.f32 %v4482, %v4744
      %v4841 = vadd.f32 %v4483, %v4747
      %v4842 = vadd.f32 %v4484, %v4752
      %v4843 = vadd.f32 %v4485, %v4755
      %v4844 = vadd.f32 %v4486, %v4760
      %v4845 = vadd.f32 %v4487, %v4763
      %v4846 = vadd.f32 %v4488, %v4768
      %v4847 = vadd.f32 %v4489, %v4771
      %v4848 = vadd.f32 %v4490, %v4776
      %v4849 = vadd.f32 %v4491, %v4779
      %v4850 = vadd.f32 %v4492, %v4784
      %v4851 = vadd.f32 %v4493, %v4787
      %v4852 = vadd.f32 %v4494, %v4792
      %v4853 = vadd.f32 %v4495, %v4795
      %v4854 = vadd.f32 %v4496, %v4800
      %v4855 = vadd.f32 %v4497, %v4803
      %v4856 = vadd.f32 %v4498, %v4808
      %v4857 = vadd.f32 %v4499, %v4811
      %v4858 = vadd.f32 %v4500, %v4816
      %v4859 = vadd.f32 %v4501, %v4819
      %v4860 = vadd.f32 %v4502, %v4824
      %v4861 = vadd.f32 %v4503, %v4827
      %s4862 = scalar_lea.vmem %s637, 420
      %v4863 = vld [vmem:[%s4862] sm:$0xf]
      %v4864 = vld [vmem:[%s4862 + $0x4] sm:$0xf]
      %v4865 = vld [vmem:[%s4862 + $0x8] sm:$0x1]
      %v4866 = vld [vmem:[%s4862 + $0xc] sm:$0xf]
      %v4867 = vld [vmem:[%s4862 + $0x10] sm:$0xf]
      %v4868 = vld [vmem:[%s4862 + $0x14] sm:$0x1]
      %v4869 = vld [vmem:[%s4862 + $0x18] sm:$0xf]
      %v4870 = vld [vmem:[%s4862 + $0x1c] sm:$0xf]
      %v4871 = vld [vmem:[%s4862 + $0x20] sm:$0x1]
      %v4872 = vld [vmem:[%s4862 + $0x24] sm:$0xf]
      %v4873 = vld [vmem:[%s4862 + $0x28] sm:$0xf]
      %v4874 = vld [vmem:[%s4862 + $0x2c] sm:$0x1]
      %v4875 = vld [vmem:[%s4862 + $0x30] sm:$0xf]
      %v4876 = vld [vmem:[%s4862 + $0x34] sm:$0xf]
      %v4877 = vld [vmem:[%s4862 + $0x38] sm:$0x1]
      %v4878 = vld [vmem:[%s4862 + $0x3c] sm:$0xf]
      %v4879 = vld [vmem:[%s4862 + $0x40] sm:$0xf]
      %v4880 = vld [vmem:[%s4862 + $0x44] sm:$0x1]
      %v4881 = vld [vmem:[%s4862 + $0x48] sm:$0xf]
      %v4882 = vld [vmem:[%s4862 + $0x4c] sm:$0xf]
      %v4883 = vld [vmem:[%s4862 + $0x50] sm:$0x1]
      %v4884 = vld [vmem:[%s4862 + $0x54] sm:$0xf]
      %v4885 = vld [vmem:[%s4862 + $0x58] sm:$0xf]
      %v4886 = vld [vmem:[%s4862 + $0x5c] sm:$0x1]
      %v4887 = vld [vmem:[%s4862 + $0x60] sm:$0xf]
      %v4888 = vld [vmem:[%s4862 + $0x64] sm:$0xf]
      %v4889 = vld [vmem:[%s4862 + $0x68] sm:$0x1]
      %v4890 = vld [vmem:[%s4862 + $0x6c] sm:$0xf]
      %v4891 = vld [vmem:[%s4862 + $0x70] sm:$0xf]
      %v4892 = vld [vmem:[%s4862 + $0x74] sm:$0x1]
      %v4893 = vld [vmem:[%s4862 + $0x78] sm:$0xf]
      %v4894 = vld [vmem:[%s4862 + $0x7c] sm:$0xf]
      %v4895 = vld [vmem:[%s4862 + $0x80] sm:$0x1]
      %v4896 = vld [vmem:[%s4862 + $0x84] sm:$0xf]
      %v4897 = vld [vmem:[%s4862 + $0x88] sm:$0xf]
      %v4898 = vld [vmem:[%s4862 + $0x8c] sm:$0x1]
      %v4899 = vld [vmem:[%s4862 + $0x90] sm:$0xf]
      %v4900 = vld [vmem:[%s4862 + $0x94] sm:$0xf]
      %v4901 = vld [vmem:[%s4862 + $0x98] sm:$0x1]
      %v4902 = vld [vmem:[%s4862 + $0x9c] sm:$0xf]
      %v4903 = vld [vmem:[%s4862 + $0xa0] sm:$0xf]
      %v4904 = vld [vmem:[%s4862 + $0xa4] sm:$0x1]
      %v4905 = vld [vmem:[%s4862 + $0xa8] sm:$0xf]
      %v4906 = vld [vmem:[%s4862 + $0xac] sm:$0xf]
      %v4907 = vld [vmem:[%s4862 + $0xb0] sm:$0x1]
      %v4908 = vld [vmem:[%s4862 + $0xb4] sm:$0xf]
      %v4909 = vld [vmem:[%s4862 + $0xb8] sm:$0xf]
      %v4910 = vld [vmem:[%s4862 + $0xbc] sm:$0x1]
      %v4912 = vshrl.u32 %v4863, 16
      %v4914 = vrot.slane %v4912, 4
      %v4915 = vshll.u32 %v4863, 16
      %v4917 = vrot.slane %v4915, 5
      %v4918 = vor.u32 %v4914, %v4917
      %v4919 = vrot.slane %v4918, 4
      %v4921 = vshll.u32 %v4864, 16
      %v4923 = vrot.slane %v4921, 5
      %v4924 = vsel %vm1018, %v4919, %v4923
      %v4925 = vshrl.u32 %v4864, 16
      %v4927 = vrot.slane %v4925, 4
      %v4928 = vor.u32 %v4927, %v4923
      %v4929 = vrot.slane %v4928, 4
      %v4931 = vshll.u32 %v4865, 16
      %v4933 = vrot.slane %v4931, 5
      %v4934 = vsel %vm1018, %v4929, %v4933
      %v4936 = vshrl.u32 %v4866, 16
      %v4938 = vrot.slane %v4936, 4
      %v4939 = vshll.u32 %v4866, 16
      %v4941 = vrot.slane %v4939, 5
      %v4942 = vor.u32 %v4938, %v4941
      %v4943 = vrot.slane %v4942, 4
      %v4945 = vshll.u32 %v4867, 16
      %v4947 = vrot.slane %v4945, 5
      %v4948 = vsel %vm1018, %v4943, %v4947
      %v4949 = vshrl.u32 %v4867, 16
      %v4951 = vrot.slane %v4949, 4
      %v4952 = vor.u32 %v4951, %v4947
      %v4953 = vrot.slane %v4952, 4
      %v4955 = vshll.u32 %v4868, 16
      %v4957 = vrot.slane %v4955, 5
      %v4958 = vsel %vm1018, %v4953, %v4957
      %v4960 = vshrl.u32 %v4869, 16
      %v4962 = vrot.slane %v4960, 4
      %v4963 = vshll.u32 %v4869, 16
      %v4965 = vrot.slane %v4963, 5
      %v4966 = vor.u32 %v4962, %v4965
      %v4967 = vrot.slane %v4966, 4
      %v4969 = vshll.u32 %v4870, 16
      %v4971 = vrot.slane %v4969, 5
      %v4972 = vsel %vm1018, %v4967, %v4971
      %v4973 = vshrl.u32 %v4870, 16
      %v4975 = vrot.slane %v4973, 4
      %v4976 = vor.u32 %v4975, %v4971
      %v4977 = vrot.slane %v4976, 4
      %v4979 = vshll.u32 %v4871, 16
      %v4981 = vrot.slane %v4979, 5
      %v4982 = vsel %vm1018, %v4977, %v4981
      %v4984 = vshrl.u32 %v4872, 16
      %v4986 = vrot.slane %v4984, 4
      %v4987 = vshll.u32 %v4872, 16
      %v4989 = vrot.slane %v4987, 5
      %v4990 = vor.u32 %v4986, %v4989
      %v4991 = vrot.slane %v4990, 4
      %v4993 = vshll.u32 %v4873, 16
      %v4995 = vrot.slane %v4993, 5
      %v4996 = vsel %vm1018, %v4991, %v4995
      %v4997 = vshrl.u32 %v4873, 16
      %v4999 = vrot.slane %v4997, 4
      %v5000 = vor.u32 %v4999, %v4995
      %v5001 = vrot.slane %v5000, 4
      %v5003 = vshll.u32 %v4874, 16
      %v5005 = vrot.slane %v5003, 5
      %v5006 = vsel %vm1018, %v5001, %v5005
      %v5008 = vshrl.u32 %v4875, 16
      %v5010 = vrot.slane %v5008, 4
      %v5011 = vshll.u32 %v4875, 16
      %v5013 = vrot.slane %v5011, 5
      %v5014 = vor.u32 %v5010, %v5013
      %v5015 = vrot.slane %v5014, 4
      %v5017 = vshll.u32 %v4876, 16
      %v5019 = vrot.slane %v5017, 5
      %v5020 = vsel %vm1018, %v5015, %v5019
      %v5021 = vshrl.u32 %v4876, 16
      %v5023 = vrot.slane %v5021, 4
      %v5024 = vor.u32 %v5023, %v5019
      %v5025 = vrot.slane %v5024, 4
      %v5027 = vshll.u32 %v4877, 16
      %v5029 = vrot.slane %v5027, 5
      %v5030 = vsel %vm1018, %v5025, %v5029
      %v5032 = vshrl.u32 %v4878, 16
      %v5034 = vrot.slane %v5032, 4
      %v5035 = vshll.u32 %v4878, 16
      %v5037 = vrot.slane %v5035, 5
      %v5038 = vor.u32 %v5034, %v5037
      %v5039 = vrot.slane %v5038, 4
      %v5041 = vshll.u32 %v4879, 16
      %v5043 = vrot.slane %v5041, 5
      %v5044 = vsel %vm1018, %v5039, %v5043
      %v5045 = vshrl.u32 %v4879, 16
      %v5047 = vrot.slane %v5045, 4
      %v5048 = vor.u32 %v5047, %v5043
      %v5049 = vrot.slane %v5048, 4
      %v5051 = vshll.u32 %v4880, 16
      %v5053 = vrot.slane %v5051, 5
      %v5054 = vsel %vm1018, %v5049, %v5053
      %v5056 = vshrl.u32 %v4881, 16
      %v5058 = vrot.slane %v5056, 4
      %v5059 = vshll.u32 %v4881, 16
      %v5061 = vrot.slane %v5059, 5
      %v5062 = vor.u32 %v5058, %v5061
      %v5063 = vrot.slane %v5062, 4
      %v5065 = vshll.u32 %v4882, 16
      %v5067 = vrot.slane %v5065, 5
      %v5068 = vsel %vm1018, %v5063, %v5067
      %v5069 = vshrl.u32 %v4882, 16
      %v5071 = vrot.slane %v5069, 4
      %v5072 = vor.u32 %v5071, %v5067
      %v5073 = vrot.slane %v5072, 4
      %v5075 = vshll.u32 %v4883, 16
      %v5077 = vrot.slane %v5075, 5
      %v5078 = vsel %vm1018, %v5073, %v5077
      %v5080 = vshrl.u32 %v4884, 16
      %v5082 = vrot.slane %v5080, 4
      %v5083 = vshll.u32 %v4884, 16
      %v5085 = vrot.slane %v5083, 5
      %v5086 = vor.u32 %v5082, %v5085
      %v5087 = vrot.slane %v5086, 4
      %v5089 = vshll.u32 %v4885, 16
      %v5091 = vrot.slane %v5089, 5
      %v5092 = vsel %vm1018, %v5087, %v5091
      %v5093 = vshrl.u32 %v4885, 16
      %v5095 = vrot.slane %v5093, 4
      %v5096 = vor.u32 %v5095, %v5091
      %v5097 = vrot.slane %v5096, 4
      %v5099 = vshll.u32 %v4886, 16
      %v5101 = vrot.slane %v5099, 5
      %v5102 = vsel %vm1018, %v5097, %v5101
      %v5104 = vshrl.u32 %v4887, 16
      %v5106 = vrot.slane %v5104, 4
      %v5107 = vshll.u32 %v4887, 16
      %v5109 = vrot.slane %v5107, 5
      %v5110 = vor.u32 %v5106, %v5109
      %v5111 = vrot.slane %v5110, 4
      %v5113 = vshll.u32 %v4888, 16
      %v5115 = vrot.slane %v5113, 5
      %v5116 = vsel %vm1018, %v5111, %v5115
      %v5117 = vshrl.u32 %v4888, 16
      %v5119 = vrot.slane %v5117, 4
      %v5120 = vor.u32 %v5119, %v5115
      %v5121 = vrot.slane %v5120, 4
      %v5123 = vshll.u32 %v4889, 16
      %v5125 = vrot.slane %v5123, 5
      %v5126 = vsel %vm1018, %v5121, %v5125
      %v5128 = vshrl.u32 %v4890, 16
      %v5130 = vrot.slane %v5128, 4
      %v5131 = vshll.u32 %v4890, 16
      %v5133 = vrot.slane %v5131, 5
      %v5134 = vor.u32 %v5130, %v5133
      %v5135 = vrot.slane %v5134, 4
      %v5137 = vshll.u32 %v4891, 16
      %v5139 = vrot.slane %v5137, 5
      %v5140 = vsel %vm1018, %v5135, %v5139
      %v5141 = vshrl.u32 %v4891, 16
      %v5143 = vrot.slane %v5141, 4
      %v5144 = vor.u32 %v5143, %v5139
      %v5145 = vrot.slane %v5144, 4
      %v5147 = vshll.u32 %v4892, 16
      %v5149 = vrot.slane %v5147, 5
      %v5150 = vsel %vm1018, %v5145, %v5149
      %v5152 = vshrl.u32 %v4893, 16
      %v5154 = vrot.slane %v5152, 4
      %v5155 = vshll.u32 %v4893, 16
      %v5157 = vrot.slane %v5155, 5
      %v5158 = vor.u32 %v5154, %v5157
      %v5159 = vrot.slane %v5158, 4
      %v5161 = vshll.u32 %v4894, 16
      %v5163 = vrot.slane %v5161, 5
      %v5164 = vsel %vm1018, %v5159, %v5163
      %v5165 = vshrl.u32 %v4894, 16
      %v5167 = vrot.slane %v5165, 4
      %v5168 = vor.u32 %v5167, %v5163
      %v5169 = vrot.slane %v5168, 4
      %v5171 = vshll.u32 %v4895, 16
      %v5173 = vrot.slane %v5171, 5
      %v5174 = vsel %vm1018, %v5169, %v5173
      %v5176 = vshrl.u32 %v4896, 16
      %v5178 = vrot.slane %v5176, 4
      %v5179 = vshll.u32 %v4896, 16
      %v5181 = vrot.slane %v5179, 5
      %v5182 = vor.u32 %v5178, %v5181
      %v5183 = vrot.slane %v5182, 4
      %v5185 = vshll.u32 %v4897, 16
      %v5187 = vrot.slane %v5185, 5
      %v5188 = vsel %vm1018, %v5183, %v5187
      %v5189 = vshrl.u32 %v4897, 16
      %v5191 = vrot.slane %v5189, 4
      %v5192 = vor.u32 %v5191, %v5187
      %v5193 = vrot.slane %v5192, 4
      %v5195 = vshll.u32 %v4898, 16
      %v5197 = vrot.slane %v5195, 5
      %v5198 = vsel %vm1018, %v5193, %v5197
      %v5200 = vshrl.u32 %v4899, 16
      %v5202 = vrot.slane %v5200, 4
      %v5203 = vshll.u32 %v4899, 16
      %v5205 = vrot.slane %v5203, 5
      %v5206 = vor.u32 %v5202, %v5205
      %v5207 = vrot.slane %v5206, 4
      %v5209 = vshll.u32 %v4900, 16
      %v5211 = vrot.slane %v5209, 5
      %v5212 = vsel %vm1018, %v5207, %v5211
      %v5213 = vshrl.u32 %v4900, 16
      %v5215 = vrot.slane %v5213, 4
      %v5216 = vor.u32 %v5215, %v5211
      %v5217 = vrot.slane %v5216, 4
      %v5219 = vshll.u32 %v4901, 16
      %v5221 = vrot.slane %v5219, 5
      %v5222 = vsel %vm1018, %v5217, %v5221
      %v5224 = vshrl.u32 %v4902, 16
      %v5226 = vrot.slane %v5224, 4
      %v5227 = vshll.u32 %v4902, 16
      %v5229 = vrot.slane %v5227, 5
      %v5230 = vor.u32 %v5226, %v5229
      %v5231 = vrot.slane %v5230, 4
      %v5233 = vshll.u32 %v4903, 16
      %v5235 = vrot.slane %v5233, 5
      %v5236 = vsel %vm1018, %v5231, %v5235
      %v5237 = vshrl.u32 %v4903, 16
      %v5239 = vrot.slane %v5237, 4
      %v5240 = vor.u32 %v5239, %v5235
      %v5241 = vrot.slane %v5240, 4
      %v5243 = vshll.u32 %v4904, 16
      %v5245 = vrot.slane %v5243, 5
      %v5246 = vsel %vm1018, %v5241, %v5245
      %v5248 = vshrl.u32 %v4905, 16
      %v5250 = vrot.slane %v5248, 4
      %v5251 = vshll.u32 %v4905, 16
      %v5253 = vrot.slane %v5251, 5
      %v5254 = vor.u32 %v5250, %v5253
      %v5255 = vrot.slane %v5254, 4
      %v5257 = vshll.u32 %v4906, 16
      %v5259 = vrot.slane %v5257, 5
      %v5260 = vsel %vm1018, %v5255, %v5259
      %v5261 = vshrl.u32 %v4906, 16
      %v5263 = vrot.slane %v5261, 4
      %v5264 = vor.u32 %v5263, %v5259
      %v5265 = vrot.slane %v5264, 4
      %v5267 = vshll.u32 %v4907, 16
      %v5269 = vrot.slane %v5267, 5
      %v5270 = vsel %vm1018, %v5265, %v5269
      %v5272 = vshrl.u32 %v4908, 16
      %v5274 = vrot.slane %v5272, 4
      %v5275 = vshll.u32 %v4908, 16
      %v5277 = vrot.slane %v5275, 5
      %v5278 = vor.u32 %v5274, %v5277
      %v5279 = vrot.slane %v5278, 4
      %v5281 = vshll.u32 %v4909, 16
      %v5283 = vrot.slane %v5281, 5
      %v5284 = vsel %vm1018, %v5279, %v5283
      %v5285 = vshrl.u32 %v4909, 16
      %v5287 = vrot.slane %v5285, 4
      %v5288 = vor.u32 %v5287, %v5283
      %v5289 = vrot.slane %v5288, 4
      %v5291 = vshll.u32 %v4910, 16
      %v5293 = vrot.slane %v5291, 5
      %v5294 = vsel %vm1018, %v5289, %v5293
      %v5295 = vld [vmem:[%s5 + $0xc] sm:$0xc]
      %v5296 = vunpack.c.l.b16 %v4924
      %v5297 = vunpack.c.l.b16 %v4934
      %v5298 = vunpack.c.l.b16 %v4948
      %v5299 = vunpack.c.l.b16 %v4958
      %v5300 = vunpack.c.l.b16 %v4972
      %v5301 = vunpack.c.l.b16 %v4982
      %v5302 = vunpack.c.l.b16 %v4996
      %v5303 = vunpack.c.l.b16 %v5006
      %v5304 = vunpack.c.l.b16 %v5020
      %v5305 = vunpack.c.l.b16 %v5030
      %v5306 = vunpack.c.l.b16 %v5044
      %v5307 = vunpack.c.l.b16 %v5054
      %v5308 = vunpack.c.l.b16 %v5068
      %v5309 = vunpack.c.l.b16 %v5078
      %v5310 = vunpack.c.l.b16 %v5092
      %v5311 = vunpack.c.l.b16 %v5102
      %v5312 = vunpack.c.l.b16 %v5116
      %v5313 = vunpack.c.l.b16 %v5126
      %v5314 = vunpack.c.l.b16 %v5140
      %v5315 = vunpack.c.l.b16 %v5150
      %v5316 = vunpack.c.l.b16 %v5164
      %v5317 = vunpack.c.l.b16 %v5174
      %v5318 = vunpack.c.l.b16 %v5188
      %v5319 = vunpack.c.l.b16 %v5198
      %v5320 = vunpack.c.l.b16 %v5212
      %v5321 = vunpack.c.l.b16 %v5222
      %v5322 = vunpack.c.l.b16 %v5236
      %v5323 = vunpack.c.l.b16 %v5246
      %v5324 = vunpack.c.l.b16 %v5260
      %v5325 = vunpack.c.l.b16 %v5270
      %v5326 = vunpack.c.l.b16 %v5284
      %v5327 = vunpack.c.l.b16 %v5294
      %v5328 = vpack.c.b16 %v5297, %v5296
      %v5329 = vpack.c.b16 %v5299, %v5298
      %v5330 = vpack.c.b16 %v5301, %v5300
      %v5331 = vpack.c.b16 %v5303, %v5302
      %v5332 = vpack.c.b16 %v5305, %v5304
      %v5333 = vpack.c.b16 %v5307, %v5306
      %v5334 = vpack.c.b16 %v5309, %v5308
      %v5335 = vpack.c.b16 %v5311, %v5310
      %v5336 = vpack.c.b16 %v5313, %v5312
      %v5337 = vpack.c.b16 %v5315, %v5314
      %v5338 = vpack.c.b16 %v5317, %v5316
      %v5339 = vpack.c.b16 %v5319, %v5318
      %v5340 = vpack.c.b16 %v5321, %v5320
      %v5341 = vpack.c.b16 %v5323, %v5322
      %v5342 = vpack.c.b16 %v5325, %v5324
      %v5343 = vpack.c.b16 %v5327, %v5326
      %v5345 = vunpack.c.l.b16 %v5295
      %v5346 = vpack.c.b16 %v5345, %v5345
      %v5347 = vrot.slane %v5346, 2
      %v5349 = vsel %vm1456, %v5328, 0
      %v5352 = vsel %vm1456, %v5329, 0
      %v5355 = vsel %vm1456, %v5330, 0
      %v5358 = vsel %vm1456, %v5331, 0
      %v5361 = vsel %vm1456, %v5332, 0
      %v5364 = vsel %vm1456, %v5333, 0
      %v5367 = vsel %vm1456, %v5334, 0
      %v5370 = vsel %vm1456, %v5335, 0
      %v5373 = vsel %vm1456, %v5336, 0
      %v5376 = vsel %vm1456, %v5337, 0
      %v5379 = vsel %vm1456, %v5338, 0
      %v5382 = vsel %vm1456, %v5339, 0
      %v5385 = vsel %vm1456, %v5340, 0
      %v5388 = vsel %vm1456, %v5341, 0
      %v5391 = vsel %vm1456, %v5342, 0
      %v5394 = vsel %vm1456, %v5343, 0
      %v5397 = vsel %vm1505, %v5347, 0
      %5399 = vmatprep.subr.bf16.mxu0 0
      %5400 = vmatpush1.bf16.msra.mxu0 0
      %5401 = vmatprep.subr.bf16.mxu0 0
      %5402 = vmatpush1.bf16.msra.mxu0 0
      %5403 = vmatprep.subr.bf16.mxu0 0
      %5404 = vmatpush1.bf16.msra.mxu0 0
      %5405 = vmatprep.subr.bf16.mxu0 0
      %5406 = vmatpush1.bf16.msra.mxu0 0
      %5407 = vmatprep.subr.bf16.mxu0 0
      %5408 = vmatpush1.bf16.msra.mxu0 0
      %5409 = vmatprep.subr.bf16.mxu0 0
      %5410 = vmatpush1.bf16.msra.mxu0 0
      %5411 = vmatprep.subr.bf16.mxu0 0
      %5412 = vmatpush1.bf16.msra.mxu0 0
      %5413 = vmatprep.subr.bf16.mxu0 0
      %5414 = vmatpush1.bf16.msra.mxu0 %v5397
      %5415 = vmatprep.subr.bf16.mxu0 0
      %5416 = vmatpush2.bf16.msra.mxu0 0
      %5417 = vmatprep.subr.bf16.mxu0 0
      %5418 = vmatpush2.bf16.msra.mxu0 0
      %5419 = vmatprep.subr.bf16.mxu0 0
      %5420 = vmatpush2.bf16.msra.mxu0 0
      %5421 = vmatprep.subr.bf16.mxu0 0
      %5422 = vmatpush2.bf16.msra.mxu0 0
      %5423 = vmatprep.subr.bf16.mxu0 0
      %5424 = vmatpush2.bf16.msra.mxu0 0
      %5425 = vmatprep.subr.bf16.mxu0 0
      %5426 = vmatpush2.bf16.msra.mxu0 0
      %5427 = vmatprep.subr.bf16.mxu0 0
      %5428 = vmatpush2.bf16.msra.mxu0 0
      %5429 = vmatprep.subr.bf16.mxu0 0
      %5430 = vmatpush2.bf16.msra.mxu0 0
      %5431 = vmatprep.mubr.bf16.mxu0 0
      %5432 = vmatmul.mubr.bf16.gmra.mxu0 %v5349
      %v5433 = vpop.f32.mrf.mxu0
      %v5434 = vadd.f32 0.0, %v5433
      %v5435 = vpop.f32.mrf.mxu0
      %v5436 = vpop.f32.mrf.mxu0
      %v5437 = vadd.f32 0.0, %v5436
      %v5438 = vpop.f32.mrf.mxu0
      %5439 = vmatprep.mubr.bf16.mxu0 0
      %5440 = vmatmul.mubr.bf16.gmra.mxu0 %v5352
      %v5441 = vpop.f32.mrf.mxu0
      %v5442 = vadd.f32 0.0, %v5441
      %v5443 = vpop.f32.mrf.mxu0
      %v5444 = vpop.f32.mrf.mxu0
      %v5445 = vadd.f32 0.0, %v5444
      %v5446 = vpop.f32.mrf.mxu0
      %5447 = vmatprep.mubr.bf16.mxu0 0
      %5448 = vmatmul.mubr.bf16.gmra.mxu0 %v5355
      %v5449 = vpop.f32.mrf.mxu0
      %v5450 = vadd.f32 0.0, %v5449
      %v5451 = vpop.f32.mrf.mxu0
      %v5452 = vpop.f32.mrf.mxu0
      %v5453 = vadd.f32 0.0, %v5452
      %v5454 = vpop.f32.mrf.mxu0
      %5455 = vmatprep.mubr.bf16.mxu0 0
      %5456 = vmatmul.mubr.bf16.gmra.mxu0 %v5358
      %v5457 = vpop.f32.mrf.mxu0
      %v5458 = vadd.f32 0.0, %v5457
      %v5459 = vpop.f32.mrf.mxu0
      %v5460 = vpop.f32.mrf.mxu0
      %v5461 = vadd.f32 0.0, %v5460
      %v5462 = vpop.f32.mrf.mxu0
      %5463 = vmatprep.mubr.bf16.mxu0 0
      %5464 = vmatmul.mubr.bf16.gmra.mxu0 %v5361
      %v5465 = vpop.f32.mrf.mxu0
      %v5466 = vadd.f32 0.0, %v5465
      %v5467 = vpop.f32.mrf.mxu0
      %v5468 = vpop.f32.mrf.mxu0
      %v5469 = vadd.f32 0.0, %v5468
      %v5470 = vpop.f32.mrf.mxu0
      %5471 = vmatprep.mubr.bf16.mxu0 0
      %5472 = vmatmul.mubr.bf16.gmra.mxu0 %v5364
      %v5473 = vpop.f32.mrf.mxu0
      %v5474 = vadd.f32 0.0, %v5473
      %v5475 = vpop.f32.mrf.mxu0
      %v5476 = vpop.f32.mrf.mxu0
      %v5477 = vadd.f32 0.0, %v5476
      %v5478 = vpop.f32.mrf.mxu0
      %5479 = vmatprep.mubr.bf16.mxu0 0
      %5480 = vmatmul.mubr.bf16.gmra.mxu0 %v5367
      %v5481 = vpop.f32.mrf.mxu0
      %v5482 = vadd.f32 0.0, %v5481
      %v5483 = vpop.f32.mrf.mxu0
      %v5484 = vpop.f32.mrf.mxu0
      %v5485 = vadd.f32 0.0, %v5484
      %v5486 = vpop.f32.mrf.mxu0
      %5487 = vmatprep.mubr.bf16.mxu0 0
      %5488 = vmatmul.mubr.bf16.gmra.mxu0 %v5370
      %v5489 = vpop.f32.mrf.mxu0
      %v5490 = vadd.f32 0.0, %v5489
      %v5491 = vpop.f32.mrf.mxu0
      %v5492 = vpop.f32.mrf.mxu0
      %v5493 = vadd.f32 0.0, %v5492
      %v5494 = vpop.f32.mrf.mxu0
      %5495 = vmatprep.mubr.bf16.mxu0 0
      %5496 = vmatmul.mubr.bf16.gmra.mxu0 %v5373
      %v5497 = vpop.f32.mrf.mxu0
      %v5498 = vadd.f32 0.0, %v5497
      %v5499 = vpop.f32.mrf.mxu0
      %v5500 = vpop.f32.mrf.mxu0
      %v5501 = vadd.f32 0.0, %v5500
      %v5502 = vpop.f32.mrf.mxu0
      %5503 = vmatprep.mubr.bf16.mxu0 0
      %5504 = vmatmul.mubr.bf16.gmra.mxu0 %v5376
      %v5505 = vpop.f32.mrf.mxu0
      %v5506 = vadd.f32 0.0, %v5505
      %v5507 = vpop.f32.mrf.mxu0
      %v5508 = vpop.f32.mrf.mxu0
      %v5509 = vadd.f32 0.0, %v5508
      %v5510 = vpop.f32.mrf.mxu0
      %5511 = vmatprep.mubr.bf16.mxu0 0
      %5512 = vmatmul.mubr.bf16.gmra.mxu0 %v5379
      %v5513 = vpop.f32.mrf.mxu0
      %v5514 = vadd.f32 0.0, %v5513
      %v5515 = vpop.f32.mrf.mxu0
      %v5516 = vpop.f32.mrf.mxu0
      %v5517 = vadd.f32 0.0, %v5516
      %v5518 = vpop.f32.mrf.mxu0
      %5519 = vmatprep.mubr.bf16.mxu0 0
      %5520 = vmatmul.mubr.bf16.gmra.mxu0 %v5382
      %v5521 = vpop.f32.mrf.mxu0
      %v5522 = vadd.f32 0.0, %v5521
      %v5523 = vpop.f32.mrf.mxu0
      %v5524 = vpop.f32.mrf.mxu0
      %v5525 = vadd.f32 0.0, %v5524
      %v5526 = vpop.f32.mrf.mxu0
      %5527 = vmatprep.mubr.bf16.mxu0 0
      %5528 = vmatmul.mubr.bf16.gmra.mxu0 %v5385
      %v5529 = vpop.f32.mrf.mxu0
      %v5530 = vadd.f32 0.0, %v5529
      %v5531 = vpop.f32.mrf.mxu0
      %v5532 = vpop.f32.mrf.mxu0
      %v5533 = vadd.f32 0.0, %v5532
      %v5534 = vpop.f32.mrf.mxu0
      %5535 = vmatprep.mubr.bf16.mxu0 0
      %5536 = vmatmul.mubr.bf16.gmra.mxu0 %v5388
      %v5537 = vpop.f32.mrf.mxu0
      %v5538 = vadd.f32 0.0, %v5537
      %v5539 = vpop.f32.mrf.mxu0
      %v5540 = vpop.f32.mrf.mxu0
      %v5541 = vadd.f32 0.0, %v5540
      %v5542 = vpop.f32.mrf.mxu0
      %5543 = vmatprep.mubr.bf16.mxu0 0
      %5544 = vmatmul.mubr.bf16.gmra.mxu0 %v5391
      %v5545 = vpop.f32.mrf.mxu0
      %v5546 = vadd.f32 0.0, %v5545
      %v5547 = vpop.f32.mrf.mxu0
      %v5548 = vpop.f32.mrf.mxu0
      %v5549 = vadd.f32 0.0, %v5548
      %v5550 = vpop.f32.mrf.mxu0
      %5551 = vmatprep.mubr.bf16.mxu0 0
      %5552 = vmatmul.mubr.bf16.gmra.mxu0 %v5394
      %v5553 = vpop.f32.mrf.mxu0
      %v5554 = vadd.f32 0.0, %v5553
      %v5555 = vpop.f32.mrf.mxu0
      %v5556 = vpop.f32.mrf.mxu0
      %v5557 = vadd.f32 0.0, %v5556
      %v5558 = vpop.f32.mrf.mxu0
      %5559 = vdwg.mxu0
      %v5560 = vadd.f32 %v4830, %v5434
      %v5561 = vadd.f32 %v4831, %v5437
      %v5562 = vadd.f32 %v4832, %v5442
      %v5563 = vadd.f32 %v4833, %v5445
      %v5564 = vadd.f32 %v4834, %v5450
      %v5565 = vadd.f32 %v4835, %v5453
      %v5566 = vadd.f32 %v4836, %v5458
      %v5567 = vadd.f32 %v4837, %v5461
      %v5568 = vadd.f32 %v4838, %v5466
      %v5569 = vadd.f32 %v4839, %v5469
      %v5570 = vadd.f32 %v4840, %v5474
      %v5571 = vadd.f32 %v4841, %v5477
      %v5572 = vadd.f32 %v4842, %v5482
      %v5573 = vadd.f32 %v4843, %v5485
      %v5574 = vadd.f32 %v4844, %v5490
      %v5575 = vadd.f32 %v4845, %v5493
      %v5576 = vadd.f32 %v4846, %v5498
      %v5577 = vadd.f32 %v4847, %v5501
      %v5578 = vadd.f32 %v4848, %v5506
      %v5579 = vadd.f32 %v4849, %v5509
      %v5580 = vadd.f32 %v4850, %v5514
      %v5581 = vadd.f32 %v4851, %v5517
      %v5582 = vadd.f32 %v4852, %v5522
      %v5583 = vadd.f32 %v4853, %v5525
      %v5584 = vadd.f32 %v4854, %v5530
      %v5585 = vadd.f32 %v4855, %v5533
      %v5586 = vadd.f32 %v4856, %v5538
      %v5587 = vadd.f32 %v4857, %v5541
      %v5588 = vadd.f32 %v4858, %v5546
      %v5589 = vadd.f32 %v4859, %v5549
      %v5590 = vadd.f32 %v4860, %v5554
      %v5591 = vadd.f32 %v4861, %v5557
      %v5592 = vld [vmem:[%s4504] sm:$0xf]
      %v5593 = vld [vmem:[%s4504 + $0x4] sm:$0xf]
      %v5594 = vld [vmem:[%s4504 + $0x8] sm:$0x1]
      %v5595 = vld [vmem:[%s4504 + $0xc] sm:$0xf]
      %v5596 = vld [vmem:[%s4504 + $0x10] sm:$0xf]
      %v5597 = vld [vmem:[%s4504 + $0x14] sm:$0x1]
      %v5598 = vld [vmem:[%s4504 + $0x18] sm:$0xf]
      %v5599 = vld [vmem:[%s4504 + $0x1c] sm:$0xf]
      %v5600 = vld [vmem:[%s4504 + $0x20] sm:$0x1]
      %v5601 = vld [vmem:[%s4504 + $0x24] sm:$0xf]
      %v5602 = vld [vmem:[%s4504 + $0x28] sm:$0xf]
      %v5603 = vld [vmem:[%s4504 + $0x2c] sm:$0x1]
      %v5604 = vld [vmem:[%s4504 + $0x30] sm:$0xf]
      %v5605 = vld [vmem:[%s4504 + $0x34] sm:$0xf]
      %v5606 = vld [vmem:[%s4504 + $0x38] sm:$0x1]
      %v5607 = vld [vmem:[%s4504 + $0x3c] sm:$0xf]
      %v5608 = vld [vmem:[%s4504 + $0x40] sm:$0xf]
      %v5609 = vld [vmem:[%s4504 + $0x44] sm:$0x1]
      %v5610 = vld [vmem:[%s4504 + $0x48] sm:$0xf]
      %v5611 = vld [vmem:[%s4504 + $0x4c] sm:$0xf]
      %v5612 = vld [vmem:[%s4504 + $0x50] sm:$0x1]
      %v5613 = vld [vmem:[%s4504 + $0x54] sm:$0xf]
      %v5614 = vld [vmem:[%s4504 + $0x58] sm:$0xf]
      %v5615 = vld [vmem:[%s4504 + $0x5c] sm:$0x1]
      %v5616 = vld [vmem:[%s4504 + $0x60] sm:$0xf]
      %v5617 = vld [vmem:[%s4504 + $0x64] sm:$0xf]
      %v5618 = vld [vmem:[%s4504 + $0x68] sm:$0x1]
      %v5619 = vld [vmem:[%s4504 + $0x6c] sm:$0xf]
      %v5620 = vld [vmem:[%s4504 + $0x70] sm:$0xf]
      %v5621 = vld [vmem:[%s4504 + $0x74] sm:$0x1]
      %v5622 = vld [vmem:[%s4504 + $0x78] sm:$0xf]
      %v5623 = vld [vmem:[%s4504 + $0x7c] sm:$0xf]
      %v5624 = vld [vmem:[%s4504 + $0x80] sm:$0x1]
      %v5625 = vld [vmem:[%s4504 + $0x84] sm:$0xf]
      %v5626 = vld [vmem:[%s4504 + $0x88] sm:$0xf]
      %v5627 = vld [vmem:[%s4504 + $0x8c] sm:$0x1]
      %v5628 = vld [vmem:[%s4504 + $0x90] sm:$0xf]
      %v5629 = vld [vmem:[%s4504 + $0x94] sm:$0xf]
      %v5630 = vld [vmem:[%s4504 + $0x98] sm:$0x1]
      %v5631 = vld [vmem:[%s4504 + $0x9c] sm:$0xf]
      %v5632 = vld [vmem:[%s4504 + $0xa0] sm:$0xf]
      %v5633 = vld [vmem:[%s4504 + $0xa4] sm:$0x1]
      %v5634 = vld [vmem:[%s4504 + $0xa8] sm:$0xf]
      %v5635 = vld [vmem:[%s4504 + $0xac] sm:$0xf]
      %v5636 = vld [vmem:[%s4504 + $0xb0] sm:$0x1]
      %v5637 = vld [vmem:[%s4504 + $0xb4] sm:$0xf]
      %v5638 = vld [vmem:[%s4504 + $0xb8] sm:$0xf]
      %v5639 = vld [vmem:[%s4504 + $0xbc] sm:$0x1]
      %v5641 = vshrl.u32 %v5592, 16
      %v5643 = vrot.slane %v5641, 4
      %v5644 = vshll.u32 %v5592, 16
      %v5646 = vrot.slane %v5644, 5
      %v5647 = vor.u32 %v5643, %v5646
      %v5648 = vrot.slane %v5647, 4
      %v5650 = vshll.u32 %v5593, 16
      %v5652 = vrot.slane %v5650, 5
      %v5653 = vsel %vm1018, %v5648, %v5652
      %v5654 = vshrl.u32 %v5593, 16
      %v5656 = vrot.slane %v5654, 4
      %v5657 = vor.u32 %v5656, %v5652
      %v5658 = vrot.slane %v5657, 4
      %v5660 = vshll.u32 %v5594, 16
      %v5662 = vrot.slane %v5660, 5
      %v5663 = vsel %vm1018, %v5658, %v5662
      %v5665 = vshrl.u32 %v5595, 16
      %v5667 = vrot.slane %v5665, 4
      %v5668 = vshll.u32 %v5595, 16
      %v5670 = vrot.slane %v5668, 5
      %v5671 = vor.u32 %v5667, %v5670
      %v5672 = vrot.slane %v5671, 4
      %v5674 = vshll.u32 %v5596, 16
      %v5676 = vrot.slane %v5674, 5
      %v5677 = vsel %vm1018, %v5672, %v5676
      %v5678 = vshrl.u32 %v5596, 16
      %v5680 = vrot.slane %v5678, 4
      %v5681 = vor.u32 %v5680, %v5676
      %v5682 = vrot.slane %v5681, 4
      %v5684 = vshll.u32 %v5597, 16
      %v5686 = vrot.slane %v5684, 5
      %v5687 = vsel %vm1018, %v5682, %v5686
      %v5689 = vshrl.u32 %v5598, 16
      %v5691 = vrot.slane %v5689, 4
      %v5692 = vshll.u32 %v5598, 16
      %v5694 = vrot.slane %v5692, 5
      %v5695 = vor.u32 %v5691, %v5694
      %v5696 = vrot.slane %v5695, 4
      %v5698 = vshll.u32 %v5599, 16
      %v5700 = vrot.slane %v5698, 5
      %v5701 = vsel %vm1018, %v5696, %v5700
      %v5702 = vshrl.u32 %v5599, 16
      %v5704 = vrot.slane %v5702, 4
      %v5705 = vor.u32 %v5704, %v5700
      %v5706 = vrot.slane %v5705, 4
      %v5708 = vshll.u32 %v5600, 16
      %v5710 = vrot.slane %v5708, 5
      %v5711 = vsel %vm1018, %v5706, %v5710
      %v5713 = vshrl.u32 %v5601, 16
      %v5715 = vrot.slane %v5713, 4
      %v5716 = vshll.u32 %v5601, 16
      %v5718 = vrot.slane %v5716, 5
      %v5719 = vor.u32 %v5715, %v5718
      %v5720 = vrot.slane %v5719, 4
      %v5722 = vshll.u32 %v5602, 16
      %v5724 = vrot.slane %v5722, 5
      %v5725 = vsel %vm1018, %v5720, %v5724
      %v5726 = vshrl.u32 %v5602, 16
      %v5728 = vrot.slane %v5726, 4
      %v5729 = vor.u32 %v5728, %v5724
      %v5730 = vrot.slane %v5729, 4
      %v5732 = vshll.u32 %v5603, 16
      %v5734 = vrot.slane %v5732, 5
      %v5735 = vsel %vm1018, %v5730, %v5734
      %v5737 = vshrl.u32 %v5604, 16
      %v5739 = vrot.slane %v5737, 4
      %v5740 = vshll.u32 %v5604, 16
      %v5742 = vrot.slane %v5740, 5
      %v5743 = vor.u32 %v5739, %v5742
      %v5744 = vrot.slane %v5743, 4
      %v5746 = vshll.u32 %v5605, 16
      %v5748 = vrot.slane %v5746, 5
      %v5749 = vsel %vm1018, %v5744, %v5748
      %v5750 = vshrl.u32 %v5605, 16
      %v5752 = vrot.slane %v5750, 4
      %v5753 = vor.u32 %v5752, %v5748
      %v5754 = vrot.slane %v5753, 4
      %v5756 = vshll.u32 %v5606, 16
      %v5758 = vrot.slane %v5756, 5
      %v5759 = vsel %vm1018, %v5754, %v5758
      %v5761 = vshrl.u32 %v5607, 16
      %v5763 = vrot.slane %v5761, 4
      %v5764 = vshll.u32 %v5607, 16
      %v5766 = vrot.slane %v5764, 5
      %v5767 = vor.u32 %v5763, %v5766
      %v5768 = vrot.slane %v5767, 4
      %v5770 = vshll.u32 %v5608, 16
      %v5772 = vrot.slane %v5770, 5
      %v5773 = vsel %vm1018, %v5768, %v5772
      %v5774 = vshrl.u32 %v5608, 16
      %v5776 = vrot.slane %v5774, 4
      %v5777 = vor.u32 %v5776, %v5772
      %v5778 = vrot.slane %v5777, 4
      %v5780 = vshll.u32 %v5609, 16
      %v5782 = vrot.slane %v5780, 5
      %v5783 = vsel %vm1018, %v5778, %v5782
      %v5785 = vshrl.u32 %v5610, 16
      %v5787 = vrot.slane %v5785, 4
      %v5788 = vshll.u32 %v5610, 16
      %v5790 = vrot.slane %v5788, 5
      %v5791 = vor.u32 %v5787, %v5790
      %v5792 = vrot.slane %v5791, 4
      %v5794 = vshll.u32 %v5611, 16
      %v5796 = vrot.slane %v5794, 5
      %v5797 = vsel %vm1018, %v5792, %v5796
      %v5798 = vshrl.u32 %v5611, 16
      %v5800 = vrot.slane %v5798, 4
      %v5801 = vor.u32 %v5800, %v5796
      %v5802 = vrot.slane %v5801, 4
      %v5804 = vshll.u32 %v5612, 16
      %v5806 = vrot.slane %v5804, 5
      %v5807 = vsel %vm1018, %v5802, %v5806
      %v5809 = vshrl.u32 %v5613, 16
      %v5811 = vrot.slane %v5809, 4
      %v5812 = vshll.u32 %v5613, 16
      %v5814 = vrot.slane %v5812, 5
      %v5815 = vor.u32 %v5811, %v5814
      %v5816 = vrot.slane %v5815, 4
      %v5818 = vshll.u32 %v5614, 16
      %v5820 = vrot.slane %v5818, 5
      %v5821 = vsel %vm1018, %v5816, %v5820
      %v5822 = vshrl.u32 %v5614, 16
      %v5824 = vrot.slane %v5822, 4
      %v5825 = vor.u32 %v5824, %v5820
      %v5826 = vrot.slane %v5825, 4
      %v5828 = vshll.u32 %v5615, 16
      %v5830 = vrot.slane %v5828, 5
      %v5831 = vsel %vm1018, %v5826, %v5830
      %v5833 = vshrl.u32 %v5616, 16
      %v5835 = vrot.slane %v5833, 4
      %v5836 = vshll.u32 %v5616, 16
      %v5838 = vrot.slane %v5836, 5
      %v5839 = vor.u32 %v5835, %v5838
      %v5840 = vrot.slane %v5839, 4
      %v5842 = vshll.u32 %v5617, 16
      %v5844 = vrot.slane %v5842, 5
      %v5845 = vsel %vm1018, %v5840, %v5844
      %v5846 = vshrl.u32 %v5617, 16
      %v5848 = vrot.slane %v5846, 4
      %v5849 = vor.u32 %v5848, %v5844
      %v5850 = vrot.slane %v5849, 4
      %v5852 = vshll.u32 %v5618, 16
      %v5854 = vrot.slane %v5852, 5
      %v5855 = vsel %vm1018, %v5850, %v5854
      %v5857 = vshrl.u32 %v5619, 16
      %v5859 = vrot.slane %v5857, 4
      %v5860 = vshll.u32 %v5619, 16
      %v5862 = vrot.slane %v5860, 5
      %v5863 = vor.u32 %v5859, %v5862
      %v5864 = vrot.slane %v5863, 4
      %v5866 = vshll.u32 %v5620, 16
      %v5868 = vrot.slane %v5866, 5
      %v5869 = vsel %vm1018, %v5864, %v5868
      %v5870 = vshrl.u32 %v5620, 16
      %v5872 = vrot.slane %v5870, 4
      %v5873 = vor.u32 %v5872, %v5868
      %v5874 = vrot.slane %v5873, 4
      %v5876 = vshll.u32 %v5621, 16
      %v5878 = vrot.slane %v5876, 5
      %v5879 = vsel %vm1018, %v5874, %v5878
      %v5881 = vshrl.u32 %v5622, 16
      %v5883 = vrot.slane %v5881, 4
      %v5884 = vshll.u32 %v5622, 16
      %v5886 = vrot.slane %v5884, 5
      %v5887 = vor.u32 %v5883, %v5886
      %v5888 = vrot.slane %v5887, 4
      %v5890 = vshll.u32 %v5623, 16
      %v5892 = vrot.slane %v5890, 5
      %v5893 = vsel %vm1018, %v5888, %v5892
      %v5894 = vshrl.u32 %v5623, 16
      %v5896 = vrot.slane %v5894, 4
      %v5897 = vor.u32 %v5896, %v5892
      %v5898 = vrot.slane %v5897, 4
      %v5900 = vshll.u32 %v5624, 16
      %v5902 = vrot.slane %v5900, 5
      %v5903 = vsel %vm1018, %v5898, %v5902
      %v5905 = vshrl.u32 %v5625, 16
      %v5907 = vrot.slane %v5905, 4
      %v5908 = vshll.u32 %v5625, 16
      %v5910 = vrot.slane %v5908, 5
      %v5911 = vor.u32 %v5907, %v5910
      %v5912 = vrot.slane %v5911, 4
      %v5914 = vshll.u32 %v5626, 16
      %v5916 = vrot.slane %v5914, 5
      %v5917 = vsel %vm1018, %v5912, %v5916
      %v5918 = vshrl.u32 %v5626, 16
      %v5920 = vrot.slane %v5918, 4
      %v5921 = vor.u32 %v5920, %v5916
      %v5922 = vrot.slane %v5921, 4
      %v5924 = vshll.u32 %v5627, 16
      %v5926 = vrot.slane %v5924, 5
      %v5927 = vsel %vm1018, %v5922, %v5926
      %v5929 = vshrl.u32 %v5628, 16
      %v5931 = vrot.slane %v5929, 4
      %v5932 = vshll.u32 %v5628, 16
      %v5934 = vrot.slane %v5932, 5
      %v5935 = vor.u32 %v5931, %v5934
      %v5936 = vrot.slane %v5935, 4
      %v5938 = vshll.u32 %v5629, 16
      %v5940 = vrot.slane %v5938, 5
      %v5941 = vsel %vm1018, %v5936, %v5940
      %v5942 = vshrl.u32 %v5629, 16
      %v5944 = vrot.slane %v5942, 4
      %v5945 = vor.u32 %v5944, %v5940
      %v5946 = vrot.slane %v5945, 4
      %v5948 = vshll.u32 %v5630, 16
      %v5950 = vrot.slane %v5948, 5
      %v5951 = vsel %vm1018, %v5946, %v5950
      %v5953 = vshrl.u32 %v5631, 16
      %v5955 = vrot.slane %v5953, 4
      %v5956 = vshll.u32 %v5631, 16
      %v5958 = vrot.slane %v5956, 5
      %v5959 = vor.u32 %v5955, %v5958
      %v5960 = vrot.slane %v5959, 4
      %v5962 = vshll.u32 %v5632, 16
      %v5964 = vrot.slane %v5962, 5
      %v5965 = vsel %vm1018, %v5960, %v5964
      %v5966 = vshrl.u32 %v5632, 16
      %v5968 = vrot.slane %v5966, 4
      %v5969 = vor.u32 %v5968, %v5964
      %v5970 = vrot.slane %v5969, 4
      %v5972 = vshll.u32 %v5633, 16
      %v5974 = vrot.slane %v5972, 5
      %v5975 = vsel %vm1018, %v5970, %v5974
      %v5977 = vshrl.u32 %v5634, 16
      %v5979 = vrot.slane %v5977, 4
      %v5980 = vshll.u32 %v5634, 16
      %v5982 = vrot.slane %v5980, 5
      %v5983 = vor.u32 %v5979, %v5982
      %v5984 = vrot.slane %v5983, 4
      %v5986 = vshll.u32 %v5635, 16
      %v5988 = vrot.slane %v5986, 5
      %v5989 = vsel %vm1018, %v5984, %v5988
      %v5990 = vshrl.u32 %v5635, 16
      %v5992 = vrot.slane %v5990, 4
      %v5993 = vor.u32 %v5992, %v5988
      %v5994 = vrot.slane %v5993, 4
      %v5996 = vshll.u32 %v5636, 16
      %v5998 = vrot.slane %v5996, 5
      %v5999 = vsel %vm1018, %v5994, %v5998
      %v6001 = vshrl.u32 %v5637, 16
      %v6003 = vrot.slane %v6001, 4
      %v6004 = vshll.u32 %v5637, 16
      %v6006 = vrot.slane %v6004, 5
      %v6007 = vor.u32 %v6003, %v6006
      %v6008 = vrot.slane %v6007, 4
      %v6010 = vshll.u32 %v5638, 16
      %v6012 = vrot.slane %v6010, 5
      %v6013 = vsel %vm1018, %v6008, %v6012
      %v6014 = vshrl.u32 %v5638, 16
      %v6016 = vrot.slane %v6014, 4
      %v6017 = vor.u32 %v6016, %v6012
      %v6018 = vrot.slane %v6017, 4
      %v6020 = vshll.u32 %v5639, 16
      %v6022 = vrot.slane %v6020, 5
      %v6023 = vsel %vm1018, %v6018, %v6022
      %v6024 = vld [vmem:[%s5 + $0x10] sm:$0x3]
      %v6025 = vunpack.c.l.b16 %v5653
      %v6026 = vunpack.c.l.b16 %v5663
      %v6027 = vunpack.c.l.b16 %v5677
      %v6028 = vunpack.c.l.b16 %v5687
      %v6029 = vunpack.c.l.b16 %v5701
      %v6030 = vunpack.c.l.b16 %v5711
      %v6031 = vunpack.c.l.b16 %v5725
      %v6032 = vunpack.c.l.b16 %v5735
      %v6033 = vunpack.c.l.b16 %v5749
      %v6034 = vunpack.c.l.b16 %v5759
      %v6035 = vunpack.c.l.b16 %v5773
      %v6036 = vunpack.c.l.b16 %v5783
      %v6037 = vunpack.c.l.b16 %v5797
      %v6038 = vunpack.c.l.b16 %v5807
      %v6039 = vunpack.c.l.b16 %v5821
      %v6040 = vunpack.c.l.b16 %v5831
      %v6041 = vunpack.c.l.b16 %v5845
      %v6042 = vunpack.c.l.b16 %v5855
      %v6043 = vunpack.c.l.b16 %v5869
      %v6044 = vunpack.c.l.b16 %v5879
      %v6045 = vunpack.c.l.b16 %v5893
      %v6046 = vunpack.c.l.b16 %v5903
      %v6047 = vunpack.c.l.b16 %v5917
      %v6048 = vunpack.c.l.b16 %v5927
      %v6049 = vunpack.c.l.b16 %v5941
      %v6050 = vunpack.c.l.b16 %v5951
      %v6051 = vunpack.c.l.b16 %v5965
      %v6052 = vunpack.c.l.b16 %v5975
      %v6053 = vunpack.c.l.b16 %v5989
      %v6054 = vunpack.c.l.b16 %v5999
      %v6055 = vunpack.c.l.b16 %v6013
      %v6056 = vunpack.c.l.b16 %v6023
      %v6057 = vpack.c.b16 %v6026, %v6025
      %v6058 = vpack.c.b16 %v6028, %v6027
      %v6059 = vpack.c.b16 %v6030, %v6029
      %v6060 = vpack.c.b16 %v6032, %v6031
      %v6061 = vpack.c.b16 %v6034, %v6033
      %v6062 = vpack.c.b16 %v6036, %v6035
      %v6063 = vpack.c.b16 %v6038, %v6037
      %v6064 = vpack.c.b16 %v6040, %v6039
      %v6065 = vpack.c.b16 %v6042, %v6041
      %v6066 = vpack.c.b16 %v6044, %v6043
      %v6067 = vpack.c.b16 %v6046, %v6045
      %v6068 = vpack.c.b16 %v6048, %v6047
      %v6069 = vpack.c.b16 %v6050, %v6049
      %v6070 = vpack.c.b16 %v6052, %v6051
      %v6071 = vpack.c.b16 %v6054, %v6053
      %v6072 = vpack.c.b16 %v6056, %v6055
      %v6074 = vsel %vm1456, %v6057, 0
      %v6077 = vsel %vm1456, %v6058, 0
      %v6080 = vsel %vm1456, %v6059, 0
      %v6083 = vsel %vm1456, %v6060, 0
      %v6086 = vsel %vm1456, %v6061, 0
      %v6089 = vsel %vm1456, %v6062, 0
      %v6092 = vsel %vm1456, %v6063, 0
      %v6095 = vsel %vm1456, %v6064, 0
      %v6098 = vsel %vm1456, %v6065, 0
      %v6101 = vsel %vm1456, %v6066, 0
      %v6104 = vsel %vm1456, %v6067, 0
      %v6107 = vsel %vm1456, %v6068, 0
      %v6110 = vsel %vm1456, %v6069, 0
      %v6113 = vsel %vm1456, %v6070, 0
      %v6116 = vsel %vm1456, %v6071, 0
      %v6119 = vsel %vm1456, %v6072, 0
      %v6122 = vsel %vm1505, %v6024, 0
      %6124 = vmatprep.subr.bf16.mxu0 0
      %6125 = vmatpush1.bf16.msra.mxu0 0
      %6126 = vmatprep.subr.bf16.mxu0 0
      %6127 = vmatpush1.bf16.msra.mxu0 0
      %6128 = vmatprep.subr.bf16.mxu0 0
      %6129 = vmatpush1.bf16.msra.mxu0 0
      %6130 = vmatprep.subr.bf16.mxu0 0
      %6131 = vmatpush1.bf16.msra.mxu0 0
      %6132 = vmatprep.subr.bf16.mxu0 0
      %6133 = vmatpush1.bf16.msra.mxu0 0
      %6134 = vmatprep.subr.bf16.mxu0 0
      %6135 = vmatpush1.bf16.msra.mxu0 0
      %6136 = vmatprep.subr.bf16.mxu0 0
      %6137 = vmatpush1.bf16.msra.mxu0 0
      %6138 = vmatprep.subr.bf16.mxu0 0
      %6139 = vmatpush1.bf16.msra.mxu0 %v6122
      %6140 = vmatprep.subr.bf16.mxu0 0
      %6141 = vmatpush2.bf16.msra.mxu0 0
      %6142 = vmatprep.subr.bf16.mxu0 0
      %6143 = vmatpush2.bf16.msra.mxu0 0
      %6144 = vmatprep.subr.bf16.mxu0 0
      %6145 = vmatpush2.bf16.msra.mxu0 0
      %6146 = vmatprep.subr.bf16.mxu0 0
      %6147 = vmatpush2.bf16.msra.mxu0 0
      %6148 = vmatprep.subr.bf16.mxu0 0
      %6149 = vmatpush2.bf16.msra.mxu0 0
      %6150 = vmatprep.subr.bf16.mxu0 0
      %6151 = vmatpush2.bf16.msra.mxu0 0
      %6152 = vmatprep.subr.bf16.mxu0 0
      %6153 = vmatpush2.bf16.msra.mxu0 0
      %6154 = vmatprep.subr.bf16.mxu0 0
      %6155 = vmatpush2.bf16.msra.mxu0 0
      %6156 = vmatprep.mubr.bf16.mxu0 0
      %6157 = vmatmul.mubr.bf16.gmra.mxu0 %v6074
      %v6158 = vpop.f32.mrf.mxu0
      %v6159 = vadd.f32 0.0, %v6158
      %v6160 = vpop.f32.mrf.mxu0
      %v6161 = vpop.f32.mrf.mxu0
      %v6162 = vadd.f32 0.0, %v6161
      %v6163 = vpop.f32.mrf.mxu0
      %6164 = vmatprep.mubr.bf16.mxu0 0
      %6165 = vmatmul.mubr.bf16.gmra.mxu0 %v6077
      %v6166 = vpop.f32.mrf.mxu0
      %v6167 = vadd.f32 0.0, %v6166
      %v6168 = vpop.f32.mrf.mxu0
      %v6169 = vpop.f32.mrf.mxu0
      %v6170 = vadd.f32 0.0, %v6169
      %v6171 = vpop.f32.mrf.mxu0
      %6172 = vmatprep.mubr.bf16.mxu0 0
      %6173 = vmatmul.mubr.bf16.gmra.mxu0 %v6080
      %v6174 = vpop.f32.mrf.mxu0
      %v6175 = vadd.f32 0.0, %v6174
      %v6176 = vpop.f32.mrf.mxu0
      %v6177 = vpop.f32.mrf.mxu0
      %v6178 = vadd.f32 0.0, %v6177
      %v6179 = vpop.f32.mrf.mxu0
      %6180 = vmatprep.mubr.bf16.mxu0 0
      %6181 = vmatmul.mubr.bf16.gmra.mxu0 %v6083
      %v6182 = vpop.f32.mrf.mxu0
      %v6183 = vadd.f32 0.0, %v6182
      %v6184 = vpop.f32.mrf.mxu0
      %v6185 = vpop.f32.mrf.mxu0
      %v6186 = vadd.f32 0.0, %v6185
      %v6187 = vpop.f32.mrf.mxu0
      %6188 = vmatprep.mubr.bf16.mxu0 0
      %6189 = vmatmul.mubr.bf16.gmra.mxu0 %v6086
      %v6190 = vpop.f32.mrf.mxu0
      %v6191 = vadd.f32 0.0, %v6190
      %v6192 = vpop.f32.mrf.mxu0
      %v6193 = vpop.f32.mrf.mxu0
      %v6194 = vadd.f32 0.0, %v6193
      %v6195 = vpop.f32.mrf.mxu0
      %6196 = vmatprep.mubr.bf16.mxu0 0
      %6197 = vmatmul.mubr.bf16.gmra.mxu0 %v6089
      %v6198 = vpop.f32.mrf.mxu0
      %v6199 = vadd.f32 0.0, %v6198
      %v6200 = vpop.f32.mrf.mxu0
      %v6201 = vpop.f32.mrf.mxu0
      %v6202 = vadd.f32 0.0, %v6201
      %v6203 = vpop.f32.mrf.mxu0
      %6204 = vmatprep.mubr.bf16.mxu0 0
      %6205 = vmatmul.mubr.bf16.gmra.mxu0 %v6092
      %v6206 = vpop.f32.mrf.mxu0
      %v6207 = vadd.f32 0.0, %v6206
      %v6208 = vpop.f32.mrf.mxu0
      %v6209 = vpop.f32.mrf.mxu0
      %v6210 = vadd.f32 0.0, %v6209
      %v6211 = vpop.f32.mrf.mxu0
      %6212 = vmatprep.mubr.bf16.mxu0 0
      %6213 = vmatmul.mubr.bf16.gmra.mxu0 %v6095
      %v6214 = vpop.f32.mrf.mxu0
      %v6215 = vadd.f32 0.0, %v6214
      %v6216 = vpop.f32.mrf.mxu0
      %v6217 = vpop.f32.mrf.mxu0
      %v6218 = vadd.f32 0.0, %v6217
      %v6219 = vpop.f32.mrf.mxu0
      %6220 = vmatprep.mubr.bf16.mxu0 0
      %6221 = vmatmul.mubr.bf16.gmra.mxu0 %v6098
      %v6222 = vpop.f32.mrf.mxu0
      %v6223 = vadd.f32 0.0, %v6222
      %v6224 = vpop.f32.mrf.mxu0
      %v6225 = vpop.f32.mrf.mxu0
      %v6226 = vadd.f32 0.0, %v6225
      %v6227 = vpop.f32.mrf.mxu0
      %6228 = vmatprep.mubr.bf16.mxu0 0
      %6229 = vmatmul.mubr.bf16.gmra.mxu0 %v6101
      %v6230 = vpop.f32.mrf.mxu0
      %v6231 = vadd.f32 0.0, %v6230
      %v6232 = vpop.f32.mrf.mxu0
      %v6233 = vpop.f32.mrf.mxu0
      %v6234 = vadd.f32 0.0, %v6233
      %v6235 = vpop.f32.mrf.mxu0
      %6236 = vmatprep.mubr.bf16.mxu0 0
      %6237 = vmatmul.mubr.bf16.gmra.mxu0 %v6104
      %v6238 = vpop.f32.mrf.mxu0
      %v6239 = vadd.f32 0.0, %v6238
      %v6240 = vpop.f32.mrf.mxu0
      %v6241 = vpop.f32.mrf.mxu0
      %v6242 = vadd.f32 0.0, %v6241
      %v6243 = vpop.f32.mrf.mxu0
      %6244 = vmatprep.mubr.bf16.mxu0 0
      %6245 = vmatmul.mubr.bf16.gmra.mxu0 %v6107
      %v6246 = vpop.f32.mrf.mxu0
      %v6247 = vadd.f32 0.0, %v6246
      %v6248 = vpop.f32.mrf.mxu0
      %v6249 = vpop.f32.mrf.mxu0
      %v6250 = vadd.f32 0.0, %v6249
      %v6251 = vpop.f32.mrf.mxu0
      %6252 = vmatprep.mubr.bf16.mxu0 0
      %6253 = vmatmul.mubr.bf16.gmra.mxu0 %v6110
      %v6254 = vpop.f32.mrf.mxu0
      %v6255 = vadd.f32 0.0, %v6254
      %v6256 = vpop.f32.mrf.mxu0
      %v6257 = vpop.f32.mrf.mxu0
      %v6258 = vadd.f32 0.0, %v6257
      %v6259 = vpop.f32.mrf.mxu0
      %6260 = vmatprep.mubr.bf16.mxu0 0
      %6261 = vmatmul.mubr.bf16.gmra.mxu0 %v6113
      %v6262 = vpop.f32.mrf.mxu0
      %v6263 = vadd.f32 0.0, %v6262
      %v6264 = vpop.f32.mrf.mxu0
      %v6265 = vpop.f32.mrf.mxu0
      %v6266 = vadd.f32 0.0, %v6265
      %v6267 = vpop.f32.mrf.mxu0
      %6268 = vmatprep.mubr.bf16.mxu0 0
      %6269 = vmatmul.mubr.bf16.gmra.mxu0 %v6116
      %v6270 = vpop.f32.mrf.mxu0
      %v6271 = vadd.f32 0.0, %v6270
      %v6272 = vpop.f32.mrf.mxu0
      %v6273 = vpop.f32.mrf.mxu0
      %v6274 = vadd.f32 0.0, %v6273
      %v6275 = vpop.f32.mrf.mxu0
      %6276 = vmatprep.mubr.bf16.mxu0 0
      %6277 = vmatmul.mubr.bf16.gmra.mxu0 %v6119
      %v6278 = vpop.f32.mrf.mxu0
      %v6279 = vadd.f32 0.0, %v6278
      %v6280 = vpop.f32.mrf.mxu0
      %v6281 = vpop.f32.mrf.mxu0
      %v6282 = vadd.f32 0.0, %v6281
      %v6283 = vpop.f32.mrf.mxu0
      %6284 = vdwg.mxu0
      %v6285 = vadd.f32 %v5560, %v6159
      %v6286 = vadd.f32 %v5561, %v6162
      %v6287 = vadd.f32 %v5562, %v6167
      %v6288 = vadd.f32 %v5563, %v6170
      %v6289 = vadd.f32 %v5564, %v6175
      %v6290 = vadd.f32 %v5565, %v6178
      %v6291 = vadd.f32 %v5566, %v6183
      %v6292 = vadd.f32 %v5567, %v6186
      %v6293 = vadd.f32 %v5568, %v6191
      %v6294 = vadd.f32 %v5569, %v6194
      %v6295 = vadd.f32 %v5570, %v6199
      %v6296 = vadd.f32 %v5571, %v6202
      %v6297 = vadd.f32 %v5572, %v6207
      %v6298 = vadd.f32 %v5573, %v6210
      %v6299 = vadd.f32 %v5574, %v6215
      %v6300 = vadd.f32 %v5575, %v6218
      %v6301 = vadd.f32 %v5576, %v6223
      %v6302 = vadd.f32 %v5577, %v6226
      %v6303 = vadd.f32 %v5578, %v6231
      %v6304 = vadd.f32 %v5579, %v6234
      %v6305 = vadd.f32 %v5580, %v6239
      %v6306 = vadd.f32 %v5581, %v6242
      %v6307 = vadd.f32 %v5582, %v6247
      %v6308 = vadd.f32 %v5583, %v6250
      %v6309 = vadd.f32 %v5584, %v6255
      %v6310 = vadd.f32 %v5585, %v6258
      %v6311 = vadd.f32 %v5586, %v6263
      %v6312 = vadd.f32 %v5587, %v6266
      %v6313 = vadd.f32 %v5588, %v6271
      %v6314 = vadd.f32 %v5589, %v6274
      %v6315 = vadd.f32 %v5590, %v6279
      %v6316 = vadd.f32 %v5591, %v6282
      %v6317 = vld [vmem:[%s6] sm:$0x1]
      %v6319 = vlaneseq
      %v6320 = vshrl.u32 %v6319, 7
      %v6321 = vsub.s32 0, %v6320
      %v6322 = vrot.slane %v6317, %v6321
      %v6324 = vadd.f32 %v6285, %v6322
      %v6325 = vadd.f32 %v6286, %v6322
      %v6326 = vadd.f32 %v6287, %v6322
      %v6327 = vadd.f32 %v6288, %v6322
      %v6328 = vadd.f32 %v6289, %v6322
      %v6329 = vadd.f32 %v6290, %v6322
      %v6330 = vadd.f32 %v6291, %v6322
      %v6331 = vadd.f32 %v6292, %v6322
      %v6332 = vadd.f32 %v6293, %v6322
      %v6333 = vadd.f32 %v6294, %v6322
      %v6334 = vadd.f32 %v6295, %v6322
      %v6335 = vadd.f32 %v6296, %v6322
      %v6336 = vadd.f32 %v6297, %v6322
      %v6337 = vadd.f32 %v6298, %v6322
      %v6338 = vadd.f32 %v6299, %v6322
      %v6339 = vadd.f32 %v6300, %v6322
      %v6340 = vadd.f32 %v6301, %v6322
      %v6341 = vadd.f32 %v6302, %v6322
      %v6342 = vadd.f32 %v6303, %v6322
      %v6343 = vadd.f32 %v6304, %v6322
      %v6344 = vadd.f32 %v6305, %v6322
      %v6345 = vadd.f32 %v6306, %v6322
      %v6346 = vadd.f32 %v6307, %v6322
      %v6347 = vadd.f32 %v6308, %v6322
      %v6348 = vadd.f32 %v6309, %v6322
      %v6349 = vadd.f32 %v6310, %v6322
      %v6350 = vadd.f32 %v6311, %v6322
      %v6351 = vadd.f32 %v6312, %v6322
      %v6352 = vadd.f32 %v6313, %v6322
      %v6353 = vadd.f32 %v6314, %v6322
      %v6354 = vadd.f32 %v6315, %v6322
      %v6355 = vadd.f32 %v6316, %v6322
      %v6356 = vmax.f32 %v6324, 0.0
      %v6357 = vmax.f32 %v6325, 0.0
      %v6358 = vmax.f32 %v6326, 0.0
      %v6359 = vmax.f32 %v6327, 0.0
      %v6360 = vmax.f32 %v6328, 0.0
      %v6361 = vmax.f32 %v6329, 0.0
      %v6362 = vmax.f32 %v6330, 0.0
      %v6363 = vmax.f32 %v6331, 0.0
      %v6364 = vmax.f32 %v6332, 0.0
      %v6365 = vmax.f32 %v6333, 0.0
      %v6366 = vmax.f32 %v6334, 0.0
      %v6367 = vmax.f32 %v6335, 0.0
      %v6368 = vmax.f32 %v6336, 0.0
      %v6369 = vmax.f32 %v6337, 0.0
      %v6370 = vmax.f32 %v6338, 0.0
      %v6371 = vmax.f32 %v6339, 0.0
      %v6372 = vmax.f32 %v6340, 0.0
      %v6373 = vmax.f32 %v6341, 0.0
      %v6374 = vmax.f32 %v6342, 0.0
      %v6375 = vmax.f32 %v6343, 0.0
      %v6376 = vmax.f32 %v6344, 0.0
      %v6377 = vmax.f32 %v6345, 0.0
      %v6378 = vmax.f32 %v6346, 0.0
      %v6379 = vmax.f32 %v6347, 0.0
      %v6380 = vmax.f32 %v6348, 0.0
      %v6381 = vmax.f32 %v6349, 0.0
      %v6382 = vmax.f32 %v6350, 0.0
      %v6383 = vmax.f32 %v6351, 0.0
      %v6384 = vmax.f32 %v6352, 0.0
      %v6385 = vmax.f32 %v6353, 0.0
      %v6386 = vmax.f32 %v6354, 0.0
      %v6387 = vmax.f32 %v6355, 0.0
      %v6388 = vmin.f32 %v6356, 6.0
      %v6389 = vmin.f32 %v6357, 6.0
      %v6390 = vmin.f32 %v6358, 6.0
      %v6391 = vmin.f32 %v6359, 6.0
      %v6392 = vmin.f32 %v6360, 6.0
      %v6393 = vmin.f32 %v6361, 6.0
      %v6394 = vmin.f32 %v6362, 6.0
      %v6395 = vmin.f32 %v6363, 6.0
      %v6396 = vmin.f32 %v6364, 6.0
      %v6397 = vmin.f32 %v6365, 6.0
      %v6398 = vmin.f32 %v6366, 6.0
      %v6399 = vmin.f32 %v6367, 6.0
      %v6400 = vmin.f32 %v6368, 6.0
      %v6401 = vmin.f32 %v6369, 6.0
      %v6402 = vmin.f32 %v6370, 6.0
      %v6403 = vmin.f32 %v6371, 6.0
      %v6404 = vmin.f32 %v6372, 6.0
      %v6405 = vmin.f32 %v6373, 6.0
      %v6406 = vmin.f32 %v6374, 6.0
      %v6407 = vmin.f32 %v6375, 6.0
      %v6408 = vmin.f32 %v6376, 6.0
      %v6409 = vmin.f32 %v6377, 6.0
      %v6410 = vmin.f32 %v6378, 6.0
      %v6411 = vmin.f32 %v6379, 6.0
      %v6412 = vmin.f32 %v6380, 6.0
      %v6413 = vmin.f32 %v6381, 6.0
      %v6414 = vmin.f32 %v6382, 6.0
      %v6415 = vmin.f32 %v6383, 6.0
      %v6416 = vmin.f32 %v6384, 6.0
      %v6417 = vmin.f32 %v6385, 6.0
      %v6418 = vmin.f32 %v6386, 6.0
      %v6419 = vmin.f32 %v6387, 6.0
      %v6420 = vld [vmem:[%s7] sm:$0xff]
      %v6421 = vld [vmem:[%s8] sm:$0x1]
      %v6423 = vlaneseq
      %v6424 = vshrl.u32 %v6423, 7
      %v6425 = vsub.s32 0, %v6424
      %v6426 = vrot.slane %v6421, %v6425
      %vm6428 = vcmask 64512
      %v6430 = vsel %vm6428, %v853, 0
      %v6433 = vsel %vm6428, %v854, 0
      %v6436 = vsel %vm6428, %v855, 0
      %v6439 = vsel %vm6428, %v856, 0
      %v6442 = vsel %vm6428, %v857, 0
      %v6445 = vsel %vm6428, %v858, 0
      %v6448 = vsel %vm6428, %v859, 0
      %v6451 = vsel %vm6428, %v860, 0
      %v6454 = vsel %vm6428, %v861, 0
      %v6457 = vsel %vm6428, %v862, 0
      %v6460 = vsel %vm6428, %v863, 0
      %v6463 = vsel %vm6428, %v864, 0
      %v6466 = vsel %vm6428, %v865, 0
      %v6469 = vsel %vm6428, %v866, 0
      %v6472 = vsel %vm6428, %v867, 0
      %v6475 = vsel %vm6428, %v868, 0
      %6477 = vmatprep.subr.mxu0 0.0
      %6478 = vmatpush1.msra.mxu0 0.0
      %6479 = vmatprep.subr.mxu0 0.0
      %6480 = vmatpush1.msra.mxu0 0.0
      %6481 = vmatprep.subr.mxu0 0.0
      %6482 = vmatpush1.msra.mxu0 0.0
      %6483 = vmatprep.subr.mxu0 0.0
      %6484 = vmatpush1.msra.mxu0 0.0
      %6485 = vmatprep.subr.mxu0 0.0
      %6486 = vmatpush1.msra.mxu0 0.0
      %6487 = vmatprep.subr.mxu0 0.0
      %6488 = vmatpush1.msra.mxu0 0.0
      %6489 = vmatprep.subr.mxu0 0.0
      %6490 = vmatpush1.msra.mxu0 0.0
      %6491 = vmatprep.subr.mxu0 0.0
      %6492 = vmatpush1.msra.mxu0 0.0
      %6493 = vmatprep.subr.mxu0 0.0
      %6494 = vmatpush1.msra.mxu0 0.0
      %6495 = vmatprep.subr.mxu0 0.0
      %6496 = vmatpush1.msra.mxu0 0.0
      %6497 = vmatprep.subr.mxu0 0.0
      %6498 = vmatpush1.msra.mxu0 0.0
      %6499 = vmatprep.subr.mxu0 0.0
      %6500 = vmatpush1.msra.mxu0 0.0
      %6501 = vmatprep.subr.mxu0 0.0
      %6502 = vmatpush1.msra.mxu0 0.0
      %6503 = vmatprep.subr.mxu0 0.0
      %6504 = vmatpush1.msra.mxu0 0.0
      %6505 = vmatprep.subr.mxu0 0.0
      %6506 = vmatpush1.msra.mxu0 0.0
      %6507 = vmatprep.subr.mxu0 0.0
      %6508 = vmatpush1.msra.mxu0 %v6420
      %6509 = vmatprep.subr.mxu0 0.0
      %6510 = vmatpush2.msra.mxu0 0.0
      %6511 = vmatprep.subr.mxu0 0.0
      %6512 = vmatpush2.msra.mxu0 0.0
      %6513 = vmatprep.subr.mxu0 0.0
      %6514 = vmatpush2.msra.mxu0 0.0
      %6515 = vmatprep.subr.mxu0 0.0
      %6516 = vmatpush2.msra.mxu0 0.0
      %6517 = vmatprep.subr.mxu0 0.0
      %6518 = vmatpush2.msra.mxu0 0.0
      %6519 = vmatprep.subr.mxu0 0.0
      %6520 = vmatpush2.msra.mxu0 0.0
      %6521 = vmatprep.subr.mxu0 0.0
      %6522 = vmatpush2.msra.mxu0 0.0
      %6523 = vmatprep.subr.mxu0 0.0
      %6524 = vmatpush2.msra.mxu0 0.0
      %6525 = vmatprep.subr.mxu0 0.0
      %6526 = vmatpush2.msra.mxu0 0.0
      %6527 = vmatprep.subr.mxu0 0.0
      %6528 = vmatpush2.msra.mxu0 0.0
      %6529 = vmatprep.subr.mxu0 0.0
      %6530 = vmatpush2.msra.mxu0 0.0
      %6531 = vmatprep.subr.mxu0 0.0
      %6532 = vmatpush2.msra.mxu0 0.0
      %6533 = vmatprep.subr.mxu0 0.0
      %6534 = vmatpush2.msra.mxu0 0.0
      %6535 = vmatprep.subr.mxu0 0.0
      %6536 = vmatpush2.msra.mxu0 0.0
      %6537 = vmatprep.subr.mxu0 0.0
      %6538 = vmatpush2.msra.mxu0 0.0
      %6539 = vmatprep.subr.mxu0 0.0
      %6540 = vmatpush2.msra.mxu0 0.0
      %6541 = vmatprep.mubr.f32.mxu0 0.0
      %6542 = vmatmul.mubr.f32.gmra.mxu0 %v6430
      %v6543 = vpop.f32.mrf.mxu0
      %v6544 = vadd.f32 %v6426, %v6543
      %v6545 = vpop.f32.mrf.mxu0
      %6546 = vmatprep.mubr.f32.mxu0 0.0
      %6547 = vmatmul.mubr.f32.gmra.mxu0 %v6433
      %v6548 = vpop.f32.mrf.mxu0
      %v6549 = vadd.f32 %v6426, %v6548
      %v6550 = vpop.f32.mrf.mxu0
      %6551 = vmatprep.mubr.f32.mxu0 0.0
      %6552 = vmatmul.mubr.f32.gmra.mxu0 %v6430
      %v6553 = vpop.f32.mrf.mxu0
      %v6554 = vadd.f32 %v6426, %v6553
      %v6555 = vpop.f32.mrf.mxu0
      %6556 = vmatprep.mubr.f32.mxu0 0.0
      %6557 = vmatmul.mubr.f32.gmra.mxu0 %v6433
      %v6558 = vpop.f32.mrf.mxu0
      %v6559 = vadd.f32 %v6426, %v6558
      %v6560 = vpop.f32.mrf.mxu0
      %6561 = vmatprep.mubr.f32.mxu0 0.0
      %6562 = vmatmul.mubr.f32.gmra.mxu0 %v6436
      %v6563 = vpop.f32.mrf.mxu0
      %v6564 = vadd.f32 %v6426, %v6563
      %v6565 = vpop.f32.mrf.mxu0
      %6566 = vmatprep.mubr.f32.mxu0 0.0
      %6567 = vmatmul.mubr.f32.gmra.mxu0 %v6439
      %v6568 = vpop.f32.mrf.mxu0
      %v6569 = vadd.f32 %v6426, %v6568
      %v6570 = vpop.f32.mrf.mxu0
      %6571 = vmatprep.mubr.f32.mxu0 0.0
      %6572 = vmatmul.mubr.f32.gmra.mxu0 %v6436
      %v6573 = vpop.f32.mrf.mxu0
      %v6574 = vadd.f32 %v6426, %v6573
      %v6575 = vpop.f32.mrf.mxu0
      %6576 = vmatprep.mubr.f32.mxu0 0.0
      %6577 = vmatmul.mubr.f32.gmra.mxu0 %v6439
      %v6578 = vpop.f32.mrf.mxu0
      %v6579 = vadd.f32 %v6426, %v6578
      %v6580 = vpop.f32.mrf.mxu0
      %6581 = vmatprep.mubr.f32.mxu0 0.0
      %6582 = vmatmul.mubr.f32.gmra.mxu0 %v6442
      %v6583 = vpop.f32.mrf.mxu0
      %v6584 = vadd.f32 %v6426, %v6583
      %v6585 = vpop.f32.mrf.mxu0
      %6586 = vmatprep.mubr.f32.mxu0 0.0
      %6587 = vmatmul.mubr.f32.gmra.mxu0 %v6445
      %v6588 = vpop.f32.mrf.mxu0
      %v6589 = vadd.f32 %v6426, %v6588
      %v6590 = vpop.f32.mrf.mxu0
      %6591 = vmatprep.mubr.f32.mxu0 0.0
      %6592 = vmatmul.mubr.f32.gmra.mxu0 %v6442
      %v6593 = vpop.f32.mrf.mxu0
      %v6594 = vadd.f32 %v6426, %v6593
      %v6595 = vpop.f32.mrf.mxu0
      %6596 = vmatprep.mubr.f32.mxu0 0.0
      %6597 = vmatmul.mubr.f32.gmra.mxu0 %v6445
      %v6598 = vpop.f32.mrf.mxu0
      %v6599 = vadd.f32 %v6426, %v6598
      %v6600 = vpop.f32.mrf.mxu0
      %6601 = vmatprep.mubr.f32.mxu0 0.0
      %6602 = vmatmul.mubr.f32.gmra.mxu0 %v6448
      %v6603 = vpop.f32.mrf.mxu0
      %v6604 = vadd.f32 %v6426, %v6603
      %v6605 = vpop.f32.mrf.mxu0
      %6606 = vmatprep.mubr.f32.mxu0 0.0
      %6607 = vmatmul.mubr.f32.gmra.mxu0 %v6451
      %v6608 = vpop.f32.mrf.mxu0
      %v6609 = vadd.f32 %v6426, %v6608
      %v6610 = vpop.f32.mrf.mxu0
      %6611 = vmatprep.mubr.f32.mxu0 0.0
      %6612 = vmatmul.mubr.f32.gmra.mxu0 %v6448
      %v6613 = vpop.f32.mrf.mxu0
      %v6614 = vadd.f32 %v6426, %v6613
      %v6615 = vpop.f32.mrf.mxu0
      %6616 = vmatprep.mubr.f32.mxu0 0.0
      %6617 = vmatmul.mubr.f32.gmra.mxu0 %v6451
      %v6618 = vpop.f32.mrf.mxu0
      %v6619 = vadd.f32 %v6426, %v6618
      %v6620 = vpop.f32.mrf.mxu0
      %6621 = vmatprep.mubr.f32.mxu0 0.0
      %6622 = vmatmul.mubr.f32.gmra.mxu0 %v6454
      %v6623 = vpop.f32.mrf.mxu0
      %v6624 = vadd.f32 %v6426, %v6623
      %v6625 = vpop.f32.mrf.mxu0
      %6626 = vmatprep.mubr.f32.mxu0 0.0
      %6627 = vmatmul.mubr.f32.gmra.mxu0 %v6457
      %v6628 = vpop.f32.mrf.mxu0
      %v6629 = vadd.f32 %v6426, %v6628
      %v6630 = vpop.f32.mrf.mxu0
      %6631 = vmatprep.mubr.f32.mxu0 0.0
      %6632 = vmatmul.mubr.f32.gmra.mxu0 %v6454
      %v6633 = vpop.f32.mrf.mxu0
      %v6634 = vadd.f32 %v6426, %v6633
      %v6635 = vpop.f32.mrf.mxu0
      %6636 = vmatprep.mubr.f32.mxu0 0.0
      %6637 = vmatmul.mubr.f32.gmra.mxu0 %v6457
      %v6638 = vpop.f32.mrf.mxu0
      %v6639 = vadd.f32 %v6426, %v6638
      %v6640 = vpop.f32.mrf.mxu0
      %6641 = vmatprep.mubr.f32.mxu0 0.0
      %6642 = vmatmul.mubr.f32.gmra.mxu0 %v6460
      %v6643 = vpop.f32.mrf.mxu0
      %v6644 = vadd.f32 %v6426, %v6643
      %v6645 = vpop.f32.mrf.mxu0
      %6646 = vmatprep.mubr.f32.mxu0 0.0
      %6647 = vmatmul.mubr.f32.gmra.mxu0 %v6463
      %v6648 = vpop.f32.mrf.mxu0
      %v6649 = vadd.f32 %v6426, %v6648
      %v6650 = vpop.f32.mrf.mxu0
      %6651 = vmatprep.mubr.f32.mxu0 0.0
      %6652 = vmatmul.mubr.f32.gmra.mxu0 %v6460
      %v6653 = vpop.f32.mrf.mxu0
      %v6654 = vadd.f32 %v6426, %v6653
      %v6655 = vpop.f32.mrf.mxu0
      %6656 = vmatprep.mubr.f32.mxu0 0.0
      %6657 = vmatmul.mubr.f32.gmra.mxu0 %v6463
      %v6658 = vpop.f32.mrf.mxu0
      %v6659 = vadd.f32 %v6426, %v6658
      %v6660 = vpop.f32.mrf.mxu0
      %6661 = vmatprep.mubr.f32.mxu0 0.0
      %6662 = vmatmul.mubr.f32.gmra.mxu0 %v6466
      %v6663 = vpop.f32.mrf.mxu0
      %v6664 = vadd.f32 %v6426, %v6663
      %v6665 = vpop.f32.mrf.mxu0
      %6666 = vmatprep.mubr.f32.mxu0 0.0
      %6667 = vmatmul.mubr.f32.gmra.mxu0 %v6469
      %v6668 = vpop.f32.mrf.mxu0
      %v6669 = vadd.f32 %v6426, %v6668
      %v6670 = vpop.f32.mrf.mxu0
      %6671 = vmatprep.mubr.f32.mxu0 0.0
      %6672 = vmatmul.mubr.f32.gmra.mxu0 %v6466
      %v6673 = vpop.f32.mrf.mxu0
      %v6674 = vadd.f32 %v6426, %v6673
      %v6675 = vpop.f32.mrf.mxu0
      %6676 = vmatprep.mubr.f32.mxu0 0.0
      %6677 = vmatmul.mubr.f32.gmra.mxu0 %v6469
      %v6678 = vpop.f32.mrf.mxu0
      %v6679 = vadd.f32 %v6426, %v6678
      %v6680 = vpop.f32.mrf.mxu0
      %6681 = vmatprep.mubr.f32.mxu0 0.0
      %6682 = vmatmul.mubr.f32.gmra.mxu0 %v6472
      %v6683 = vpop.f32.mrf.mxu0
      %v6684 = vadd.f32 %v6426, %v6683
      %v6685 = vpop.f32.mrf.mxu0
      %6686 = vmatprep.mubr.f32.mxu0 0.0
      %6687 = vmatmul.mubr.f32.gmra.mxu0 %v6475
      %v6688 = vpop.f32.mrf.mxu0
      %v6689 = vadd.f32 %v6426, %v6688
      %v6690 = vpop.f32.mrf.mxu0
      %6691 = vmatprep.mubr.f32.mxu0 0.0
      %6692 = vmatmul.mubr.f32.gmra.mxu0 %v6472
      %v6693 = vpop.f32.mrf.mxu0
      %v6694 = vadd.f32 %v6426, %v6693
      %v6695 = vpop.f32.mrf.mxu0
      %6696 = vmatprep.mubr.f32.mxu0 0.0
      %6697 = vmatmul.mubr.f32.gmra.mxu0 %v6475
      %v6698 = vpop.f32.mrf.mxu0
      %v6699 = vadd.f32 %v6426, %v6698
      %v6700 = vpop.f32.mrf.mxu0
      %6701 = vdwg.mxu0
      %v6702 = vmax.f32 %v6544, 0.0
      %v6703 = vmax.f32 %v6549, 0.0
      %v6704 = vmax.f32 %v6554, 0.0
      %v6705 = vmax.f32 %v6559, 0.0
      %v6706 = vmax.f32 %v6564, 0.0
      %v6707 = vmax.f32 %v6569, 0.0
      %v6708 = vmax.f32 %v6574, 0.0
      %v6709 = vmax.f32 %v6579, 0.0
      %v6710 = vmax.f32 %v6584, 0.0
      %v6711 = vmax.f32 %v6589, 0.0
      %v6712 = vmax.f32 %v6594, 0.0
      %v6713 = vmax.f32 %v6599, 0.0
      %v6714 = vmax.f32 %v6604, 0.0
      %v6715 = vmax.f32 %v6609, 0.0
      %v6716 = vmax.f32 %v6614, 0.0
      %v6717 = vmax.f32 %v6619, 0.0
      %v6718 = vmax.f32 %v6624, 0.0
      %v6719 = vmax.f32 %v6629, 0.0
      %v6720 = vmax.f32 %v6634, 0.0
      %v6721 = vmax.f32 %v6639, 0.0
      %v6722 = vmax.f32 %v6644, 0.0
      %v6723 = vmax.f32 %v6649, 0.0
      %v6724 = vmax.f32 %v6654, 0.0
      %v6725 = vmax.f32 %v6659, 0.0
      %v6726 = vmax.f32 %v6664, 0.0
      %v6727 = vmax.f32 %v6669, 0.0
      %v6728 = vmax.f32 %v6674, 0.0
      %v6729 = vmax.f32 %v6679, 0.0
      %v6730 = vmax.f32 %v6684, 0.0
      %v6731 = vmax.f32 %v6689, 0.0
      %v6732 = vmax.f32 %v6694, 0.0
      %v6733 = vmax.f32 %v6699, 0.0
      %v6734 = vmin.f32 %v6702, 6.0
      %v6735 = vmin.f32 %v6703, 6.0
      %v6736 = vmin.f32 %v6704, 6.0
      %v6737 = vmin.f32 %v6705, 6.0
      %v6738 = vmin.f32 %v6706, 6.0
      %v6739 = vmin.f32 %v6707, 6.0
      %v6740 = vmin.f32 %v6708, 6.0
      %v6741 = vmin.f32 %v6709, 6.0
      %v6742 = vmin.f32 %v6710, 6.0
      %v6743 = vmin.f32 %v6711, 6.0
      %v6744 = vmin.f32 %v6712, 6.0
      %v6745 = vmin.f32 %v6713, 6.0
      %v6746 = vmin.f32 %v6714, 6.0
      %v6747 = vmin.f32 %v6715, 6.0
      %v6748 = vmin.f32 %v6716, 6.0
      %v6749 = vmin.f32 %v6717, 6.0
      %v6750 = vmin.f32 %v6718, 6.0
      %v6751 = vmin.f32 %v6719, 6.0
      %v6752 = vmin.f32 %v6720, 6.0
      %v6753 = vmin.f32 %v6721, 6.0
      %v6754 = vmin.f32 %v6722, 6.0
      %v6755 = vmin.f32 %v6723, 6.0
      %v6756 = vmin.f32 %v6724, 6.0
      %v6757 = vmin.f32 %v6725, 6.0
      %v6758 = vmin.f32 %v6726, 6.0
      %v6759 = vmin.f32 %v6727, 6.0
      %v6760 = vmin.f32 %v6728, 6.0
      %v6761 = vmin.f32 %v6729, 6.0
      %v6762 = vmin.f32 %v6730, 6.0
      %v6763 = vmin.f32 %v6731, 6.0
      %v6764 = vmin.f32 %v6732, 6.0
      %v6765 = vmin.f32 %v6733, 6.0
      %v6766 = vld [vmem:[%s9] sm:$0xff]
      %v6767 = vld [vmem:[%s10] sm:$0x1]
      %v6769 = vlaneseq
      %v6770 = vshrl.u32 %v6769, 7
      %v6771 = vsub.s32 0, %v6770
      %v6772 = vrot.slane %v6767, %v6771
      %v6775 = vsel %vm6428, %v901, 0
      %v6778 = vsel %vm6428, %v902, 0
      %v6781 = vsel %vm6428, %v903, 0
      %v6784 = vsel %vm6428, %v904, 0
      %v6787 = vsel %vm6428, %v905, 0
      %v6790 = vsel %vm6428, %v906, 0
      %v6793 = vsel %vm6428, %v907, 0
      %v6796 = vsel %vm6428, %v908, 0
      %v6799 = vsel %vm6428, %v909, 0
      %v6802 = vsel %vm6428, %v910, 0
      %v6805 = vsel %vm6428, %v911, 0
      %v6808 = vsel %vm6428, %v912, 0
      %v6811 = vsel %vm6428, %v913, 0
      %v6814 = vsel %vm6428, %v914, 0
      %v6817 = vsel %vm6428, %v915, 0
      %v6820 = vsel %vm6428, %v916, 0
      %v6823 = vsel %vm6428, %v917, 0
      %v6826 = vsel %vm6428, %v918, 0
      %v6829 = vsel %vm6428, %v919, 0
      %v6832 = vsel %vm6428, %v920, 0
      %v6835 = vsel %vm6428, %v921, 0
      %v6838 = vsel %vm6428, %v922, 0
      %v6841 = vsel %vm6428, %v923, 0
      %v6844 = vsel %vm6428, %v924, 0
      %v6847 = vsel %vm6428, %v925, 0
      %v6850 = vsel %vm6428, %v926, 0
      %v6853 = vsel %vm6428, %v927, 0
      %v6856 = vsel %vm6428, %v928, 0
      %v6859 = vsel %vm6428, %v929, 0
      %v6862 = vsel %vm6428, %v930, 0
      %v6865 = vsel %vm6428, %v931, 0
      %v6868 = vsel %vm6428, %v932, 0
      %6870 = vmatprep.subr.mxu0 0.0
      %6871 = vmatpush1.msra.mxu0 0.0
      %6872 = vmatprep.subr.mxu0 0.0
      %6873 = vmatpush1.msra.mxu0 0.0
      %6874 = vmatprep.subr.mxu0 0.0
      %6875 = vmatpush1.msra.mxu0 0.0
      %6876 = vmatprep.subr.mxu0 0.0
      %6877 = vmatpush1.msra.mxu0 0.0
      %6878 = vmatprep.subr.mxu0 0.0
      %6879 = vmatpush1.msra.mxu0 0.0
      %6880 = vmatprep.subr.mxu0 0.0
      %6881 = vmatpush1.msra.mxu0 0.0
      %6882 = vmatprep.subr.mxu0 0.0
      %6883 = vmatpush1.msra.mxu0 0.0
      %6884 = vmatprep.subr.mxu0 0.0
      %6885 = vmatpush1.msra.mxu0 0.0
      %6886 = vmatprep.subr.mxu0 0.0
      %6887 = vmatpush1.msra.mxu0 0.0
      %6888 = vmatprep.subr.mxu0 0.0
      %6889 = vmatpush1.msra.mxu0 0.0
      %6890 = vmatprep.subr.mxu0 0.0
      %6891 = vmatpush1.msra.mxu0 0.0
      %6892 = vmatprep.subr.mxu0 0.0
      %6893 = vmatpush1.msra.mxu0 0.0
      %6894 = vmatprep.subr.mxu0 0.0
      %6895 = vmatpush1.msra.mxu0 0.0
      %6896 = vmatprep.subr.mxu0 0.0
      %6897 = vmatpush1.msra.mxu0 0.0
      %6898 = vmatprep.subr.mxu0 0.0
      %6899 = vmatpush1.msra.mxu0 0.0
      %6900 = vmatprep.subr.mxu0 0.0
      %6901 = vmatpush1.msra.mxu0 %v6766
      %6902 = vmatprep.subr.mxu0 0.0
      %6903 = vmatpush2.msra.mxu0 0.0
      %6904 = vmatprep.subr.mxu0 0.0
      %6905 = vmatpush2.msra.mxu0 0.0
      %6906 = vmatprep.subr.mxu0 0.0
      %6907 = vmatpush2.msra.mxu0 0.0
      %6908 = vmatprep.subr.mxu0 0.0
      %6909 = vmatpush2.msra.mxu0 0.0
      %6910 = vmatprep.subr.mxu0 0.0
      %6911 = vmatpush2.msra.mxu0 0.0
      %6912 = vmatprep.subr.mxu0 0.0
      %6913 = vmatpush2.msra.mxu0 0.0
      %6914 = vmatprep.subr.mxu0 0.0
      %6915 = vmatpush2.msra.mxu0 0.0
      %6916 = vmatprep.subr.mxu0 0.0
      %6917 = vmatpush2.msra.mxu0 0.0
      %6918 = vmatprep.subr.mxu0 0.0
      %6919 = vmatpush2.msra.mxu0 0.0
      %6920 = vmatprep.subr.mxu0 0.0
      %6921 = vmatpush2.msra.mxu0 0.0
      %6922 = vmatprep.subr.mxu0 0.0
      %6923 = vmatpush2.msra.mxu0 0.0
      %6924 = vmatprep.subr.mxu0 0.0
      %6925 = vmatpush2.msra.mxu0 0.0
      %6926 = vmatprep.subr.mxu0 0.0
      %6927 = vmatpush2.msra.mxu0 0.0
      %6928 = vmatprep.subr.mxu0 0.0
      %6929 = vmatpush2.msra.mxu0 0.0
      %6930 = vmatprep.subr.mxu0 0.0
      %6931 = vmatpush2.msra.mxu0 0.0
      %6932 = vmatprep.subr.mxu0 0.0
      %6933 = vmatpush2.msra.mxu0 0.0
      %6934 = vmatprep.mubr.f32.mxu0 0.0
      %6935 = vmatmul.mubr.f32.gmra.mxu0 %v6775
      %v6936 = vpop.f32.mrf.mxu0
      %v6937 = vadd.f32 %v6772, %v6936
      %v6938 = vpop.f32.mrf.mxu0
      %6939 = vmatprep.mubr.f32.mxu0 0.0
      %6940 = vmatmul.mubr.f32.gmra.mxu0 %v6778
      %v6941 = vpop.f32.mrf.mxu0
      %v6942 = vadd.f32 %v6772, %v6941
      %v6943 = vpop.f32.mrf.mxu0
      %6944 = vmatprep.mubr.f32.mxu0 0.0
      %6945 = vmatmul.mubr.f32.gmra.mxu0 %v6781
      %v6946 = vpop.f32.mrf.mxu0
      %v6947 = vadd.f32 %v6772, %v6946
      %v6948 = vpop.f32.mrf.mxu0
      %6949 = vmatprep.mubr.f32.mxu0 0.0
      %6950 = vmatmul.mubr.f32.gmra.mxu0 %v6784
      %v6951 = vpop.f32.mrf.mxu0
      %v6952 = vadd.f32 %v6772, %v6951
      %v6953 = vpop.f32.mrf.mxu0
      %6954 = vmatprep.mubr.f32.mxu0 0.0
      %6955 = vmatmul.mubr.f32.gmra.mxu0 %v6787
      %v6956 = vpop.f32.mrf.mxu0
      %v6957 = vadd.f32 %v6772, %v6956
      %v6958 = vpop.f32.mrf.mxu0
      %6959 = vmatprep.mubr.f32.mxu0 0.0
      %6960 = vmatmul.mubr.f32.gmra.mxu0 %v6790
      %v6961 = vpop.f32.mrf.mxu0
      %v6962 = vadd.f32 %v6772, %v6961
      %v6963 = vpop.f32.mrf.mxu0
      %6964 = vmatprep.mubr.f32.mxu0 0.0
      %6965 = vmatmul.mubr.f32.gmra.mxu0 %v6793
      %v6966 = vpop.f32.mrf.mxu0
      %v6967 = vadd.f32 %v6772, %v6966
      %v6968 = vpop.f32.mrf.mxu0
      %6969 = vmatprep.mubr.f32.mxu0 0.0
      %6970 = vmatmul.mubr.f32.gmra.mxu0 %v6796
      %v6971 = vpop.f32.mrf.mxu0
      %v6972 = vadd.f32 %v6772, %v6971
      %v6973 = vpop.f32.mrf.mxu0
      %6974 = vmatprep.mubr.f32.mxu0 0.0
      %6975 = vmatmul.mubr.f32.gmra.mxu0 %v6799
      %v6976 = vpop.f32.mrf.mxu0
      %v6977 = vadd.f32 %v6772, %v6976
      %v6978 = vpop.f32.mrf.mxu0
      %6979 = vmatprep.mubr.f32.mxu0 0.0
      %6980 = vmatmul.mubr.f32.gmra.mxu0 %v6802
      %v6981 = vpop.f32.mrf.mxu0
      %v6982 = vadd.f32 %v6772, %v6981
      %v6983 = vpop.f32.mrf.mxu0
      %6984 = vmatprep.mubr.f32.mxu0 0.0
      %6985 = vmatmul.mubr.f32.gmra.mxu0 %v6805
      %v6986 = vpop.f32.mrf.mxu0
      %v6987 = vadd.f32 %v6772, %v6986
      %v6988 = vpop.f32.mrf.mxu0
      %6989 = vmatprep.mubr.f32.mxu0 0.0
      %6990 = vmatmul.mubr.f32.gmra.mxu0 %v6808
      %v6991 = vpop.f32.mrf.mxu0
      %v6992 = vadd.f32 %v6772, %v6991
      %v6993 = vpop.f32.mrf.mxu0
      %6994 = vmatprep.mubr.f32.mxu0 0.0
      %6995 = vmatmul.mubr.f32.gmra.mxu0 %v6811
      %v6996 = vpop.f32.mrf.mxu0
      %v6997 = vadd.f32 %v6772, %v6996
      %v6998 = vpop.f32.mrf.mxu0
      %6999 = vmatprep.mubr.f32.mxu0 0.0
      %7000 = vmatmul.mubr.f32.gmra.mxu0 %v6814
      %v7001 = vpop.f32.mrf.mxu0
      %v7002 = vadd.f32 %v6772, %v7001
      %v7003 = vpop.f32.mrf.mxu0
      %7004 = vmatprep.mubr.f32.mxu0 0.0
      %7005 = vmatmul.mubr.f32.gmra.mxu0 %v6817
      %v7006 = vpop.f32.mrf.mxu0
      %v7007 = vadd.f32 %v6772, %v7006
      %v7008 = vpop.f32.mrf.mxu0
      %7009 = vmatprep.mubr.f32.mxu0 0.0
      %7010 = vmatmul.mubr.f32.gmra.mxu0 %v6820
      %v7011 = vpop.f32.mrf.mxu0
      %v7012 = vadd.f32 %v6772, %v7011
      %v7013 = vpop.f32.mrf.mxu0
      %7014 = vmatprep.mubr.f32.mxu0 0.0
      %7015 = vmatmul.mubr.f32.gmra.mxu0 %v6823
      %v7016 = vpop.f32.mrf.mxu0
      %v7017 = vadd.f32 %v6772, %v7016
      %v7018 = vpop.f32.mrf.mxu0
      %7019 = vmatprep.mubr.f32.mxu0 0.0
      %7020 = vmatmul.mubr.f32.gmra.mxu0 %v6826
      %v7021 = vpop.f32.mrf.mxu0
      %v7022 = vadd.f32 %v6772, %v7021
      %v7023 = vpop.f32.mrf.mxu0
      %7024 = vmatprep.mubr.f32.mxu0 0.0
      %7025 = vmatmul.mubr.f32.gmra.mxu0 %v6829
      %v7026 = vpop.f32.mrf.mxu0
      %v7027 = vadd.f32 %v6772, %v7026
      %v7028 = vpop.f32.mrf.mxu0
      %7029 = vmatprep.mubr.f32.mxu0 0.0
      %7030 = vmatmul.mubr.f32.gmra.mxu0 %v6832
      %v7031 = vpop.f32.mrf.mxu0
      %v7032 = vadd.f32 %v6772, %v7031
      %v7033 = vpop.f32.mrf.mxu0
      %7034 = vmatprep.mubr.f32.mxu0 0.0
      %7035 = vmatmul.mubr.f32.gmra.mxu0 %v6835
      %v7036 = vpop.f32.mrf.mxu0
      %v7037 = vadd.f32 %v6772, %v7036
      %v7038 = vpop.f32.mrf.mxu0
      %7039 = vmatprep.mubr.f32.mxu0 0.0
      %7040 = vmatmul.mubr.f32.gmra.mxu0 %v6838
      %v7041 = vpop.f32.mrf.mxu0
      %v7042 = vadd.f32 %v6772, %v7041
      %v7043 = vpop.f32.mrf.mxu0
      %7044 = vmatprep.mubr.f32.mxu0 0.0
      %7045 = vmatmul.mubr.f32.gmra.mxu0 %v6841
      %v7046 = vpop.f32.mrf.mxu0
      %v7047 = vadd.f32 %v6772, %v7046
      %v7048 = vpop.f32.mrf.mxu0
      %7049 = vmatprep.mubr.f32.mxu0 0.0
      %7050 = vmatmul.mubr.f32.gmra.mxu0 %v6844
      %v7051 = vpop.f32.mrf.mxu0
      %v7052 = vadd.f32 %v6772, %v7051
      %v7053 = vpop.f32.mrf.mxu0
      %7054 = vmatprep.mubr.f32.mxu0 0.0
      %7055 = vmatmul.mubr.f32.gmra.mxu0 %v6847
      %v7056 = vpop.f32.mrf.mxu0
      %v7057 = vadd.f32 %v6772, %v7056
      %v7058 = vpop.f32.mrf.mxu0
      %7059 = vmatprep.mubr.f32.mxu0 0.0
      %7060 = vmatmul.mubr.f32.gmra.mxu0 %v6850
      %v7061 = vpop.f32.mrf.mxu0
      %v7062 = vadd.f32 %v6772, %v7061
      %v7063 = vpop.f32.mrf.mxu0
      %7064 = vmatprep.mubr.f32.mxu0 0.0
      %7065 = vmatmul.mubr.f32.gmra.mxu0 %v6853
      %v7066 = vpop.f32.mrf.mxu0
      %v7067 = vadd.f32 %v6772, %v7066
      %v7068 = vpop.f32.mrf.mxu0
      %7069 = vmatprep.mubr.f32.mxu0 0.0
      %7070 = vmatmul.mubr.f32.gmra.mxu0 %v6856
      %v7071 = vpop.f32.mrf.mxu0
      %v7072 = vadd.f32 %v6772, %v7071
      %v7073 = vpop.f32.mrf.mxu0
      %7074 = vmatprep.mubr.f32.mxu0 0.0
      %7075 = vmatmul.mubr.f32.gmra.mxu0 %v6859
      %v7076 = vpop.f32.mrf.mxu0
      %v7077 = vadd.f32 %v6772, %v7076
      %v7078 = vpop.f32.mrf.mxu0
      %7079 = vmatprep.mubr.f32.mxu0 0.0
      %7080 = vmatmul.mubr.f32.gmra.mxu0 %v6862
      %v7081 = vpop.f32.mrf.mxu0
      %v7082 = vadd.f32 %v6772, %v7081
      %v7083 = vpop.f32.mrf.mxu0
      %7084 = vmatprep.mubr.f32.mxu0 0.0
      %7085 = vmatmul.mubr.f32.gmra.mxu0 %v6865
      %v7086 = vpop.f32.mrf.mxu0
      %v7087 = vadd.f32 %v6772, %v7086
      %v7088 = vpop.f32.mrf.mxu0
      %7089 = vmatprep.mubr.f32.mxu0 0.0
      %7090 = vmatmul.mubr.f32.gmra.mxu0 %v6868
      %v7091 = vpop.f32.mrf.mxu0
      %v7092 = vadd.f32 %v6772, %v7091
      %v7093 = vpop.f32.mrf.mxu0
      %7094 = vdwg.mxu0
      %v7095 = vmax.f32 %v6937, 0.0
      %v7096 = vmax.f32 %v6942, 0.0
      %v7097 = vmax.f32 %v6947, 0.0
      %v7098 = vmax.f32 %v6952, 0.0
      %v7099 = vmax.f32 %v6957, 0.0
      %v7100 = vmax.f32 %v6962, 0.0
      %v7101 = vmax.f32 %v6967, 0.0
      %v7102 = vmax.f32 %v6972, 0.0
      %v7103 = vmax.f32 %v6977, 0.0
      %v7104 = vmax.f32 %v6982, 0.0
      %v7105 = vmax.f32 %v6987, 0.0
      %v7106 = vmax.f32 %v6992, 0.0
      %v7107 = vmax.f32 %v6997, 0.0
      %v7108 = vmax.f32 %v7002, 0.0
      %v7109 = vmax.f32 %v7007, 0.0
      %v7110 = vmax.f32 %v7012, 0.0
      %v7111 = vmax.f32 %v7017, 0.0
      %v7112 = vmax.f32 %v7022, 0.0
      %v7113 = vmax.f32 %v7027, 0.0
      %v7114 = vmax.f32 %v7032, 0.0
      %v7115 = vmax.f32 %v7037, 0.0
      %v7116 = vmax.f32 %v7042, 0.0
      %v7117 = vmax.f32 %v7047, 0.0
      %v7118 = vmax.f32 %v7052, 0.0
      %v7119 = vmax.f32 %v7057, 0.0
      %v7120 = vmax.f32 %v7062, 0.0
      %v7121 = vmax.f32 %v7067, 0.0
      %v7122 = vmax.f32 %v7072, 0.0
      %v7123 = vmax.f32 %v7077, 0.0
      %v7124 = vmax.f32 %v7082, 0.0
      %v7125 = vmax.f32 %v7087, 0.0
      %v7126 = vmax.f32 %v7092, 0.0
      %v7127 = vmin.f32 %v7095, 6.0
      %v7128 = vmin.f32 %v7096, 6.0
      %v7129 = vmin.f32 %v7097, 6.0
      %v7130 = vmin.f32 %v7098, 6.0
      %v7131 = vmin.f32 %v7099, 6.0
      %v7132 = vmin.f32 %v7100, 6.0
      %v7133 = vmin.f32 %v7101, 6.0
      %v7134 = vmin.f32 %v7102, 6.0
      %v7135 = vmin.f32 %v7103, 6.0
      %v7136 = vmin.f32 %v7104, 6.0
      %v7137 = vmin.f32 %v7105, 6.0
      %v7138 = vmin.f32 %v7106, 6.0
      %v7139 = vmin.f32 %v7107, 6.0
      %v7140 = vmin.f32 %v7108, 6.0
      %v7141 = vmin.f32 %v7109, 6.0
      %v7142 = vmin.f32 %v7110, 6.0
      %v7143 = vmin.f32 %v7111, 6.0
      %v7144 = vmin.f32 %v7112, 6.0
      %v7145 = vmin.f32 %v7113, 6.0
      %v7146 = vmin.f32 %v7114, 6.0
      %v7147 = vmin.f32 %v7115, 6.0
      %v7148 = vmin.f32 %v7116, 6.0
      %v7149 = vmin.f32 %v7117, 6.0
      %v7150 = vmin.f32 %v7118, 6.0
      %v7151 = vmin.f32 %v7119, 6.0
      %v7152 = vmin.f32 %v7120, 6.0
      %v7153 = vmin.f32 %v7121, 6.0
      %v7154 = vmin.f32 %v7122, 6.0
      %v7155 = vmin.f32 %v7123, 6.0
      %v7156 = vmin.f32 %v7124, 6.0
      %v7157 = vmin.f32 %v7125, 6.0
      %v7158 = vmin.f32 %v7126, 6.0
      %v7159 = vld [vmem:[%s11] sm:$0xff]
      %v7160 = vld [vmem:[%s12] sm:$0x1]
      %v7162 = vlaneseq
      %v7163 = vshrl.u32 %v7162, 7
      %v7164 = vsub.s32 0, %v7163
      %v7165 = vrot.slane %v7160, %v7164
      %v7168 = vsel %vm6428, %v6388, 0
      %v7171 = vsel %vm6428, %v6389, 0
      %v7174 = vsel %vm6428, %v6390, 0
      %v7177 = vsel %vm6428, %v6391, 0
      %v7180 = vsel %vm6428, %v6392, 0
      %v7183 = vsel %vm6428, %v6393, 0
      %v7186 = vsel %vm6428, %v6394, 0
      %v7189 = vsel %vm6428, %v6395, 0
      %v7192 = vsel %vm6428, %v6396, 0
      %v7195 = vsel %vm6428, %v6397, 0
      %v7198 = vsel %vm6428, %v6398, 0
      %v7201 = vsel %vm6428, %v6399, 0
      %v7204 = vsel %vm6428, %v6400, 0
      %v7207 = vsel %vm6428, %v6401, 0
      %v7210 = vsel %vm6428, %v6402, 0
      %v7213 = vsel %vm6428, %v6403, 0
      %v7216 = vsel %vm6428, %v6404, 0
      %v7219 = vsel %vm6428, %v6405, 0
      %v7222 = vsel %vm6428, %v6406, 0
      %v7225 = vsel %vm6428, %v6407, 0
      %v7228 = vsel %vm6428, %v6408, 0
      %v7231 = vsel %vm6428, %v6409, 0
      %v7234 = vsel %vm6428, %v6410, 0
      %v7237 = vsel %vm6428, %v6411, 0
      %v7240 = vsel %vm6428, %v6412, 0
      %v7243 = vsel %vm6428, %v6413, 0
      %v7246 = vsel %vm6428, %v6414, 0
      %v7249 = vsel %vm6428, %v6415, 0
      %v7252 = vsel %vm6428, %v6416, 0
      %v7255 = vsel %vm6428, %v6417, 0
      %v7258 = vsel %vm6428, %v6418, 0
      %v7261 = vsel %vm6428, %v6419, 0
      %7263 = vmatprep.subr.mxu0 0.0
      %7264 = vmatpush1.msra.mxu0 0.0
      %7265 = vmatprep.subr.mxu0 0.0
      %7266 = vmatpush1.msra.mxu0 0.0
      %7267 = vmatprep.subr.mxu0 0.0
      %7268 = vmatpush1.msra.mxu0 0.0
      %7269 = vmatprep.subr.mxu0 0.0
      %7270 = vmatpush1.msra.mxu0 0.0
      %7271 = vmatprep.subr.mxu0 0.0
      %7272 = vmatpush1.msra.mxu0 0.0
      %7273 = vmatprep.subr.mxu0 0.0
      %7274 = vmatpush1.msra.mxu0 0.0
      %7275 = vmatprep.subr.mxu0 0.0
      %7276 = vmatpush1.msra.mxu0 0.0
      %7277 = vmatprep.subr.mxu0 0.0
      %7278 = vmatpush1.msra.mxu0 0.0
      %7279 = vmatprep.subr.mxu0 0.0
      %7280 = vmatpush1.msra.mxu0 0.0
      %7281 = vmatprep.subr.mxu0 0.0
      %7282 = vmatpush1.msra.mxu0 0.0
      %7283 = vmatprep.subr.mxu0 0.0
      %7284 = vmatpush1.msra.mxu0 0.0
      %7285 = vmatprep.subr.mxu0 0.0
      %7286 = vmatpush1.msra.mxu0 0.0
      %7287 = vmatprep.subr.mxu0 0.0
      %7288 = vmatpush1.msra.mxu0 0.0
      %7289 = vmatprep.subr.mxu0 0.0
      %7290 = vmatpush1.msra.mxu0 0.0
      %7291 = vmatprep.subr.mxu0 0.0
      %7292 = vmatpush1.msra.mxu0 0.0
      %7293 = vmatprep.subr.mxu0 0.0
      %7294 = vmatpush1.msra.mxu0 %v7159
      %7295 = vmatprep.subr.mxu0 0.0
      %7296 = vmatpush2.msra.mxu0 0.0
      %7297 = vmatprep.subr.mxu0 0.0
      %7298 = vmatpush2.msra.mxu0 0.0
      %7299 = vmatprep.subr.mxu0 0.0
      %7300 = vmatpush2.msra.mxu0 0.0
      %7301 = vmatprep.subr.mxu0 0.0
      %7302 = vmatpush2.msra.mxu0 0.0
      %7303 = vmatprep.subr.mxu0 0.0
      %7304 = vmatpush2.msra.mxu0 0.0
      %7305 = vmatprep.subr.mxu0 0.0
      %7306 = vmatpush2.msra.mxu0 0.0
      %7307 = vmatprep.subr.mxu0 0.0
      %7308 = vmatpush2.msra.mxu0 0.0
      %7309 = vmatprep.subr.mxu0 0.0
      %7310 = vmatpush2.msra.mxu0 0.0
      %7311 = vmatprep.subr.mxu0 0.0
      %7312 = vmatpush2.msra.mxu0 0.0
      %7313 = vmatprep.subr.mxu0 0.0
      %7314 = vmatpush2.msra.mxu0 0.0
      %7315 = vmatprep.subr.mxu0 0.0
      %7316 = vmatpush2.msra.mxu0 0.0
      %7317 = vmatprep.subr.mxu0 0.0
      %7318 = vmatpush2.msra.mxu0 0.0
      %7319 = vmatprep.subr.mxu0 0.0
      %7320 = vmatpush2.msra.mxu0 0.0
      %7321 = vmatprep.subr.mxu0 0.0
      %7322 = vmatpush2.msra.mxu0 0.0
      %7323 = vmatprep.subr.mxu0 0.0
      %7324 = vmatpush2.msra.mxu0 0.0
      %7325 = vmatprep.subr.mxu0 0.0
      %7326 = vmatpush2.msra.mxu0 0.0
      %7327 = vmatprep.mubr.f32.mxu0 0.0
      %7328 = vmatmul.mubr.f32.gmra.mxu0 %v7168
      %v7329 = vpop.f32.mrf.mxu0
      %v7330 = vadd.f32 %v7165, %v7329
      %v7331 = vpop.f32.mrf.mxu0
      %7332 = vmatprep.mubr.f32.mxu0 0.0
      %7333 = vmatmul.mubr.f32.gmra.mxu0 %v7171
      %v7334 = vpop.f32.mrf.mxu0
      %v7335 = vadd.f32 %v7165, %v7334
      %v7336 = vpop.f32.mrf.mxu0
      %7337 = vmatprep.mubr.f32.mxu0 0.0
      %7338 = vmatmul.mubr.f32.gmra.mxu0 %v7174
      %v7339 = vpop.f32.mrf.mxu0
      %v7340 = vadd.f32 %v7165, %v7339
      %v7341 = vpop.f32.mrf.mxu0
      %7342 = vmatprep.mubr.f32.mxu0 0.0
      %7343 = vmatmul.mubr.f32.gmra.mxu0 %v7177
      %v7344 = vpop.f32.mrf.mxu0
      %v7345 = vadd.f32 %v7165, %v7344
      %v7346 = vpop.f32.mrf.mxu0
      %7347 = vmatprep.mubr.f32.mxu0 0.0
      %7348 = vmatmul.mubr.f32.gmra.mxu0 %v7180
      %v7349 = vpop.f32.mrf.mxu0
      %v7350 = vadd.f32 %v7165, %v7349
      %v7351 = vpop.f32.mrf.mxu0
      %7352 = vmatprep.mubr.f32.mxu0 0.0
      %7353 = vmatmul.mubr.f32.gmra.mxu0 %v7183
      %v7354 = vpop.f32.mrf.mxu0
      %v7355 = vadd.f32 %v7165, %v7354
      %v7356 = vpop.f32.mrf.mxu0
      %7357 = vmatprep.mubr.f32.mxu0 0.0
      %7358 = vmatmul.mubr.f32.gmra.mxu0 %v7186
      %v7359 = vpop.f32.mrf.mxu0
      %v7360 = vadd.f32 %v7165, %v7359
      %v7361 = vpop.f32.mrf.mxu0
      %7362 = vmatprep.mubr.f32.mxu0 0.0
      %7363 = vmatmul.mubr.f32.gmra.mxu0 %v7189
      %v7364 = vpop.f32.mrf.mxu0
      %v7365 = vadd.f32 %v7165, %v7364
      %v7366 = vpop.f32.mrf.mxu0
      %7367 = vmatprep.mubr.f32.mxu0 0.0
      %7368 = vmatmul.mubr.f32.gmra.mxu0 %v7192
      %v7369 = vpop.f32.mrf.mxu0
      %v7370 = vadd.f32 %v7165, %v7369
      %v7371 = vpop.f32.mrf.mxu0
      %7372 = vmatprep.mubr.f32.mxu0 0.0
      %7373 = vmatmul.mubr.f32.gmra.mxu0 %v7195
      %v7374 = vpop.f32.mrf.mxu0
      %v7375 = vadd.f32 %v7165, %v7374
      %v7376 = vpop.f32.mrf.mxu0
      %7377 = vmatprep.mubr.f32.mxu0 0.0
      %7378 = vmatmul.mubr.f32.gmra.mxu0 %v7198
      %v7379 = vpop.f32.mrf.mxu0
      %v7380 = vadd.f32 %v7165, %v7379
      %v7381 = vpop.f32.mrf.mxu0
      %7382 = vmatprep.mubr.f32.mxu0 0.0
      %7383 = vmatmul.mubr.f32.gmra.mxu0 %v7201
      %v7384 = vpop.f32.mrf.mxu0
      %v7385 = vadd.f32 %v7165, %v7384
      %v7386 = vpop.f32.mrf.mxu0
      %7387 = vmatprep.mubr.f32.mxu0 0.0
      %7388 = vmatmul.mubr.f32.gmra.mxu0 %v7204
      %v7389 = vpop.f32.mrf.mxu0
      %v7390 = vadd.f32 %v7165, %v7389
      %v7391 = vpop.f32.mrf.mxu0
      %7392 = vmatprep.mubr.f32.mxu0 0.0
      %7393 = vmatmul.mubr.f32.gmra.mxu0 %v7207
      %v7394 = vpop.f32.mrf.mxu0
      %v7395 = vadd.f32 %v7165, %v7394
      %v7396 = vpop.f32.mrf.mxu0
      %7397 = vmatprep.mubr.f32.mxu0 0.0
      %7398 = vmatmul.mubr.f32.gmra.mxu0 %v7210
      %v7399 = vpop.f32.mrf.mxu0
      %v7400 = vadd.f32 %v7165, %v7399
      %v7401 = vpop.f32.mrf.mxu0
      %7402 = vmatprep.mubr.f32.mxu0 0.0
      %7403 = vmatmul.mubr.f32.gmra.mxu0 %v7213
      %v7404 = vpop.f32.mrf.mxu0
      %v7405 = vadd.f32 %v7165, %v7404
      %v7406 = vpop.f32.mrf.mxu0
      %7407 = vmatprep.mubr.f32.mxu0 0.0
      %7408 = vmatmul.mubr.f32.gmra.mxu0 %v7216
      %v7409 = vpop.f32.mrf.mxu0
      %v7410 = vadd.f32 %v7165, %v7409
      %v7411 = vpop.f32.mrf.mxu0
      %7412 = vmatprep.mubr.f32.mxu0 0.0
      %7413 = vmatmul.mubr.f32.gmra.mxu0 %v7219
      %v7414 = vpop.f32.mrf.mxu0
      %v7415 = vadd.f32 %v7165, %v7414
      %v7416 = vpop.f32.mrf.mxu0
      %7417 = vmatprep.mubr.f32.mxu0 0.0
      %7418 = vmatmul.mubr.f32.gmra.mxu0 %v7222
      %v7419 = vpop.f32.mrf.mxu0
      %v7420 = vadd.f32 %v7165, %v7419
      %v7421 = vpop.f32.mrf.mxu0
      %7422 = vmatprep.mubr.f32.mxu0 0.0
      %7423 = vmatmul.mubr.f32.gmra.mxu0 %v7225
      %v7424 = vpop.f32.mrf.mxu0
      %v7425 = vadd.f32 %v7165, %v7424
      %v7426 = vpop.f32.mrf.mxu0
      %7427 = vmatprep.mubr.f32.mxu0 0.0
      %7428 = vmatmul.mubr.f32.gmra.mxu0 %v7228
      %v7429 = vpop.f32.mrf.mxu0
      %v7430 = vadd.f32 %v7165, %v7429
      %v7431 = vpop.f32.mrf.mxu0
      %7432 = vmatprep.mubr.f32.mxu0 0.0
      %7433 = vmatmul.mubr.f32.gmra.mxu0 %v7231
      %v7434 = vpop.f32.mrf.mxu0
      %v7435 = vadd.f32 %v7165, %v7434
      %v7436 = vpop.f32.mrf.mxu0
      %7437 = vmatprep.mubr.f32.mxu0 0.0
      %7438 = vmatmul.mubr.f32.gmra.mxu0 %v7234
      %v7439 = vpop.f32.mrf.mxu0
      %v7440 = vadd.f32 %v7165, %v7439
      %v7441 = vpop.f32.mrf.mxu0
      %7442 = vmatprep.mubr.f32.mxu0 0.0
      %7443 = vmatmul.mubr.f32.gmra.mxu0 %v7237
      %v7444 = vpop.f32.mrf.mxu0
      %v7445 = vadd.f32 %v7165, %v7444
      %v7446 = vpop.f32.mrf.mxu0
      %7447 = vmatprep.mubr.f32.mxu0 0.0
      %7448 = vmatmul.mubr.f32.gmra.mxu0 %v7240
      %v7449 = vpop.f32.mrf.mxu0
      %v7450 = vadd.f32 %v7165, %v7449
      %v7451 = vpop.f32.mrf.mxu0
      %7452 = vmatprep.mubr.f32.mxu0 0.0
      %7453 = vmatmul.mubr.f32.gmra.mxu0 %v7243
      %v7454 = vpop.f32.mrf.mxu0
      %v7455 = vadd.f32 %v7165, %v7454
      %v7456 = vpop.f32.mrf.mxu0
      %7457 = vmatprep.mubr.f32.mxu0 0.0
      %7458 = vmatmul.mubr.f32.gmra.mxu0 %v7246
      %v7459 = vpop.f32.mrf.mxu0
      %v7460 = vadd.f32 %v7165, %v7459
      %v7461 = vpop.f32.mrf.mxu0
      %7462 = vmatprep.mubr.f32.mxu0 0.0
      %7463 = vmatmul.mubr.f32.gmra.mxu0 %v7249
      %v7464 = vpop.f32.mrf.mxu0
      %v7465 = vadd.f32 %v7165, %v7464
      %v7466 = vpop.f32.mrf.mxu0
      %7467 = vmatprep.mubr.f32.mxu0 0.0
      %7468 = vmatmul.mubr.f32.gmra.mxu0 %v7252
      %v7469 = vpop.f32.mrf.mxu0
      %v7470 = vadd.f32 %v7165, %v7469
      %v7471 = vpop.f32.mrf.mxu0
      %7472 = vmatprep.mubr.f32.mxu0 0.0
      %7473 = vmatmul.mubr.f32.gmra.mxu0 %v7255
      %v7474 = vpop.f32.mrf.mxu0
      %v7475 = vadd.f32 %v7165, %v7474
      %v7476 = vpop.f32.mrf.mxu0
      %7477 = vmatprep.mubr.f32.mxu0 0.0
      %7478 = vmatmul.mubr.f32.gmra.mxu0 %v7258
      %v7479 = vpop.f32.mrf.mxu0
      %v7480 = vadd.f32 %v7165, %v7479
      %v7481 = vpop.f32.mrf.mxu0
      %7482 = vmatprep.mubr.f32.mxu0 0.0
      %7483 = vmatmul.mubr.f32.gmra.mxu0 %v7261
      %v7484 = vpop.f32.mrf.mxu0
      %v7485 = vadd.f32 %v7165, %v7484
      %v7486 = vpop.f32.mrf.mxu0
      %7487 = vdwg.mxu0
      %v7488 = vmax.f32 %v7330, 0.0
      %v7489 = vmax.f32 %v7335, 0.0
      %v7490 = vmax.f32 %v7340, 0.0
      %v7491 = vmax.f32 %v7345, 0.0
      %v7492 = vmax.f32 %v7350, 0.0
      %v7493 = vmax.f32 %v7355, 0.0
      %v7494 = vmax.f32 %v7360, 0.0
      %v7495 = vmax.f32 %v7365, 0.0
      %v7496 = vmax.f32 %v7370, 0.0
      %v7497 = vmax.f32 %v7375, 0.0
      %v7498 = vmax.f32 %v7380, 0.0
      %v7499 = vmax.f32 %v7385, 0.0
      %v7500 = vmax.f32 %v7390, 0.0
      %v7501 = vmax.f32 %v7395, 0.0
      %v7502 = vmax.f32 %v7400, 0.0
      %v7503 = vmax.f32 %v7405, 0.0
      %v7504 = vmax.f32 %v7410, 0.0
      %v7505 = vmax.f32 %v7415, 0.0
      %v7506 = vmax.f32 %v7420, 0.0
      %v7507 = vmax.f32 %v7425, 0.0
      %v7508 = vmax.f32 %v7430, 0.0
      %v7509 = vmax.f32 %v7435, 0.0
      %v7510 = vmax.f32 %v7440, 0.0
      %v7511 = vmax.f32 %v7445, 0.0
      %v7512 = vmax.f32 %v7450, 0.0
      %v7513 = vmax.f32 %v7455, 0.0
      %v7514 = vmax.f32 %v7460, 0.0
      %v7515 = vmax.f32 %v7465, 0.0
      %v7516 = vmax.f32 %v7470, 0.0
      %v7517 = vmax.f32 %v7475, 0.0
      %v7518 = vmax.f32 %v7480, 0.0
      %v7519 = vmax.f32 %v7485, 0.0
      %v7520 = vmin.f32 %v7488, 6.0
      %v7521 = vmin.f32 %v7489, 6.0
      %v7522 = vmin.f32 %v7490, 6.0
      %v7523 = vmin.f32 %v7491, 6.0
      %v7524 = vmin.f32 %v7492, 6.0
      %v7525 = vmin.f32 %v7493, 6.0
      %v7526 = vmin.f32 %v7494, 6.0
      %v7527 = vmin.f32 %v7495, 6.0
      %v7528 = vmin.f32 %v7496, 6.0
      %v7529 = vmin.f32 %v7497, 6.0
      %v7530 = vmin.f32 %v7498, 6.0
      %v7531 = vmin.f32 %v7499, 6.0
      %v7532 = vmin.f32 %v7500, 6.0
      %v7533 = vmin.f32 %v7501, 6.0
      %v7534 = vmin.f32 %v7502, 6.0
      %v7535 = vmin.f32 %v7503, 6.0
      %v7536 = vmin.f32 %v7504, 6.0
      %v7537 = vmin.f32 %v7505, 6.0
      %v7538 = vmin.f32 %v7506, 6.0
      %v7539 = vmin.f32 %v7507, 6.0
      %v7540 = vmin.f32 %v7508, 6.0
      %v7541 = vmin.f32 %v7509, 6.0
      %v7542 = vmin.f32 %v7510, 6.0
      %v7543 = vmin.f32 %v7511, 6.0
      %v7544 = vmin.f32 %v7512, 6.0
      %v7545 = vmin.f32 %v7513, 6.0
      %v7546 = vmin.f32 %v7514, 6.0
      %v7547 = vmin.f32 %v7515, 6.0
      %v7548 = vmin.f32 %v7516, 6.0
      %v7549 = vmin.f32 %v7517, 6.0
      %v7550 = vmin.f32 %v7518, 6.0
      %v7551 = vmin.f32 %v7519, 6.0
      %v7552 = vld [vmem:[%s13] sm:$0xff]
      %v7553 = vld [vmem:[%s14] sm:$0xff]
      %v7555 = vsel %vm6428, %v7127, 0
      %v7558 = vsel %vm6428, %v7128, 0
      %v7561 = vsel %vm6428, %v7129, 0
      %v7564 = vsel %vm6428, %v7130, 0
      %v7567 = vsel %vm6428, %v7131, 0
      %v7570 = vsel %vm6428, %v7132, 0
      %v7573 = vsel %vm6428, %v7133, 0
      %v7576 = vsel %vm6428, %v7134, 0
      %v7579 = vsel %vm6428, %v7135, 0
      %v7582 = vsel %vm6428, %v7136, 0
      %v7585 = vsel %vm6428, %v7137, 0
      %v7588 = vsel %vm6428, %v7138, 0
      %v7591 = vsel %vm6428, %v7139, 0
      %v7594 = vsel %vm6428, %v7140, 0
      %v7597 = vsel %vm6428, %v7141, 0
      %v7600 = vsel %vm6428, %v7142, 0
      %v7603 = vsel %vm6428, %v7143, 0
      %v7606 = vsel %vm6428, %v7144, 0
      %v7609 = vsel %vm6428, %v7145, 0
      %v7612 = vsel %vm6428, %v7146, 0
      %v7615 = vsel %vm6428, %v7147, 0
      %v7618 = vsel %vm6428, %v7148, 0
      %v7621 = vsel %vm6428, %v7149, 0
      %v7624 = vsel %vm6428, %v7150, 0
      %v7627 = vsel %vm6428, %v7151, 0
      %v7630 = vsel %vm6428, %v7152, 0
      %v7633 = vsel %vm6428, %v7153, 0
      %v7636 = vsel %vm6428, %v7154, 0
      %v7639 = vsel %vm6428, %v7155, 0
      %v7642 = vsel %vm6428, %v7156, 0
      %v7645 = vsel %vm6428, %v7157, 0
      %v7648 = vsel %vm6428, %v7158, 0
      %7650 = vmatprep.subr.mxu0 0.0
      %7651 = vmatpush1.msra.mxu0 0.0
      %7652 = vmatprep.subr.mxu0 0.0
      %7653 = vmatpush1.msra.mxu0 0.0
      %7654 = vmatprep.subr.mxu0 0.0
      %7655 = vmatpush1.msra.mxu0 0.0
      %7656 = vmatprep.subr.mxu0 0.0
      %7657 = vmatpush1.msra.mxu0 0.0
      %7658 = vmatprep.subr.mxu0 0.0
      %7659 = vmatpush1.msra.mxu0 0.0
      %7660 = vmatprep.subr.mxu0 0.0
      %7661 = vmatpush1.msra.mxu0 0.0
      %7662 = vmatprep.subr.mxu0 0.0
      %7663 = vmatpush1.msra.mxu0 0.0
      %7664 = vmatprep.subr.mxu0 0.0
      %7665 = vmatpush1.msra.mxu0 0.0
      %7666 = vmatprep.subr.mxu0 0.0
      %7667 = vmatpush1.msra.mxu0 0.0
      %7668 = vmatprep.subr.mxu0 0.0
      %7669 = vmatpush1.msra.mxu0 0.0
      %7670 = vmatprep.subr.mxu0 0.0
      %7671 = vmatpush1.msra.mxu0 0.0
      %7672 = vmatprep.subr.mxu0 0.0
      %7673 = vmatpush1.msra.mxu0 0.0
      %7674 = vmatprep.subr.mxu0 0.0
      %7675 = vmatpush1.msra.mxu0 0.0
      %7676 = vmatprep.subr.mxu0 0.0
      %7677 = vmatpush1.msra.mxu0 0.0
      %7678 = vmatprep.subr.mxu0 0.0
      %7679 = vmatpush1.msra.mxu0 0.0
      %7680 = vmatprep.subr.mxu0 0.0
      %7681 = vmatpush1.msra.mxu0 %v7553
      %7682 = vmatprep.subr.mxu0 0.0
      %7683 = vmatpush2.msra.mxu0 0.0
      %7684 = vmatprep.subr.mxu0 0.0
      %7685 = vmatpush2.msra.mxu0 0.0
      %7686 = vmatprep.subr.mxu0 0.0
      %7687 = vmatpush2.msra.mxu0 0.0
      %7688 = vmatprep.subr.mxu0 0.0
      %7689 = vmatpush2.msra.mxu0 0.0
      %7690 = vmatprep.subr.mxu0 0.0
      %7691 = vmatpush2.msra.mxu0 0.0
      %7692 = vmatprep.subr.mxu0 0.0
      %7693 = vmatpush2.msra.mxu0 0.0
      %7694 = vmatprep.subr.mxu0 0.0
      %7695 = vmatpush2.msra.mxu0 0.0
      %7696 = vmatprep.subr.mxu0 0.0
      %7697 = vmatpush2.msra.mxu0 0.0
      %7698 = vmatprep.subr.mxu0 0.0
      %7699 = vmatpush2.msra.mxu0 0.0
      %7700 = vmatprep.subr.mxu0 0.0
      %7701 = vmatpush2.msra.mxu0 0.0
      %7702 = vmatprep.subr.mxu0 0.0
      %7703 = vmatpush2.msra.mxu0 0.0
      %7704 = vmatprep.subr.mxu0 0.0
      %7705 = vmatpush2.msra.mxu0 0.0
      %7706 = vmatprep.subr.mxu0 0.0
      %7707 = vmatpush2.msra.mxu0 0.0
      %7708 = vmatprep.subr.mxu0 0.0
      %7709 = vmatpush2.msra.mxu0 0.0
      %7710 = vmatprep.subr.mxu0 0.0
      %7711 = vmatpush2.msra.mxu0 0.0
      %7712 = vmatprep.subr.mxu0 0.0
      %7713 = vmatpush2.msra.mxu0 0.0
      %7714 = vmatprep.mubr.f32.mxu0 0.0
      %7715 = vmatmul.mubr.f32.gmra.mxu0 %v7555
      %v7716 = vpop.f32.mrf.mxu0
      %v7717 = vadd.f32 0.0, %v7716
      %v7718 = vpop.f32.mrf.mxu0
      %7719 = vmatprep.mubr.f32.mxu0 0.0
      %7720 = vmatmul.mubr.f32.gmra.mxu0 %v7558
      %v7721 = vpop.f32.mrf.mxu0
      %v7722 = vadd.f32 0.0, %v7721
      %v7723 = vpop.f32.mrf.mxu0
      %7724 = vmatprep.mubr.f32.mxu0 0.0
      %7725 = vmatmul.mubr.f32.gmra.mxu0 %v7561
      %v7726 = vpop.f32.mrf.mxu0
      %v7727 = vadd.f32 0.0, %v7726
      %v7728 = vpop.f32.mrf.mxu0
      %7729 = vmatprep.mubr.f32.mxu0 0.0
      %7730 = vmatmul.mubr.f32.gmra.mxu0 %v7564
      %v7731 = vpop.f32.mrf.mxu0
      %v7732 = vadd.f32 0.0, %v7731
      %v7733 = vpop.f32.mrf.mxu0
      %7734 = vmatprep.mubr.f32.mxu0 0.0
      %7735 = vmatmul.mubr.f32.gmra.mxu0 %v7567
      %v7736 = vpop.f32.mrf.mxu0
      %v7737 = vadd.f32 0.0, %v7736
      %v7738 = vpop.f32.mrf.mxu0
      %7739 = vmatprep.mubr.f32.mxu0 0.0
      %7740 = vmatmul.mubr.f32.gmra.mxu0 %v7570
      %v7741 = vpop.f32.mrf.mxu0
      %v7742 = vadd.f32 0.0, %v7741
      %v7743 = vpop.f32.mrf.mxu0
      %7744 = vmatprep.mubr.f32.mxu0 0.0
      %7745 = vmatmul.mubr.f32.gmra.mxu0 %v7573
      %v7746 = vpop.f32.mrf.mxu0
      %v7747 = vadd.f32 0.0, %v7746
      %v7748 = vpop.f32.mrf.mxu0
      %7749 = vmatprep.mubr.f32.mxu0 0.0
      %7750 = vmatmul.mubr.f32.gmra.mxu0 %v7576
      %v7751 = vpop.f32.mrf.mxu0
      %v7752 = vadd.f32 0.0, %v7751
      %v7753 = vpop.f32.mrf.mxu0
      %7754 = vmatprep.mubr.f32.mxu0 0.0
      %7755 = vmatmul.mubr.f32.gmra.mxu0 %v7579
      %v7756 = vpop.f32.mrf.mxu0
      %v7757 = vadd.f32 0.0, %v7756
      %v7758 = vpop.f32.mrf.mxu0
      %7759 = vmatprep.mubr.f32.mxu0 0.0
      %7760 = vmatmul.mubr.f32.gmra.mxu0 %v7582
      %v7761 = vpop.f32.mrf.mxu0
      %v7762 = vadd.f32 0.0, %v7761
      %v7763 = vpop.f32.mrf.mxu0
      %7764 = vmatprep.mubr.f32.mxu0 0.0
      %7765 = vmatmul.mubr.f32.gmra.mxu0 %v7585
      %v7766 = vpop.f32.mrf.mxu0
      %v7767 = vadd.f32 0.0, %v7766
      %v7768 = vpop.f32.mrf.mxu0
      %7769 = vmatprep.mubr.f32.mxu0 0.0
      %7770 = vmatmul.mubr.f32.gmra.mxu0 %v7588
      %v7771 = vpop.f32.mrf.mxu0
      %v7772 = vadd.f32 0.0, %v7771
      %v7773 = vpop.f32.mrf.mxu0
      %7774 = vmatprep.mubr.f32.mxu0 0.0
      %7775 = vmatmul.mubr.f32.gmra.mxu0 %v7591
      %v7776 = vpop.f32.mrf.mxu0
      %v7777 = vadd.f32 0.0, %v7776
      %v7778 = vpop.f32.mrf.mxu0
      %7779 = vmatprep.mubr.f32.mxu0 0.0
      %7780 = vmatmul.mubr.f32.gmra.mxu0 %v7594
      %v7781 = vpop.f32.mrf.mxu0
      %v7782 = vadd.f32 0.0, %v7781
      %v7783 = vpop.f32.mrf.mxu0
      %7784 = vmatprep.mubr.f32.mxu0 0.0
      %7785 = vmatmul.mubr.f32.gmra.mxu0 %v7597
      %v7786 = vpop.f32.mrf.mxu0
      %v7787 = vadd.f32 0.0, %v7786
      %v7788 = vpop.f32.mrf.mxu0
      %7789 = vmatprep.mubr.f32.mxu0 0.0
      %7790 = vmatmul.mubr.f32.gmra.mxu0 %v7600
      %v7791 = vpop.f32.mrf.mxu0
      %v7792 = vadd.f32 0.0, %v7791
      %v7793 = vpop.f32.mrf.mxu0
      %7794 = vmatprep.mubr.f32.mxu0 0.0
      %7795 = vmatmul.mubr.f32.gmra.mxu0 %v7603
      %v7796 = vpop.f32.mrf.mxu0
      %v7797 = vadd.f32 0.0, %v7796
      %v7798 = vpop.f32.mrf.mxu0
      %7799 = vmatprep.mubr.f32.mxu0 0.0
      %7800 = vmatmul.mubr.f32.gmra.mxu0 %v7606
      %v7801 = vpop.f32.mrf.mxu0
      %v7802 = vadd.f32 0.0, %v7801
      %v7803 = vpop.f32.mrf.mxu0
      %7804 = vmatprep.mubr.f32.mxu0 0.0
      %7805 = vmatmul.mubr.f32.gmra.mxu0 %v7609
      %v7806 = vpop.f32.mrf.mxu0
      %v7807 = vadd.f32 0.0, %v7806
      %v7808 = vpop.f32.mrf.mxu0
      %7809 = vmatprep.mubr.f32.mxu0 0.0
      %7810 = vmatmul.mubr.f32.gmra.mxu0 %v7612
      %v7811 = vpop.f32.mrf.mxu0
      %v7812 = vadd.f32 0.0, %v7811
      %v7813 = vpop.f32.mrf.mxu0
      %7814 = vmatprep.mubr.f32.mxu0 0.0
      %7815 = vmatmul.mubr.f32.gmra.mxu0 %v7615
      %v7816 = vpop.f32.mrf.mxu0
      %v7817 = vadd.f32 0.0, %v7816
      %v7818 = vpop.f32.mrf.mxu0
      %7819 = vmatprep.mubr.f32.mxu0 0.0
      %7820 = vmatmul.mubr.f32.gmra.mxu0 %v7618
      %v7821 = vpop.f32.mrf.mxu0
      %v7822 = vadd.f32 0.0, %v7821
      %v7823 = vpop.f32.mrf.mxu0
      %7824 = vmatprep.mubr.f32.mxu0 0.0
      %7825 = vmatmul.mubr.f32.gmra.mxu0 %v7621
      %v7826 = vpop.f32.mrf.mxu0
      %v7827 = vadd.f32 0.0, %v7826
      %v7828 = vpop.f32.mrf.mxu0
      %7829 = vmatprep.mubr.f32.mxu0 0.0
      %7830 = vmatmul.mubr.f32.gmra.mxu0 %v7624
      %v7831 = vpop.f32.mrf.mxu0
      %v7832 = vadd.f32 0.0, %v7831
      %v7833 = vpop.f32.mrf.mxu0
      %7834 = vmatprep.mubr.f32.mxu0 0.0
      %7835 = vmatmul.mubr.f32.gmra.mxu0 %v7627
      %v7836 = vpop.f32.mrf.mxu0
      %v7837 = vadd.f32 0.0, %v7836
      %v7838 = vpop.f32.mrf.mxu0
      %7839 = vmatprep.mubr.f32.mxu0 0.0
      %7840 = vmatmul.mubr.f32.gmra.mxu0 %v7630
      %v7841 = vpop.f32.mrf.mxu0
      %v7842 = vadd.f32 0.0, %v7841
      %v7843 = vpop.f32.mrf.mxu0
      %7844 = vmatprep.mubr.f32.mxu0 0.0
      %7845 = vmatmul.mubr.f32.gmra.mxu0 %v7633
      %v7846 = vpop.f32.mrf.mxu0
      %v7847 = vadd.f32 0.0, %v7846
      %v7848 = vpop.f32.mrf.mxu0
      %7849 = vmatprep.mubr.f32.mxu0 0.0
      %7850 = vmatmul.mubr.f32.gmra.mxu0 %v7636
      %v7851 = vpop.f32.mrf.mxu0
      %v7852 = vadd.f32 0.0, %v7851
      %v7853 = vpop.f32.mrf.mxu0
      %7854 = vmatprep.mubr.f32.mxu0 0.0
      %7855 = vmatmul.mubr.f32.gmra.mxu0 %v7639
      %v7856 = vpop.f32.mrf.mxu0
      %v7857 = vadd.f32 0.0, %v7856
      %v7858 = vpop.f32.mrf.mxu0
      %7859 = vmatprep.mubr.f32.mxu0 0.0
      %7860 = vmatmul.mubr.f32.gmra.mxu0 %v7642
      %v7861 = vpop.f32.mrf.mxu0
      %v7862 = vadd.f32 0.0, %v7861
      %v7863 = vpop.f32.mrf.mxu0
      %7864 = vmatprep.mubr.f32.mxu0 0.0
      %7865 = vmatmul.mubr.f32.gmra.mxu0 %v7645
      %v7866 = vpop.f32.mrf.mxu0
      %v7867 = vadd.f32 0.0, %v7866
      %v7868 = vpop.f32.mrf.mxu0
      %7869 = vmatprep.mubr.f32.mxu0 0.0
      %7870 = vmatmul.mubr.f32.gmra.mxu0 %v7648
      %v7871 = vpop.f32.mrf.mxu0
      %v7872 = vadd.f32 0.0, %v7871
      %v7873 = vpop.f32.mrf.mxu0
      %7874 = vdwg.mxu0
      %v7876 = vsel %vm6428, %v6734, 0
      %v7879 = vsel %vm6428, %v6735, 0
      %v7882 = vsel %vm6428, %v6736, 0
      %v7885 = vsel %vm6428, %v6737, 0
      %v7888 = vsel %vm6428, %v6738, 0
      %v7891 = vsel %vm6428, %v6739, 0
      %v7894 = vsel %vm6428, %v6740, 0
      %v7897 = vsel %vm6428, %v6741, 0
      %v7900 = vsel %vm6428, %v6742, 0
      %v7903 = vsel %vm6428, %v6743, 0
      %v7906 = vsel %vm6428, %v6744, 0
      %v7909 = vsel %vm6428, %v6745, 0
      %v7912 = vsel %vm6428, %v6746, 0
      %v7915 = vsel %vm6428, %v6747, 0
      %v7918 = vsel %vm6428, %v6748, 0
      %v7921 = vsel %vm6428, %v6749, 0
      %v7924 = vsel %vm6428, %v6750, 0
      %v7927 = vsel %vm6428, %v6751, 0
      %v7930 = vsel %vm6428, %v6752, 0
      %v7933 = vsel %vm6428, %v6753, 0
      %v7936 = vsel %vm6428, %v6754, 0
      %v7939 = vsel %vm6428, %v6755, 0
      %v7942 = vsel %vm6428, %v6756, 0
      %v7945 = vsel %vm6428, %v6757, 0
      %v7948 = vsel %vm6428, %v6758, 0
      %v7951 = vsel %vm6428, %v6759, 0
      %v7954 = vsel %vm6428, %v6760, 0
      %v7957 = vsel %vm6428, %v6761, 0
      %v7960 = vsel %vm6428, %v6762, 0
      %v7963 = vsel %vm6428, %v6763, 0
      %v7966 = vsel %vm6428, %v6764, 0
      %v7969 = vsel %vm6428, %v6765, 0
      %7971 = vmatprep.subr.mxu0 0.0
      %7972 = vmatpush1.msra.mxu0 0.0
      %7973 = vmatprep.subr.mxu0 0.0
      %7974 = vmatpush1.msra.mxu0 0.0
      %7975 = vmatprep.subr.mxu0 0.0
      %7976 = vmatpush1.msra.mxu0 0.0
      %7977 = vmatprep.subr.mxu0 0.0
      %7978 = vmatpush1.msra.mxu0 0.0
      %7979 = vmatprep.subr.mxu0 0.0
      %7980 = vmatpush1.msra.mxu0 0.0
      %7981 = vmatprep.subr.mxu0 0.0
      %7982 = vmatpush1.msra.mxu0 0.0
      %7983 = vmatprep.subr.mxu0 0.0
      %7984 = vmatpush1.msra.mxu0 0.0
      %7985 = vmatprep.subr.mxu0 0.0
      %7986 = vmatpush1.msra.mxu0 0.0
      %7987 = vmatprep.subr.mxu0 0.0
      %7988 = vmatpush1.msra.mxu0 0.0
      %7989 = vmatprep.subr.mxu0 0.0
      %7990 = vmatpush1.msra.mxu0 0.0
      %7991 = vmatprep.subr.mxu0 0.0
      %7992 = vmatpush1.msra.mxu0 0.0
      %7993 = vmatprep.subr.mxu0 0.0
      %7994 = vmatpush1.msra.mxu0 0.0
      %7995 = vmatprep.subr.mxu0 0.0
      %7996 = vmatpush1.msra.mxu0 0.0
      %7997 = vmatprep.subr.mxu0 0.0
      %7998 = vmatpush1.msra.mxu0 0.0
      %7999 = vmatprep.subr.mxu0 0.0
      %8000 = vmatpush1.msra.mxu0 0.0
      %8001 = vmatprep.subr.mxu0 0.0
      %8002 = vmatpush1.msra.mxu0 %v7552
      %8003 = vmatprep.subr.mxu0 0.0
      %8004 = vmatpush2.msra.mxu0 0.0
      %8005 = vmatprep.subr.mxu0 0.0
      %8006 = vmatpush2.msra.mxu0 0.0
      %8007 = vmatprep.subr.mxu0 0.0
      %8008 = vmatpush2.msra.mxu0 0.0
      %8009 = vmatprep.subr.mxu0 0.0
      %8010 = vmatpush2.msra.mxu0 0.0
      %8011 = vmatprep.subr.mxu0 0.0
      %8012 = vmatpush2.msra.mxu0 0.0
      %8013 = vmatprep.subr.mxu0 0.0
      %8014 = vmatpush2.msra.mxu0 0.0
      %8015 = vmatprep.subr.mxu0 0.0
      %8016 = vmatpush2.msra.mxu0 0.0
      %8017 = vmatprep.subr.mxu0 0.0
      %8018 = vmatpush2.msra.mxu0 0.0
      %8019 = vmatprep.subr.mxu0 0.0
      %8020 = vmatpush2.msra.mxu0 0.0
      %8021 = vmatprep.subr.mxu0 0.0
      %8022 = vmatpush2.msra.mxu0 0.0
      %8023 = vmatprep.subr.mxu0 0.0
      %8024 = vmatpush2.msra.mxu0 0.0
      %8025 = vmatprep.subr.mxu0 0.0
      %8026 = vmatpush2.msra.mxu0 0.0
      %8027 = vmatprep.subr.mxu0 0.0
      %8028 = vmatpush2.msra.mxu0 0.0
      %8029 = vmatprep.subr.mxu0 0.0
      %8030 = vmatpush2.msra.mxu0 0.0
      %8031 = vmatprep.subr.mxu0 0.0
      %8032 = vmatpush2.msra.mxu0 0.0
      %8033 = vmatprep.subr.mxu0 0.0
      %8034 = vmatpush2.msra.mxu0 0.0
      %8035 = vmatprep.mubr.f32.mxu0 0.0
      %8036 = vmatmul.mubr.f32.gmra.mxu0 %v7876
      %v8037 = vpop.f32.mrf.mxu0
      %v8038 = vadd.f32 %v7717, %v8037
      %v8039 = vpop.f32.mrf.mxu0
      %8040 = vmatprep.mubr.f32.mxu0 0.0
      %8041 = vmatmul.mubr.f32.gmra.mxu0 %v7879
      %v8042 = vpop.f32.mrf.mxu0
      %v8043 = vadd.f32 %v7722, %v8042
      %v8044 = vpop.f32.mrf.mxu0
      %8045 = vmatprep.mubr.f32.mxu0 0.0
      %8046 = vmatmul.mubr.f32.gmra.mxu0 %v7882
      %v8047 = vpop.f32.mrf.mxu0
      %v8048 = vadd.f32 %v7727, %v8047
      %v8049 = vpop.f32.mrf.mxu0
      %8050 = vmatprep.mubr.f32.mxu0 0.0
      %8051 = vmatmul.mubr.f32.gmra.mxu0 %v7885
      %v8052 = vpop.f32.mrf.mxu0
      %v8053 = vadd.f32 %v7732, %v8052
      %v8054 = vpop.f32.mrf.mxu0
      %8055 = vmatprep.mubr.f32.mxu0 0.0
      %8056 = vmatmul.mubr.f32.gmra.mxu0 %v7888
      %v8057 = vpop.f32.mrf.mxu0
      %v8058 = vadd.f32 %v7737, %v8057
      %v8059 = vpop.f32.mrf.mxu0
      %8060 = vmatprep.mubr.f32.mxu0 0.0
      %8061 = vmatmul.mubr.f32.gmra.mxu0 %v7891
      %v8062 = vpop.f32.mrf.mxu0
      %v8063 = vadd.f32 %v7742, %v8062
      %v8064 = vpop.f32.mrf.mxu0
      %8065 = vmatprep.mubr.f32.mxu0 0.0
      %8066 = vmatmul.mubr.f32.gmra.mxu0 %v7894
      %v8067 = vpop.f32.mrf.mxu0
      %v8068 = vadd.f32 %v7747, %v8067
      %v8069 = vpop.f32.mrf.mxu0
      %8070 = vmatprep.mubr.f32.mxu0 0.0
      %8071 = vmatmul.mubr.f32.gmra.mxu0 %v7897
      %v8072 = vpop.f32.mrf.mxu0
      %v8073 = vadd.f32 %v7752, %v8072
      %v8074 = vpop.f32.mrf.mxu0
      %8075 = vmatprep.mubr.f32.mxu0 0.0
      %8076 = vmatmul.mubr.f32.gmra.mxu0 %v7900
      %v8077 = vpop.f32.mrf.mxu0
      %v8078 = vadd.f32 %v7757, %v8077
      %v8079 = vpop.f32.mrf.mxu0
      %8080 = vmatprep.mubr.f32.mxu0 0.0
      %8081 = vmatmul.mubr.f32.gmra.mxu0 %v7903
      %v8082 = vpop.f32.mrf.mxu0
      %v8083 = vadd.f32 %v7762, %v8082
      %v8084 = vpop.f32.mrf.mxu0
      %8085 = vmatprep.mubr.f32.mxu0 0.0
      %8086 = vmatmul.mubr.f32.gmra.mxu0 %v7906
      %v8087 = vpop.f32.mrf.mxu0
      %v8088 = vadd.f32 %v7767, %v8087
      %v8089 = vpop.f32.mrf.mxu0
      %8090 = vmatprep.mubr.f32.mxu0 0.0
      %8091 = vmatmul.mubr.f32.gmra.mxu0 %v7909
      %v8092 = vpop.f32.mrf.mxu0
      %v8093 = vadd.f32 %v7772, %v8092
      %v8094 = vpop.f32.mrf.mxu0
      %8095 = vmatprep.mubr.f32.mxu0 0.0
      %8096 = vmatmul.mubr.f32.gmra.mxu0 %v7912
      %v8097 = vpop.f32.mrf.mxu0
      %v8098 = vadd.f32 %v7777, %v8097
      %v8099 = vpop.f32.mrf.mxu0
      %8100 = vmatprep.mubr.f32.mxu0 0.0
      %8101 = vmatmul.mubr.f32.gmra.mxu0 %v7915
      %v8102 = vpop.f32.mrf.mxu0
      %v8103 = vadd.f32 %v7782, %v8102
      %v8104 = vpop.f32.mrf.mxu0
      %8105 = vmatprep.mubr.f32.mxu0 0.0
      %8106 = vmatmul.mubr.f32.gmra.mxu0 %v7918
      %v8107 = vpop.f32.mrf.mxu0
      %v8108 = vadd.f32 %v7787, %v8107
      %v8109 = vpop.f32.mrf.mxu0
      %8110 = vmatprep.mubr.f32.mxu0 0.0
      %8111 = vmatmul.mubr.f32.gmra.mxu0 %v7921
      %v8112 = vpop.f32.mrf.mxu0
      %v8113 = vadd.f32 %v7792, %v8112
      %v8114 = vpop.f32.mrf.mxu0
      %8115 = vmatprep.mubr.f32.mxu0 0.0
      %8116 = vmatmul.mubr.f32.gmra.mxu0 %v7924
      %v8117 = vpop.f32.mrf.mxu0
      %v8118 = vadd.f32 %v7797, %v8117
      %v8119 = vpop.f32.mrf.mxu0
      %8120 = vmatprep.mubr.f32.mxu0 0.0
      %8121 = vmatmul.mubr.f32.gmra.mxu0 %v7927
      %v8122 = vpop.f32.mrf.mxu0
      %v8123 = vadd.f32 %v7802, %v8122
      %v8124 = vpop.f32.mrf.mxu0
      %8125 = vmatprep.mubr.f32.mxu0 0.0
      %8126 = vmatmul.mubr.f32.gmra.mxu0 %v7930
      %v8127 = vpop.f32.mrf.mxu0
      %v8128 = vadd.f32 %v7807, %v8127
      %v8129 = vpop.f32.mrf.mxu0
      %8130 = vmatprep.mubr.f32.mxu0 0.0
      %8131 = vmatmul.mubr.f32.gmra.mxu0 %v7933
      %v8132 = vpop.f32.mrf.mxu0
      %v8133 = vadd.f32 %v7812, %v8132
      %v8134 = vpop.f32.mrf.mxu0
      %8135 = vmatprep.mubr.f32.mxu0 0.0
      %8136 = vmatmul.mubr.f32.gmra.mxu0 %v7936
      %v8137 = vpop.f32.mrf.mxu0
      %v8138 = vadd.f32 %v7817, %v8137
      %v8139 = vpop.f32.mrf.mxu0
      %8140 = vmatprep.mubr.f32.mxu0 0.0
      %8141 = vmatmul.mubr.f32.gmra.mxu0 %v7939
      %v8142 = vpop.f32.mrf.mxu0
      %v8143 = vadd.f32 %v7822, %v8142
      %v8144 = vpop.f32.mrf.mxu0
      %8145 = vmatprep.mubr.f32.mxu0 0.0
      %8146 = vmatmul.mubr.f32.gmra.mxu0 %v7942
      %v8147 = vpop.f32.mrf.mxu0
      %v8148 = vadd.f32 %v7827, %v8147
      %v8149 = vpop.f32.mrf.mxu0
      %8150 = vmatprep.mubr.f32.mxu0 0.0
      %8151 = vmatmul.mubr.f32.gmra.mxu0 %v7945
      %v8152 = vpop.f32.mrf.mxu0
      %v8153 = vadd.f32 %v7832, %v8152
      %v8154 = vpop.f32.mrf.mxu0
      %8155 = vmatprep.mubr.f32.mxu0 0.0
      %8156 = vmatmul.mubr.f32.gmra.mxu0 %v7948
      %v8157 = vpop.f32.mrf.mxu0
      %v8158 = vadd.f32 %v7837, %v8157
      %v8159 = vpop.f32.mrf.mxu0
      %8160 = vmatprep.mubr.f32.mxu0 0.0
      %8161 = vmatmul.mubr.f32.gmra.mxu0 %v7951
      %v8162 = vpop.f32.mrf.mxu0
      %v8163 = vadd.f32 %v7842, %v8162
      %v8164 = vpop.f32.mrf.mxu0
      %8165 = vmatprep.mubr.f32.mxu0 0.0
      %8166 = vmatmul.mubr.f32.gmra.mxu0 %v7954
      %v8167 = vpop.f32.mrf.mxu0
      %v8168 = vadd.f32 %v7847, %v8167
      %v8169 = vpop.f32.mrf.mxu0
      %8170 = vmatprep.mubr.f32.mxu0 0.0
      %8171 = vmatmul.mubr.f32.gmra.mxu0 %v7957
      %v8172 = vpop.f32.mrf.mxu0
      %v8173 = vadd.f32 %v7852, %v8172
      %v8174 = vpop.f32.mrf.mxu0
      %8175 = vmatprep.mubr.f32.mxu0 0.0
      %8176 = vmatmul.mubr.f32.gmra.mxu0 %v7960
      %v8177 = vpop.f32.mrf.mxu0
      %v8178 = vadd.f32 %v7857, %v8177
      %v8179 = vpop.f32.mrf.mxu0
      %8180 = vmatprep.mubr.f32.mxu0 0.0
      %8181 = vmatmul.mubr.f32.gmra.mxu0 %v7963
      %v8182 = vpop.f32.mrf.mxu0
      %v8183 = vadd.f32 %v7862, %v8182
      %v8184 = vpop.f32.mrf.mxu0
      %8185 = vmatprep.mubr.f32.mxu0 0.0
      %8186 = vmatmul.mubr.f32.gmra.mxu0 %v7966
      %v8187 = vpop.f32.mrf.mxu0
      %v8188 = vadd.f32 %v7867, %v8187
      %v8189 = vpop.f32.mrf.mxu0
      %8190 = vmatprep.mubr.f32.mxu0 0.0
      %8191 = vmatmul.mubr.f32.gmra.mxu0 %v7969
      %v8192 = vpop.f32.mrf.mxu0
      %v8193 = vadd.f32 %v7872, %v8192
      %v8194 = vpop.f32.mrf.mxu0
      %8195 = vdwg.mxu0
      %v8196 = vld [vmem:[%s15] sm:$0xff]
      %v8198 = vsel %vm6428, %v7520, 0
      %v8201 = vsel %vm6428, %v7521, 0
      %v8204 = vsel %vm6428, %v7522, 0
      %v8207 = vsel %vm6428, %v7523, 0
      %v8210 = vsel %vm6428, %v7524, 0
      %v8213 = vsel %vm6428, %v7525, 0
      %v8216 = vsel %vm6428, %v7526, 0
      %v8219 = vsel %vm6428, %v7527, 0
      %v8222 = vsel %vm6428, %v7528, 0
      %v8225 = vsel %vm6428, %v7529, 0
      %v8228 = vsel %vm6428, %v7530, 0
      %v8231 = vsel %vm6428, %v7531, 0
      %v8234 = vsel %vm6428, %v7532, 0
      %v8237 = vsel %vm6428, %v7533, 0
      %v8240 = vsel %vm6428, %v7534, 0
      %v8243 = vsel %vm6428, %v7535, 0
      %v8246 = vsel %vm6428, %v7536, 0
      %v8249 = vsel %vm6428, %v7537, 0
      %v8252 = vsel %vm6428, %v7538, 0
      %v8255 = vsel %vm6428, %v7539, 0
      %v8258 = vsel %vm6428, %v7540, 0
      %v8261 = vsel %vm6428, %v7541, 0
      %v8264 = vsel %vm6428, %v7542, 0
      %v8267 = vsel %vm6428, %v7543, 0
      %v8270 = vsel %vm6428, %v7544, 0
      %v8273 = vsel %vm6428, %v7545, 0
      %v8276 = vsel %vm6428, %v7546, 0
      %v8279 = vsel %vm6428, %v7547, 0
      %v8282 = vsel %vm6428, %v7548, 0
      %v8285 = vsel %vm6428, %v7549, 0
      %v8288 = vsel %vm6428, %v7550, 0
      %v8291 = vsel %vm6428, %v7551, 0
      %8293 = vmatprep.subr.mxu0 0.0
      %8294 = vmatpush1.msra.mxu0 0.0
      %8295 = vmatprep.subr.mxu0 0.0
      %8296 = vmatpush1.msra.mxu0 0.0
      %8297 = vmatprep.subr.mxu0 0.0
      %8298 = vmatpush1.msra.mxu0 0.0
      %8299 = vmatprep.subr.mxu0 0.0
      %8300 = vmatpush1.msra.mxu0 0.0
      %8301 = vmatprep.subr.mxu0 0.0
      %8302 = vmatpush1.msra.mxu0 0.0
      %8303 = vmatprep.subr.mxu0 0.0
      %8304 = vmatpush1.msra.mxu0 0.0
      %8305 = vmatprep.subr.mxu0 0.0
      %8306 = vmatpush1.msra.mxu0 0.0
      %8307 = vmatprep.subr.mxu0 0.0
      %8308 = vmatpush1.msra.mxu0 0.0
      %8309 = vmatprep.subr.mxu0 0.0
      %8310 = vmatpush1.msra.mxu0 0.0
      %8311 = vmatprep.subr.mxu0 0.0
      %8312 = vmatpush1.msra.mxu0 0.0
      %8313 = vmatprep.subr.mxu0 0.0
      %8314 = vmatpush1.msra.mxu0 0.0
      %8315 = vmatprep.subr.mxu0 0.0
      %8316 = vmatpush1.msra.mxu0 0.0
      %8317 = vmatprep.subr.mxu0 0.0
      %8318 = vmatpush1.msra.mxu0 0.0
      %8319 = vmatprep.subr.mxu0 0.0
      %8320 = vmatpush1.msra.mxu0 0.0
      %8321 = vmatprep.subr.mxu0 0.0
      %8322 = vmatpush1.msra.mxu0 0.0
      %8323 = vmatprep.subr.mxu0 0.0
      %8324 = vmatpush1.msra.mxu0 %v8196
      %8325 = vmatprep.subr.mxu0 0.0
      %8326 = vmatpush2.msra.mxu0 0.0
      %8327 = vmatprep.subr.mxu0 0.0
      %8328 = vmatpush2.msra.mxu0 0.0
      %8329 = vmatprep.subr.mxu0 0.0
      %8330 = vmatpush2.msra.mxu0 0.0
      %8331 = vmatprep.subr.mxu0 0.0
      %8332 = vmatpush2.msra.mxu0 0.0
      %8333 = vmatprep.subr.mxu0 0.0
      %8334 = vmatpush2.msra.mxu0 0.0
      %8335 = vmatprep.subr.mxu0 0.0
      %8336 = vmatpush2.msra.mxu0 0.0
      %8337 = vmatprep.subr.mxu0 0.0
      %8338 = vmatpush2.msra.mxu0 0.0
      %8339 = vmatprep.subr.mxu0 0.0
      %8340 = vmatpush2.msra.mxu0 0.0
      %8341 = vmatprep.subr.mxu0 0.0
      %8342 = vmatpush2.msra.mxu0 0.0
      %8343 = vmatprep.subr.mxu0 0.0
      %8344 = vmatpush2.msra.mxu0 0.0
      %8345 = vmatprep.subr.mxu0 0.0
      %8346 = vmatpush2.msra.mxu0 0.0
      %8347 = vmatprep.subr.mxu0 0.0
      %8348 = vmatpush2.msra.mxu0 0.0
      %8349 = vmatprep.subr.mxu0 0.0
      %8350 = vmatpush2.msra.mxu0 0.0
      %8351 = vmatprep.subr.mxu0 0.0
      %8352 = vmatpush2.msra.mxu0 0.0
      %8353 = vmatprep.subr.mxu0 0.0
      %8354 = vmatpush2.msra.mxu0 0.0
      %8355 = vmatprep.subr.mxu0 0.0
      %8356 = vmatpush2.msra.mxu0 0.0
      %8357 = vmatprep.mubr.f32.mxu0 0.0
      %8358 = vmatmul.mubr.f32.gmra.mxu0 %v8198
      %v8359 = vpop.f32.mrf.mxu0
      %v8360 = vadd.f32 0.0, %v8359
      %v8361 = vpop.f32.mrf.mxu0
      %8362 = vmatprep.mubr.f32.mxu0 0.0
      %8363 = vmatmul.mubr.f32.gmra.mxu0 %v8201
      %v8364 = vpop.f32.mrf.mxu0
      %v8365 = vadd.f32 0.0, %v8364
      %v8366 = vpop.f32.mrf.mxu0
      %8367 = vmatprep.mubr.f32.mxu0 0.0
      %8368 = vmatmul.mubr.f32.gmra.mxu0 %v8204
      %v8369 = vpop.f32.mrf.mxu0
      %v8370 = vadd.f32 0.0, %v8369
      %v8371 = vpop.f32.mrf.mxu0
      %8372 = vmatprep.mubr.f32.mxu0 0.0
      %8373 = vmatmul.mubr.f32.gmra.mxu0 %v8207
      %v8374 = vpop.f32.mrf.mxu0
      %v8375 = vadd.f32 0.0, %v8374
      %v8376 = vpop.f32.mrf.mxu0
      %8377 = vmatprep.mubr.f32.mxu0 0.0
      %8378 = vmatmul.mubr.f32.gmra.mxu0 %v8210
      %v8379 = vpop.f32.mrf.mxu0
      %v8380 = vadd.f32 0.0, %v8379
      %v8381 = vpop.f32.mrf.mxu0
      %8382 = vmatprep.mubr.f32.mxu0 0.0
      %8383 = vmatmul.mubr.f32.gmra.mxu0 %v8213
      %v8384 = vpop.f32.mrf.mxu0
      %v8385 = vadd.f32 0.0, %v8384
      %v8386 = vpop.f32.mrf.mxu0
      %8387 = vmatprep.mubr.f32.mxu0 0.0
      %8388 = vmatmul.mubr.f32.gmra.mxu0 %v8216
      %v8389 = vpop.f32.mrf.mxu0
      %v8390 = vadd.f32 0.0, %v8389
      %v8391 = vpop.f32.mrf.mxu0
      %8392 = vmatprep.mubr.f32.mxu0 0.0
      %8393 = vmatmul.mubr.f32.gmra.mxu0 %v8219
      %v8394 = vpop.f32.mrf.mxu0
      %v8395 = vadd.f32 0.0, %v8394
      %v8396 = vpop.f32.mrf.mxu0
      %8397 = vmatprep.mubr.f32.mxu0 0.0
      %8398 = vmatmul.mubr.f32.gmra.mxu0 %v8222
      %v8399 = vpop.f32.mrf.mxu0
      %v8400 = vadd.f32 0.0, %v8399
      %v8401 = vpop.f32.mrf.mxu0
      %8402 = vmatprep.mubr.f32.mxu0 0.0
      %8403 = vmatmul.mubr.f32.gmra.mxu0 %v8225
      %v8404 = vpop.f32.mrf.mxu0
      %v8405 = vadd.f32 0.0, %v8404
      %v8406 = vpop.f32.mrf.mxu0
      %8407 = vmatprep.mubr.f32.mxu0 0.0
      %8408 = vmatmul.mubr.f32.gmra.mxu0 %v8228
      %v8409 = vpop.f32.mrf.mxu0
      %v8410 = vadd.f32 0.0, %v8409
      %v8411 = vpop.f32.mrf.mxu0
      %8412 = vmatprep.mubr.f32.mxu0 0.0
      %8413 = vmatmul.mubr.f32.gmra.mxu0 %v8231
      %v8414 = vpop.f32.mrf.mxu0
      %v8415 = vadd.f32 0.0, %v8414
      %v8416 = vpop.f32.mrf.mxu0
      %8417 = vmatprep.mubr.f32.mxu0 0.0
      %8418 = vmatmul.mubr.f32.gmra.mxu0 %v8234
      %v8419 = vpop.f32.mrf.mxu0
      %v8420 = vadd.f32 0.0, %v8419
      %v8421 = vpop.f32.mrf.mxu0
      %8422 = vmatprep.mubr.f32.mxu0 0.0
      %8423 = vmatmul.mubr.f32.gmra.mxu0 %v8237
      %v8424 = vpop.f32.mrf.mxu0
      %v8425 = vadd.f32 0.0, %v8424
      %v8426 = vpop.f32.mrf.mxu0
      %8427 = vmatprep.mubr.f32.mxu0 0.0
      %8428 = vmatmul.mubr.f32.gmra.mxu0 %v8240
      %v8429 = vpop.f32.mrf.mxu0
      %v8430 = vadd.f32 0.0, %v8429
      %v8431 = vpop.f32.mrf.mxu0
      %8432 = vmatprep.mubr.f32.mxu0 0.0
      %8433 = vmatmul.mubr.f32.gmra.mxu0 %v8243
      %v8434 = vpop.f32.mrf.mxu0
      %v8435 = vadd.f32 0.0, %v8434
      %v8436 = vpop.f32.mrf.mxu0
      %8437 = vmatprep.mubr.f32.mxu0 0.0
      %8438 = vmatmul.mubr.f32.gmra.mxu0 %v8246
      %v8439 = vpop.f32.mrf.mxu0
      %v8440 = vadd.f32 0.0, %v8439
      %v8441 = vpop.f32.mrf.mxu0
      %8442 = vmatprep.mubr.f32.mxu0 0.0
      %8443 = vmatmul.mubr.f32.gmra.mxu0 %v8249
      %v8444 = vpop.f32.mrf.mxu0
      %v8445 = vadd.f32 0.0, %v8444
      %v8446 = vpop.f32.mrf.mxu0
      %8447 = vmatprep.mubr.f32.mxu0 0.0
      %8448 = vmatmul.mubr.f32.gmra.mxu0 %v8252
      %v8449 = vpop.f32.mrf.mxu0
      %v8450 = vadd.f32 0.0, %v8449
      %v8451 = vpop.f32.mrf.mxu0
      %8452 = vmatprep.mubr.f32.mxu0 0.0
      %8453 = vmatmul.mubr.f32.gmra.mxu0 %v8255
      %v8454 = vpop.f32.mrf.mxu0
      %v8455 = vadd.f32 0.0, %v8454
      %v8456 = vpop.f32.mrf.mxu0
      %8457 = vmatprep.mubr.f32.mxu0 0.0
      %8458 = vmatmul.mubr.f32.gmra.mxu0 %v8258
      %v8459 = vpop.f32.mrf.mxu0
      %v8460 = vadd.f32 0.0, %v8459
      %v8461 = vpop.f32.mrf.mxu0
      %8462 = vmatprep.mubr.f32.mxu0 0.0
      %8463 = vmatmul.mubr.f32.gmra.mxu0 %v8261
      %v8464 = vpop.f32.mrf.mxu0
      %v8465 = vadd.f32 0.0, %v8464
      %v8466 = vpop.f32.mrf.mxu0
      %8467 = vmatprep.mubr.f32.mxu0 0.0
      %8468 = vmatmul.mubr.f32.gmra.mxu0 %v8264
      %v8469 = vpop.f32.mrf.mxu0
      %v8470 = vadd.f32 0.0, %v8469
      %v8471 = vpop.f32.mrf.mxu0
      %8472 = vmatprep.mubr.f32.mxu0 0.0
      %8473 = vmatmul.mubr.f32.gmra.mxu0 %v8267
      %v8474 = vpop.f32.mrf.mxu0
      %v8475 = vadd.f32 0.0, %v8474
      %v8476 = vpop.f32.mrf.mxu0
      %8477 = vmatprep.mubr.f32.mxu0 0.0
      %8478 = vmatmul.mubr.f32.gmra.mxu0 %v8270
      %v8479 = vpop.f32.mrf.mxu0
      %v8480 = vadd.f32 0.0, %v8479
      %v8481 = vpop.f32.mrf.mxu0
      %8482 = vmatprep.mubr.f32.mxu0 0.0
      %8483 = vmatmul.mubr.f32.gmra.mxu0 %v8273
      %v8484 = vpop.f32.mrf.mxu0
      %v8485 = vadd.f32 0.0, %v8484
      %v8486 = vpop.f32.mrf.mxu0
      %8487 = vmatprep.mubr.f32.mxu0 0.0
      %8488 = vmatmul.mubr.f32.gmra.mxu0 %v8276
      %v8489 = vpop.f32.mrf.mxu0
      %v8490 = vadd.f32 0.0, %v8489
      %v8491 = vpop.f32.mrf.mxu0
      %8492 = vmatprep.mubr.f32.mxu0 0.0
      %8493 = vmatmul.mubr.f32.gmra.mxu0 %v8279
      %v8494 = vpop.f32.mrf.mxu0
      %v8495 = vadd.f32 0.0, %v8494
      %v8496 = vpop.f32.mrf.mxu0
      %8497 = vmatprep.mubr.f32.mxu0 0.0
      %8498 = vmatmul.mubr.f32.gmra.mxu0 %v8282
      %v8499 = vpop.f32.mrf.mxu0
      %v8500 = vadd.f32 0.0, %v8499
      %v8501 = vpop.f32.mrf.mxu0
      %8502 = vmatprep.mubr.f32.mxu0 0.0
      %8503 = vmatmul.mubr.f32.gmra.mxu0 %v8285
      %v8504 = vpop.f32.mrf.mxu0
      %v8505 = vadd.f32 0.0, %v8504
      %v8506 = vpop.f32.mrf.mxu0
      %8507 = vmatprep.mubr.f32.mxu0 0.0
      %8508 = vmatmul.mubr.f32.gmra.mxu0 %v8288
      %v8509 = vpop.f32.mrf.mxu0
      %v8510 = vadd.f32 0.0, %v8509
      %v8511 = vpop.f32.mrf.mxu0
      %8512 = vmatprep.mubr.f32.mxu0 0.0
      %8513 = vmatmul.mubr.f32.gmra.mxu0 %v8291
      %v8514 = vpop.f32.mrf.mxu0
      %v8515 = vadd.f32 0.0, %v8514
      %v8516 = vpop.f32.mrf.mxu0
      %8517 = vdwg.mxu0
      %v8518 = vadd.f32 %v8038, %v8360
      %v8519 = vadd.f32 %v8043, %v8365
      %v8520 = vadd.f32 %v8048, %v8370
      %v8521 = vadd.f32 %v8053, %v8375
      %v8522 = vadd.f32 %v8058, %v8380
      %v8523 = vadd.f32 %v8063, %v8385
      %v8524 = vadd.f32 %v8068, %v8390
      %v8525 = vadd.f32 %v8073, %v8395
      %v8526 = vadd.f32 %v8078, %v8400
      %v8527 = vadd.f32 %v8083, %v8405
      %v8528 = vadd.f32 %v8088, %v8410
      %v8529 = vadd.f32 %v8093, %v8415
      %v8530 = vadd.f32 %v8098, %v8420
      %v8531 = vadd.f32 %v8103, %v8425
      %v8532 = vadd.f32 %v8108, %v8430
      %v8533 = vadd.f32 %v8113, %v8435
      %v8534 = vadd.f32 %v8118, %v8440
      %v8535 = vadd.f32 %v8123, %v8445
      %v8536 = vadd.f32 %v8128, %v8450
      %v8537 = vadd.f32 %v8133, %v8455
      %v8538 = vadd.f32 %v8138, %v8460
      %v8539 = vadd.f32 %v8143, %v8465
      %v8540 = vadd.f32 %v8148, %v8470
      %v8541 = vadd.f32 %v8153, %v8475
      %v8542 = vadd.f32 %v8158, %v8480
      %v8543 = vadd.f32 %v8163, %v8485
      %v8544 = vadd.f32 %v8168, %v8490
      %v8545 = vadd.f32 %v8173, %v8495
      %v8546 = vadd.f32 %v8178, %v8500
      %v8547 = vadd.f32 %v8183, %v8505
      %v8548 = vadd.f32 %v8188, %v8510
      %v8549 = vadd.f32 %v8193, %v8515
      %v8550 = vld [vmem:[%s16] sm:$0x1]
      %v8552 = vlaneseq
      %v8553 = vshrl.u32 %v8552, 7
      %v8554 = vsub.s32 0, %v8553
      %v8555 = vrot.slane %v8550, %v8554
      %v8557 = vadd.f32 %v8518, %v8555
      %v8558 = vadd.f32 %v8519, %v8555
      %v8559 = vadd.f32 %v8520, %v8555
      %v8560 = vadd.f32 %v8521, %v8555
      %v8561 = vadd.f32 %v8522, %v8555
      %v8562 = vadd.f32 %v8523, %v8555
      %v8563 = vadd.f32 %v8524, %v8555
      %v8564 = vadd.f32 %v8525, %v8555
      %v8565 = vadd.f32 %v8526, %v8555
      %v8566 = vadd.f32 %v8527, %v8555
      %v8567 = vadd.f32 %v8528, %v8555
      %v8568 = vadd.f32 %v8529, %v8555
      %v8569 = vadd.f32 %v8530, %v8555
      %v8570 = vadd.f32 %v8531, %v8555
      %v8571 = vadd.f32 %v8532, %v8555
      %v8572 = vadd.f32 %v8533, %v8555
      %v8573 = vadd.f32 %v8534, %v8555
      %v8574 = vadd.f32 %v8535, %v8555
      %v8575 = vadd.f32 %v8536, %v8555
      %v8576 = vadd.f32 %v8537, %v8555
      %v8577 = vadd.f32 %v8538, %v8555
      %v8578 = vadd.f32 %v8539, %v8555
      %v8579 = vadd.f32 %v8540, %v8555
      %v8580 = vadd.f32 %v8541, %v8555
      %v8581 = vadd.f32 %v8542, %v8555
      %v8582 = vadd.f32 %v8543, %v8555
      %v8583 = vadd.f32 %v8544, %v8555
      %v8584 = vadd.f32 %v8545, %v8555
      %v8585 = vadd.f32 %v8546, %v8555
      %v8586 = vadd.f32 %v8547, %v8555
      %v8587 = vadd.f32 %v8548, %v8555
      %v8588 = vadd.f32 %v8549, %v8555
      %vm8589 = vcmask 23552
      %v8590 = vsel %vm8589, %v8557, -inf
      %8591 = vmax.xlane.f32.xlu0 %v8590
      %v8592 = vpop.xlane.xlu0 %8591
      %v8593 = vsel %vm8589, %v8558, -inf
      %8594 = vmax.xlane.f32.xlu0 %v8593
      %v8595 = vpop.xlane.xlu0 %8594
      %v8596 = vsel %vm8589, %v8559, -inf
      %8597 = vmax.xlane.f32.xlu0 %v8596
      %v8598 = vpop.xlane.xlu0 %8597
      %v8599 = vsel %vm8589, %v8560, -inf
      %8600 = vmax.xlane.f32.xlu0 %v8599
      %v8601 = vpop.xlane.xlu0 %8600
      %v8602 = vsel %vm8589, %v8561, -inf
      %8603 = vmax.xlane.f32.xlu0 %v8602
      %v8604 = vpop.xlane.xlu0 %8603
      %v8605 = vsel %vm8589, %v8562, -inf
      %8606 = vmax.xlane.f32.xlu0 %v8605
      %v8607 = vpop.xlane.xlu0 %8606
      %v8608 = vsel %vm8589, %v8563, -inf
      %8609 = vmax.xlane.f32.xlu0 %v8608
      %v8610 = vpop.xlane.xlu0 %8609
      %v8611 = vsel %vm8589, %v8564, -inf
      %8612 = vmax.xlane.f32.xlu0 %v8611
      %v8613 = vpop.xlane.xlu0 %8612
      %v8614 = vsel %vm8589, %v8565, -inf
      %8615 = vmax.xlane.f32.xlu0 %v8614
      %v8616 = vpop.xlane.xlu0 %8615
      %v8617 = vsel %vm8589, %v8566, -inf
      %8618 = vmax.xlane.f32.xlu0 %v8617
      %v8619 = vpop.xlane.xlu0 %8618
      %v8620 = vsel %vm8589, %v8567, -inf
      %8621 = vmax.xlane.f32.xlu0 %v8620
      %v8622 = vpop.xlane.xlu0 %8621
      %v8623 = vsel %vm8589, %v8568, -inf
      %8624 = vmax.xlane.f32.xlu0 %v8623
      %v8625 = vpop.xlane.xlu0 %8624
      %v8626 = vsel %vm8589, %v8569, -inf
      %8627 = vmax.xlane.f32.xlu0 %v8626
      %v8628 = vpop.xlane.xlu0 %8627
      %v8629 = vsel %vm8589, %v8570, -inf
      %8630 = vmax.xlane.f32.xlu0 %v8629
      %v8631 = vpop.xlane.xlu0 %8630
      %v8632 = vsel %vm8589, %v8571, -inf
      %8633 = vmax.xlane.f32.xlu0 %v8632
      %v8634 = vpop.xlane.xlu0 %8633
      %v8635 = vsel %vm8589, %v8572, -inf
      %8636 = vmax.xlane.f32.xlu0 %v8635
      %v8637 = vpop.xlane.xlu0 %8636
      %v8638 = vsel %vm8589, %v8573, -inf
      %8639 = vmax.xlane.f32.xlu0 %v8638
      %v8640 = vpop.xlane.xlu0 %8639
      %v8641 = vsel %vm8589, %v8574, -inf
      %8642 = vmax.xlane.f32.xlu0 %v8641
      %v8643 = vpop.xlane.xlu0 %8642
      %v8644 = vsel %vm8589, %v8575, -inf
      %8645 = vmax.xlane.f32.xlu0 %v8644
      %v8646 = vpop.xlane.xlu0 %8645
      %v8647 = vsel %vm8589, %v8576, -inf
      %8648 = vmax.xlane.f32.xlu0 %v8647
      %v8649 = vpop.xlane.xlu0 %8648
      %v8650 = vsel %vm8589, %v8577, -inf
      %8651 = vmax.xlane.f32.xlu0 %v8650
      %v8652 = vpop.xlane.xlu0 %8651
      %v8653 = vsel %vm8589, %v8578, -inf
      %8654 = vmax.xlane.f32.xlu0 %v8653
      %v8655 = vpop.xlane.xlu0 %8654
      %v8656 = vsel %vm8589, %v8579, -inf
      %8657 = vmax.xlane.f32.xlu0 %v8656
      %v8658 = vpop.xlane.xlu0 %8657
      %v8659 = vsel %vm8589, %v8580, -inf
      %8660 = vmax.xlane.f32.xlu0 %v8659
      %v8661 = vpop.xlane.xlu0 %8660
      %v8662 = vsel %vm8589, %v8581, -inf
      %8663 = vmax.xlane.f32.xlu0 %v8662
      %v8664 = vpop.xlane.xlu0 %8663
      %v8665 = vsel %vm8589, %v8582, -inf
      %8666 = vmax.xlane.f32.xlu0 %v8665
      %v8667 = vpop.xlane.xlu0 %8666
      %v8668 = vsel %vm8589, %v8583, -inf
      %8669 = vmax.xlane.f32.xlu0 %v8668
      %v8670 = vpop.xlane.xlu0 %8669
      %v8671 = vsel %vm8589, %v8584, -inf
      %8672 = vmax.xlane.f32.xlu0 %v8671
      %v8673 = vpop.xlane.xlu0 %8672
      %v8674 = vsel %vm8589, %v8585, -inf
      %8675 = vmax.xlane.f32.xlu0 %v8674
      %v8676 = vpop.xlane.xlu0 %8675
      %v8677 = vsel %vm8589, %v8586, -inf
      %8678 = vmax.xlane.f32.xlu0 %v8677
      %v8679 = vpop.xlane.xlu0 %8678
      %v8680 = vsel %vm8589, %v8587, -inf
      %8681 = vmax.xlane.f32.xlu0 %v8680
      %v8682 = vpop.xlane.xlu0 %8681
      %v8683 = vsel %vm8589, %v8588, -inf
      %8684 = vmax.xlane.f32.xlu0 %v8683
      %v8685 = vpop.xlane.xlu0 %8684
      %v8686 = vsub.f32 %v8557, %v8592
      %v8687 = vsub.f32 %v8558, %v8595
      %v8688 = vsub.f32 %v8559, %v8598
      %v8689 = vsub.f32 %v8560, %v8601
      %v8690 = vsub.f32 %v8561, %v8604
      %v8691 = vsub.f32 %v8562, %v8607
      %v8692 = vsub.f32 %v8563, %v8610
      %v8693 = vsub.f32 %v8564, %v8613
      %v8694 = vsub.f32 %v8565, %v8616
      %v8695 = vsub.f32 %v8566, %v8619
      %v8696 = vsub.f32 %v8567, %v8622
      %v8697 = vsub.f32 %v8568, %v8625
      %v8698 = vsub.f32 %v8569, %v8628
      %v8699 = vsub.f32 %v8570, %v8631
      %v8700 = vsub.f32 %v8571, %v8634
      %v8701 = vsub.f32 %v8572, %v8637
      %v8702 = vsub.f32 %v8573, %v8640
      %v8703 = vsub.f32 %v8574, %v8643
      %v8704 = vsub.f32 %v8575, %v8646
      %v8705 = vsub.f32 %v8576, %v8649
      %v8706 = vsub.f32 %v8577, %v8652
      %v8707 = vsub.f32 %v8578, %v8655
      %v8708 = vsub.f32 %v8579, %v8658
      %v8709 = vsub.f32 %v8580, %v8661
      %v8710 = vsub.f32 %v8581, %v8664
      %v8711 = vsub.f32 %v8582, %v8667
      %v8712 = vsub.f32 %v8583, %v8670
      %v8713 = vsub.f32 %v8584, %v8673
      %v8714 = vsub.f32 %v8585, %v8676
      %v8715 = vsub.f32 %v8586, %v8679
      %v8716 = vsub.f32 %v8587, %v8682
      %v8717 = vsub.f32 %v8588, %v8685
      %v8718 = vmul.f32 %v8686, 1.442695
      %v8719 = vpow.pop %v8718
      %v8720 = vmul.f32 %v8687, 1.442695
      %v8721 = vpow.pop %v8720
      %v8722 = vmul.f32 %v8688, 1.442695
      %v8723 = vpow.pop %v8722
      %v8724 = vmul.f32 %v8689, 1.442695
      %v8725 = vpow.pop %v8724
      %v8726 = vmul.f32 %v8690, 1.442695
      %v8727 = vpow.pop %v8726
      %v8728 = vmul.f32 %v8691, 1.442695
      %v8729 = vpow.pop %v8728
      %v8730 = vmul.f32 %v8692, 1.442695
      %v8731 = vpow.pop %v8730
      %v8732 = vmul.f32 %v8693, 1.442695
      %v8733 = vpow.pop %v8732
      %v8734 = vmul.f32 %v8694, 1.442695
      %v8735 = vpow.pop %v8734
      %v8736 = vmul.f32 %v8695, 1.442695
      %v8737 = vpow.pop %v8736
      %v8738 = vmul.f32 %v8696, 1.442695
      %v8739 = vpow.pop %v8738
      %v8740 = vmul.f32 %v8697, 1.442695
      %v8741 = vpow.pop %v8740
      %v8742 = vmul.f32 %v8698, 1.442695
      %v8743 = vpow.pop %v8742
      %v8744 = vmul.f32 %v8699, 1.442695
      %v8745 = vpow.pop %v8744
      %v8746 = vmul.f32 %v8700, 1.442695
      %v8747 = vpow.pop %v8746
      %v8748 = vmul.f32 %v8701, 1.442695
      %v8749 = vpow.pop %v8748
      %v8750 = vmul.f32 %v8702, 1.442695
      %v8751 = vpow.pop %v8750
      %v8752 = vmul.f32 %v8703, 1.442695
      %v8753 = vpow.pop %v8752
      %v8754 = vmul.f32 %v8704, 1.442695
      %v8755 = vpow.pop %v8754
      %v8756 = vmul.f32 %v8705, 1.442695
      %v8757 = vpow.pop %v8756
      %v8758 = vmul.f32 %v8706, 1.442695
      %v8759 = vpow.pop %v8758
      %v8760 = vmul.f32 %v8707, 1.442695
      %v8761 = vpow.pop %v8760
      %v8762 = vmul.f32 %v8708, 1.442695
      %v8763 = vpow.pop %v8762
      %v8764 = vmul.f32 %v8709, 1.442695
      %v8765 = vpow.pop %v8764
      %v8766 = vmul.f32 %v8710, 1.442695
      %v8767 = vpow.pop %v8766
      %v8768 = vmul.f32 %v8711, 1.442695
      %v8769 = vpow.pop %v8768
      %v8770 = vmul.f32 %v8712, 1.442695
      %v8771 = vpow.pop %v8770
      %v8772 = vmul.f32 %v8713, 1.442695
      %v8773 = vpow.pop %v8772
      %v8774 = vmul.f32 %v8714, 1.442695
      %v8775 = vpow.pop %v8774
      %v8776 = vmul.f32 %v8715, 1.442695
      %v8777 = vpow.pop %v8776
      %v8778 = vmul.f32 %v8716, 1.442695
      %v8779 = vpow.pop %v8778
      %v8780 = vmul.f32 %v8717, 1.442695
      %v8781 = vpow.pop %v8780
      %v8782 = vsel %vm8589, %v8719, 0.0
      %8783 = vadd.xlane.f32.xlu0 %v8782
      %v8784 = vpop.xlane.xlu0 %8783
      %v8785 = vsel %vm8589, %v8721, 0.0
      %8786 = vadd.xlane.f32.xlu0 %v8785
      %v8787 = vpop.xlane.xlu0 %8786
      %v8788 = vsel %vm8589, %v8723, 0.0
      %8789 = vadd.xlane.f32.xlu0 %v8788
      %v8790 = vpop.xlane.xlu0 %8789
      %v8791 = vsel %vm8589, %v8725, 0.0
      %8792 = vadd.xlane.f32.xlu0 %v8791
      %v8793 = vpop.xlane.xlu0 %8792
      %v8794 = vsel %vm8589, %v8727, 0.0
      %8795 = vadd.xlane.f32.xlu0 %v8794
      %v8796 = vpop.xlane.xlu0 %8795
      %v8797 = vsel %vm8589, %v8729, 0.0
      %8798 = vadd.xlane.f32.xlu0 %v8797
      %v8799 = vpop.xlane.xlu0 %8798
      %v8800 = vsel %vm8589, %v8731, 0.0
      %8801 = vadd.xlane.f32.xlu0 %v8800
      %v8802 = vpop.xlane.xlu0 %8801
      %v8803 = vsel %vm8589, %v8733, 0.0
      %8804 = vadd.xlane.f32.xlu0 %v8803
      %v8805 = vpop.xlane.xlu0 %8804
      %v8806 = vsel %vm8589, %v8735, 0.0
      %8807 = vadd.xlane.f32.xlu0 %v8806
      %v8808 = vpop.xlane.xlu0 %8807
      %v8809 = vsel %vm8589, %v8737, 0.0
      %8810 = vadd.xlane.f32.xlu0 %v8809
      %v8811 = vpop.xlane.xlu0 %8810
      %v8812 = vsel %vm8589, %v8739, 0.0
      %8813 = vadd.xlane.f32.xlu0 %v8812
      %v8814 = vpop.xlane.xlu0 %8813
      %v8815 = vsel %vm8589, %v8741, 0.0
      %8816 = vadd.xlane.f32.xlu0 %v8815
      %v8817 = vpop.xlane.xlu0 %8816
      %v8818 = vsel %vm8589, %v8743, 0.0
      %8819 = vadd.xlane.f32.xlu0 %v8818
      %v8820 = vpop.xlane.xlu0 %8819
      %v8821 = vsel %vm8589, %v8745, 0.0
      %8822 = vadd.xlane.f32.xlu0 %v8821
      %v8823 = vpop.xlane.xlu0 %8822
      %v8824 = vsel %vm8589, %v8747, 0.0
      %8825 = vadd.xlane.f32.xlu0 %v8824
      %v8826 = vpop.xlane.xlu0 %8825
      %v8827 = vsel %vm8589, %v8749, 0.0
      %8828 = vadd.xlane.f32.xlu0 %v8827
      %v8829 = vpop.xlane.xlu0 %8828
      %v8830 = vsel %vm8589, %v8751, 0.0
      %8831 = vadd.xlane.f32.xlu0 %v8830
      %v8832 = vpop.xlane.xlu0 %8831
      %v8833 = vsel %vm8589, %v8753, 0.0
      %8834 = vadd.xlane.f32.xlu0 %v8833
      %v8835 = vpop.xlane.xlu0 %8834
      %v8836 = vsel %vm8589, %v8755, 0.0
      %8837 = vadd.xlane.f32.xlu0 %v8836
      %v8838 = vpop.xlane.xlu0 %8837
      %v8839 = vsel %vm8589, %v8757, 0.0
      %8840 = vadd.xlane.f32.xlu0 %v8839
      %v8841 = vpop.xlane.xlu0 %8840
      %v8842 = vsel %vm8589, %v8759, 0.0
      %8843 = vadd.xlane.f32.xlu0 %v8842
      %v8844 = vpop.xlane.xlu0 %8843
      %v8845 = vsel %vm8589, %v8761, 0.0
      %8846 = vadd.xlane.f32.xlu0 %v8845
      %v8847 = vpop.xlane.xlu0 %8846
      %v8848 = vsel %vm8589, %v8763, 0.0
      %8849 = vadd.xlane.f32.xlu0 %v8848
      %v8850 = vpop.xlane.xlu0 %8849
      %v8851 = vsel %vm8589, %v8765, 0.0
      %8852 = vadd.xlane.f32.xlu0 %v8851
      %v8853 = vpop.xlane.xlu0 %8852
      %v8854 = vsel %vm8589, %v8767, 0.0
      %8855 = vadd.xlane.f32.xlu0 %v8854
      %v8856 = vpop.xlane.xlu0 %8855
      %v8857 = vsel %vm8589, %v8769, 0.0
      %8858 = vadd.xlane.f32.xlu0 %v8857
      %v8859 = vpop.xlane.xlu0 %8858
      %v8860 = vsel %vm8589, %v8771, 0.0
      %8861 = vadd.xlane.f32.xlu0 %v8860
      %v8862 = vpop.xlane.xlu0 %8861
      %v8863 = vsel %vm8589, %v8773, 0.0
      %8864 = vadd.xlane.f32.xlu0 %v8863
      %v8865 = vpop.xlane.xlu0 %8864
      %v8866 = vsel %vm8589, %v8775, 0.0
      %8867 = vadd.xlane.f32.xlu0 %v8866
      %v8868 = vpop.xlane.xlu0 %8867
      %v8869 = vsel %vm8589, %v8777, 0.0
      %8870 = vadd.xlane.f32.xlu0 %v8869
      %v8871 = vpop.xlane.xlu0 %8870
      %v8872 = vsel %vm8589, %v8779, 0.0
      %8873 = vadd.xlane.f32.xlu0 %v8872
      %v8874 = vpop.xlane.xlu0 %8873
      %v8875 = vsel %vm8589, %v8781, 0.0
      %8876 = vadd.xlane.f32.xlu0 %v8875
      %v8877 = vpop.xlane.xlu0 %8876
      %v8878 = vrcp.pop %v8784
      %v8879 = vrcp.pop %v8787
      %v8880 = vrcp.pop %v8790
      %v8881 = vrcp.pop %v8793
      %v8882 = vrcp.pop %v8796
      %v8883 = vrcp.pop %v8799
      %v8884 = vrcp.pop %v8802
      %v8885 = vrcp.pop %v8805
      %v8886 = vrcp.pop %v8808
      %v8887 = vrcp.pop %v8811
      %v8888 = vrcp.pop %v8814
      %v8889 = vrcp.pop %v8817
      %v8890 = vrcp.pop %v8820
      %v8891 = vrcp.pop %v8823
      %v8892 = vrcp.pop %v8826
      %v8893 = vrcp.pop %v8829
      %v8894 = vrcp.pop %v8832
      %v8895 = vrcp.pop %v8835
      %v8896 = vrcp.pop %v8838
      %v8897 = vrcp.pop %v8841
      %v8898 = vrcp.pop %v8844
      %v8899 = vrcp.pop %v8847
      %v8900 = vrcp.pop %v8850
      %v8901 = vrcp.pop %v8853
      %v8902 = vrcp.pop %v8856
      %v8903 = vrcp.pop %v8859
      %v8904 = vrcp.pop %v8862
      %v8905 = vrcp.pop %v8865
      %v8906 = vrcp.pop %v8868
      %v8907 = vrcp.pop %v8871
      %v8908 = vrcp.pop %v8874
      %v8909 = vrcp.pop %v8877
      %v8910 = vmul.f32 %v8719, %v8878
      %v8911 = vmul.f32 %v8721, %v8879
      %v8912 = vmul.f32 %v8723, %v8880
      %v8913 = vmul.f32 %v8725, %v8881
      %v8914 = vmul.f32 %v8727, %v8882
      %v8915 = vmul.f32 %v8729, %v8883
      %v8916 = vmul.f32 %v8731, %v8884
      %v8917 = vmul.f32 %v8733, %v8885
      %v8918 = vmul.f32 %v8735, %v8886
      %v8919 = vmul.f32 %v8737, %v8887
      %v8920 = vmul.f32 %v8739, %v8888
      %v8921 = vmul.f32 %v8741, %v8889
      %v8922 = vmul.f32 %v8743, %v8890
      %v8923 = vmul.f32 %v8745, %v8891
      %v8924 = vmul.f32 %v8747, %v8892
      %v8925 = vmul.f32 %v8749, %v8893
      %v8926 = vmul.f32 %v8751, %v8894
      %v8927 = vmul.f32 %v8753, %v8895
      %v8928 = vmul.f32 %v8755, %v8896
      %v8929 = vmul.f32 %v8757, %v8897
      %v8930 = vmul.f32 %v8759, %v8898
      %v8931 = vmul.f32 %v8761, %v8899
      %v8932 = vmul.f32 %v8763, %v8900
      %v8933 = vmul.f32 %v8765, %v8901
      %v8934 = vmul.f32 %v8767, %v8902
      %v8935 = vmul.f32 %v8769, %v8903
      %v8936 = vmul.f32 %v8771, %v8904
      %v8937 = vmul.f32 %v8773, %v8905
      %v8938 = vmul.f32 %v8775, %v8906
      %v8939 = vmul.f32 %v8777, %v8907
      %v8940 = vmul.f32 %v8779, %v8908
      %v8941 = vmul.f32 %v8781, %v8909
      %8943 = vset.pattern.permute.xlu0 0
      %8944 = vperm.xlu0 %8943, %v8910
      %v8945 = vpop.permute.xlu0 %8944
      %8948 = vset.pattern.permute.xlu0 0
      %8949 = vperm.xlu0 %8948, %v8911
      %v8950 = vpop.permute.xlu0 %8949
      %8953 = vset.pattern.permute.xlu0 0
      %8954 = vperm.xlu0 %8953, %v8912
      %v8955 = vpop.permute.xlu0 %8954
      %8958 = vset.pattern.permute.xlu0 0
      %8959 = vperm.xlu0 %8958, %v8913
      %v8960 = vpop.permute.xlu0 %8959
      %8963 = vset.pattern.permute.xlu0 0
      %8964 = vperm.xlu0 %8963, %v8914
      %v8965 = vpop.permute.xlu0 %8964
      %8968 = vset.pattern.permute.xlu0 0
      %8969 = vperm.xlu0 %8968, %v8915
      %v8970 = vpop.permute.xlu0 %8969
      %8973 = vset.pattern.permute.xlu0 0
      %8974 = vperm.xlu0 %8973, %v8916
      %v8975 = vpop.permute.xlu0 %8974
      %8978 = vset.pattern.permute.xlu0 0
      %8979 = vperm.xlu0 %8978, %v8917
      %v8980 = vpop.permute.xlu0 %8979
      %8983 = vset.pattern.permute.xlu0 0
      %8984 = vperm.xlu0 %8983, %v8918
      %v8985 = vpop.permute.xlu0 %8984
      %8988 = vset.pattern.permute.xlu0 0
      %8989 = vperm.xlu0 %8988, %v8919
      %v8990 = vpop.permute.xlu0 %8989
      %8993 = vset.pattern.permute.xlu0 0
      %8994 = vperm.xlu0 %8993, %v8920
      %v8995 = vpop.permute.xlu0 %8994
      %8998 = vset.pattern.permute.xlu0 0
      %8999 = vperm.xlu0 %8998, %v8921
      %v9000 = vpop.permute.xlu0 %8999
      %9003 = vset.pattern.permute.xlu0 0
      %9004 = vperm.xlu0 %9003, %v8922
      %v9005 = vpop.permute.xlu0 %9004
      %9008 = vset.pattern.permute.xlu0 0
      %9009 = vperm.xlu0 %9008, %v8923
      %v9010 = vpop.permute.xlu0 %9009
      %9013 = vset.pattern.permute.xlu0 0
      %9014 = vperm.xlu0 %9013, %v8924
      %v9015 = vpop.permute.xlu0 %9014
      %9018 = vset.pattern.permute.xlu0 0
      %9019 = vperm.xlu0 %9018, %v8925
      %v9020 = vpop.permute.xlu0 %9019
      %9023 = vset.pattern.permute.xlu0 0
      %9024 = vperm.xlu0 %9023, %v8926
      %v9025 = vpop.permute.xlu0 %9024
      %9028 = vset.pattern.permute.xlu0 0
      %9029 = vperm.xlu0 %9028, %v8927
      %v9030 = vpop.permute.xlu0 %9029
      %9033 = vset.pattern.permute.xlu0 0
      %9034 = vperm.xlu0 %9033, %v8928
      %v9035 = vpop.permute.xlu0 %9034
      %9038 = vset.pattern.permute.xlu0 0
      %9039 = vperm.xlu0 %9038, %v8929
      %v9040 = vpop.permute.xlu0 %9039
      %9043 = vset.pattern.permute.xlu0 0
      %9044 = vperm.xlu0 %9043, %v8930
      %v9045 = vpop.permute.xlu0 %9044
      %9048 = vset.pattern.permute.xlu0 0
      %9049 = vperm.xlu0 %9048, %v8931
      %v9050 = vpop.permute.xlu0 %9049
      %9053 = vset.pattern.permute.xlu0 0
      %9054 = vperm.xlu0 %9053, %v8932
      %v9055 = vpop.permute.xlu0 %9054
      %9058 = vset.pattern.permute.xlu0 0
      %9059 = vperm.xlu0 %9058, %v8933
      %v9060 = vpop.permute.xlu0 %9059
      %9063 = vset.pattern.permute.xlu0 0
      %9064 = vperm.xlu0 %9063, %v8934
      %v9065 = vpop.permute.xlu0 %9064
      %9068 = vset.pattern.permute.xlu0 0
      %9069 = vperm.xlu0 %9068, %v8935
      %v9070 = vpop.permute.xlu0 %9069
      %9073 = vset.pattern.permute.xlu0 0
      %9074 = vperm.xlu0 %9073, %v8936
      %v9075 = vpop.permute.xlu0 %9074
      %9078 = vset.pattern.permute.xlu0 0
      %9079 = vperm.xlu0 %9078, %v8937
      %v9080 = vpop.permute.xlu0 %9079
      %9083 = vset.pattern.permute.xlu0 0
      %9084 = vperm.xlu0 %9083, %v8938
      %v9085 = vpop.permute.xlu0 %9084
      %9088 = vset.pattern.permute.xlu0 0
      %9089 = vperm.xlu0 %9088, %v8939
      %v9090 = vpop.permute.xlu0 %9089
      %9093 = vset.pattern.permute.xlu0 0
      %9094 = vperm.xlu0 %9093, %v8940
      %v9095 = vpop.permute.xlu0 %9094
      %9098 = vset.pattern.permute.xlu0 0
      %9099 = vperm.xlu0 %9098, %v8941
      %v9100 = vpop.permute.xlu0 %9099
      %v9102 = vmul.f32 %v853, %v8945
      %v9103 = vmul.f32 %v854, %v8950
      %v9104 = vmul.f32 %v853, %v8955
      %v9105 = vmul.f32 %v854, %v8960
      %v9106 = vmul.f32 %v855, %v8965
      %v9107 = vmul.f32 %v856, %v8970
      %v9108 = vmul.f32 %v855, %v8975
      %v9109 = vmul.f32 %v856, %v8980
      %v9110 = vmul.f32 %v857, %v8985
      %v9111 = vmul.f32 %v858, %v8990
      %v9112 = vmul.f32 %v857, %v8995
      %v9113 = vmul.f32 %v858, %v9000
      %v9114 = vmul.f32 %v859, %v9005
      %v9115 = vmul.f32 %v860, %v9010
      %v9116 = vmul.f32 %v859, %v9015
      %v9117 = vmul.f32 %v860, %v9020
      %v9118 = vmul.f32 %v861, %v9025
      %v9119 = vmul.f32 %v862, %v9030
      %v9120 = vmul.f32 %v861, %v9035
      %v9121 = vmul.f32 %v862, %v9040
      %v9122 = vmul.f32 %v863, %v9045
      %v9123 = vmul.f32 %v864, %v9050
      %v9124 = vmul.f32 %v863, %v9055
      %v9125 = vmul.f32 %v864, %v9060
      %v9126 = vmul.f32 %v865, %v9065
      %v9127 = vmul.f32 %v866, %v9070
      %v9128 = vmul.f32 %v865, %v9075
      %v9129 = vmul.f32 %v866, %v9080
      %v9130 = vmul.f32 %v867, %v9085
      %v9131 = vmul.f32 %v868, %v9090
      %v9132 = vmul.f32 %v867, %v9095
      %v9133 = vmul.f32 %v868, %v9100
      %9134 = vset.pattern.permute.xlu0 1
      %9135 = vperm.xlu0 %9134, %v8910
      %v9136 = vpop.permute.xlu0 %9135
      %9138 = vset.pattern.permute.xlu0 1
      %9139 = vperm.xlu0 %9138, %v8911
      %v9140 = vpop.permute.xlu0 %9139
      %9142 = vset.pattern.permute.xlu0 1
      %9143 = vperm.xlu0 %9142, %v8912
      %v9144 = vpop.permute.xlu0 %9143
      %9146 = vset.pattern.permute.xlu0 1
      %9147 = vperm.xlu0 %9146, %v8913
      %v9148 = vpop.permute.xlu0 %9147
      %9150 = vset.pattern.permute.xlu0 1
      %9151 = vperm.xlu0 %9150, %v8914
      %v9152 = vpop.permute.xlu0 %9151
      %9154 = vset.pattern.permute.xlu0 1
      %9155 = vperm.xlu0 %9154, %v8915
      %v9156 = vpop.permute.xlu0 %9155
      %9158 = vset.pattern.permute.xlu0 1
      %9159 = vperm.xlu0 %9158, %v8916
      %v9160 = vpop.permute.xlu0 %9159
      %9162 = vset.pattern.permute.xlu0 1
      %9163 = vperm.xlu0 %9162, %v8917
      %v9164 = vpop.permute.xlu0 %9163
      %9166 = vset.pattern.permute.xlu0 1
      %9167 = vperm.xlu0 %9166, %v8918
      %v9168 = vpop.permute.xlu0 %9167
      %9170 = vset.pattern.permute.xlu0 1
      %9171 = vperm.xlu0 %9170, %v8919
      %v9172 = vpop.permute.xlu0 %9171
      %9174 = vset.pattern.permute.xlu0 1
      %9175 = vperm.xlu0 %9174, %v8920
      %v9176 = vpop.permute.xlu0 %9175
      %9178 = vset.pattern.permute.xlu0 1
      %9179 = vperm.xlu0 %9178, %v8921
      %v9180 = vpop.permute.xlu0 %9179
      %9182 = vset.pattern.permute.xlu0 1
      %9183 = vperm.xlu0 %9182, %v8922
      %v9184 = vpop.permute.xlu0 %9183
      %9186 = vset.pattern.permute.xlu0 1
      %9187 = vperm.xlu0 %9186, %v8923
      %v9188 = vpop.permute.xlu0 %9187
      %9190 = vset.pattern.permute.xlu0 1
      %9191 = vperm.xlu0 %9190, %v8924
      %v9192 = vpop.permute.xlu0 %9191
      %9194 = vset.pattern.permute.xlu0 1
      %9195 = vperm.xlu0 %9194, %v8925
      %v9196 = vpop.permute.xlu0 %9195
      %9198 = vset.pattern.permute.xlu0 1
      %9199 = vperm.xlu0 %9198, %v8926
      %v9200 = vpop.permute.xlu0 %9199
      %9202 = vset.pattern.permute.xlu0 1
      %9203 = vperm.xlu0 %9202, %v8927
      %v9204 = vpop.permute.xlu0 %9203
      %9206 = vset.pattern.permute.xlu0 1
      %9207 = vperm.xlu0 %9206, %v8928
      %v9208 = vpop.permute.xlu0 %9207
      %9210 = vset.pattern.permute.xlu0 1
      %9211 = vperm.xlu0 %9210, %v8929
      %v9212 = vpop.permute.xlu0 %9211
      %9214 = vset.pattern.permute.xlu0 1
      %9215 = vperm.xlu0 %9214, %v8930
      %v9216 = vpop.permute.xlu0 %9215
      %9218 = vset.pattern.permute.xlu0 1
      %9219 = vperm.xlu0 %9218, %v8931
      %v9220 = vpop.permute.xlu0 %9219
      %9222 = vset.pattern.permute.xlu0 1
      %9223 = vperm.xlu0 %9222, %v8932
      %v9224 = vpop.permute.xlu0 %9223
      %9226 = vset.pattern.permute.xlu0 1
      %9227 = vperm.xlu0 %9226, %v8933
      %v9228 = vpop.permute.xlu0 %9227
      %9230 = vset.pattern.permute.xlu0 1
      %9231 = vperm.xlu0 %9230, %v8934
      %v9232 = vpop.permute.xlu0 %9231
      %9234 = vset.pattern.permute.xlu0 1
      %9235 = vperm.xlu0 %9234, %v8935
      %v9236 = vpop.permute.xlu0 %9235
      %9238 = vset.pattern.permute.xlu0 1
      %9239 = vperm.xlu0 %9238, %v8936
      %v9240 = vpop.permute.xlu0 %9239
      %9242 = vset.pattern.permute.xlu0 1
      %9243 = vperm.xlu0 %9242, %v8937
      %v9244 = vpop.permute.xlu0 %9243
      %9246 = vset.pattern.permute.xlu0 1
      %9247 = vperm.xlu0 %9246, %v8938
      %v9248 = vpop.permute.xlu0 %9247
      %9250 = vset.pattern.permute.xlu0 1
      %9251 = vperm.xlu0 %9250, %v8939
      %v9252 = vpop.permute.xlu0 %9251
      %9254 = vset.pattern.permute.xlu0 1
      %9255 = vperm.xlu0 %9254, %v8940
      %v9256 = vpop.permute.xlu0 %9255
      %9258 = vset.pattern.permute.xlu0 1
      %9259 = vperm.xlu0 %9258, %v8941
      %v9260 = vpop.permute.xlu0 %9259
      %v9262 = vmul.f32 %v901, %v9136
      %v9263 = vmul.f32 %v902, %v9140
      %v9264 = vmul.f32 %v903, %v9144
      %v9265 = vmul.f32 %v904, %v9148
      %v9266 = vmul.f32 %v905, %v9152
      %v9267 = vmul.f32 %v906, %v9156
      %v9268 = vmul.f32 %v907, %v9160
      %v9269 = vmul.f32 %v908, %v9164
      %v9270 = vmul.f32 %v909, %v9168
      %v9271 = vmul.f32 %v910, %v9172
      %v9272 = vmul.f32 %v911, %v9176
      %v9273 = vmul.f32 %v912, %v9180
      %v9274 = vmul.f32 %v913, %v9184
      %v9275 = vmul.f32 %v914, %v9188
      %v9276 = vmul.f32 %v915, %v9192
      %v9277 = vmul.f32 %v916, %v9196
      %v9278 = vmul.f32 %v917, %v9200
      %v9279 = vmul.f32 %v918, %v9204
      %v9280 = vmul.f32 %v919, %v9208
      %v9281 = vmul.f32 %v920, %v9212
      %v9282 = vmul.f32 %v921, %v9216
      %v9283 = vmul.f32 %v922, %v9220
      %v9284 = vmul.f32 %v923, %v9224
      %v9285 = vmul.f32 %v924, %v9228
      %v9286 = vmul.f32 %v925, %v9232
      %v9287 = vmul.f32 %v926, %v9236
      %v9288 = vmul.f32 %v927, %v9240
      %v9289 = vmul.f32 %v928, %v9244
      %v9290 = vmul.f32 %v929, %v9248
      %v9291 = vmul.f32 %v930, %v9252
      %v9292 = vmul.f32 %v931, %v9256
      %v9293 = vmul.f32 %v932, %v9260
      %v9294 = vadd.f32 %v9102, %v9262
      %v9295 = vadd.f32 %v9103, %v9263
      %v9296 = vadd.f32 %v9104, %v9264
      %v9297 = vadd.f32 %v9105, %v9265
      %v9298 = vadd.f32 %v9106, %v9266
      %v9299 = vadd.f32 %v9107, %v9267
      %v9300 = vadd.f32 %v9108, %v9268
      %v9301 = vadd.f32 %v9109, %v9269
      %v9302 = vadd.f32 %v9110, %v9270
      %v9303 = vadd.f32 %v9111, %v9271
      %v9304 = vadd.f32 %v9112, %v9272
      %v9305 = vadd.f32 %v9113, %v9273
      %v9306 = vadd.f32 %v9114, %v9274
      %v9307 = vadd.f32 %v9115, %v9275
      %v9308 = vadd.f32 %v9116, %v9276
      %v9309 = vadd.f32 %v9117, %v9277
      %v9310 = vadd.f32 %v9118, %v9278
      %v9311 = vadd.f32 %v9119, %v9279
      %v9312 = vadd.f32 %v9120, %v9280
      %v9313 = vadd.f32 %v9121, %v9281
      %v9314 = vadd.f32 %v9122, %v9282
      %v9315 = vadd.f32 %v9123, %v9283
      %v9316 = vadd.f32 %v9124, %v9284
      %v9317 = vadd.f32 %v9125, %v9285
      %v9318 = vadd.f32 %v9126, %v9286
      %v9319 = vadd.f32 %v9127, %v9287
      %v9320 = vadd.f32 %v9128, %v9288
      %v9321 = vadd.f32 %v9129, %v9289
      %v9322 = vadd.f32 %v9130, %v9290
      %v9323 = vadd.f32 %v9131, %v9291
      %v9324 = vadd.f32 %v9132, %v9292
      %v9325 = vadd.f32 %v9133, %v9293
      %9326 = vset.pattern.permute.xlu0 2
      %9327 = vperm.xlu0 %9326, %v8910
      %v9328 = vpop.permute.xlu0 %9327
      %9330 = vset.pattern.permute.xlu0 2
      %9331 = vperm.xlu0 %9330, %v8911
      %v9332 = vpop.permute.xlu0 %9331
      %9334 = vset.pattern.permute.xlu0 2
      %9335 = vperm.xlu0 %9334, %v8912
      %v9336 = vpop.permute.xlu0 %9335
      %9338 = vset.pattern.permute.xlu0 2
      %9339 = vperm.xlu0 %9338, %v8913
      %v9340 = vpop.permute.xlu0 %9339
      %9342 = vset.pattern.permute.xlu0 2
      %9343 = vperm.xlu0 %9342, %v8914
      %v9344 = vpop.permute.xlu0 %9343
      %9346 = vset.pattern.permute.xlu0 2
      %9347 = vperm.xlu0 %9346, %v8915
      %v9348 = vpop.permute.xlu0 %9347
      %9350 = vset.pattern.permute.xlu0 2
      %9351 = vperm.xlu0 %9350, %v8916
      %v9352 = vpop.permute.xlu0 %9351
      %9354 = vset.pattern.permute.xlu0 2
      %9355 = vperm.xlu0 %9354, %v8917
      %v9356 = vpop.permute.xlu0 %9355
      %9358 = vset.pattern.permute.xlu0 2
      %9359 = vperm.xlu0 %9358, %v8918
      %v9360 = vpop.permute.xlu0 %9359
      %9362 = vset.pattern.permute.xlu0 2
      %9363 = vperm.xlu0 %9362, %v8919
      %v9364 = vpop.permute.xlu0 %9363
      %9366 = vset.pattern.permute.xlu0 2
      %9367 = vperm.xlu0 %9366, %v8920
      %v9368 = vpop.permute.xlu0 %9367
      %9370 = vset.pattern.permute.xlu0 2
      %9371 = vperm.xlu0 %9370, %v8921
      %v9372 = vpop.permute.xlu0 %9371
      %9374 = vset.pattern.permute.xlu0 2
      %9375 = vperm.xlu0 %9374, %v8922
      %v9376 = vpop.permute.xlu0 %9375
      %9378 = vset.pattern.permute.xlu0 2
      %9379 = vperm.xlu0 %9378, %v8923
      %v9380 = vpop.permute.xlu0 %9379
      %9382 = vset.pattern.permute.xlu0 2
      %9383 = vperm.xlu0 %9382, %v8924
      %v9384 = vpop.permute.xlu0 %9383
      %9386 = vset.pattern.permute.xlu0 2
      %9387 = vperm.xlu0 %9386, %v8925
      %v9388 = vpop.permute.xlu0 %9387
      %9390 = vset.pattern.permute.xlu0 2
      %9391 = vperm.xlu0 %9390, %v8926
      %v9392 = vpop.permute.xlu0 %9391
      %9394 = vset.pattern.permute.xlu0 2
      %9395 = vperm.xlu0 %9394, %v8927
      %v9396 = vpop.permute.xlu0 %9395
      %9398 = vset.pattern.permute.xlu0 2
      %9399 = vperm.xlu0 %9398, %v8928
      %v9400 = vpop.permute.xlu0 %9399
      %9402 = vset.pattern.permute.xlu0 2
      %9403 = vperm.xlu0 %9402, %v8929
      %v9404 = vpop.permute.xlu0 %9403
      %9406 = vset.pattern.permute.xlu0 2
      %9407 = vperm.xlu0 %9406, %v8930
      %v9408 = vpop.permute.xlu0 %9407
      %9410 = vset.pattern.permute.xlu0 2
      %9411 = vperm.xlu0 %9410, %v8931
      %v9412 = vpop.permute.xlu0 %9411
      %9414 = vset.pattern.permute.xlu0 2
      %9415 = vperm.xlu0 %9414, %v8932
      %v9416 = vpop.permute.xlu0 %9415
      %9418 = vset.pattern.permute.xlu0 2
      %9419 = vperm.xlu0 %9418, %v8933
      %v9420 = vpop.permute.xlu0 %9419
      %9422 = vset.pattern.permute.xlu0 2
      %9423 = vperm.xlu0 %9422, %v8934
      %v9424 = vpop.permute.xlu0 %9423
      %9426 = vset.pattern.permute.xlu0 2
      %9427 = vperm.xlu0 %9426, %v8935
      %v9428 = vpop.permute.xlu0 %9427
      %9430 = vset.pattern.permute.xlu0 2
      %9431 = vperm.xlu0 %9430, %v8936
      %v9432 = vpop.permute.xlu0 %9431
      %9434 = vset.pattern.permute.xlu0 2
      %9435 = vperm.xlu0 %9434, %v8937
      %v9436 = vpop.permute.xlu0 %9435
      %9438 = vset.pattern.permute.xlu0 2
      %9439 = vperm.xlu0 %9438, %v8938
      %v9440 = vpop.permute.xlu0 %9439
      %9442 = vset.pattern.permute.xlu0 2
      %9443 = vperm.xlu0 %9442, %v8939
      %v9444 = vpop.permute.xlu0 %9443
      %9446 = vset.pattern.permute.xlu0 2
      %9447 = vperm.xlu0 %9446, %v8940
      %v9448 = vpop.permute.xlu0 %9447
      %9450 = vset.pattern.permute.xlu0 2
      %9451 = vperm.xlu0 %9450, %v8941
      %v9452 = vpop.permute.xlu0 %9451
      %v9454 = vmul.f32 %v6388, %v9328
      %v9455 = vmul.f32 %v6389, %v9332
      %v9456 = vmul.f32 %v6390, %v9336
      %v9457 = vmul.f32 %v6391, %v9340
      %v9458 = vmul.f32 %v6392, %v9344
      %v9459 = vmul.f32 %v6393, %v9348
      %v9460 = vmul.f32 %v6394, %v9352
      %v9461 = vmul.f32 %v6395, %v9356
      %v9462 = vmul.f32 %v6396, %v9360
      %v9463 = vmul.f32 %v6397, %v9364
      %v9464 = vmul.f32 %v6398, %v9368
      %v9465 = vmul.f32 %v6399, %v9372
      %v9466 = vmul.f32 %v6400, %v9376
      %v9467 = vmul.f32 %v6401, %v9380
      %v9468 = vmul.f32 %v6402, %v9384
      %v9469 = vmul.f32 %v6403, %v9388
      %v9470 = vmul.f32 %v6404, %v9392
      %v9471 = vmul.f32 %v6405, %v9396
      %v9472 = vmul.f32 %v6406, %v9400
      %v9473 = vmul.f32 %v6407, %v9404
      %v9474 = vmul.f32 %v6408, %v9408
      %v9475 = vmul.f32 %v6409, %v9412
      %v9476 = vmul.f32 %v6410, %v9416
      %v9477 = vmul.f32 %v6411, %v9420
      %v9478 = vmul.f32 %v6412, %v9424
      %v9479 = vmul.f32 %v6413, %v9428
      %v9480 = vmul.f32 %v6414, %v9432
      %v9481 = vmul.f32 %v6415, %v9436
      %v9482 = vmul.f32 %v6416, %v9440
      %v9483 = vmul.f32 %v6417, %v9444
      %v9484 = vmul.f32 %v6418, %v9448
      %v9485 = vmul.f32 %v6419, %v9452
      %v9486 = vadd.f32 %v9294, %v9454
      %v9487 = vadd.f32 %v9295, %v9455
      %v9488 = vadd.f32 %v9296, %v9456
      %v9489 = vadd.f32 %v9297, %v9457
      %v9490 = vadd.f32 %v9298, %v9458
      %v9491 = vadd.f32 %v9299, %v9459
      %v9492 = vadd.f32 %v9300, %v9460
      %v9493 = vadd.f32 %v9301, %v9461
      %v9494 = vadd.f32 %v9302, %v9462
      %v9495 = vadd.f32 %v9303, %v9463
      %v9496 = vadd.f32 %v9304, %v9464
      %v9497 = vadd.f32 %v9305, %v9465
      %v9498 = vadd.f32 %v9306, %v9466
      %v9499 = vadd.f32 %v9307, %v9467
      %v9500 = vadd.f32 %v9308, %v9468
      %v9501 = vadd.f32 %v9309, %v9469
      %v9502 = vadd.f32 %v9310, %v9470
      %v9503 = vadd.f32 %v9311, %v9471
      %v9504 = vadd.f32 %v9312, %v9472
      %v9505 = vadd.f32 %v9313, %v9473
      %v9506 = vadd.f32 %v9314, %v9474
      %v9507 = vadd.f32 %v9315, %v9475
      %v9508 = vadd.f32 %v9316, %v9476
      %v9509 = vadd.f32 %v9317, %v9477
      %v9510 = vadd.f32 %v9318, %v9478
      %v9511 = vadd.f32 %v9319, %v9479
      %v9512 = vadd.f32 %v9320, %v9480
      %v9513 = vadd.f32 %v9321, %v9481
      %v9514 = vadd.f32 %v9322, %v9482
      %v9515 = vadd.f32 %v9323, %v9483
      %v9516 = vadd.f32 %v9324, %v9484
      %v9517 = vadd.f32 %v9325, %v9485
      %v9518 = vpack.c.bf16 %v9487, %v9486
      %v9519 = vpack.c.bf16 %v9489, %v9488
      %v9520 = vpack.c.bf16 %v9491, %v9490
      %v9521 = vpack.c.bf16 %v9493, %v9492
      %v9522 = vpack.c.bf16 %v9495, %v9494
      %v9523 = vpack.c.bf16 %v9497, %v9496
      %v9524 = vpack.c.bf16 %v9499, %v9498
      %v9525 = vpack.c.bf16 %v9501, %v9500
      %v9526 = vpack.c.bf16 %v9503, %v9502
      %v9527 = vpack.c.bf16 %v9505, %v9504
      %v9528 = vpack.c.bf16 %v9507, %v9506
      %v9529 = vpack.c.bf16 %v9509, %v9508
      %v9530 = vpack.c.bf16 %v9511, %v9510
      %v9531 = vpack.c.bf16 %v9513, %v9512
      %v9532 = vpack.c.bf16 %v9515, %v9514
      %v9533 = vpack.c.bf16 %v9517, %v9516
      %v9534 = vld [vmem:[%s17] sm:$0xf]
      %v9535 = vld [vmem:[%s18] sm:$0x1]
      %v9537 = vlaneseq
      %v9538 = vshrl.u32 %v9537, 7
      %v9539 = vsub.s32 0, %v9538
      %v9540 = vrot.slane %v9535, %v9539
      %v9543 = vsel %vm6428, %v9518, 0
      %v9546 = vsel %vm6428, %v9519, 0
      %v9549 = vsel %vm6428, %v9520, 0
      %v9552 = vsel %vm6428, %v9521, 0
      %v9555 = vsel %vm6428, %v9522, 0
      %v9558 = vsel %vm6428, %v9523, 0
      %v9561 = vsel %vm6428, %v9524, 0
      %v9564 = vsel %vm6428, %v9525, 0
      %v9567 = vsel %vm6428, %v9526, 0
      %v9570 = vsel %vm6428, %v9527, 0
      %v9573 = vsel %vm6428, %v9528, 0
      %v9576 = vsel %vm6428, %v9529, 0
      %v9579 = vsel %vm6428, %v9530, 0
      %v9582 = vsel %vm6428, %v9531, 0
      %v9585 = vsel %vm6428, %v9532, 0
      %v9588 = vsel %vm6428, %v9533, 0
      %vm9590 = vcmask 1043456
      %v9592 = vsel %vm9590, %v9534, 0
      %9594 = vmatprep.subr.bf16.mxu0 0
      %9595 = vmatpush1.bf16.msra.mxu0 0
      %9596 = vmatprep.subr.bf16.mxu0 0
      %9597 = vmatpush1.bf16.msra.mxu0 0
      %9598 = vmatprep.subr.bf16.mxu0 0
      %9599 = vmatpush1.bf16.msra.mxu0 0
      %9600 = vmatprep.subr.bf16.mxu0 0
      %9601 = vmatpush1.bf16.msra.mxu0 0
      %9602 = vmatprep.subr.bf16.mxu0 0
      %9603 = vmatpush1.bf16.msra.mxu0 0
      %9604 = vmatprep.subr.bf16.mxu0 0
      %9605 = vmatpush1.bf16.msra.mxu0 0
      %9606 = vmatprep.subr.bf16.mxu0 0
      %9607 = vmatpush1.bf16.msra.mxu0 0
      %9608 = vmatprep.subr.bf16.mxu0 0
      %9609 = vmatpush1.bf16.msra.mxu0 %v9592
      %9610 = vmatprep.subr.bf16.mxu0 0
      %9611 = vmatpush2.bf16.msra.mxu0 0
      %9612 = vmatprep.subr.bf16.mxu0 0
      %9613 = vmatpush2.bf16.msra.mxu0 0
      %9614 = vmatprep.subr.bf16.mxu0 0
      %9615 = vmatpush2.bf16.msra.mxu0 0
      %9616 = vmatprep.subr.bf16.mxu0 0
      %9617 = vmatpush2.bf16.msra.mxu0 0
      %9618 = vmatprep.subr.bf16.mxu0 0
      %9619 = vmatpush2.bf16.msra.mxu0 0
      %9620 = vmatprep.subr.bf16.mxu0 0
      %9621 = vmatpush2.bf16.msra.mxu0 0
      %9622 = vmatprep.subr.bf16.mxu0 0
      %9623 = vmatpush2.bf16.msra.mxu0 0
      %9624 = vmatprep.subr.bf16.mxu0 0
      %9625 = vmatpush2.bf16.msra.mxu0 0
      %9626 = vmatprep.mubr.bf16.mxu0 0
      %9627 = vmatmul.mubr.bf16.gmra.mxu0 %v9543
      %v9628 = vpop.f32.mrf.mxu0
      %v9629 = vadd.f32 %v9540, %v9628
      %v9630 = vpop.f32.mrf.mxu0
      %v9631 = vpop.f32.mrf.mxu0
      %v9632 = vadd.f32 %v9540, %v9631
      %v9633 = vpop.f32.mrf.mxu0
      %9634 = vmatprep.mubr.bf16.mxu0 0
      %9635 = vmatmul.mubr.bf16.gmra.mxu0 %v9546
      %v9636 = vpop.f32.mrf.mxu0
      %v9637 = vadd.f32 %v9540, %v9636
      %v9638 = vpop.f32.mrf.mxu0
      %v9639 = vpop.f32.mrf.mxu0
      %v9640 = vadd.f32 %v9540, %v9639
      %v9641 = vpop.f32.mrf.mxu0
      %9642 = vmatprep.mubr.bf16.mxu0 0
      %9643 = vmatmul.mubr.bf16.gmra.mxu0 %v9549
      %v9644 = vpop.f32.mrf.mxu0
      %v9645 = vadd.f32 %v9540, %v9644
      %v9646 = vpop.f32.mrf.mxu0
      %v9647 = vpop.f32.mrf.mxu0
      %v9648 = vadd.f32 %v9540, %v9647
      %v9649 = vpop.f32.mrf.mxu0
      %9650 = vmatprep.mubr.bf16.mxu0 0
      %9651 = vmatmul.mubr.bf16.gmra.mxu0 %v9552
      %v9652 = vpop.f32.mrf.mxu0
      %v9653 = vadd.f32 %v9540, %v9652
      %v9654 = vpop.f32.mrf.mxu0
      %v9655 = vpop.f32.mrf.mxu0
      %v9656 = vadd.f32 %v9540, %v9655
      %v9657 = vpop.f32.mrf.mxu0
      %9658 = vmatprep.mubr.bf16.mxu0 0
      %9659 = vmatmul.mubr.bf16.gmra.mxu0 %v9555
      %v9660 = vpop.f32.mrf.mxu0
      %v9661 = vadd.f32 %v9540, %v9660
      %v9662 = vpop.f32.mrf.mxu0
      %v9663 = vpop.f32.mrf.mxu0
      %v9664 = vadd.f32 %v9540, %v9663
      %v9665 = vpop.f32.mrf.mxu0
      %9666 = vmatprep.mubr.bf16.mxu0 0
      %9667 = vmatmul.mubr.bf16.gmra.mxu0 %v9558
      %v9668 = vpop.f32.mrf.mxu0
      %v9669 = vadd.f32 %v9540, %v9668
      %v9670 = vpop.f32.mrf.mxu0
      %v9671 = vpop.f32.mrf.mxu0
      %v9672 = vadd.f32 %v9540, %v9671
      %v9673 = vpop.f32.mrf.mxu0
      %9674 = vmatprep.mubr.bf16.mxu0 0
      %9675 = vmatmul.mubr.bf16.gmra.mxu0 %v9561
      %v9676 = vpop.f32.mrf.mxu0
      %v9677 = vadd.f32 %v9540, %v9676
      %v9678 = vpop.f32.mrf.mxu0
      %v9679 = vpop.f32.mrf.mxu0
      %v9680 = vadd.f32 %v9540, %v9679
      %v9681 = vpop.f32.mrf.mxu0
      %9682 = vmatprep.mubr.bf16.mxu0 0
      %9683 = vmatmul.mubr.bf16.gmra.mxu0 %v9564
      %v9684 = vpop.f32.mrf.mxu0
      %v9685 = vadd.f32 %v9540, %v9684
      %v9686 = vpop.f32.mrf.mxu0
      %v9687 = vpop.f32.mrf.mxu0
      %v9688 = vadd.f32 %v9540, %v9687
      %v9689 = vpop.f32.mrf.mxu0
      %9690 = vmatprep.mubr.bf16.mxu0 0
      %9691 = vmatmul.mubr.bf16.gmra.mxu0 %v9567
      %v9692 = vpop.f32.mrf.mxu0
      %v9693 = vadd.f32 %v9540, %v9692
      %v9694 = vpop.f32.mrf.mxu0
      %v9695 = vpop.f32.mrf.mxu0
      %v9696 = vadd.f32 %v9540, %v9695
      %v9697 = vpop.f32.mrf.mxu0
      %9698 = vmatprep.mubr.bf16.mxu0 0
      %9699 = vmatmul.mubr.bf16.gmra.mxu0 %v9570
      %v9700 = vpop.f32.mrf.mxu0
      %v9701 = vadd.f32 %v9540, %v9700
      %v9702 = vpop.f32.mrf.mxu0
      %v9703 = vpop.f32.mrf.mxu0
      %v9704 = vadd.f32 %v9540, %v9703
      %v9705 = vpop.f32.mrf.mxu0
      %9706 = vmatprep.mubr.bf16.mxu0 0
      %9707 = vmatmul.mubr.bf16.gmra.mxu0 %v9573
      %v9708 = vpop.f32.mrf.mxu0
      %v9709 = vadd.f32 %v9540, %v9708
      %v9710 = vpop.f32.mrf.mxu0
      %v9711 = vpop.f32.mrf.mxu0
      %v9712 = vadd.f32 %v9540, %v9711
      %v9713 = vpop.f32.mrf.mxu0
      %9714 = vmatprep.mubr.bf16.mxu0 0
      %9715 = vmatmul.mubr.bf16.gmra.mxu0 %v9576
      %v9716 = vpop.f32.mrf.mxu0
      %v9717 = vadd.f32 %v9540, %v9716
      %v9718 = vpop.f32.mrf.mxu0
      %v9719 = vpop.f32.mrf.mxu0
      %v9720 = vadd.f32 %v9540, %v9719
      %v9721 = vpop.f32.mrf.mxu0
      %9722 = vmatprep.mubr.bf16.mxu0 0
      %9723 = vmatmul.mubr.bf16.gmra.mxu0 %v9579
      %v9724 = vpop.f32.mrf.mxu0
      %v9725 = vadd.f32 %v9540, %v9724
      %v9726 = vpop.f32.mrf.mxu0
      %v9727 = vpop.f32.mrf.mxu0
      %v9728 = vadd.f32 %v9540, %v9727
      %v9729 = vpop.f32.mrf.mxu0
      %9730 = vmatprep.mubr.bf16.mxu0 0
      %9731 = vmatmul.mubr.bf16.gmra.mxu0 %v9582
      %v9732 = vpop.f32.mrf.mxu0
      %v9733 = vadd.f32 %v9540, %v9732
      %v9734 = vpop.f32.mrf.mxu0
      %v9735 = vpop.f32.mrf.mxu0
      %v9736 = vadd.f32 %v9540, %v9735
      %v9737 = vpop.f32.mrf.mxu0
      %9738 = vmatprep.mubr.bf16.mxu0 0
      %9739 = vmatmul.mubr.bf16.gmra.mxu0 %v9585
      %v9740 = vpop.f32.mrf.mxu0
      %v9741 = vadd.f32 %v9540, %v9740
      %v9742 = vpop.f32.mrf.mxu0
      %v9743 = vpop.f32.mrf.mxu0
      %v9744 = vadd.f32 %v9540, %v9743
      %v9745 = vpop.f32.mrf.mxu0
      %9746 = vmatprep.mubr.bf16.mxu0 0
      %9747 = vmatmul.mubr.bf16.gmra.mxu0 %v9588
      %v9748 = vpop.f32.mrf.mxu0
      %v9749 = vadd.f32 %v9540, %v9748
      %v9750 = vpop.f32.mrf.mxu0
      %v9751 = vpop.f32.mrf.mxu0
      %v9752 = vadd.f32 %v9540, %v9751
      %v9753 = vpop.f32.mrf.mxu0
      %9754 = vdwg.mxu0
      %v9755 = vmax.f32 %v9629, 0.0
      %v9756 = vmax.f32 %v9632, 0.0
      %v9757 = vmax.f32 %v9637, 0.0
      %v9758 = vmax.f32 %v9640, 0.0
      %v9759 = vmax.f32 %v9645, 0.0
      %v9760 = vmax.f32 %v9648, 0.0
      %v9761 = vmax.f32 %v9653, 0.0
      %v9762 = vmax.f32 %v9656, 0.0
      %v9763 = vmax.f32 %v9661, 0.0
      %v9764 = vmax.f32 %v9664, 0.0
      %v9765 = vmax.f32 %v9669, 0.0
      %v9766 = vmax.f32 %v9672, 0.0
      %v9767 = vmax.f32 %v9677, 0.0
      %v9768 = vmax.f32 %v9680, 0.0
      %v9769 = vmax.f32 %v9685, 0.0
      %v9770 = vmax.f32 %v9688, 0.0
      %v9771 = vmax.f32 %v9693, 0.0
      %v9772 = vmax.f32 %v9696, 0.0
      %v9773 = vmax.f32 %v9701, 0.0
      %v9774 = vmax.f32 %v9704, 0.0
      %v9775 = vmax.f32 %v9709, 0.0
      %v9776 = vmax.f32 %v9712, 0.0
      %v9777 = vmax.f32 %v9717, 0.0
      %v9778 = vmax.f32 %v9720, 0.0
      %v9779 = vmax.f32 %v9725, 0.0
      %v9780 = vmax.f32 %v9728, 0.0
      %v9781 = vmax.f32 %v9733, 0.0
      %v9782 = vmax.f32 %v9736, 0.0
      %v9783 = vmax.f32 %v9741, 0.0
      %v9784 = vmax.f32 %v9744, 0.0
      %v9785 = vmax.f32 %v9749, 0.0
      %v9786 = vmax.f32 %v9752, 0.0
      %v9787 = vmin.f32 %v9755, 6.0
      %v9788 = vmin.f32 %v9756, 6.0
      %v9789 = vmin.f32 %v9757, 6.0
      %v9790 = vmin.f32 %v9758, 6.0
      %v9791 = vmin.f32 %v9759, 6.0
      %v9792 = vmin.f32 %v9760, 6.0
      %v9793 = vmin.f32 %v9761, 6.0
      %v9794 = vmin.f32 %v9762, 6.0
      %v9795 = vmin.f32 %v9763, 6.0
      %v9796 = vmin.f32 %v9764, 6.0
      %v9797 = vmin.f32 %v9765, 6.0
      %v9798 = vmin.f32 %v9766, 6.0
      %v9799 = vmin.f32 %v9767, 6.0
      %v9800 = vmin.f32 %v9768, 6.0
      %v9801 = vmin.f32 %v9769, 6.0
      %v9802 = vmin.f32 %v9770, 6.0
      %v9803 = vmin.f32 %v9771, 6.0
      %v9804 = vmin.f32 %v9772, 6.0
      %v9805 = vmin.f32 %v9773, 6.0
      %v9806 = vmin.f32 %v9774, 6.0
      %v9807 = vmin.f32 %v9775, 6.0
      %v9808 = vmin.f32 %v9776, 6.0
      %v9809 = vmin.f32 %v9777, 6.0
      %v9810 = vmin.f32 %v9778, 6.0
      %v9811 = vmin.f32 %v9779, 6.0
      %v9812 = vmin.f32 %v9780, 6.0
      %v9813 = vmin.f32 %v9781, 6.0
      %v9814 = vmin.f32 %v9782, 6.0
      %v9815 = vmin.f32 %v9783, 6.0
      %v9816 = vmin.f32 %v9784, 6.0
      %v9817 = vmin.f32 %v9785, 6.0
      %v9818 = vmin.f32 %v9786, 6.0
      %9819 = vst.msk [vmem:[%s642] sm:$0xff] %vm6428, %v9787
      %9820 = vst.msk [vmem:[%s642 + $0x8] sm:$0xff] %vm6428, %v9788
      %9821 = vst.msk [vmem:[%s642 + $0x10] sm:$0xff] %vm6428, %v9789
      %9822 = vst.msk [vmem:[%s642 + $0x18] sm:$0xff] %vm6428, %v9790
      %9823 = vst.msk [vmem:[%s642 + $0x20] sm:$0xff] %vm6428, %v9791
      %9824 = vst.msk [vmem:[%s642 + $0x28] sm:$0xff] %vm6428, %v9792
      %9825 = vst.msk [vmem:[%s642 + $0x30] sm:$0xff] %vm6428, %v9793
      %9826 = vst.msk [vmem:[%s642 + $0x38] sm:$0xff] %vm6428, %v9794
      %9827 = vst.msk [vmem:[%s642 + $0x40] sm:$0xff] %vm6428, %v9795
      %9828 = vst.msk [vmem:[%s642 + $0x48] sm:$0xff] %vm6428, %v9796
      %9829 = vst.msk [vmem:[%s642 + $0x50] sm:$0xff] %vm6428, %v9797
      %9830 = vst.msk [vmem:[%s642 + $0x58] sm:$0xff] %vm6428, %v9798
      %9831 = vst.msk [vmem:[%s642 + $0x60] sm:$0xff] %vm6428, %v9799
      %9832 = vst.msk [vmem:[%s642 + $0x68] sm:$0xff] %vm6428, %v9800
      %9833 = vst.msk [vmem:[%s642 + $0x70] sm:$0xff] %vm6428, %v9801
      %9834 = vst.msk [vmem:[%s642 + $0x78] sm:$0xff] %vm6428, %v9802
      %9835 = vst.msk [vmem:[%s642 + $0x80] sm:$0xff] %vm6428, %v9803
      %9836 = vst.msk [vmem:[%s642 + $0x88] sm:$0xff] %vm6428, %v9804
      %9837 = vst.msk [vmem:[%s642 + $0x90] sm:$0xff] %vm6428, %v9805
      %9838 = vst.msk [vmem:[%s642 + $0x98] sm:$0xff] %vm6428, %v9806
      %9839 = vst.msk [vmem:[%s642 + $0xa0] sm:$0xff] %vm6428, %v9807
      %9840 = vst.msk [vmem:[%s642 + $0xa8] sm:$0xff] %vm6428, %v9808
      %9841 = vst.msk [vmem:[%s642 + $0xb0] sm:$0xff] %vm6428, %v9809
      %9842 = vst.msk [vmem:[%s642 + $0xb8] sm:$0xff] %vm6428, %v9810
      %9843 = vst.msk [vmem:[%s642 + $0xc0] sm:$0xff] %vm6428, %v9811
      %9844 = vst.msk [vmem:[%s642 + $0xc8] sm:$0xff] %vm6428, %v9812
      %9845 = vst.msk [vmem:[%s642 + $0xd0] sm:$0xff] %vm6428, %v9813
      %9846 = vst.msk [vmem:[%s642 + $0xd8] sm:$0xff] %vm6428, %v9814
      %9847 = vst.msk [vmem:[%s642 + $0xe0] sm:$0xff] %vm6428, %v9815
      %9848 = vst.msk [vmem:[%s642 + $0xe8] sm:$0xff] %vm6428, %v9816
      %9849 = vst.msk [vmem:[%s642 + $0xf0] sm:$0xff] %vm6428, %v9817
      %9850 = vst.msk [vmem:[%s642 + $0xf8] sm:$0xff] %vm6428, %v9818
      %p9851 = scmp.lt.s32.totalorder %s30, 1
      %s9852 = scalar_select %p9851, %s30, 1
      %s9853 = smul.addr %s9852, 32
      %s9854 = smul.addr %s9853, 8
      %s9855 = scalar_lea.vmem %s19, %s9854
      // Predicated region
      $region97: #{asff_level2_pallas.1} parent=95 // pred_check
        %p9856 = pneg %p462
      $region98: #{asff_level2_pallas.1} parent=95 // pred_check_branch
        %9858 = sbr.rel (%p9856) target = $region100
      $region99: #{asff_level2_pallas.1} parent=95 // pred_region
        _
      $region100: #{asff_level2_pallas.1} parent=95 // pred_fallthru
        _
    $region96: #{asff_level2_pallas.1} parent=5 // pred_fallthru
      _
    %p9859 = scmp.le.s32.totalorder 2, %s25
    // Predicated region
    $region101: #{asff_level2_pallas.1} parent=5 // pred_check
      %p9860 = pneg %p9859
    $region102: #{asff_level2_pallas.1} parent=5 // pred_check_branch
      %9862 = sbr.rel (%p9860) target = $region104
    $region103: #{asff_level2_pallas.1} parent=5 // pred_region
      %s9863 = ssub.s32 %s25, 2
      // Predicated region
      $region105: #{asff_level2_pallas.1} parent=103 // pred_check
        %p9864 = pneg %p468
      $region106: #{asff_level2_pallas.1} parent=103 // pred_check_branch
        %9866 = sbr.rel (%p9864) target = $region108
      $region107: #{asff_level2_pallas.1} parent=103 // pred_region
        %p9867 = scmp.lt.s32.totalorder %s31, 1
        %s9868 = scalar_select %p9867, %s31, 1
        %s9869 = smul.addr %s9868, 32
        %s9870 = smul.addr %s9869, 8
        %s9871 = scalar_lea.vmem %s19, %s9870
      $region108: #{asff_level2_pallas.1} parent=103 // pred_fallthru
        _
    $region104: #{asff_level2_pallas.1} parent=5 // pred_fallthru
      _
  $region6: #{asff_level2_pallas.1} parent=0 // loop_footer
    %s29 = sadd.s32 1, %s25
  $region7: #{asff_level2_pallas.1} parent=0 // loop_footer_branch
    %24 = sbr.rel target = $region3
  $region8: #{asff_level2_pallas.1} parent=0 // loop_exit
    _

</llo_original>
